<compile_context>
chip_gen: v7x
topology: tpu7x:2x2x1
jax: 0.10.0
libtpu: 0.0.40
codegen_flags: <defaults>
</compile_context>

<pallas_src>
import functools

import jax
import jax.numpy as jnp
from jax import lax
from jax.experimental import pallas as pl
from jax.experimental.pallas import tpu as pltpu

LANE = 128  # vreg lane width = canvas row pitch


def _elu(y):
    # ELU(alpha=1): y if y > 0 else exp(y) - 1   (exp(min(y,0)) guards overflow)
    return jnp.where(y > 0, y, jnp.exp(jnp.minimum(y, 0.0)) - 1.0)


def _round_up(v, m):
    return -(-v // m) * m


def _resblock_kernel(*refs, H, W, nf, cin1, cin23, ks, pmax, has_proj):
    """Fused ResBlock forward for one batch element.

    Canvas layout: (C, rows*128) bf16, image pixel (h, w) at flat index
    (1 + pmax + h) * 128 + pmax + w (one guard row on top/bottom so every
    lane-shifted conv view stays in bounds).  A conv tap (kh, kw) of a kernel
    with half-width p is the flat shift (kh - p) * 128 + (kw - p): the row part
    is vreg aligned, only the tiny kw part is a lane shift.
    """
    (x_ref, mask_ref, w1, b1, w2, b2, w3, b3, wsc_or_ssc, bsc,
     o_ref, canvas, patch) = refs

    row0 = (1 + pmax) * LANE          # flat offset of image row 0
    nspan = H * LANE                  # matmul N dim: H full 128-lane rows

    # Zero canvas (guard/margin rows, pad channels), drop padded x into the
    # interior rows -- all full-width lane-aligned stores.
    canvas[...] = jnp.zeros(canvas.shape, canvas.dtype)
    canvas[0:cin1, row0:row0 + nspan] = x_ref[0].astype(canvas.dtype)

    mask = mask_ref[...]              # (1, H*128) f32, 1.0 on valid image columns

    def conv_bn(cin, k, w_ref, b_ref, act):
        # Build bf16 im2col patch from k lane-shifted canvas views (one per kw);
        # per-kh sub-slices are free vreg-aligned value slices and land on
        # 8-sublane-aligned patch rows.  Then ONE MXU matmul (bf16 x bf16 -> f32).
        p = (k - 1) // 2
        for kw in range(k):
            base = (1 + pmax - p) * LANE + (kw - p)
            sh = canvas[0:cin, base: base + (H + 2 * p) * LANE]
            for kh in range(k):
                t = kh * k + kw
                patch[t * cin:(t + 1) * cin, :] = sh[:, kh * LANE: kh * LANE + nspan]
        kk = k * k * cin
        y = jnp.dot(w_ref[...], patch[0:kk, :],
                    preferred_element_type=jnp.float32)      # (nf, H*128) f32
        y = y + b_ref[...]                                   # BN scale folded into w
        return _elu(y) if act else y

    def write_back(y):
        # zero the pad columns (keeps the zero-padding invariant), then one
        # aligned full-width store of the interior rows.
        canvas[0:nf, row0:row0 + nspan] = (y * mask).astype(canvas.dtype)

    write_back(conv_bn(cin1, ks[0], w1, b1, act=True))
    write_back(conv_bn(cin23, ks[1], w2, b2, act=True))
    y = conv_bn(cin23, ks[2], w3, b3, act=False)

    # ---- shortcut: 1x1 ConvBlock (BN folded into wsc) or BN-only ----
    x2d = x_ref[0]                                           # (cin1, H*128) f32
    if has_proj:
        sc = jnp.dot(wsc_or_ssc[...], x2d.astype(jnp.bfloat16),
                     preferred_element_type=jnp.float32) + bsc[...]
    else:
        sc = x2d[0:nf, :] * wsc_or_ssc[...] + bsc[...]

    # residual add + ELU; (1, nf, H*128) output block -> unmasked lane-dense stores
    o_ref[0] = _elu(y + sc).astype(o_ref.dtype)


def resblock_forward(x_nchw, params):
    """x: (N, C, H, W) float32 -> (N, nf, H, W).  NCHW in/out."""
    N, ni, H, W = x_nchw.shape
    ks = params["ks"]
    nf = params["b1"].shape[0]
    has_proj = params["wsc"] is not None
    # TODO(synk): even kernel sizes would need PyTorch's asymmetric 'same' padding.
    assert all(k % 2 == 1 for k in ks), "only odd kernel sizes supported"
    pmax = (max(ks) - 1) // 2
    assert W + 2 * pmax <= LANE, "image row + padding must fit one 128-lane row"

    cin1 = _round_up(ni, 8)
    cin23 = _round_up(nf, 8)
    cpad = max(cin1, cin23)
    HC = H + 2 * pmax + 2                              # + 1 guard row top & bottom
    kmax = max(k * k * c for k, c in zip(ks, (cin1, cin23, cin23)))

    # channel-pad to a sublane multiple; place each image row in a 128-lane slot
    # with the valid pixels at columns [pmax, pmax+W)
    x_pad = jnp.pad(x_nchw, ((0, 0), (0, cin1 - ni), (0, 0),
                             (pmax, LANE - W - pmax)))
    x_flat = x_pad.reshape(N, cin1, H * LANE)

    col = jnp.arange(LANE, dtype=jnp.int32)
    colmask = jnp.tile(((col >= pmax) & (col < pmax + W)).astype(jnp.float32),
                       (H,)).reshape(1, H * LANE)

    inputs = [x_flat, colmask,
              params["w1"], params["b1"], params["w2"], params["b2"],
              params["w3"], params["b3"],
              params["wsc"] if has_proj else params["ssc"], params["bsc"]]

    in_specs = [pl.BlockSpec((1, cin1, H * LANE), lambda n: (n, 0, 0))]
    in_specs += [pl.BlockSpec(a.shape, lambda n: (0, 0)) for a in inputs[1:]]

    kernel = functools.partial(
        _resblock_kernel, H=H, W=W, nf=nf, cin1=cin1, cin23=cin23,
        ks=tuple(int(k) for k in ks), pmax=pmax, has_proj=has_proj)

    out = pl.pallas_call(
        kernel,
        out_shape=jax.ShapeDtypeStruct((N, nf, H * LANE), x_nchw.dtype),
        grid=(N,),
        in_specs=in_specs,
        out_specs=pl.BlockSpec((1, nf, H * LANE), lambda n: (n, 0, 0)),
        scratch_shapes=[
            pltpu.VMEM((cpad, HC * LANE), jnp.bfloat16),   # zero-margin canvas
            pltpu.VMEM((kmax, H * LANE), jnp.bfloat16),    # bf16 im2col patch
        ],
        compiler_params=pltpu.CompilerParams(
            dimension_semantics=("parallel",),             # batch across TCs (v7x)
        ),
    )(*inputs)
    # crop the 128-lane padded rows back to the W valid columns (cheap XLA slice)
    return out.reshape(N, nf, H, LANE)[:, :, :, pmax:pmax + W]


# ----------------------------------------------------------------------------
# Parameters (PyTorch layouts) + BN folding + kernel-ready re-layout
# ----------------------------------------------------------------------------
def _fold_bn(gamma, beta, mean, var, eps=1e-5):
    scale = gamma / jnp.sqrt(var + eps)
    return scale, beta - mean * scale


def make_raw_params(key, ni, nf, ksize):
    """Synthetic ResBlock(ni, nf, ksize, bn=True) parameters (PyTorch layouts)."""
    def bn_stats(k, c):
        k1, k2, k3, k4 = jax.random.split(k, 4)
        return (1.0 + 0.1 * jax.random.normal(k1, (c,), jnp.float32),   # gamma
                0.1 * jax.random.normal(k2, (c,), jnp.float32),         # beta
                0.1 * jax.random.normal(k3, (c,), jnp.float32),         # mean
                0.5 + jax.random.uniform(k4, (c,), jnp.float32))        # var

    keys = jax.random.split(key, 8)
    raw = {}
    cins = (ni, nf, nf)
    for i in range(3):
        k = int(ksize[i])
        w = 0.1 * jax.random.normal(keys[i], (nf, cins[i], k, k), jnp.float32)  # OIHW
        raw[f"conv{i + 1}"] = (w, bn_stats(keys[3 + i], nf))
    if ni == nf:
        raw["shortcut"] = (None, bn_stats(keys[6], nf))
    else:
        wsc = 0.1 * jax.random.normal(keys[6], (nf, ni, 1, 1), jnp.float32)
        raw["shortcut"] = (wsc, bn_stats(keys[7], nf))
    return raw


def prepare_kernel_params(raw, ksize):
    """Fold BN scale into the conv weights; lay them out as (Cout, k*k*Cin_pad) bf16."""
    ks = tuple(int(k) for k in ksize)
    nf, ni = raw["conv1"][0].shape[:2]
    cin1, cin23 = _round_up(ni, 8), _round_up(nf, 8)

    def w_mat(w, scale, cin_pad):
        # OIHW -> (O, (kh*k + kw)*cin_pad + c) with BN scale folded into each row
        o, i, k, _ = w.shape
        wf = w * scale.reshape(-1, 1, 1, 1)
        wf = jnp.pad(wf, ((0, 0), (0, cin_pad - i), (0, 0), (0, 0)))
        return (jnp.transpose(wf, (0, 2, 3, 1))
                .reshape(o, k * k * cin_pad).astype(jnp.bfloat16))

    p = {"ks": ks}
    for idx, cin in zip((1, 2, 3), (cin1, cin23, cin23)):
        w, bn = raw[f"conv{idx}"]
        s, b = _fold_bn(*bn)
        p[f"w{idx}"] = w_mat(w, s, cin)
        p[f"b{idx}"] = b.reshape(-1, 1)
    wsc, bn = raw["shortcut"]
    s, b = _fold_bn(*bn)
    if wsc is None:
        p["wsc"], p["ssc"] = None, s.reshape(-1, 1)
    else:
        p["wsc"], p["ssc"] = w_mat(wsc, s, cin1), None        # (nf, cin1) bf16
    p["bsc"] = b.reshape(-1, 1)
    return p


# ----------------------------------------------------------------------------
# Pure-JAX reference (same bf16/BN-folded quantization as the kernel)
# ----------------------------------------------------------------------------
def _conv_bn_ref(x, w, scale, bias, act):
    xq = x.astype(jnp.bfloat16).astype(jnp.float32)
    wq = (w * scale.reshape(-1, 1, 1, 1)).astype(jnp.bfloat16).astype(jnp.float32)
    y = lax.conv_general_dilated(
        xq, wq, window_strides=(1, 1), padding="SAME",
        dimension_numbers=("NCHW", "OIHW", "NCHW"))
    y = y + bias.reshape(1, -1, 1, 1)
    return _elu(y) if act else y


def resblock_reference(x, raw):
    h = x
    for i in (1, 2, 3):
        w, bn = raw[f"conv{i}"]
        s, b = _fold_bn(*bn)
        h = _conv_bn_ref(h, w, s, b, act=(i != 3))
    wsc, bn = raw["shortcut"]
    s, b = _fold_bn(*bn)
    if wsc is None:
        sc = x * s.reshape(1, -1, 1, 1) + b.reshape(1, -1, 1, 1)
    else:
        sc = _conv_bn_ref(x, wsc, s, b, act=False)
    return _elu(h + sc)


if __name__ == "__main__":
    # TODO(synk): training-mode BatchNorm (running-stat updates) is not
    # implemented; BN is folded to inference-time scale/bias.
    ni, nf = 4, 8
    ksize = (7, 5, 3)
    key = jax.random.PRNGKey(0)
    kx, kp = jax.random.split(key)

    x = jax.random.normal(kx, (2, ni, 16, 16), jnp.float32)   # NCHW, like PyTorch
    raw = make_raw_params(kp, ni, nf, ksize)
    params = prepare_kernel_params(raw, ksize)

    out = jax.block_until_ready(resblock_forward(x, params))
    assert out.shape == (2, nf, 16, 16), out.shape

    ref = jax.block_until_ready(resblock_reference(x, raw))
    err = float(jnp.max(jnp.abs(out - ref)))
    assert err < 5e-2, f"max abs error vs reference: {err}"
    print("KERNEL_OK")
</pallas_src>

<mosaic_0001>
module attributes {stable_mosaic.version = 11 : i64} {
  func.func @_resblock_kernel(%arg0: i32, %arg1: memref<1x8x2048xf32, #tpu.memory_space<vmem>>, %arg2: memref<1x2048xf32, #tpu.memory_space<vmem>>, %arg3: memref<8x392xbf16, #tpu.memory_space<vmem>>, %arg4: memref<8x1xf32, #tpu.memory_space<vmem>>, %arg5: memref<8x200xbf16, #tpu.memory_space<vmem>>, %arg6: memref<8x1xf32, #tpu.memory_space<vmem>>, %arg7: memref<8x72xbf16, #tpu.memory_space<vmem>>, %arg8: memref<8x1xf32, #tpu.memory_space<vmem>>, %arg9: memref<8x8xbf16, #tpu.memory_space<vmem>>, %arg10: memref<8x1xf32, #tpu.memory_space<vmem>>, %arg11: memref<1x8x2048xf32, #tpu.memory_space<vmem>>, %arg12: memref<8x3072xbf16, #tpu.memory_space<vmem>>, %arg13: memref<392x2048xbf16, #tpu.memory_space<vmem>>) attributes {dimension_semantics = [#tpu.dimension_semantics<parallel>], iteration_bounds = array<i64: 2>, scalar_prefetch = 0 : i64, scratch_operands = 2 : i64, tpu.core_type = #tpu.core_type<tc>, window_params = [{transform_indices = @transform_0, window_bounds = array<i64: 1, 8, 2048>}, {pipeline_mode = #tpu.pipeline_mode<synchronous>, transform_indices = @transform_1, window_bounds = array<i64: 1, 2048>}, {pipeline_mode = #tpu.pipeline_mode<synchronous>, transform_indices = @transform_2, window_bounds = array<i64: 8, 392>}, {pipeline_mode = #tpu.pipeline_mode<synchronous>, transform_indices = @transform_3, window_bounds = array<i64: 8, 1>}, {pipeline_mode = #tpu.pipeline_mode<synchronous>, transform_indices = @transform_4, window_bounds = array<i64: 8, 200>}, {pipeline_mode = #tpu.pipeline_mode<synchronous>, transform_indices = @transform_5, window_bounds = array<i64: 8, 1>}, {pipeline_mode = #tpu.pipeline_mode<synchronous>, transform_indices = @transform_6, window_bounds = array<i64: 8, 72>}, {pipeline_mode = #tpu.pipeline_mode<synchronous>, transform_indices = @transform_7, window_bounds = array<i64: 8, 1>}, {pipeline_mode = #tpu.pipeline_mode<synchronous>, transform_indices = @transform_8, window_bounds = array<i64: 8, 8>}, {pipeline_mode = #tpu.pipeline_mode<synchronous>, transform_indices = @transform_9, window_bounds = array<i64: 8, 1>}, {transform_indices = @transform_10, window_bounds = array<i64: 1, 8, 2048>}]} {
    %cst = arith.constant 0.000000e+00 : bf16
    %0 = vector.broadcast %cst : bf16 to vector<8x3072xbf16>
    %c0 = arith.constant 0 : index
    %c0_0 = arith.constant 0 : index
    %1 = vector.load %arg12[%c0, %c0_0] : memref<8x3072xbf16, #tpu.memory_space<vmem>>, vector<8x3072xbf16>
    tpu.vector_store %arg12[%c0, %c0_0], %0 {strides = array<i32>} : memref<8x3072xbf16, #tpu.memory_space<vmem>>, vector<8x3072xbf16>,
    %c0_1 = arith.constant 0 : index
    %c0_2 = arith.constant 0 : index
    %c0_3 = arith.constant 0 : index
    %2 = vector.load %arg1[%c0_1, %c0_2, %c0_3] : memref<1x8x2048xf32, #tpu.memory_space<vmem>>, vector<1x8x2048xf32>
    %3 = vector.shape_cast %2 : vector<1x8x2048xf32> to vector<8x2048xf32>
    %4 = arith.truncf %3 : vector<8x2048xf32> to vector<8x2048xbf16>
    %c0_4 = arith.constant 0 : index
    %c512 = arith.constant 512 : index
    %5 = vector.load %arg12[%c0_4, %c512] : memref<8x3072xbf16, #tpu.memory_space<vmem>>, vector<8x2048xbf16>
    tpu.vector_store %arg12[%c0_4, %c512], %4 {strides = array<i32>} : memref<8x3072xbf16, #tpu.memory_space<vmem>>, vector<8x2048xbf16>,
    %c0_5 = arith.constant 0 : index
    %c0_6 = arith.constant 0 : index
    %6 = vector.load %arg2[%c0_5, %c0_6] : memref<1x2048xf32, #tpu.memory_space<vmem>>, vector<1x2048xf32>
    %c0_7 = arith.constant 0 : index
    %c125 = arith.constant 125 : index
    %7 = vector.load %arg12[%c0_7, %c125] : memref<8x3072xbf16, #tpu.memory_space<vmem>>, vector<8x2816xbf16>
    %8 = vector.extract_strided_slice %7 {offsets = [0, 0], sizes = [8, 2048], strides = [1, 1]} : vector<8x2816xbf16> to vector<8x2048xbf16>
    %c0_8 = arith.constant 0 : index
    %c0_9 = arith.constant 0 : index
    %9 = vector.load %arg13[%c0_8, %c0_9] : memref<392x2048xbf16, #tpu.memory_space<vmem>>, vector<8x2048xbf16>
    tpu.vector_store %arg13[%c0_8, %c0_9], %8 {strides = array<i32>} : memref<392x2048xbf16, #tpu.memory_space<vmem>>, vector<8x2048xbf16>,
    %10 = vector.extract_strided_slice %7 {offsets = [0, 128], sizes = [8, 2048], strides = [1, 1]} : vector<8x2816xbf16> to vector<8x2048xbf16>
    %c56 = arith.constant 56 : index
    %c0_10 = arith.constant 0 : index
    %11 = vector.load %arg13[%c56, %c0_10] : memref<392x2048xbf16, #tpu.memory_space<vmem>>, vector<8x2048xbf16>
    tpu.vector_store %arg13[%c56, %c0_10], %10 {strides = array<i32>} : memref<392x2048xbf16, #tpu.memory_space<vmem>>, vector<8x2048xbf16>,
    %12 = vector.extract_strided_slice %7 {offsets = [0, 256], sizes = [8, 2048], strides = [1, 1]} : vector<8x2816xbf16> to vector<8x2048xbf16>
    %c112 = arith.constant 112 : index
    %c0_11 = arith.constant 0 : index
    %13 = vector.load %arg13[%c112, %c0_11] : memref<392x2048xbf16, #tpu.memory_space<vmem>>, vector<8x2048xbf16>
    tpu.vector_store %arg13[%c112, %c0_11], %12 {strides = array<i32>} : memref<392x2048xbf16, #tpu.memory_space<vmem>>, vector<8x2048xbf16>,
    %14 = vector.extract_strided_slice %7 {offsets = [0, 384], sizes = [8, 2048], strides = [1, 1]} : vector<8x2816xbf16> to vector<8x2048xbf16>
    %c168 = arith.constant 168 : index
    %c0_12 = arith.constant 0 : index
    %15 = vector.load %arg13[%c168, %c0_12] : memref<392x2048xbf16, #tpu.memory_space<vmem>>, vector<8x2048xbf16>
    tpu.vector_store %arg13[%c168, %c0_12], %14 {strides = array<i32>} : memref<392x2048xbf16, #tpu.memory_space<vmem>>, vector<8x2048xbf16>,
    %16 = vector.extract_strided_slice %7 {offsets = [0, 512], sizes = [8, 2048], strides = [1, 1]} : vector<8x2816xbf16> to vector<8x2048xbf16>
    %c224 = arith.constant 224 : index
    %c0_13 = arith.constant 0 : index
    %17 = vector.load %arg13[%c224, %c0_13] : memref<392x2048xbf16, #tpu.memory_space<vmem>>, vector<8x2048xbf16>
    tpu.vector_store %arg13[%c224, %c0_13], %16 {strides = array<i32>} : memref<392x2048xbf16, #tpu.memory_space<vmem>>, vector<8x2048xbf16>,
    %18 = vector.extract_strided_slice %7 {offsets = [0, 640], sizes = [8, 2048], strides = [1, 1]} : vector<8x2816xbf16> to vector<8x2048xbf16>
    %c280 = arith.constant 280 : index
    %c0_14 = arith.constant 0 : index
    %19 = vector.load %arg13[%c280, %c0_14] : memref<392x2048xbf16, #tpu.memory_space<vmem>>, vector<8x2048xbf16>
    tpu.vector_store %arg13[%c280, %c0_14], %18 {strides = array<i32>} : memref<392x2048xbf16, #tpu.memory_space<vmem>>, vector<8x2048xbf16>,
    %20 = vector.extract_strided_slice %7 {offsets = [0, 768], sizes = [8, 2048], strides = [1, 1]} : vector<8x2816xbf16> to vector<8x2048xbf16>
    %c336 = arith.constant 336 : index
    %c0_15 = arith.constant 0 : index
    %21 = vector.load %arg13[%c336, %c0_15] : memref<392x2048xbf16, #tpu.memory_space<vmem>>, vector<8x2048xbf16>
    tpu.vector_store %arg13[%c336, %c0_15], %20 {strides = array<i32>} : memref<392x2048xbf16, #tpu.memory_space<vmem>>, vector<8x2048xbf16>,
    %c0_16 = arith.constant 0 : index
    %c126 = arith.constant 126 : index
    %22 = vector.load %arg12[%c0_16, %c126] : memref<8x3072xbf16, #tpu.memory_space<vmem>>, vector<8x2816xbf16>
    %23 = vector.extract_strided_slice %22 {offsets = [0, 0], sizes = [8, 2048], strides = [1, 1]} : vector<8x2816xbf16> to vector<8x2048xbf16>
    %c8 = arith.constant 8 : index
    %c0_17 = arith.constant 0 : index
    %24 = vector.load %arg13[%c8, %c0_17] : memref<392x2048xbf16, #tpu.memory_space<vmem>>, vector<8x2048xbf16>
    tpu.vector_store %arg13[%c8, %c0_17], %23 {strides = array<i32>} : memref<392x2048xbf16, #tpu.memory_space<vmem>>, vector<8x2048xbf16>,
    %25 = vector.extract_strided_slice %22 {offsets = [0, 128], sizes = [8, 2048], strides = [1, 1]} : vector<8x2816xbf16> to vector<8x2048xbf16>
    %c64 = arith.constant 64 : index
    %c0_18 = arith.constant 0 : index
    %26 = vector.load %arg13[%c64, %c0_18] : memref<392x2048xbf16, #tpu.memory_space<vmem>>, vector<8x2048xbf16>
    tpu.vector_store %arg13[%c64, %c0_18], %25 {strides = array<i32>} : memref<392x2048xbf16, #tpu.memory_space<vmem>>, vector<8x2048xbf16>,
    %27 = vector.extract_strided_slice %22 {offsets = [0, 256], sizes = [8, 2048], strides = [1, 1]} : vector<8x2816xbf16> to vector<8x2048xbf16>
    %c120 = arith.constant 120 : index
    %c0_19 = arith.constant 0 : index
    %28 = vector.load %arg13[%c120, %c0_19] : memref<392x2048xbf16, #tpu.memory_space<vmem>>, vector<8x2048xbf16>
    tpu.vector_store %arg13[%c120, %c0_19], %27 {strides = array<i32>} : memref<392x2048xbf16, #tpu.memory_space<vmem>>, vector<8x2048xbf16>,
    %29 = vector.extract_strided_slice %22 {offsets = [0, 384], sizes = [8, 2048], strides = [1, 1]} : vector<8x2816xbf16> to vector<8x2048xbf16>
    %c176 = arith.constant 176 : index
    %c0_20 = arith.constant 0 : index
    %30 = vector.load %arg13[%c176, %c0_20] : memref<392x2048xbf16, #tpu.memory_space<vmem>>, vector<8x2048xbf16>
    tpu.vector_store %arg13[%c176, %c0_20], %29 {strides = array<i32>} : memref<392x2048xbf16, #tpu.memory_space<vmem>>, vector<8x2048xbf16>,
    %31 = vector.extract_strided_slice %22 {offsets = [0, 512], sizes = [8, 2048], strides = [1, 1]} : vector<8x2816xbf16> to vector<8x2048xbf16>
    %c232 = arith.constant 232 : index
    %c0_21 = arith.constant 0 : index
    %32 = vector.load %arg13[%c232, %c0_21] : memref<392x2048xbf16, #tpu.memory_space<vmem>>, vector<8x2048xbf16>
    tpu.vector_store %arg13[%c232, %c0_21], %31 {strides = array<i32>} : memref<392x2048xbf16, #tpu.memory_space<vmem>>, vector<8x2048xbf16>,
    %33 = vector.extract_strided_slice %22 {offsets = [0, 640], sizes = [8, 2048], strides = [1, 1]} : vector<8x2816xbf16> to vector<8x2048xbf16>
    %c288 = arith.constant 288 : index
    %c0_22 = arith.constant 0 : index
    %34 = vector.load %arg13[%c288, %c0_22] : memref<392x2048xbf16, #tpu.memory_space<vmem>>, vector<8x2048xbf16>
    tpu.vector_store %arg13[%c288, %c0_22], %33 {strides = array<i32>} : memref<392x2048xbf16, #tpu.memory_space<vmem>>, vector<8x2048xbf16>,
    %35 = vector.extract_strided_slice %22 {offsets = [0, 768], sizes = [8, 2048], strides = [1, 1]} : vector<8x2816xbf16> to vector<8x2048xbf16>
    %c344 = arith.constant 344 : index
    %c0_23 = arith.constant 0 : index
    %36 = vector.load %arg13[%c344, %c0_23] : memref<392x2048xbf16, #tpu.memory_space<vmem>>, vector<8x2048xbf16>
    tpu.vector_store %arg13[%c344, %c0_23], %35 {strides = array<i32>} : memref<392x2048xbf16, #tpu.memory_space<vmem>>, vector<8x2048xbf16>,
    %c0_24 = arith.constant 0 : index
    %c127 = arith.constant 127 : index
    %37 = vector.load %arg12[%c0_24, %c127] : memref<8x3072xbf16, #tpu.memory_space<vmem>>, vector<8x2816xbf16>
    %38 = vector.extract_strided_slice %37 {offsets = [0, 0], sizes = [8, 2048], strides = [1, 1]} : vector<8x2816xbf16> to vector<8x2048xbf16>
    %c16 = arith.constant 16 : index
    %c0_25 = arith.constant 0 : index
    %39 = vector.load %arg13[%c16, %c0_25] : memref<392x2048xbf16, #tpu.memory_space<vmem>>, vector<8x2048xbf16>
    tpu.vector_store %arg13[%c16, %c0_25], %38 {strides = array<i32>} : memref<392x2048xbf16, #tpu.memory_space<vmem>>, vector<8x2048xbf16>,
    %40 = vector.extract_strided_slice %37 {offsets = [0, 128], sizes = [8, 2048], strides = [1, 1]} : vector<8x2816xbf16> to vector<8x2048xbf16>
    %c72 = arith.constant 72 : index
    %c0_26 = arith.constant 0 : index
    %41 = vector.load %arg13[%c72, %c0_26] : memref<392x2048xbf16, #tpu.memory_space<vmem>>, vector<8x2048xbf16>
    tpu.vector_store %arg13[%c72, %c0_26], %40 {strides = array<i32>} : memref<392x2048xbf16, #tpu.memory_space<vmem>>, vector<8x2048xbf16>,
    %42 = vector.extract_strided_slice %37 {offsets = [0, 256], sizes = [8, 2048], strides = [1, 1]} : vector<8x2816xbf16> to vector<8x2048xbf16>
    %c128 = arith.constant 128 : index
    %c0_27 = arith.constant 0 : index
    %43 = vector.load %arg13[%c128, %c0_27] : memref<392x2048xbf16, #tpu.memory_space<vmem>>, vector<8x2048xbf16>
    tpu.vector_store %arg13[%c128, %c0_27], %42 {strides = array<i32>} : memref<392x2048xbf16, #tpu.memory_space<vmem>>, vector<8x2048xbf16>,
    %44 = vector.extract_strided_slice %37 {offsets = [0, 384], sizes = [8, 2048], strides = [1, 1]} : vector<8x2816xbf16> to vector<8x2048xbf16>
    %c184 = arith.constant 184 : index
    %c0_28 = arith.constant 0 : index
    %45 = vector.load %arg13[%c184, %c0_28] : memref<392x2048xbf16, #tpu.memory_space<vmem>>, vector<8x2048xbf16>
    tpu.vector_store %arg13[%c184, %c0_28], %44 {strides = array<i32>} : memref<392x2048xbf16, #tpu.memory_space<vmem>>, vector<8x2048xbf16>,
    %46 = vector.extract_strided_slice %37 {offsets = [0, 512], sizes = [8, 2048], strides = [1, 1]} : vector<8x2816xbf16> to vector<8x2048xbf16>
    %c240 = arith.constant 240 : index
    %c0_29 = arith.constant 0 : index
    %47 = vector.load %arg13[%c240, %c0_29] : memref<392x2048xbf16, #tpu.memory_space<vmem>>, vector<8x2048xbf16>
    tpu.vector_store %arg13[%c240, %c0_29], %46 {strides = array<i32>} : memref<392x2048xbf16, #tpu.memory_space<vmem>>, vector<8x2048xbf16>,
    %48 = vector.extract_strided_slice %37 {offsets = [0, 640], sizes = [8, 2048], strides = [1, 1]} : vector<8x2816xbf16> to vector<8x2048xbf16>
    %c296 = arith.constant 296 : index
    %c0_30 = arith.constant 0 : index
    %49 = vector.load %arg13[%c296, %c0_30] : memref<392x2048xbf16, #tpu.memory_space<vmem>>, vector<8x2048xbf16>
    tpu.vector_store %arg13[%c296, %c0_30], %48 {strides = array<i32>} : memref<392x2048xbf16, #tpu.memory_space<vmem>>, vector<8x2048xbf16>,
    %50 = vector.extract_strided_slice %37 {offsets = [0, 768], sizes = [8, 2048], strides = [1, 1]} : vector<8x2816xbf16> to vector<8x2048xbf16>
    %c352 = arith.constant 352 : index
    %c0_31 = arith.constant 0 : index
    %51 = vector.load %arg13[%c352, %c0_31] : memref<392x2048xbf16, #tpu.memory_space<vmem>>, vector<8x2048xbf16>
    tpu.vector_store %arg13[%c352, %c0_31], %50 {strides = array<i32>} : memref<392x2048xbf16, #tpu.memory_space<vmem>>, vector<8x2048xbf16>,
    %c0_32 = arith.constant 0 : index
    %c128_33 = arith.constant 128 : index
    %52 = vector.load %arg12[%c0_32, %c128_33] : memref<8x3072xbf16, #tpu.memory_space<vmem>>, vector<8x2816xbf16>
    %53 = vector.extract_strided_slice %52 {offsets = [0, 0], sizes = [8, 2048], strides = [1, 1]} : vector<8x2816xbf16> to vector<8x2048xbf16>
    %c24 = arith.constant 24 : index
    %c0_34 = arith.constant 0 : index
    %54 = vector.load %arg13[%c24, %c0_34] : memref<392x2048xbf16, #tpu.memory_space<vmem>>, vector<8x2048xbf16>
    tpu.vector_store %arg13[%c24, %c0_34], %53 {strides = array<i32>} : memref<392x2048xbf16, #tpu.memory_space<vmem>>, vector<8x2048xbf16>,
    %55 = vector.extract_strided_slice %52 {offsets = [0, 128], sizes = [8, 2048], strides = [1, 1]} : vector<8x2816xbf16> to vector<8x2048xbf16>
    %c80 = arith.constant 80 : index
    %c0_35 = arith.constant 0 : index
    %56 = vector.load %arg13[%c80, %c0_35] : memref<392x2048xbf16, #tpu.memory_space<vmem>>, vector<8x2048xbf16>
    tpu.vector_store %arg13[%c80, %c0_35], %55 {strides = array<i32>} : memref<392x2048xbf16, #tpu.memory_space<vmem>>, vector<8x2048xbf16>,
    %57 = vector.extract_strided_slice %52 {offsets = [0, 256], sizes = [8, 2048], strides = [1, 1]} : vector<8x2816xbf16> to vector<8x2048xbf16>
    %c136 = arith.constant 136 : index
    %c0_36 = arith.constant 0 : index
    %58 = vector.load %arg13[%c136, %c0_36] : memref<392x2048xbf16, #tpu.memory_space<vmem>>, vector<8x2048xbf16>
    tpu.vector_store %arg13[%c136, %c0_36], %57 {strides = array<i32>} : memref<392x2048xbf16, #tpu.memory_space<vmem>>, vector<8x2048xbf16>,
    %59 = vector.extract_strided_slice %52 {offsets = [0, 384], sizes = [8, 2048], strides = [1, 1]} : vector<8x2816xbf16> to vector<8x2048xbf16>
    %c192 = arith.constant 192 : index
    %c0_37 = arith.constant 0 : index
    %60 = vector.load %arg13[%c192, %c0_37] : memref<392x2048xbf16, #tpu.memory_space<vmem>>, vector<8x2048xbf16>
    tpu.vector_store %arg13[%c192, %c0_37], %59 {strides = array<i32>} : memref<392x2048xbf16, #tpu.memory_space<vmem>>, vector<8x2048xbf16>,
    %61 = vector.extract_strided_slice %52 {offsets = [0, 512], sizes = [8, 2048], strides = [1, 1]} : vector<8x2816xbf16> to vector<8x2048xbf16>
    %c248 = arith.constant 248 : index
    %c0_38 = arith.constant 0 : index
    %62 = vector.load %arg13[%c248, %c0_38] : memref<392x2048xbf16, #tpu.memory_space<vmem>>, vector<8x2048xbf16>
    tpu.vector_store %arg13[%c248, %c0_38], %61 {strides = array<i32>} : memref<392x2048xbf16, #tpu.memory_space<vmem>>, vector<8x2048xbf16>,
    %63 = vector.extract_strided_slice %52 {offsets = [0, 640], sizes = [8, 2048], strides = [1, 1]} : vector<8x2816xbf16> to vector<8x2048xbf16>
    %c304 = arith.constant 304 : index
    %c0_39 = arith.constant 0 : index
    %64 = vector.load %arg13[%c304, %c0_39] : memref<392x2048xbf16, #tpu.memory_space<vmem>>, vector<8x2048xbf16>
    tpu.vector_store %arg13[%c304, %c0_39], %63 {strides = array<i32>} : memref<392x2048xbf16, #tpu.memory_space<vmem>>, vector<8x2048xbf16>,
    %65 = vector.extract_strided_slice %52 {offsets = [0, 768], sizes = [8, 2048], strides = [1, 1]} : vector<8x2816xbf16> to vector<8x2048xbf16>
    %c360 = arith.constant 360 : index
    %c0_40 = arith.constant 0 : index
    %66 = vector.load %arg13[%c360, %c0_40] : memref<392x2048xbf16, #tpu.memory_space<vmem>>, vector<8x2048xbf16>
    tpu.vector_store %arg13[%c360, %c0_40], %65 {strides = array<i32>} : memref<392x2048xbf16, #tpu.memory_space<vmem>>, vector<8x2048xbf16>,
    %c0_41 = arith.constant 0 : index
    %c129 = arith.constant 129 : index
    %67 = vector.load %arg12[%c0_41, %c129] : memref<8x3072xbf16, #tpu.memory_space<vmem>>, vector<8x2816xbf16>
    %68 = vector.extract_strided_slice %67 {offsets = [0, 0], sizes = [8, 2048], strides = [1, 1]} : vector<8x2816xbf16> to vector<8x2048xbf16>
    %c32 = arith.constant 32 : index
    %c0_42 = arith.constant 0 : index
    %69 = vector.load %arg13[%c32, %c0_42] : memref<392x2048xbf16, #tpu.memory_space<vmem>>, vector<8x2048xbf16>
    tpu.vector_store %arg13[%c32, %c0_42], %68 {strides = array<i32>} : memref<392x2048xbf16, #tpu.memory_space<vmem>>, vector<8x2048xbf16>,
    %70 = vector.extract_strided_slice %67 {offsets = [0, 128], sizes = [8, 2048], strides = [1, 1]} : vector<8x2816xbf16> to vector<8x2048xbf16>
    %c88 = arith.constant 88 : index
    %c0_43 = arith.constant 0 : index
    %71 = vector.load %arg13[%c88, %c0_43] : memref<392x2048xbf16, #tpu.memory_space<vmem>>, vector<8x2048xbf16>
    tpu.vector_store %arg13[%c88, %c0_43], %70 {strides = array<i32>} : memref<392x2048xbf16, #tpu.memory_space<vmem>>, vector<8x2048xbf16>,
    %72 = vector.extract_strided_slice %67 {offsets = [0, 256], sizes = [8, 2048], strides = [1, 1]} : vector<8x2816xbf16> to vector<8x2048xbf16>
    %c144 = arith.constant 144 : index
    %c0_44 = arith.constant 0 : index
    %73 = vector.load %arg13[%c144, %c0_44] : memref<392x2048xbf16, #tpu.memory_space<vmem>>, vector<8x2048xbf16>
    tpu.vector_store %arg13[%c144, %c0_44], %72 {strides = array<i32>} : memref<392x2048xbf16, #tpu.memory_space<vmem>>, vector<8x2048xbf16>,
    %74 = vector.extract_strided_slice %67 {offsets = [0, 384], sizes = [8, 2048], strides = [1, 1]} : vector<8x2816xbf16> to vector<8x2048xbf16>
    %c200 = arith.constant 200 : index
    %c0_45 = arith.constant 0 : index
    %75 = vector.load %arg13[%c200, %c0_45] : memref<392x2048xbf16, #tpu.memory_space<vmem>>, vector<8x2048xbf16>
    tpu.vector_store %arg13[%c200, %c0_45], %74 {strides = array<i32>} : memref<392x2048xbf16, #tpu.memory_space<vmem>>, vector<8x2048xbf16>,
    %76 = vector.extract_strided_slice %67 {offsets = [0, 512], sizes = [8, 2048], strides = [1, 1]} : vector<8x2816xbf16> to vector<8x2048xbf16>
    %c256 = arith.constant 256 : index
    %c0_46 = arith.constant 0 : index
    %77 = vector.load %arg13[%c256, %c0_46] : memref<392x2048xbf16, #tpu.memory_space<vmem>>, vector<8x2048xbf16>
    tpu.vector_store %arg13[%c256, %c0_46], %76 {strides = array<i32>} : memref<392x2048xbf16, #tpu.memory_space<vmem>>, vector<8x2048xbf16>,
    %78 = vector.extract_strided_slice %67 {offsets = [0, 640], sizes = [8, 2048], strides = [1, 1]} : vector<8x2816xbf16> to vector<8x2048xbf16>
    %c312 = arith.constant 312 : index
    %c0_47 = arith.constant 0 : index
    %79 = vector.load %arg13[%c312, %c0_47] : memref<392x2048xbf16, #tpu.memory_space<vmem>>, vector<8x2048xbf16>
    tpu.vector_store %arg13[%c312, %c0_47], %78 {strides = array<i32>} : memref<392x2048xbf16, #tpu.memory_space<vmem>>, vector<8x2048xbf16>,
    %80 = vector.extract_strided_slice %67 {offsets = [0, 768], sizes = [8, 2048], strides = [1, 1]} : vector<8x2816xbf16> to vector<8x2048xbf16>
    %c368 = arith.constant 368 : index
    %c0_48 = arith.constant 0 : index
    %81 = vector.load %arg13[%c368, %c0_48] : memref<392x2048xbf16, #tpu.memory_space<vmem>>, vector<8x2048xbf16>
    tpu.vector_store %arg13[%c368, %c0_48], %80 {strides = array<i32>} : memref<392x2048xbf16, #tpu.memory_space<vmem>>, vector<8x2048xbf16>,
    %c0_49 = arith.constant 0 : index
    %c130 = arith.constant 130 : index
    %82 = vector.load %arg12[%c0_49, %c130] : memref<8x3072xbf16, #tpu.memory_space<vmem>>, vector<8x2816xbf16>
    %83 = vector.extract_strided_slice %82 {offsets = [0, 0], sizes = [8, 2048], strides = [1, 1]} : vector<8x2816xbf16> to vector<8x2048xbf16>
    %c40 = arith.constant 40 : index
    %c0_50 = arith.constant 0 : index
    %84 = vector.load %arg13[%c40, %c0_50] : memref<392x2048xbf16, #tpu.memory_space<vmem>>, vector<8x2048xbf16>
    tpu.vector_store %arg13[%c40, %c0_50], %83 {strides = array<i32>} : memref<392x2048xbf16, #tpu.memory_space<vmem>>, vector<8x2048xbf16>,
    %85 = vector.extract_strided_slice %82 {offsets = [0, 128], sizes = [8, 2048], strides = [1, 1]} : vector<8x2816xbf16> to vector<8x2048xbf16>
    %c96 = arith.constant 96 : index
    %c0_51 = arith.constant 0 : index
    %86 = vector.load %arg13[%c96, %c0_51] : memref<392x2048xbf16, #tpu.memory_space<vmem>>, vector<8x2048xbf16>
    tpu.vector_store %arg13[%c96, %c0_51], %85 {strides = array<i32>} : memref<392x2048xbf16, #tpu.memory_space<vmem>>, vector<8x2048xbf16>,
    %87 = vector.extract_strided_slice %82 {offsets = [0, 256], sizes = [8, 2048], strides = [1, 1]} : vector<8x2816xbf16> to vector<8x2048xbf16>
    %c152 = arith.constant 152 : index
    %c0_52 = arith.constant 0 : index
    %88 = vector.load %arg13[%c152, %c0_52] : memref<392x2048xbf16, #tpu.memory_space<vmem>>, vector<8x2048xbf16>
    tpu.vector_store %arg13[%c152, %c0_52], %87 {strides = array<i32>} : memref<392x2048xbf16, #tpu.memory_space<vmem>>, vector<8x2048xbf16>,
    %89 = vector.extract_strided_slice %82 {offsets = [0, 384], sizes = [8, 2048], strides = [1, 1]} : vector<8x2816xbf16> to vector<8x2048xbf16>
    %c208 = arith.constant 208 : index
    %c0_53 = arith.constant 0 : index
    %90 = vector.load %arg13[%c208, %c0_53] : memref<392x2048xbf16, #tpu.memory_space<vmem>>, vector<8x2048xbf16>
    tpu.vector_store %arg13[%c208, %c0_53], %89 {strides = array<i32>} : memref<392x2048xbf16, #tpu.memory_space<vmem>>, vector<8x2048xbf16>,
    %91 = vector.extract_strided_slice %82 {offsets = [0, 512], sizes = [8, 2048], strides = [1, 1]} : vector<8x2816xbf16> to vector<8x2048xbf16>
    %c264 = arith.constant 264 : index
    %c0_54 = arith.constant 0 : index
    %92 = vector.load %arg13[%c264, %c0_54] : memref<392x2048xbf16, #tpu.memory_space<vmem>>, vector<8x2048xbf16>
    tpu.vector_store %arg13[%c264, %c0_54], %91 {strides = array<i32>} : memref<392x2048xbf16, #tpu.memory_space<vmem>>, vector<8x2048xbf16>,
    %93 = vector.extract_strided_slice %82 {offsets = [0, 640], sizes = [8, 2048], strides = [1, 1]} : vector<8x2816xbf16> to vector<8x2048xbf16>
    %c320 = arith.constant 320 : index
    %c0_55 = arith.constant 0 : index
    %94 = vector.load %arg13[%c320, %c0_55] : memref<392x2048xbf16, #tpu.memory_space<vmem>>, vector<8x2048xbf16>
    tpu.vector_store %arg13[%c320, %c0_55], %93 {strides = array<i32>} : memref<392x2048xbf16, #tpu.memory_space<vmem>>, vector<8x2048xbf16>,
    %95 = vector.extract_strided_slice %82 {offsets = [0, 768], sizes = [8, 2048], strides = [1, 1]} : vector<8x2816xbf16> to vector<8x2048xbf16>
    %c376 = arith.constant 376 : index
    %c0_56 = arith.constant 0 : index
    %96 = vector.load %arg13[%c376, %c0_56] : memref<392x2048xbf16, #tpu.memory_space<vmem>>, vector<8x2048xbf16>
    tpu.vector_store %arg13[%c376, %c0_56], %95 {strides = array<i32>} : memref<392x2048xbf16, #tpu.memory_space<vmem>>, vector<8x2048xbf16>,
    %c0_57 = arith.constant 0 : index
    %c131 = arith.constant 131 : index
    %97 = vector.load %arg12[%c0_57, %c131] : memref<8x3072xbf16, #tpu.memory_space<vmem>>, vector<8x2816xbf16>
    %98 = vector.extract_strided_slice %97 {offsets = [0, 0], sizes = [8, 2048], strides = [1, 1]} : vector<8x2816xbf16> to vector<8x2048xbf16>
    %c48 = arith.constant 48 : index
    %c0_58 = arith.constant 0 : index
    %99 = vector.load %arg13[%c48, %c0_58] : memref<392x2048xbf16, #tpu.memory_space<vmem>>, vector<8x2048xbf16>
    tpu.vector_store %arg13[%c48, %c0_58], %98 {strides = array<i32>} : memref<392x2048xbf16, #tpu.memory_space<vmem>>, vector<8x2048xbf16>,
    %100 = vector.extract_strided_slice %97 {offsets = [0, 128], sizes = [8, 2048], strides = [1, 1]} : vector<8x2816xbf16> to vector<8x2048xbf16>
    %c104 = arith.constant 104 : index
    %c0_59 = arith.constant 0 : index
    %101 = vector.load %arg13[%c104, %c0_59] : memref<392x2048xbf16, #tpu.memory_space<vmem>>, vector<8x2048xbf16>
    tpu.vector_store %arg13[%c104, %c0_59], %100 {strides = array<i32>} : memref<392x2048xbf16, #tpu.memory_space<vmem>>, vector<8x2048xbf16>,
    %102 = vector.extract_strided_slice %97 {offsets = [0, 256], sizes = [8, 2048], strides = [1, 1]} : vector<8x2816xbf16> to vector<8x2048xbf16>
    %c160 = arith.constant 160 : index
    %c0_60 = arith.constant 0 : index
    %103 = vector.load %arg13[%c160, %c0_60] : memref<392x2048xbf16, #tpu.memory_space<vmem>>, vector<8x2048xbf16>
    tpu.vector_store %arg13[%c160, %c0_60], %102 {strides = array<i32>} : memref<392x2048xbf16, #tpu.memory_space<vmem>>, vector<8x2048xbf16>,
    %104 = vector.extract_strided_slice %97 {offsets = [0, 384], sizes = [8, 2048], strides = [1, 1]} : vector<8x2816xbf16> to vector<8x2048xbf16>
    %c216 = arith.constant 216 : index
    %c0_61 = arith.constant 0 : index
    %105 = vector.load %arg13[%c216, %c0_61] : memref<392x2048xbf16, #tpu.memory_space<vmem>>, vector<8x2048xbf16>
    tpu.vector_store %arg13[%c216, %c0_61], %104 {strides = array<i32>} : memref<392x2048xbf16, #tpu.memory_space<vmem>>, vector<8x2048xbf16>,
    %106 = vector.extract_strided_slice %97 {offsets = [0, 512], sizes = [8, 2048], strides = [1, 1]} : vector<8x2816xbf16> to vector<8x2048xbf16>
    %c272 = arith.constant 272 : index
    %c0_62 = arith.constant 0 : index
    %107 = vector.load %arg13[%c272, %c0_62] : memref<392x2048xbf16, #tpu.memory_space<vmem>>, vector<8x2048xbf16>
    tpu.vector_store %arg13[%c272, %c0_62], %106 {strides = array<i32>} : memref<392x2048xbf16, #tpu.memory_space<vmem>>, vector<8x2048xbf16>,
    %108 = vector.extract_strided_slice %97 {offsets = [0, 640], sizes = [8, 2048], strides = [1, 1]} : vector<8x2816xbf16> to vector<8x2048xbf16>
    %c328 = arith.constant 328 : index
    %c0_63 = arith.constant 0 : index
    %109 = vector.load %arg13[%c328, %c0_63] : memref<392x2048xbf16, #tpu.memory_space<vmem>>, vector<8x2048xbf16>
    tpu.vector_store %arg13[%c328, %c0_63], %108 {strides = array<i32>} : memref<392x2048xbf16, #tpu.memory_space<vmem>>, vector<8x2048xbf16>,
    %110 = vector.extract_strided_slice %97 {offsets = [0, 768], sizes = [8, 2048], strides = [1, 1]} : vector<8x2816xbf16> to vector<8x2048xbf16>
    %c384 = arith.constant 384 : index
    %c0_64 = arith.constant 0 : index
    %111 = vector.load %arg13[%c384, %c0_64] : memref<392x2048xbf16, #tpu.memory_space<vmem>>, vector<8x2048xbf16>
    tpu.vector_store %arg13[%c384, %c0_64], %110 {strides = array<i32>} : memref<392x2048xbf16, #tpu.memory_space<vmem>>, vector<8x2048xbf16>,
    %c0_65 = arith.constant 0 : index
    %c0_66 = arith.constant 0 : index
    %112 = vector.load %arg3[%c0_65, %c0_66] : memref<8x392xbf16, #tpu.memory_space<vmem>>, vector<8x392xbf16>
    %c0_67 = arith.constant 0 : index
    %c0_68 = arith.constant 0 : index
    %113 = vector.load %arg13[%c0_67, %c0_68] : memref<392x2048xbf16, #tpu.memory_space<vmem>>, vector<392x2048xbf16>
    %cst_69 = arith.constant dense<0.000000e+00> : vector<8x2048xf32>
    %114 = tpu.matmul %112, %113, %cst_69 {dimension_numbers = #tpu.dot_dimension_numbers<[1], [0], [0], [1], [0, 0, 1, 1], [], []>} : vector<8x392xbf16>, vector<392x2048xbf16>, vector<8x2048xf32> -> vector<8x2048xf32>
    %c0_70 = arith.constant 0 : index
    %c0_71 = arith.constant 0 : index
    %115 = vector.load %arg4[%c0_70, %c0_71] : memref<8x1xf32, #tpu.memory_space<vmem>>, vector<8x1xf32>
    %116 = vector.broadcast %115 : vector<8x1xf32> to vector<8x2048xf32>
    %117 = arith.addf %114, %116 : vector<8x2048xf32>
    %cst_72 = arith.constant 0.000000e+00 : f32
    %118 = vector.broadcast %cst_72 : f32 to vector<8x2048xf32>
    %119 = arith.cmpf ogt, %117, %118 : vector<8x2048xf32>
    %cst_73 = arith.constant 0.000000e+00 : f32
    %120 = vector.broadcast %cst_73 : f32 to vector<8x2048xf32>
    %121 = arith.minimumf %117, %120 : vector<8x2048xf32>
    %122 = math.exp %121 : vector<8x2048xf32>
    %cst_74 = arith.constant 1.000000e+00 : f32
    %123 = vector.broadcast %cst_74 : f32 to vector<8x2048xf32>
    %124 = arith.subf %122, %123 : vector<8x2048xf32>
    %125 = arith.select %119, %117, %124 : vector<8x2048xi1>, vector<8x2048xf32>
    %126 = vector.broadcast %6 : vector<1x2048xf32> to vector<8x2048xf32>
    %127 = arith.mulf %125, %126 : vector<8x2048xf32>
    %128 = arith.truncf %127 : vector<8x2048xf32> to vector<8x2048xbf16>
    %c0_75 = arith.constant 0 : index
    %c512_76 = arith.constant 512 : index
    %129 = vector.load %arg12[%c0_75, %c512_76] : memref<8x3072xbf16, #tpu.memory_space<vmem>>, vector<8x2048xbf16>
    tpu.vector_store %arg12[%c0_75, %c512_76], %128 {strides = array<i32>} : memref<8x3072xbf16, #tpu.memory_space<vmem>>, vector<8x2048xbf16>,
    %c0_77 = arith.constant 0 : index
    %c254 = arith.constant 254 : index
    %130 = vector.load %arg12[%c0_77, %c254] : memref<8x3072xbf16, #tpu.memory_space<vmem>>, vector<8x2560xbf16>
    %131 = vector.extract_strided_slice %130 {offsets = [0, 0], sizes = [8, 2048], strides = [1, 1]} : vector<8x2560xbf16> to vector<8x2048xbf16>
    %c0_78 = arith.constant 0 : index
    %c0_79 = arith.constant 0 : index
    %132 = vector.load %arg13[%c0_78, %c0_79] : memref<392x2048xbf16, #tpu.memory_space<vmem>>, vector<8x2048xbf16>
    tpu.vector_store %arg13[%c0_78, %c0_79], %131 {strides = array<i32>} : memref<392x2048xbf16, #tpu.memory_space<vmem>>, vector<8x2048xbf16>,
    %133 = vector.extract_strided_slice %130 {offsets = [0, 128], sizes = [8, 2048], strides = [1, 1]} : vector<8x2560xbf16> to vector<8x2048xbf16>
    %c40_80 = arith.constant 40 : index
    %c0_81 = arith.constant 0 : index
    %134 = vector.load %arg13[%c40_80, %c0_81] : memref<392x2048xbf16, #tpu.memory_space<vmem>>, vector<8x2048xbf16>
    tpu.vector_store %arg13[%c40_80, %c0_81], %133 {strides = array<i32>} : memref<392x2048xbf16, #tpu.memory_space<vmem>>, vector<8x2048xbf16>,
    %135 = vector.extract_strided_slice %130 {offsets = [0, 256], sizes = [8, 2048], strides = [1, 1]} : vector<8x2560xbf16> to vector<8x2048xbf16>
    %c80_82 = arith.constant 80 : index
    %c0_83 = arith.constant 0 : index
    %136 = vector.load %arg13[%c80_82, %c0_83] : memref<392x2048xbf16, #tpu.memory_space<vmem>>, vector<8x2048xbf16>
    tpu.vector_store %arg13[%c80_82, %c0_83], %135 {strides = array<i32>} : memref<392x2048xbf16, #tpu.memory_space<vmem>>, vector<8x2048xbf16>,
    %137 = vector.extract_strided_slice %130 {offsets = [0, 384], sizes = [8, 2048], strides = [1, 1]} : vector<8x2560xbf16> to vector<8x2048xbf16>
    %c120_84 = arith.constant 120 : index
    %c0_85 = arith.constant 0 : index
    %138 = vector.load %arg13[%c120_84, %c0_85] : memref<392x2048xbf16, #tpu.memory_space<vmem>>, vector<8x2048xbf16>
    tpu.vector_store %arg13[%c120_84, %c0_85], %137 {strides = array<i32>} : memref<392x2048xbf16, #tpu.memory_space<vmem>>, vector<8x2048xbf16>,
    %139 = vector.extract_strided_slice %130 {offsets = [0, 512], sizes = [8, 2048], strides = [1, 1]} : vector<8x2560xbf16> to vector<8x2048xbf16>
    %c160_86 = arith.constant 160 : index
    %c0_87 = arith.constant 0 : index
    %140 = vector.load %arg13[%c160_86, %c0_87] : memref<392x2048xbf16, #tpu.memory_space<vmem>>, vector<8x2048xbf16>
    tpu.vector_store %arg13[%c160_86, %c0_87], %139 {strides = array<i32>} : memref<392x2048xbf16, #tpu.memory_space<vmem>>, vector<8x2048xbf16>,
    %c0_88 = arith.constant 0 : index
    %c255 = arith.constant 255 : index
    %141 = vector.load %arg12[%c0_88, %c255] : memref<8x3072xbf16, #tpu.memory_space<vmem>>, vector<8x2560xbf16>
    %142 = vector.extract_strided_slice %141 {offsets = [0, 0], sizes = [8, 2048], strides = [1, 1]} : vector<8x2560xbf16> to vector<8x2048xbf16>
    %c8_89 = arith.constant 8 : index
    %c0_90 = arith.constant 0 : index
    %143 = vector.load %arg13[%c8_89, %c0_90] : memref<392x2048xbf16, #tpu.memory_space<vmem>>, vector<8x2048xbf16>
    tpu.vector_store %arg13[%c8_89, %c0_90], %142 {strides = array<i32>} : memref<392x2048xbf16, #tpu.memory_space<vmem>>, vector<8x2048xbf16>,
    %144 = vector.extract_strided_slice %141 {offsets = [0, 128], sizes = [8, 2048], strides = [1, 1]} : vector<8x2560xbf16> to vector<8x2048xbf16>
    %c48_91 = arith.constant 48 : index
    %c0_92 = arith.constant 0 : index
    %145 = vector.load %arg13[%c48_91, %c0_92] : memref<392x2048xbf16, #tpu.memory_space<vmem>>, vector<8x2048xbf16>
    tpu.vector_store %arg13[%c48_91, %c0_92], %144 {strides = array<i32>} : memref<392x2048xbf16, #tpu.memory_space<vmem>>, vector<8x2048xbf16>,
    %146 = vector.extract_strided_slice %141 {offsets = [0, 256], sizes = [8, 2048], strides = [1, 1]} : vector<8x2560xbf16> to vector<8x2048xbf16>
    %c88_93 = arith.constant 88 : index
    %c0_94 = arith.constant 0 : index
    %147 = vector.load %arg13[%c88_93, %c0_94] : memref<392x2048xbf16, #tpu.memory_space<vmem>>, vector<8x2048xbf16>
    tpu.vector_store %arg13[%c88_93, %c0_94], %146 {strides = array<i32>} : memref<392x2048xbf16, #tpu.memory_space<vmem>>, vector<8x2048xbf16>,
    %148 = vector.extract_strided_slice %141 {offsets = [0, 384], sizes = [8, 2048], strides = [1, 1]} : vector<8x2560xbf16> to vector<8x2048xbf16>
    %c128_95 = arith.constant 128 : index
    %c0_96 = arith.constant 0 : index
    %149 = vector.load %arg13[%c128_95, %c0_96] : memref<392x2048xbf16, #tpu.memory_space<vmem>>, vector<8x2048xbf16>
    tpu.vector_store %arg13[%c128_95, %c0_96], %148 {strides = array<i32>} : memref<392x2048xbf16, #tpu.memory_space<vmem>>, vector<8x2048xbf16>,
    %150 = vector.extract_strided_slice %141 {offsets = [0, 512], sizes = [8, 2048], strides = [1, 1]} : vector<8x2560xbf16> to vector<8x2048xbf16>
    %c168_97 = arith.constant 168 : index
    %c0_98 = arith.constant 0 : index
    %151 = vector.load %arg13[%c168_97, %c0_98] : memref<392x2048xbf16, #tpu.memory_space<vmem>>, vector<8x2048xbf16>
    tpu.vector_store %arg13[%c168_97, %c0_98], %150 {strides = array<i32>} : memref<392x2048xbf16, #tpu.memory_space<vmem>>, vector<8x2048xbf16>,
    %c0_99 = arith.constant 0 : index
    %c256_100 = arith.constant 256 : index
    %152 = vector.load %arg12[%c0_99, %c256_100] : memref<8x3072xbf16, #tpu.memory_space<vmem>>, vector<8x2560xbf16>
    %153 = vector.extract_strided_slice %152 {offsets = [0, 0], sizes = [8, 2048], strides = [1, 1]} : vector<8x2560xbf16> to vector<8x2048xbf16>
    %c16_101 = arith.constant 16 : index
    %c0_102 = arith.constant 0 : index
    %154 = vector.load %arg13[%c16_101, %c0_102] : memref<392x2048xbf16, #tpu.memory_space<vmem>>, vector<8x2048xbf16>
    tpu.vector_store %arg13[%c16_101, %c0_102], %153 {strides = array<i32>} : memref<392x2048xbf16, #tpu.memory_space<vmem>>, vector<8x2048xbf16>,
    %155 = vector.extract_strided_slice %152 {offsets = [0, 128], sizes = [8, 2048], strides = [1, 1]} : vector<8x2560xbf16> to vector<8x2048xbf16>
    %c56_103 = arith.constant 56 : index
    %c0_104 = arith.constant 0 : index
    %156 = vector.load %arg13[%c56_103, %c0_104] : memref<392x2048xbf16, #tpu.memory_space<vmem>>, vector<8x2048xbf16>
    tpu.vector_store %arg13[%c56_103, %c0_104], %155 {strides = array<i32>} : memref<392x2048xbf16, #tpu.memory_space<vmem>>, vector<8x2048xbf16>,
    %157 = vector.extract_strided_slice %152 {offsets = [0, 256], sizes = [8, 2048], strides = [1, 1]} : vector<8x2560xbf16> to vector<8x2048xbf16>
    %c96_105 = arith.constant 96 : index
    %c0_106 = arith.constant 0 : index
    %158 = vector.load %arg13[%c96_105, %c0_106] : memref<392x2048xbf16, #tpu.memory_space<vmem>>, vector<8x2048xbf16>
    tpu.vector_store %arg13[%c96_105, %c0_106], %157 {strides = array<i32>} : memref<392x2048xbf16, #tpu.memory_space<vmem>>, vector<8x2048xbf16>,
    %159 = vector.extract_strided_slice %152 {offsets = [0, 384], sizes = [8, 2048], strides = [1, 1]} : vector<8x2560xbf16> to vector<8x2048xbf16>
    %c136_107 = arith.constant 136 : index
    %c0_108 = arith.constant 0 : index
    %160 = vector.load %arg13[%c136_107, %c0_108] : memref<392x2048xbf16, #tpu.memory_space<vmem>>, vector<8x2048xbf16>
    tpu.vector_store %arg13[%c136_107, %c0_108], %159 {strides = array<i32>} : memref<392x2048xbf16, #tpu.memory_space<vmem>>, vector<8x2048xbf16>,
    %161 = vector.extract_strided_slice %152 {offsets = [0, 512], sizes = [8, 2048], strides = [1, 1]} : vector<8x2560xbf16> to vector<8x2048xbf16>
    %c176_109 = arith.constant 176 : index
    %c0_110 = arith.constant 0 : index
    %162 = vector.load %arg13[%c176_109, %c0_110] : memref<392x2048xbf16, #tpu.memory_space<vmem>>, vector<8x2048xbf16>
    tpu.vector_store %arg13[%c176_109, %c0_110], %161 {strides = array<i32>} : memref<392x2048xbf16, #tpu.memory_space<vmem>>, vector<8x2048xbf16>,
    %c0_111 = arith.constant 0 : index
    %c257 = arith.constant 257 : index
    %163 = vector.load %arg12[%c0_111, %c257] : memref<8x3072xbf16, #tpu.memory_space<vmem>>, vector<8x2560xbf16>
    %164 = vector.extract_strided_slice %163 {offsets = [0, 0], sizes = [8, 2048], strides = [1, 1]} : vector<8x2560xbf16> to vector<8x2048xbf16>
    %c24_112 = arith.constant 24 : index
    %c0_113 = arith.constant 0 : index
    %165 = vector.load %arg13[%c24_112, %c0_113] : memref<392x2048xbf16, #tpu.memory_space<vmem>>, vector<8x2048xbf16>
    tpu.vector_store %arg13[%c24_112, %c0_113], %164 {strides = array<i32>} : memref<392x2048xbf16, #tpu.memory_space<vmem>>, vector<8x2048xbf16>,
    %166 = vector.extract_strided_slice %163 {offsets = [0, 128], sizes = [8, 2048], strides = [1, 1]} : vector<8x2560xbf16> to vector<8x2048xbf16>
    %c64_114 = arith.constant 64 : index
    %c0_115 = arith.constant 0 : index
    %167 = vector.load %arg13[%c64_114, %c0_115] : memref<392x2048xbf16, #tpu.memory_space<vmem>>, vector<8x2048xbf16>
    tpu.vector_store %arg13[%c64_114, %c0_115], %166 {strides = array<i32>} : memref<392x2048xbf16, #tpu.memory_space<vmem>>, vector<8x2048xbf16>,
    %168 = vector.extract_strided_slice %163 {offsets = [0, 256], sizes = [8, 2048], strides = [1, 1]} : vector<8x2560xbf16> to vector<8x2048xbf16>
    %c104_116 = arith.constant 104 : index
    %c0_117 = arith.constant 0 : index
    %169 = vector.load %arg13[%c104_116, %c0_117] : memref<392x2048xbf16, #tpu.memory_space<vmem>>, vector<8x2048xbf16>
    tpu.vector_store %arg13[%c104_116, %c0_117], %168 {strides = array<i32>} : memref<392x2048xbf16, #tpu.memory_space<vmem>>, vector<8x2048xbf16>,
    %170 = vector.extract_strided_slice %163 {offsets = [0, 384], sizes = [8, 2048], strides = [1, 1]} : vector<8x2560xbf16> to vector<8x2048xbf16>
    %c144_118 = arith.constant 144 : index
    %c0_119 = arith.constant 0 : index
    %171 = vector.load %arg13[%c144_118, %c0_119] : memref<392x2048xbf16, #tpu.memory_space<vmem>>, vector<8x2048xbf16>
    tpu.vector_store %arg13[%c144_118, %c0_119], %170 {strides = array<i32>} : memref<392x2048xbf16, #tpu.memory_space<vmem>>, vector<8x2048xbf16>,
    %172 = vector.extract_strided_slice %163 {offsets = [0, 512], sizes = [8, 2048], strides = [1, 1]} : vector<8x2560xbf16> to vector<8x2048xbf16>
    %c184_120 = arith.constant 184 : index
    %c0_121 = arith.constant 0 : index
    %173 = vector.load %arg13[%c184_120, %c0_121] : memref<392x2048xbf16, #tpu.memory_space<vmem>>, vector<8x2048xbf16>
    tpu.vector_store %arg13[%c184_120, %c0_121], %172 {strides = array<i32>} : memref<392x2048xbf16, #tpu.memory_space<vmem>>, vector<8x2048xbf16>,
    %c0_122 = arith.constant 0 : index
    %c258 = arith.constant 258 : index
    %174 = vector.load %arg12[%c0_122, %c258] : memref<8x3072xbf16, #tpu.memory_space<vmem>>, vector<8x2560xbf16>
    %175 = vector.extract_strided_slice %174 {offsets = [0, 0], sizes = [8, 2048], strides = [1, 1]} : vector<8x2560xbf16> to vector<8x2048xbf16>
    %c32_123 = arith.constant 32 : index
    %c0_124 = arith.constant 0 : index
    %176 = vector.load %arg13[%c32_123, %c0_124] : memref<392x2048xbf16, #tpu.memory_space<vmem>>, vector<8x2048xbf16>
    tpu.vector_store %arg13[%c32_123, %c0_124], %175 {strides = array<i32>} : memref<392x2048xbf16, #tpu.memory_space<vmem>>, vector<8x2048xbf16>,
    %177 = vector.extract_strided_slice %174 {offsets = [0, 128], sizes = [8, 2048], strides = [1, 1]} : vector<8x2560xbf16> to vector<8x2048xbf16>
    %c72_125 = arith.constant 72 : index
    %c0_126 = arith.constant 0 : index
    %178 = vector.load %arg13[%c72_125, %c0_126] : memref<392x2048xbf16, #tpu.memory_space<vmem>>, vector<8x2048xbf16>
    tpu.vector_store %arg13[%c72_125, %c0_126], %177 {strides = array<i32>} : memref<392x2048xbf16, #tpu.memory_space<vmem>>, vector<8x2048xbf16>,
    %179 = vector.extract_strided_slice %174 {offsets = [0, 256], sizes = [8, 2048], strides = [1, 1]} : vector<8x2560xbf16> to vector<8x2048xbf16>
    %c112_127 = arith.constant 112 : index
    %c0_128 = arith.constant 0 : index
    %180 = vector.load %arg13[%c112_127, %c0_128] : memref<392x2048xbf16, #tpu.memory_space<vmem>>, vector<8x2048xbf16>
    tpu.vector_store %arg13[%c112_127, %c0_128], %179 {strides = array<i32>} : memref<392x2048xbf16, #tpu.memory_space<vmem>>, vector<8x2048xbf16>,
    %181 = vector.extract_strided_slice %174 {offsets = [0, 384], sizes = [8, 2048], strides = [1, 1]} : vector<8x2560xbf16> to vector<8x2048xbf16>
    %c152_129 = arith.constant 152 : index
    %c0_130 = arith.constant 0 : index
    %182 = vector.load %arg13[%c152_129, %c0_130] : memref<392x2048xbf16, #tpu.memory_space<vmem>>, vector<8x2048xbf16>
    tpu.vector_store %arg13[%c152_129, %c0_130], %181 {strides = array<i32>} : memref<392x2048xbf16, #tpu.memory_space<vmem>>, vector<8x2048xbf16>,
    %183 = vector.extract_strided_slice %174 {offsets = [0, 512], sizes = [8, 2048], strides = [1, 1]} : vector<8x2560xbf16> to vector<8x2048xbf16>
    %c192_131 = arith.constant 192 : index
    %c0_132 = arith.constant 0 : index
    %184 = vector.load %arg13[%c192_131, %c0_132] : memref<392x2048xbf16, #tpu.memory_space<vmem>>, vector<8x2048xbf16>
    tpu.vector_store %arg13[%c192_131, %c0_132], %183 {strides = array<i32>} : memref<392x2048xbf16, #tpu.memory_space<vmem>>, vector<8x2048xbf16>,
    %c0_133 = arith.constant 0 : index
    %c0_134 = arith.constant 0 : index
    %185 = vector.load %arg5[%c0_133, %c0_134] : memref<8x200xbf16, #tpu.memory_space<vmem>>, vector<8x200xbf16>
    %c0_135 = arith.constant 0 : index
    %c0_136 = arith.constant 0 : index
    %186 = vector.load %arg13[%c0_135, %c0_136] : memref<392x2048xbf16, #tpu.memory_space<vmem>>, vector<200x2048xbf16>
    %cst_137 = arith.constant dense<0.000000e+00> : vector<8x2048xf32>
    %187 = tpu.matmul %185, %186, %cst_137 {dimension_numbers = #tpu.dot_dimension_numbers<[1], [0], [0], [1], [0, 0, 1, 1], [], []>} : vector<8x200xbf16>, vector<200x2048xbf16>, vector<8x2048xf32> -> vector<8x2048xf32>
    %c0_138 = arith.constant 0 : index
    %c0_139 = arith.constant 0 : index
    %188 = vector.load %arg6[%c0_138, %c0_139] : memref<8x1xf32, #tpu.memory_space<vmem>>, vector<8x1xf32>
    %189 = vector.broadcast %188 : vector<8x1xf32> to vector<8x2048xf32>
    %190 = arith.addf %187, %189 : vector<8x2048xf32>
    %cst_140 = arith.constant 0.000000e+00 : f32
    %191 = vector.broadcast %cst_140 : f32 to vector<8x2048xf32>
    %192 = arith.cmpf ogt, %190, %191 : vector<8x2048xf32>
    %cst_141 = arith.constant 0.000000e+00 : f32
    %193 = vector.broadcast %cst_141 : f32 to vector<8x2048xf32>
    %194 = arith.minimumf %190, %193 : vector<8x2048xf32>
    %195 = math.exp %194 : vector<8x2048xf32>
    %cst_142 = arith.constant 1.000000e+00 : f32
    %196 = vector.broadcast %cst_142 : f32 to vector<8x2048xf32>
    %197 = arith.subf %195, %196 : vector<8x2048xf32>
    %198 = arith.select %192, %190, %197 : vector<8x2048xi1>, vector<8x2048xf32>
    %199 = vector.broadcast %6 : vector<1x2048xf32> to vector<8x2048xf32>
    %200 = arith.mulf %198, %199 : vector<8x2048xf32>
    %201 = arith.truncf %200 : vector<8x2048xf32> to vector<8x2048xbf16>
    %c0_143 = arith.constant 0 : index
    %c512_144 = arith.constant 512 : index
    %202 = vector.load %arg12[%c0_143, %c512_144] : memref<8x3072xbf16, #tpu.memory_space<vmem>>, vector<8x2048xbf16>
    tpu.vector_store %arg12[%c0_143, %c512_144], %201 {strides = array<i32>} : memref<8x3072xbf16, #tpu.memory_space<vmem>>, vector<8x2048xbf16>,
    %c0_145 = arith.constant 0 : index
    %c383 = arith.constant 383 : index
    %203 = vector.load %arg12[%c0_145, %c383] : memref<8x3072xbf16, #tpu.memory_space<vmem>>, vector<8x2304xbf16>
    %204 = vector.extract_strided_slice %203 {offsets = [0, 0], sizes = [8, 2048], strides = [1, 1]} : vector<8x2304xbf16> to vector<8x2048xbf16>
    %c0_146 = arith.constant 0 : index
    %c0_147 = arith.constant 0 : index
    %205 = vector.load %arg13[%c0_146, %c0_147] : memref<392x2048xbf16, #tpu.memory_space<vmem>>, vector<8x2048xbf16>
    tpu.vector_store %arg13[%c0_146, %c0_147], %204 {strides = array<i32>} : memref<392x2048xbf16, #tpu.memory_space<vmem>>, vector<8x2048xbf16>,
    %206 = vector.extract_strided_slice %203 {offsets = [0, 128], sizes = [8, 2048], strides = [1, 1]} : vector<8x2304xbf16> to vector<8x2048xbf16>
    %c24_148 = arith.constant 24 : index
    %c0_149 = arith.constant 0 : index
    %207 = vector.load %arg13[%c24_148, %c0_149] : memref<392x2048xbf16, #tpu.memory_space<vmem>>, vector<8x2048xbf16>
    tpu.vector_store %arg13[%c24_148, %c0_149], %206 {strides = array<i32>} : memref<392x2048xbf16, #tpu.memory_space<vmem>>, vector<8x2048xbf16>,
    %208 = vector.extract_strided_slice %203 {offsets = [0, 256], sizes = [8, 2048], strides = [1, 1]} : vector<8x2304xbf16> to vector<8x2048xbf16>
    %c48_150 = arith.constant 48 : index
    %c0_151 = arith.constant 0 : index
    %209 = vector.load %arg13[%c48_150, %c0_151] : memref<392x2048xbf16, #tpu.memory_space<vmem>>, vector<8x2048xbf16>
    tpu.vector_store %arg13[%c48_150, %c0_151], %208 {strides = array<i32>} : memref<392x2048xbf16, #tpu.memory_space<vmem>>, vector<8x2048xbf16>,
    %c0_152 = arith.constant 0 : index
    %c384_153 = arith.constant 384 : index
    %210 = vector.load %arg12[%c0_152, %c384_153] : memref<8x3072xbf16, #tpu.memory_space<vmem>>, vector<8x2304xbf16>
    %211 = vector.extract_strided_slice %210 {offsets = [0, 0], sizes = [8, 2048], strides = [1, 1]} : vector<8x2304xbf16> to vector<8x2048xbf16>
    %c8_154 = arith.constant 8 : index
    %c0_155 = arith.constant 0 : index
    %212 = vector.load %arg13[%c8_154, %c0_155] : memref<392x2048xbf16, #tpu.memory_space<vmem>>, vector<8x2048xbf16>
    tpu.vector_store %arg13[%c8_154, %c0_155], %211 {strides = array<i32>} : memref<392x2048xbf16, #tpu.memory_space<vmem>>, vector<8x2048xbf16>,
    %213 = vector.extract_strided_slice %210 {offsets = [0, 128], sizes = [8, 2048], strides = [1, 1]} : vector<8x2304xbf16> to vector<8x2048xbf16>
    %c32_156 = arith.constant 32 : index
    %c0_157 = arith.constant 0 : index
    %214 = vector.load %arg13[%c32_156, %c0_157] : memref<392x2048xbf16, #tpu.memory_space<vmem>>, vector<8x2048xbf16>
    tpu.vector_store %arg13[%c32_156, %c0_157], %213 {strides = array<i32>} : memref<392x2048xbf16, #tpu.memory_space<vmem>>, vector<8x2048xbf16>,
    %215 = vector.extract_strided_slice %210 {offsets = [0, 256], sizes = [8, 2048], strides = [1, 1]} : vector<8x2304xbf16> to vector<8x2048xbf16>
    %c56_158 = arith.constant 56 : index
    %c0_159 = arith.constant 0 : index
    %216 = vector.load %arg13[%c56_158, %c0_159] : memref<392x2048xbf16, #tpu.memory_space<vmem>>, vector<8x2048xbf16>
    tpu.vector_store %arg13[%c56_158, %c0_159], %215 {strides = array<i32>} : memref<392x2048xbf16, #tpu.memory_space<vmem>>, vector<8x2048xbf16>,
    %c0_160 = arith.constant 0 : index
    %c385 = arith.constant 385 : index
    %217 = vector.load %arg12[%c0_160, %c385] : memref<8x3072xbf16, #tpu.memory_space<vmem>>, vector<8x2304xbf16>
    %218 = vector.extract_strided_slice %217 {offsets = [0, 0], sizes = [8, 2048], strides = [1, 1]} : vector<8x2304xbf16> to vector<8x2048xbf16>
    %c16_161 = arith.constant 16 : index
    %c0_162 = arith.constant 0 : index
    %219 = vector.load %arg13[%c16_161, %c0_162] : memref<392x2048xbf16, #tpu.memory_space<vmem>>, vector<8x2048xbf16>
    tpu.vector_store %arg13[%c16_161, %c0_162], %218 {strides = array<i32>} : memref<392x2048xbf16, #tpu.memory_space<vmem>>, vector<8x2048xbf16>,
    %220 = vector.extract_strided_slice %217 {offsets = [0, 128], sizes = [8, 2048], strides = [1, 1]} : vector<8x2304xbf16> to vector<8x2048xbf16>
    %c40_163 = arith.constant 40 : index
    %c0_164 = arith.constant 0 : index
    %221 = vector.load %arg13[%c40_163, %c0_164] : memref<392x2048xbf16, #tpu.memory_space<vmem>>, vector<8x2048xbf16>
    tpu.vector_store %arg13[%c40_163, %c0_164], %220 {strides = array<i32>} : memref<392x2048xbf16, #tpu.memory_space<vmem>>, vector<8x2048xbf16>,
    %222 = vector.extract_strided_slice %217 {offsets = [0, 256], sizes = [8, 2048], strides = [1, 1]} : vector<8x2304xbf16> to vector<8x2048xbf16>
    %c64_165 = arith.constant 64 : index
    %c0_166 = arith.constant 0 : index
    %223 = vector.load %arg13[%c64_165, %c0_166] : memref<392x2048xbf16, #tpu.memory_space<vmem>>, vector<8x2048xbf16>
    tpu.vector_store %arg13[%c64_165, %c0_166], %222 {strides = array<i32>} : memref<392x2048xbf16, #tpu.memory_space<vmem>>, vector<8x2048xbf16>,
    %c0_167 = arith.constant 0 : index
    %c0_168 = arith.constant 0 : index
    %224 = vector.load %arg7[%c0_167, %c0_168] : memref<8x72xbf16, #tpu.memory_space<vmem>>, vector<8x72xbf16>
    %c0_169 = arith.constant 0 : index
    %c0_170 = arith.constant 0 : index
    %225 = vector.load %arg13[%c0_169, %c0_170] : memref<392x2048xbf16, #tpu.memory_space<vmem>>, vector<72x2048xbf16>
    %cst_171 = arith.constant dense<0.000000e+00> : vector<8x2048xf32>
    %226 = tpu.matmul %224, %225, %cst_171 {dimension_numbers = #tpu.dot_dimension_numbers<[1], [0], [0], [1], [0, 0, 1, 1], [], []>} : vector<8x72xbf16>, vector<72x2048xbf16>, vector<8x2048xf32> -> vector<8x2048xf32>
    %c0_172 = arith.constant 0 : index
    %c0_173 = arith.constant 0 : index
    %227 = vector.load %arg8[%c0_172, %c0_173] : memref<8x1xf32, #tpu.memory_space<vmem>>, vector<8x1xf32>
    %228 = vector.broadcast %227 : vector<8x1xf32> to vector<8x2048xf32>
    %229 = arith.addf %226, %228 : vector<8x2048xf32>
    %c0_174 = arith.constant 0 : index
    %c0_175 = arith.constant 0 : index
    %c0_176 = arith.constant 0 : index
    %230 = vector.load %arg1[%c0_174, %c0_175, %c0_176] : memref<1x8x2048xf32, #tpu.memory_space<vmem>>, vector<1x8x2048xf32>
    %231 = vector.shape_cast %230 : vector<1x8x2048xf32> to vector<8x2048xf32>
    %c0_177 = arith.constant 0 : index
    %c0_178 = arith.constant 0 : index
    %232 = vector.load %arg9[%c0_177, %c0_178] : memref<8x8xbf16, #tpu.memory_space<vmem>>, vector<8x8xbf16>
    %233 = arith.truncf %231 : vector<8x2048xf32> to vector<8x2048xbf16>
    %cst_179 = arith.constant dense<0.000000e+00> : vector<8x2048xf32>
    %234 = tpu.matmul %232, %233, %cst_179 {dimension_numbers = #tpu.dot_dimension_numbers<[1], [0], [0], [1], [0, 0, 1, 1], [], []>} : vector<8x8xbf16>, vector<8x2048xbf16>, vector<8x2048xf32> -> vector<8x2048xf32>
    %c0_180 = arith.constant 0 : index
    %c0_181 = arith.constant 0 : index
    %235 = vector.load %arg10[%c0_180, %c0_181] : memref<8x1xf32, #tpu.memory_space<vmem>>, vector<8x1xf32>
    %236 = vector.broadcast %235 : vector<8x1xf32> to vector<8x2048xf32>
    %237 = arith.addf %234, %236 : vector<8x2048xf32>
    %238 = arith.addf %229, %237 : vector<8x2048xf32>
    %cst_182 = arith.constant 0.000000e+00 : f32
    %239 = vector.broadcast %cst_182 : f32 to vector<8x2048xf32>
    %240 = arith.cmpf ogt, %238, %239 : vector<8x2048xf32>
    %cst_183 = arith.constant 0.000000e+00 : f32
    %241 = vector.broadcast %cst_183 : f32 to vector<8x2048xf32>
    %242 = arith.minimumf %238, %241 : vector<8x2048xf32>
    %243 = math.exp %242 : vector<8x2048xf32>
    %cst_184 = arith.constant 1.000000e+00 : f32
    %244 = vector.broadcast %cst_184 : f32 to vector<8x2048xf32>
    %245 = arith.subf %243, %244 : vector<8x2048xf32>
    %246 = arith.select %240, %238, %245 : vector<8x2048xi1>, vector<8x2048xf32>
    %c0_185 = arith.constant 0 : index
    %c0_186 = arith.constant 0 : index
    %c0_187 = arith.constant 0 : index
    %247 = vector.load %arg11[%c0_185, %c0_186, %c0_187] : memref<1x8x2048xf32, #tpu.memory_space<vmem>>, vector<1x8x2048xf32>
    %248 = vector.shape_cast %247 : vector<1x8x2048xf32> to vector<8x2048xf32>
    %249 = vector.shape_cast %246 : vector<8x2048xf32> to vector<1x8x2048xf32>
    tpu.vector_store %arg11[%c0_185, %c0_186, %c0_187], %249 {strides = array<i32>} : memref<1x8x2048xf32, #tpu.memory_space<vmem>>, vector<1x8x2048xf32>,
    return
  }
  func.func @transform_0(%arg0: i32) -> (i32, i32, i32) {
    %c0_i32 = arith.constant 0 : i32
    %c0_i32_0 = arith.constant 0 : i32
    %c0_i32_1 = arith.constant 0 : i32
    return %arg0, %c0_i32, %c0_i32_0 : i32, i32, i32
  }
  func.func @transform_1(%arg0: i32) -> (i32, i32) {
    %c0_i32 = arith.constant 0 : i32
    %c0_i32_0 = arith.constant 0 : i32
    %c0_i32_1 = arith.constant 0 : i32
    return %c0_i32, %c0_i32_0 : i32, i32
  }
  func.func @transform_2(%arg0: i32) -> (i32, i32) {
    %c0_i32 = arith.constant 0 : i32
    %c0_i32_0 = arith.constant 0 : i32
    %c0_i32_1 = arith.constant 0 : i32
    return %c0_i32, %c0_i32_0 : i32, i32
  }
  func.func @transform_3(%arg0: i32) -> (i32, i32) {
    %c0_i32 = arith.constant 0 : i32
    %c0_i32_0 = arith.constant 0 : i32
    %c0_i32_1 = arith.constant 0 : i32
    return %c0_i32, %c0_i32_0 : i32, i32
  }
  func.func @transform_4(%arg0: i32) -> (i32, i32) {
    %c0_i32 = arith.constant 0 : i32
    %c0_i32_0 = arith.constant 0 : i32
    %c0_i32_1 = arith.constant 0 : i32
    return %c0_i32, %c0_i32_0 : i32, i32
  }
  func.func @transform_5(%arg0: i32) -> (i32, i32) {
    %c0_i32 = arith.constant 0 : i32
    %c0_i32_0 = arith.constant 0 : i32
    %c0_i32_1 = arith.constant 0 : i32
    return %c0_i32, %c0_i32_0 : i32, i32
  }
  func.func @transform_6(%arg0: i32) -> (i32, i32) {
    %c0_i32 = arith.constant 0 : i32
    %c0_i32_0 = arith.constant 0 : i32
    %c0_i32_1 = arith.constant 0 : i32
    return %c0_i32, %c0_i32_0 : i32, i32
  }
  func.func @transform_7(%arg0: i32) -> (i32, i32) {
    %c0_i32 = arith.constant 0 : i32
    %c0_i32_0 = arith.constant 0 : i32
    %c0_i32_1 = arith.constant 0 : i32
    return %c0_i32, %c0_i32_0 : i32, i32
  }
  func.func @transform_8(%arg0: i32) -> (i32, i32) {
    %c0_i32 = arith.constant 0 : i32
    %c0_i32_0 = arith.constant 0 : i32
    %c0_i32_1 = arith.constant 0 : i32
    return %c0_i32, %c0_i32_0 : i32, i32
  }
  func.func @transform_9(%arg0: i32) -> (i32, i32) {
    %c0_i32 = arith.constant 0 : i32
    %c0_i32_0 = arith.constant 0 : i32
    %c0_i32_1 = arith.constant 0 : i32
    return %c0_i32, %c0_i32_0 : i32, i32
  }
  func.func @transform_10(%arg0: i32) -> (i32, i32, i32) {
    %c0_i32 = arith.constant 0 : i32
    %c0_i32_0 = arith.constant 0 : i32
    %c0_i32_1 = arith.constant 0 : i32
    return %arg0, %c0_i32, %c0_i32_0 : i32, i32, i32
  }
}

</mosaic_0001>

<llo_original>
// kernel: tpu_custom_call.1
$region0: #{tpu_custom_call.1}
  #allocation0 [shape = 'u32[]', space=smem, size = 0x4, offset = 0x4, fixed_abs, tag = 'smem constant byte address 0x4 - core index']
  #allocation1 [shape = 'u32[144,128]{1,0:T(1,128)}', space=vmem, size = 0x12000, scoped, tag = 'internal scratch']
  #allocation2 [shape = 'bf16[8,3072]{1,0:T(8,128)(2,1)}', space=vmem, size = 0xc000, scoped, tag = 'scratch operand']
  #allocation3 [shape = 'bf16[392,2048]{1,0:T(8,128)(2,1)}', space=vmem, size = 0x188000, scoped, tag = 'scratch operand']
  %s0 = inlined_call_operand.hbm [shape: f32[2,8,2048], index: 0, kind: input, shape index: {}]
  %s1 = inlined_call_operand.vmem [shape: f32[1,2048], index: 1, kind: input, shape index: {}]
  %s2 = inlined_call_operand.vmem [shape: bf16[8,392], index: 2, kind: input, shape index: {}]
  %s3 = inlined_call_operand.vmem [shape: f32[8,1], index: 3, kind: input, shape index: {}]
  %s4 = inlined_call_operand.vmem [shape: bf16[8,200], index: 4, kind: input, shape index: {}]
  %s5 = inlined_call_operand.vmem [shape: f32[8,1], index: 5, kind: input, shape index: {}]
  %s6 = inlined_call_operand.vmem [shape: bf16[8,72], index: 6, kind: input, shape index: {}]
  %s7 = inlined_call_operand.vmem [shape: f32[8,1], index: 7, kind: input, shape index: {}]
  %s8 = inlined_call_operand.vmem [shape: bf16[8,8], index: 8, kind: input, shape index: {}]
  %s9 = inlined_call_operand.vmem [shape: f32[8,1], index: 9, kind: input, shape index: {}]
  %s10 = inlined_call_operand.hbm [shape: f32[2,8,2048], index: 10, kind: output, shape index: {}]
  %s11 = sld [smem:[#allocation0]]
  $region77: #{tpu_custom_call.1} parent=0
    _
  %s13 = ssub.s32 1, %s11
  %s14 = scalar_select 0, %s13, %s11
  $region1: #{tpu_custom_call.1} parent=0
    #allocation4 [shape = 'u8[131072]{0}', space=vmem, size = 0x20000, scoped, tag = 'input window, operand 0']
    #allocation5 [shape = 's32[2]{0}', space=sflag, size = 0x8, scoped, tag = 'scoped memory for tpu_custom_call.1']
    #allocation6 [shape = 's32[2]{0}', space=sflag, size = 0x8, scoped, tag = 'scoped memory for tpu_custom_call.1']
    #allocation7 [shape = 'u8[131072]{0}', space=vmem, size = 0x20000, scoped, tag = 'output window, operand 0']
    %15 = vsyncpa [#allocation5], 0
    %s16 = scalar_lea.sflag [#allocation5], 1
    %17 = vsyncpa %s16, 0
    %18 = vsyncpa [#allocation6], 0
    %s19 = scalar_lea.sflag [#allocation6], 1
    %20 = vsyncpa %s19, 0
    loop: start=0, step=1, limit=4
    $region2: #{tpu_custom_call.1} parent=1 // loop_pre_header
      _
    $region3: #{tpu_custom_call.1} parent=1 // loop_header
      %s22 = sphi 0, %s26
      %p23 = scmp.ge.s32.totalorder %s22, 4
      %s32 = sphi 0, %s34
      %s35 = sphi 0, %s32
      %s36 = sphi 0, %s35
      %s52 = sphi 0, %s36
      %s56 = sphi 0, %s56
      %s58 = sphi 0, %s56
      %s59 = sphi 0, %s58
      %s73 = sphi 0, %s59
      %s77 = sphi 0, %s77
      %s79 = sphi 0, %s77
      %s80 = sphi 0, %s79
      %s94 = sphi 0, %s80
      %s98 = sphi 0, %s98
      %s100 = sphi 0, %s98
      %s101 = sphi 0, %s100
      %s115 = sphi 0, %s101
      %s119 = sphi 0, %s119
      %s121 = sphi 0, %s119
      %s122 = sphi 0, %s121
      %s136 = sphi 0, %s122
      %s140 = sphi 0, %s140
      %s142 = sphi 0, %s140
      %s143 = sphi 0, %s142
      %s157 = sphi 0, %s143
      %s161 = sphi 0, %s161
      %s163 = sphi 0, %s161
      %s164 = sphi 0, %s163
      %s178 = sphi 0, %s164
      %s182 = sphi 0, %s182
      %s184 = sphi 0, %s182
      %s185 = sphi 0, %s184
      %s199 = sphi 0, %s185
      %s203 = sphi 0, %s203
      %s205 = sphi 0, %s203
      %s206 = sphi 0, %s205
      %s220 = sphi 0, %s206
      %s224 = sphi 0, %s224
      %s226 = sphi 0, %s224
      %s227 = sphi 0, %s226
      %s241 = sphi 0, %s227
      %s247 = sphi 0, %s249
      %s250 = sphi 0, %s247
      %s251 = sphi 0, %s250
      %s267 = sphi 0, %s251
    $region4: #{tpu_custom_call.1} parent=1 // loop_header_branch
      %25 = sbr.rel (%p23) target = $region8
    $region5: #{tpu_custom_call.1} parent=1 // loop_body
      %s27 = ssub.s32 %s22, 1
      %s28 = ssub.s32 %s22, 2
      %s29 = sadd.s32 %s22, 1
      %s30 = ssub.s32 %s22, %s29
      %p31 = scmp.eq.s32.totalorder %s30, 0
      %s33 = sadd.s32 %s32, 1
      %s34 = scalar_select %p31, %s32, %s33
      %p37 = pneg %p31
      %p38 = scmp.eq.s32.totalorder %s22, 1
      %p39 = por %p37, %p38
      %p40 = scmp.ne.s32.totalorder %s32, %s35
      %p41 = scmp.eq.s32.totalorder %s22, 0
      %p42 = por %p40, %p41
      %p43 = scmp.ne.s32.totalorder %s32, %s35
      %p44 = scmp.eq.s32.totalorder %s27, 1
      %p45 = por %p43, %p44
      %p46 = scmp.ne.s32.totalorder %s35, %s36
      %p47 = scmp.eq.s32.totalorder %s27, 0
      %p48 = por %p46, %p47
      %p49 = scmp.ne.s32.totalorder %s35, %s36
      %p50 = scmp.eq.s32.totalorder %s28, 1
      %p51 = por %p49, %p50
      %p53 = scmp.ne.s32.totalorder %s36, %s52
      %p54 = scmp.eq.s32.totalorder %s28, 0
      %p55 = por %p53, %p54
      %s57 = sadd.s32 %s56, 1
      %p60 = scmp.eq.s32.totalorder %s22, 1
      %p61 = scmp.ne.s32.totalorder %s56, %s58
      %p62 = scmp.eq.s32.totalorder %s22, 0
      %p63 = por %p61, %p62
      %p64 = scmp.ne.s32.totalorder %s56, %s58
      %p65 = scmp.eq.s32.totalorder %s27, 1
      %p66 = por %p64, %p65
      %p67 = scmp.ne.s32.totalorder %s58, %s59
      %p68 = scmp.eq.s32.totalorder %s27, 0
      %p69 = por %p67, %p68
      %p70 = scmp.ne.s32.totalorder %s58, %s59
      %p71 = scmp.eq.s32.totalorder %s28, 1
      %p72 = por %p70, %p71
      %p74 = scmp.ne.s32.totalorder %s59, %s73
      %p75 = scmp.eq.s32.totalorder %s28, 0
      %p76 = por %p74, %p75
      %s78 = sadd.s32 %s77, 1
      %p81 = scmp.eq.s32.totalorder %s22, 1
      %p82 = scmp.ne.s32.totalorder %s77, %s79
      %p83 = scmp.eq.s32.totalorder %s22, 0
      %p84 = por %p82, %p83
      %p85 = scmp.ne.s32.totalorder %s77, %s79
      %p86 = scmp.eq.s32.totalorder %s27, 1
      %p87 = por %p85, %p86
      %p88 = scmp.ne.s32.totalorder %s79, %s80
      %p89 = scmp.eq.s32.totalorder %s27, 0
      %p90 = por %p88, %p89
      %p91 = scmp.ne.s32.totalorder %s79, %s80
      %p92 = scmp.eq.s32.totalorder %s28, 1
      %p93 = por %p91, %p92
      %p95 = scmp.ne.s32.totalorder %s80, %s94
      %p96 = scmp.eq.s32.totalorder %s28, 0
      %p97 = por %p95, %p96
      %s99 = sadd.s32 %s98, 1
      %p102 = scmp.eq.s32.totalorder %s22, 1
      %p103 = scmp.ne.s32.totalorder %s98, %s100
      %p104 = scmp.eq.s32.totalorder %s22, 0
      %p105 = por %p103, %p104
      %p106 = scmp.ne.s32.totalorder %s98, %s100
      %p107 = scmp.eq.s32.totalorder %s27, 1
      %p108 = por %p106, %p107
      %p109 = scmp.ne.s32.totalorder %s100, %s101
      %p110 = scmp.eq.s32.totalorder %s27, 0
      %p111 = por %p109, %p110
      %p112 = scmp.ne.s32.totalorder %s100, %s101
      %p113 = scmp.eq.s32.totalorder %s28, 1
      %p114 = por %p112, %p113
      %p116 = scmp.ne.s32.totalorder %s101, %s115
      %p117 = scmp.eq.s32.totalorder %s28, 0
      %p118 = por %p116, %p117
      %s120 = sadd.s32 %s119, 1
      %p123 = scmp.eq.s32.totalorder %s22, 1
      %p124 = scmp.ne.s32.totalorder %s119, %s121
      %p125 = scmp.eq.s32.totalorder %s22, 0
      %p126 = por %p124, %p125
      %p127 = scmp.ne.s32.totalorder %s119, %s121
      %p128 = scmp.eq.s32.totalorder %s27, 1
      %p129 = por %p127, %p128
      %p130 = scmp.ne.s32.totalorder %s121, %s122
      %p131 = scmp.eq.s32.totalorder %s27, 0
      %p132 = por %p130, %p131
      %p133 = scmp.ne.s32.totalorder %s121, %s122
      %p134 = scmp.eq.s32.totalorder %s28, 1
      %p135 = por %p133, %p134
      %p137 = scmp.ne.s32.totalorder %s122, %s136
      %p138 = scmp.eq.s32.totalorder %s28, 0
      %p139 = por %p137, %p138
      %s141 = sadd.s32 %s140, 1
      %p144 = scmp.eq.s32.totalorder %s22, 1
      %p145 = scmp.ne.s32.totalorder %s140, %s142
      %p146 = scmp.eq.s32.totalorder %s22, 0
      %p147 = por %p145, %p146
      %p148 = scmp.ne.s32.totalorder %s140, %s142
      %p149 = scmp.eq.s32.totalorder %s27, 1
      %p150 = por %p148, %p149
      %p151 = scmp.ne.s32.totalorder %s142, %s143
      %p152 = scmp.eq.s32.totalorder %s27, 0
      %p153 = por %p151, %p152
      %p154 = scmp.ne.s32.totalorder %s142, %s143
      %p155 = scmp.eq.s32.totalorder %s28, 1
      %p156 = por %p154, %p155
      %p158 = scmp.ne.s32.totalorder %s143, %s157
      %p159 = scmp.eq.s32.totalorder %s28, 0
      %p160 = por %p158, %p159
      %s162 = sadd.s32 %s161, 1
      %p165 = scmp.eq.s32.totalorder %s22, 1
      %p166 = scmp.ne.s32.totalorder %s161, %s163
      %p167 = scmp.eq.s32.totalorder %s22, 0
      %p168 = por %p166, %p167
      %p169 = scmp.ne.s32.totalorder %s161, %s163
      %p170 = scmp.eq.s32.totalorder %s27, 1
      %p171 = por %p169, %p170
      %p172 = scmp.ne.s32.totalorder %s163, %s164
      %p173 = scmp.eq.s32.totalorder %s27, 0
      %p174 = por %p172, %p173
      %p175 = scmp.ne.s32.totalorder %s163, %s164
      %p176 = scmp.eq.s32.totalorder %s28, 1
      %p177 = por %p175, %p176
      %p179 = scmp.ne.s32.totalorder %s164, %s178
      %p180 = scmp.eq.s32.totalorder %s28, 0
      %p181 = por %p179, %p180
      %s183 = sadd.s32 %s182, 1
      %p186 = scmp.eq.s32.totalorder %s22, 1
      %p187 = scmp.ne.s32.totalorder %s182, %s184
      %p188 = scmp.eq.s32.totalorder %s22, 0
      %p189 = por %p187, %p188
      %p190 = scmp.ne.s32.totalorder %s182, %s184
      %p191 = scmp.eq.s32.totalorder %s27, 1
      %p192 = por %p190, %p191
      %p193 = scmp.ne.s32.totalorder %s184, %s185
      %p194 = scmp.eq.s32.totalorder %s27, 0
      %p195 = por %p193, %p194
      %p196 = scmp.ne.s32.totalorder %s184, %s185
      %p197 = scmp.eq.s32.totalorder %s28, 1
      %p198 = por %p196, %p197
      %p200 = scmp.ne.s32.totalorder %s185, %s199
      %p201 = scmp.eq.s32.totalorder %s28, 0
      %p202 = por %p200, %p201
      %s204 = sadd.s32 %s203, 1
      %p207 = scmp.eq.s32.totalorder %s22, 1
      %p208 = scmp.ne.s32.totalorder %s203, %s205
      %p209 = scmp.eq.s32.totalorder %s22, 0
      %p210 = por %p208, %p209
      %p211 = scmp.ne.s32.totalorder %s203, %s205
      %p212 = scmp.eq.s32.totalorder %s27, 1
      %p213 = por %p211, %p212
      %p214 = scmp.ne.s32.totalorder %s205, %s206
      %p215 = scmp.eq.s32.totalorder %s27, 0
      %p216 = por %p214, %p215
      %p217 = scmp.ne.s32.totalorder %s205, %s206
      %p218 = scmp.eq.s32.totalorder %s28, 1
      %p219 = por %p217, %p218
      %p221 = scmp.ne.s32.totalorder %s206, %s220
      %p222 = scmp.eq.s32.totalorder %s28, 0
      %p223 = por %p221, %p222
      %s225 = sadd.s32 %s224, 1
      %p228 = scmp.eq.s32.totalorder %s22, 1
      %p229 = scmp.ne.s32.totalorder %s224, %s226
      %p230 = scmp.eq.s32.totalorder %s22, 0
      %p231 = por %p229, %p230
      %p232 = scmp.ne.s32.totalorder %s224, %s226
      %p233 = scmp.eq.s32.totalorder %s27, 1
      %p234 = por %p232, %p233
      %p235 = scmp.ne.s32.totalorder %s226, %s227
      %p236 = scmp.eq.s32.totalorder %s27, 0
      %p237 = por %p235, %p236
      %p238 = scmp.ne.s32.totalorder %s226, %s227
      %p239 = scmp.eq.s32.totalorder %s28, 1
      %p240 = por %p238, %p239
      %p242 = scmp.ne.s32.totalorder %s227, %s241
      %p243 = scmp.eq.s32.totalorder %s28, 0
      %p244 = por %p242, %p243
      %s245 = ssub.s32 %s22, %s29
      %p246 = scmp.eq.s32.totalorder %s245, 0
      %s248 = sadd.s32 %s247, 1
      %s249 = scalar_select %p246, %s247, %s248
      %p252 = pneg %p246
      %p253 = scmp.eq.s32.totalorder %s22, 1
      %p254 = por %p252, %p253
      %p255 = scmp.ne.s32.totalorder %s247, %s250
      %p256 = scmp.eq.s32.totalorder %s22, 0
      %p257 = por %p255, %p256
      %p258 = scmp.ne.s32.totalorder %s247, %s250
      %p259 = scmp.eq.s32.totalorder %s27, 1
      %p260 = por %p258, %p259
      %p261 = scmp.ne.s32.totalorder %s250, %s251
      %p262 = scmp.eq.s32.totalorder %s27, 0
      %p263 = por %p261, %p262
      %p264 = scmp.ne.s32.totalorder %s250, %s251
      %p265 = scmp.eq.s32.totalorder %s28, 1
      %p266 = por %p264, %p265
      %p268 = scmp.ne.s32.totalorder %s251, %s267
      %p269 = scmp.eq.s32.totalorder %s28, 0
      %p270 = por %p268, %p269
      %p271 = scmp.le.s32.totalorder 1, %s22
      %p272 = scmp.lt.s32.totalorder %s22, 3
      %p273 = pnand %p271, %p272
      %p274 = pneg %p273
      // Predicated region
      $region9: #{tpu_custom_call.1} parent=5 // pred_check
        _
      $region10: #{tpu_custom_call.1} parent=5 // pred_check_branch
        %276 = sbr.rel (%p273) target = $region12
      $region11: #{tpu_custom_call.1} parent=5 // pred_region
        %s277 = ssub.s32 %s22, 1
        // Predicated region
        $region13: #{tpu_custom_call.1} parent=11 // pred_check
          %p278 = pneg %p69
        $region14: #{tpu_custom_call.1} parent=11 // pred_check_branch
          %280 = sbr.rel (%p278) target = $region16
        $region15: #{tpu_custom_call.1} parent=11 // pred_region
          _
        $region16: #{tpu_custom_call.1} parent=11 // pred_fallthru
          _
        // Predicated region
        $region17: #{tpu_custom_call.1} parent=11 // pred_check
          %p281 = pneg %p90
        $region18: #{tpu_custom_call.1} parent=11 // pred_check_branch
          %283 = sbr.rel (%p281) target = $region20
        $region19: #{tpu_custom_call.1} parent=11 // pred_region
          _
        $region20: #{tpu_custom_call.1} parent=11 // pred_fallthru
          _
        // Predicated region
        $region21: #{tpu_custom_call.1} parent=11 // pred_check
          %p284 = pneg %p111
        $region22: #{tpu_custom_call.1} parent=11 // pred_check_branch
          %286 = sbr.rel (%p284) target = $region24
        $region23: #{tpu_custom_call.1} parent=11 // pred_region
          _
        $region24: #{tpu_custom_call.1} parent=11 // pred_fallthru
          _
        // Predicated region
        $region25: #{tpu_custom_call.1} parent=11 // pred_check
          %p287 = pneg %p132
        $region26: #{tpu_custom_call.1} parent=11 // pred_check_branch
          %289 = sbr.rel (%p287) target = $region28
        $region27: #{tpu_custom_call.1} parent=11 // pred_region
          _
        $region28: #{tpu_custom_call.1} parent=11 // pred_fallthru
          _
        // Predicated region
        $region29: #{tpu_custom_call.1} parent=11 // pred_check
          %p290 = pneg %p153
        $region30: #{tpu_custom_call.1} parent=11 // pred_check_branch
          %292 = sbr.rel (%p290) target = $region32
        $region31: #{tpu_custom_call.1} parent=11 // pred_region
          _
        $region32: #{tpu_custom_call.1} parent=11 // pred_fallthru
          _
        // Predicated region
        $region33: #{tpu_custom_call.1} parent=11 // pred_check
          %p293 = pneg %p174
        $region34: #{tpu_custom_call.1} parent=11 // pred_check_branch
          %295 = sbr.rel (%p293) target = $region36
        $region35: #{tpu_custom_call.1} parent=11 // pred_region
          _
        $region36: #{tpu_custom_call.1} parent=11 // pred_fallthru
          _
        // Predicated region
        $region37: #{tpu_custom_call.1} parent=11 // pred_check
          %p296 = pneg %p195
        $region38: #{tpu_custom_call.1} parent=11 // pred_check_branch
          %298 = sbr.rel (%p296) target = $region40
        $region39: #{tpu_custom_call.1} parent=11 // pred_region
          _
        $region40: #{tpu_custom_call.1} parent=11 // pred_fallthru
          _
        // Predicated region
        $region41: #{tpu_custom_call.1} parent=11 // pred_check
          %p299 = pneg %p216
        $region42: #{tpu_custom_call.1} parent=11 // pred_check_branch
          %301 = sbr.rel (%p299) target = $region44
        $region43: #{tpu_custom_call.1} parent=11 // pred_region
          _
        $region44: #{tpu_custom_call.1} parent=11 // pred_fallthru
          _
        // Predicated region
        $region45: #{tpu_custom_call.1} parent=11 // pred_check
          %p302 = pneg %p237
        $region46: #{tpu_custom_call.1} parent=11 // pred_check_branch
          %304 = sbr.rel (%p302) target = $region48
        $region47: #{tpu_custom_call.1} parent=11 // pred_region
          _
        $region48: #{tpu_custom_call.1} parent=11 // pred_fallthru
          _
      $region12: #{tpu_custom_call.1} parent=5 // pred_fallthru
        _
      %p305 = scmp.lt.s32.totalorder %s22, 2
      // Predicated region
      $region49: #{tpu_custom_call.1} parent=5 // pred_check
        %p306 = pneg %p305
      $region50: #{tpu_custom_call.1} parent=5 // pred_check_branch
        %308 = sbr.rel (%p306) target = $region52
      $region51: #{tpu_custom_call.1} parent=5 // pred_region
        // Predicated region
        $region53: #{tpu_custom_call.1} parent=51 // pred_check
          %p309 = pneg %p42
        $region54: #{tpu_custom_call.1} parent=51 // pred_check_branch
          %311 = sbr.rel (%p309) target = $region56
        $region55: #{tpu_custom_call.1} parent=51 // pred_region
          %s312 = sand.u32 %s32, 1
          %s313 = scalar_lea.sflag [#allocation5], %s312
          %s314 = sand.u32 %s32, 1
          %s315 = smul.addr %s314, 128
          %s316 = scalar_lea.vmem [#allocation4], %s315
          %s318 = ssub.s32 2048, 2048
          %319 = vsyncadd %s313, %s318
          %s320 = smul.addr %s22, 16
          %s321 = smul.addr %s320, 128
          %s322 = scalar_lea.hbm %s0, %s321
          %s324 = sshll.u32 %s316, 4
          %s325 = int_to_ptr.vmem [resolvable:$true] %s324
          %327 = dma.hbm_to_vmem [thread:$0]  %s322, 2048, %s325, %s313
        $region56: #{tpu_custom_call.1} parent=51 // pred_fallthru
          _
      $region52: #{tpu_custom_call.1} parent=5 // pred_fallthru
        _
      %p328 = scmp.le.s32.totalorder 1, %s22
      %p329 = scmp.lt.s32.totalorder %s22, 3
      %p330 = pnand %p328, %p329
      %p331 = pneg %p330
      // Predicated region
      $region57: #{tpu_custom_call.1} parent=5 // pred_check
        _
      $region58: #{tpu_custom_call.1} parent=5 // pred_check_branch
        %333 = sbr.rel (%p330) target = $region60
      $region59: #{tpu_custom_call.1} parent=5 // pred_region
        %s334 = ssub.s32 %s22, 1
        %s335 = sand.u32 %s35, 1
        %s336 = scalar_lea.sflag [#allocation5], %s335
        %s337 = sand.u32 %s35, 1
        %s338 = smul.addr %s337, 128
        %s339 = scalar_lea.vmem [#allocation4], %s338
        // Predicated region
        $region61: #{tpu_custom_call.1} parent=59 // pred_check
          %p340 = pneg %p48
        $region62: #{tpu_custom_call.1} parent=59 // pred_check_branch
          %342 = sbr.rel (%p340) target = $region64
        $region63: #{tpu_custom_call.1} parent=59 // pred_region
          %343 = dma.done %s336, 2048
        $region64: #{tpu_custom_call.1} parent=59 // pred_fallthru
          _
        %s344 = sand.u32 %s35, 1
        %s345 = scalar_lea.sflag [#allocation5], %s344
        %s346 = sand.u32 %s35, 1
        %s347 = smul.addr %s346, 128
        %s348 = scalar_lea.vmem [#allocation4], %s347
        %p349 = pneg %p48
        %p350 = pneg %p45
        %p351 = pneg %p69
        %p352 = pneg %p66
        %p353 = pneg %p90
        %p354 = pneg %p87
        %p355 = pneg %p111
        %p356 = pneg %p108
        %p357 = pneg %p132
        %p358 = pneg %p129
        %p359 = pneg %p153
        %p360 = pneg %p150
        %p361 = pneg %p174
        %p362 = pneg %p171
        %p363 = pneg %p195
        %p364 = pneg %p192
        %p365 = pneg %p216
        %p366 = pneg %p213
        %p367 = pneg %p237
        %p368 = pneg %p234
        %p369 = pneg %p263
        %p370 = pneg %p260
        %s371 = sand.u32 %s250, 1
        %s372 = scalar_lea.sflag [#allocation6], %s371
        %s373 = sand.u32 %s250, 1
        %s374 = smul.addr %s373, 128
        %s375 = scalar_lea.vmem [#allocation7], %s374
        %377 = vst [vmem:[#allocation2] sm:$0xff] 0
        %378 = vst [vmem:[#allocation2 + $0x8] sm:$0xff] 0
        %379 = vst [vmem:[#allocation2 + $0x10] sm:$0xff] 0
        %380 = vst [vmem:[#allocation2 + $0x18] sm:$0xff] 0
        %381 = vst [vmem:[#allocation2 + $0x20] sm:$0xff] 0
        %382 = vst [vmem:[#allocation2 + $0x28] sm:$0xff] 0
        %383 = vst [vmem:[#allocation2 + $0x30] sm:$0xff] 0
        %384 = vst [vmem:[#allocation2 + $0x38] sm:$0xff] 0
        %385 = vst [vmem:[#allocation2 + $0x40] sm:$0xff] 0
        %386 = vst [vmem:[#allocation2 + $0x48] sm:$0xff] 0
        %387 = vst [vmem:[#allocation2 + $0x50] sm:$0xff] 0
        %388 = vst [vmem:[#allocation2 + $0x58] sm:$0xff] 0
        %v389 = vld [vmem:[%s339] sm:$0xff]
        %v390 = vld [vmem:[%s339 + $0x8] sm:$0xff]
        %v391 = vld [vmem:[%s339 + $0x10] sm:$0xff]
        %v392 = vld [vmem:[%s339 + $0x18] sm:$0xff]
        %v393 = vld [vmem:[%s339 + $0x20] sm:$0xff]
        %v394 = vld [vmem:[%s339 + $0x28] sm:$0xff]
        %v395 = vld [vmem:[%s339 + $0x30] sm:$0xff]
        %v396 = vld [vmem:[%s339 + $0x38] sm:$0xff]
        %v397 = vld [vmem:[%s339 + $0x40] sm:$0xff]
        %v398 = vld [vmem:[%s339 + $0x48] sm:$0xff]
        %v399 = vld [vmem:[%s339 + $0x50] sm:$0xff]
        %v400 = vld [vmem:[%s339 + $0x58] sm:$0xff]
        %v401 = vld [vmem:[%s339 + $0x60] sm:$0xff]
        %v402 = vld [vmem:[%s339 + $0x68] sm:$0xff]
        %v403 = vld [vmem:[%s339 + $0x70] sm:$0xff]
        %v404 = vld [vmem:[%s339 + $0x78] sm:$0xff]
        %v405 = vpack.c.bf16 %v389, %v389
        %v406 = vpack.c.bf16 %v390, %v390
        %v407 = vpack.c.bf16 %v391, %v391
        %v408 = vpack.c.bf16 %v392, %v392
        %v409 = vpack.c.bf16 %v393, %v393
        %v410 = vpack.c.bf16 %v394, %v394
        %v411 = vpack.c.bf16 %v395, %v395
        %v412 = vpack.c.bf16 %v396, %v396
        %v413 = vpack.c.bf16 %v397, %v397
        %v414 = vpack.c.bf16 %v398, %v398
        %v415 = vpack.c.bf16 %v399, %v399
        %v416 = vpack.c.bf16 %v400, %v400
        %v417 = vpack.c.bf16 %v401, %v401
        %v418 = vpack.c.bf16 %v402, %v402
        %v419 = vpack.c.bf16 %v403, %v403
        %v420 = vpack.c.bf16 %v404, %v404
        %v437 = vunpack.c.l.b16 %v405
        %v438 = vunpack.c.l.b16 %v406
        %v439 = vunpack.c.l.b16 %v407
        %v440 = vunpack.c.l.b16 %v408
        %v441 = vunpack.c.l.b16 %v409
        %v442 = vunpack.c.l.b16 %v410
        %v443 = vunpack.c.l.b16 %v411
        %v444 = vunpack.c.l.b16 %v412
        %v445 = vunpack.c.l.b16 %v413
        %v446 = vunpack.c.l.b16 %v414
        %v447 = vunpack.c.l.b16 %v415
        %v448 = vunpack.c.l.b16 %v416
        %v449 = vunpack.c.l.b16 %v417
        %v450 = vunpack.c.l.b16 %v418
        %v451 = vunpack.c.l.b16 %v419
        %v452 = vunpack.c.l.b16 %v420
        %v453 = vpack.c.b16 %v438, %v437
        %v454 = vpack.c.b16 %v440, %v439
        %v455 = vpack.c.b16 %v442, %v441
        %v456 = vpack.c.b16 %v444, %v443
        %v457 = vpack.c.b16 %v446, %v445
        %v458 = vpack.c.b16 %v448, %v447
        %v459 = vpack.c.b16 %v450, %v449
        %v460 = vpack.c.b16 %v452, %v451
        %469 = vst [vmem:[#allocation2 + $0x10] sm:$0xff] %v453
        %470 = vst [vmem:[#allocation2 + $0x18] sm:$0xff] %v454
        %471 = vst [vmem:[#allocation2 + $0x20] sm:$0xff] %v455
        %472 = vst [vmem:[#allocation2 + $0x28] sm:$0xff] %v456
        %473 = vst [vmem:[#allocation2 + $0x30] sm:$0xff] %v457
        %474 = vst [vmem:[#allocation2 + $0x38] sm:$0xff] %v458
        %475 = vst [vmem:[#allocation2 + $0x40] sm:$0xff] %v459
        %476 = vst [vmem:[#allocation2 + $0x48] sm:$0xff] %v460
        %v477 = vld [vmem:[%s1] sm:$0xff]
        %v478 = vld [vmem:[%s1 + $0x8] sm:$0xff]
        %v479 = vld [vmem:[#allocation2] sm:$0xff]
        %v480 = vld [vmem:[#allocation2 + $0x8] sm:$0xff]
        %v481 = vld [vmem:[#allocation2 + $0x10] sm:$0xff]
        %v482 = vld [vmem:[#allocation2 + $0x18] sm:$0xff]
        %v483 = vld [vmem:[#allocation2 + $0x20] sm:$0xff]
        %v484 = vld [vmem:[#allocation2 + $0x28] sm:$0xff]
        %v485 = vld [vmem:[#allocation2 + $0x30] sm:$0xff]
        %v486 = vld [vmem:[#allocation2 + $0x38] sm:$0xff]
        %v487 = vld [vmem:[#allocation2 + $0x40] sm:$0xff]
        %v488 = vld [vmem:[#allocation2 + $0x48] sm:$0xff]
        %v489 = vld [vmem:[#allocation2 + $0x50] sm:$0xff]
        %v490 = vld [vmem:[#allocation2 + $0x58] sm:$0xf]
        %500 = vrot.lane.b32.xlu0 %v479, 3
        %v501 = vpop.permute.xlu0 %500
        %502 = vrot.lane.b32.xlu0 %v480, 3
        %v503 = vpop.permute.xlu0 %502
        %504 = vrot.lane.b32.xlu0 %v481, 3
        %v505 = vpop.permute.xlu0 %504
        %506 = vrot.lane.b32.xlu0 %v482, 3
        %v507 = vpop.permute.xlu0 %506
        %508 = vrot.lane.b32.xlu0 %v483, 3
        %v509 = vpop.permute.xlu0 %508
        %510 = vrot.lane.b32.xlu0 %v484, 3
        %v511 = vpop.permute.xlu0 %510
        %512 = vrot.lane.b32.xlu0 %v485, 3
        %v513 = vpop.permute.xlu0 %512
        %514 = vrot.lane.b32.xlu0 %v486, 3
        %v515 = vpop.permute.xlu0 %514
        %516 = vrot.lane.b32.xlu0 %v487, 3
        %v517 = vpop.permute.xlu0 %516
        %v518 = vrot.slane %v501, 4
        %v519 = vrot.slane %v503, 4
        %v520 = vrot.slane %v505, 4
        %v521 = vrot.slane %v507, 4
        %v522 = vrot.slane %v509, 4
        %v523 = vrot.slane %v511, 4
        %v524 = vrot.slane %v513, 4
        %v525 = vrot.slane %v515, 4
        %v526 = vrot.slane %v517, 4
        %vm527 = vcmask 1043456
        %v528 = vsel %vm527, %v518, %v519
        %vm529 = vcmask 23552
        %v530 = vsel %vm529, %v501, %v528
        %v531 = vsel %vm527, %v519, %v520
        %v532 = vsel %vm529, %v503, %v531
        %v533 = vsel %vm527, %v520, %v521
        %v534 = vsel %vm529, %v505, %v533
        %v535 = vsel %vm527, %v521, %v522
        %v536 = vsel %vm529, %v507, %v535
        %v537 = vsel %vm527, %v522, %v523
        %v538 = vsel %vm529, %v509, %v537
        %v539 = vsel %vm527, %v523, %v524
        %v540 = vsel %vm529, %v511, %v539
        %v541 = vsel %vm527, %v524, %v525
        %v542 = vsel %vm529, %v513, %v541
        %v543 = vsel %vm527, %v525, %v526
        %v544 = vsel %vm529, %v515, %v543
        %553 = vst [vmem:[#allocation3] sm:$0xff] %v530
        %554 = vst [vmem:[#allocation3 + $0x8] sm:$0xff] %v532
        %555 = vst [vmem:[#allocation3 + $0x10] sm:$0xff] %v534
        %556 = vst [vmem:[#allocation3 + $0x18] sm:$0xff] %v536
        %557 = vst [vmem:[#allocation3 + $0x20] sm:$0xff] %v538
        %558 = vst [vmem:[#allocation3 + $0x28] sm:$0xff] %v540
        %559 = vst [vmem:[#allocation3 + $0x30] sm:$0xff] %v542
        %560 = vst [vmem:[#allocation3 + $0x38] sm:$0xff] %v544
        %v561 = vsel %vm529, %v528, %v503
        %v562 = vsel %vm529, %v531, %v505
        %v563 = vsel %vm529, %v533, %v507
        %v564 = vsel %vm529, %v535, %v509
        %v565 = vsel %vm529, %v537, %v511
        %v566 = vsel %vm529, %v539, %v513
        %v567 = vsel %vm529, %v541, %v515
        %v568 = vsel %vm529, %v543, %v517
        %577 = vst [vmem:[#allocation3 + $0x1c0] sm:$0xff] %v561
        %578 = vst [vmem:[#allocation3 + $0x1c8] sm:$0xff] %v562
        %579 = vst [vmem:[#allocation3 + $0x1d0] sm:$0xff] %v563
        %580 = vst [vmem:[#allocation3 + $0x1d8] sm:$0xff] %v564
        %581 = vst [vmem:[#allocation3 + $0x1e0] sm:$0xff] %v565
        %582 = vst [vmem:[#allocation3 + $0x1e8] sm:$0xff] %v566
        %583 = vst [vmem:[#allocation3 + $0x1f0] sm:$0xff] %v567
        %584 = vst [vmem:[#allocation3 + $0x1f8] sm:$0xff] %v568
        %586 = vrot.lane.b32.xlu0 %v488, 3
        %v587 = vpop.permute.xlu0 %586
        %v588 = vrot.slane %v587, 4
        %v589 = vsel %vm527, %v526, %v588
        %v590 = vsel %vm529, %v517, %v589
        %592 = vst [vmem:[#allocation3 + $0x380] sm:$0xff] %v532
        %593 = vst [vmem:[#allocation3 + $0x388] sm:$0xff] %v534
        %594 = vst [vmem:[#allocation3 + $0x390] sm:$0xff] %v536
        %595 = vst [vmem:[#allocation3 + $0x398] sm:$0xff] %v538
        %596 = vst [vmem:[#allocation3 + $0x3a0] sm:$0xff] %v540
        %597 = vst [vmem:[#allocation3 + $0x3a8] sm:$0xff] %v542
        %598 = vst [vmem:[#allocation3 + $0x3b0] sm:$0xff] %v544
        %599 = vst [vmem:[#allocation3 + $0x3b8] sm:$0xff] %v590
        %v600 = vsel %vm529, %v589, %v587
        %602 = vst [vmem:[#allocation3 + $0x540] sm:$0xff] %v562
        %603 = vst [vmem:[#allocation3 + $0x548] sm:$0xff] %v563
        %604 = vst [vmem:[#allocation3 + $0x550] sm:$0xff] %v564
        %605 = vst [vmem:[#allocation3 + $0x558] sm:$0xff] %v565
        %606 = vst [vmem:[#allocation3 + $0x560] sm:$0xff] %v566
        %607 = vst [vmem:[#allocation3 + $0x568] sm:$0xff] %v567
        %608 = vst [vmem:[#allocation3 + $0x570] sm:$0xff] %v568
        %609 = vst [vmem:[#allocation3 + $0x578] sm:$0xff] %v600
        %611 = vrot.lane.b32.xlu0 %v489, 3
        %v612 = vpop.permute.xlu0 %611
        %v613 = vrot.slane %v612, 4
        %v614 = vsel %vm527, %v588, %v613
        %v615 = vsel %vm529, %v587, %v614
        %617 = vst [vmem:[#allocation3 + $0x700] sm:$0xff] %v534
        %618 = vst [vmem:[#allocation3 + $0x708] sm:$0xff] %v536
        %619 = vst [vmem:[#allocation3 + $0x710] sm:$0xff] %v538
        %620 = vst [vmem:[#allocation3 + $0x718] sm:$0xff] %v540
        %621 = vst [vmem:[#allocation3 + $0x720] sm:$0xff] %v542
        %622 = vst [vmem:[#allocation3 + $0x728] sm:$0xff] %v544
        %623 = vst [vmem:[#allocation3 + $0x730] sm:$0xff] %v590
        %624 = vst [vmem:[#allocation3 + $0x738] sm:$0xff] %v615
        %v625 = vsel %vm529, %v614, %v612
        %627 = vst [vmem:[#allocation3 + $0x8c0] sm:$0xff] %v563
        %628 = vst [vmem:[#allocation3 + $0x8c8] sm:$0xff] %v564
        %629 = vst [vmem:[#allocation3 + $0x8d0] sm:$0xff] %v565
        %630 = vst [vmem:[#allocation3 + $0x8d8] sm:$0xff] %v566
        %631 = vst [vmem:[#allocation3 + $0x8e0] sm:$0xff] %v567
        %632 = vst [vmem:[#allocation3 + $0x8e8] sm:$0xff] %v568
        %633 = vst [vmem:[#allocation3 + $0x8f0] sm:$0xff] %v600
        %634 = vst [vmem:[#allocation3 + $0x8f8] sm:$0xff] %v625
        %636 = vrot.lane.b32.xlu0 %v490, 3
        %v637 = vpop.permute.xlu0 %636
        %v638 = vrot.slane %v637, 4
        %v639 = vsel %vm527, %v613, %v638
        %v640 = vsel %vm529, %v612, %v639
        %642 = vst [vmem:[#allocation3 + $0xa80] sm:$0xff] %v536
        %643 = vst [vmem:[#allocation3 + $0xa88] sm:$0xff] %v538
        %644 = vst [vmem:[#allocation3 + $0xa90] sm:$0xff] %v540
        %645 = vst [vmem:[#allocation3 + $0xa98] sm:$0xff] %v542
        %646 = vst [vmem:[#allocation3 + $0xaa0] sm:$0xff] %v544
        %647 = vst [vmem:[#allocation3 + $0xaa8] sm:$0xff] %v590
        %648 = vst [vmem:[#allocation3 + $0xab0] sm:$0xff] %v615
        %649 = vst [vmem:[#allocation3 + $0xab8] sm:$0xff] %v640
        %v650 = vld [vmem:[#allocation2] sm:$0xff]
        %v651 = vld [vmem:[#allocation2 + $0x8] sm:$0xff]
        %v652 = vld [vmem:[#allocation2 + $0x10] sm:$0xff]
        %v653 = vld [vmem:[#allocation2 + $0x18] sm:$0xff]
        %v654 = vld [vmem:[#allocation2 + $0x20] sm:$0xff]
        %v655 = vld [vmem:[#allocation2 + $0x28] sm:$0xff]
        %v656 = vld [vmem:[#allocation2 + $0x30] sm:$0xff]
        %v657 = vld [vmem:[#allocation2 + $0x38] sm:$0xff]
        %v658 = vld [vmem:[#allocation2 + $0x40] sm:$0xff]
        %v659 = vld [vmem:[#allocation2 + $0x48] sm:$0xff]
        %v660 = vld [vmem:[#allocation2 + $0x50] sm:$0xff]
        %v661 = vld [vmem:[#allocation2 + $0x58] sm:$0xf]
        %671 = vrot.lane.b32.xlu0 %v650, 2
        %v672 = vpop.permute.xlu0 %671
        %673 = vrot.lane.b32.xlu0 %v651, 2
        %v674 = vpop.permute.xlu0 %673
        %675 = vrot.lane.b32.xlu0 %v652, 2
        %v676 = vpop.permute.xlu0 %675
        %677 = vrot.lane.b32.xlu0 %v653, 2
        %v678 = vpop.permute.xlu0 %677
        %679 = vrot.lane.b32.xlu0 %v654, 2
        %v680 = vpop.permute.xlu0 %679
        %681 = vrot.lane.b32.xlu0 %v655, 2
        %v682 = vpop.permute.xlu0 %681
        %683 = vrot.lane.b32.xlu0 %v656, 2
        %v684 = vpop.permute.xlu0 %683
        %685 = vrot.lane.b32.xlu0 %v657, 2
        %v686 = vpop.permute.xlu0 %685
        %687 = vrot.lane.b32.xlu0 %v658, 2
        %v688 = vpop.permute.xlu0 %687
        %v689 = vrot.slane %v672, 4
        %v690 = vrot.slane %v674, 4
        %v691 = vrot.slane %v676, 4
        %v692 = vrot.slane %v678, 4
        %v693 = vrot.slane %v680, 4
        %v694 = vrot.slane %v682, 4
        %v695 = vrot.slane %v684, 4
        %v696 = vrot.slane %v686, 4
        %v697 = vrot.slane %v688, 4
        %v698 = vsel %vm527, %v689, %v690
        %vm699 = vcmask 15360
        %v700 = vsel %vm699, %v672, %v698
        %v701 = vsel %vm527, %v690, %v691
        %v702 = vsel %vm699, %v674, %v701
        %v703 = vsel %vm527, %v691, %v692
        %v704 = vsel %vm699, %v676, %v703
        %v705 = vsel %vm527, %v692, %v693
        %v706 = vsel %vm699, %v678, %v705
        %v707 = vsel %vm527, %v693, %v694
        %v708 = vsel %vm699, %v680, %v707
        %v709 = vsel %vm527, %v694, %v695
        %v710 = vsel %vm699, %v682, %v709
        %v711 = vsel %vm527, %v695, %v696
        %v712 = vsel %vm699, %v684, %v711
        %v713 = vsel %vm527, %v696, %v697
        %v714 = vsel %vm699, %v686, %v713
        %723 = vst [vmem:[#allocation3 + $0x40] sm:$0xff] %v700
        %724 = vst [vmem:[#allocation3 + $0x48] sm:$0xff] %v702
        %725 = vst [vmem:[#allocation3 + $0x50] sm:$0xff] %v704
        %726 = vst [vmem:[#allocation3 + $0x58] sm:$0xff] %v706
        %727 = vst [vmem:[#allocation3 + $0x60] sm:$0xff] %v708
        %728 = vst [vmem:[#allocation3 + $0x68] sm:$0xff] %v710
        %729 = vst [vmem:[#allocation3 + $0x70] sm:$0xff] %v712
        %730 = vst [vmem:[#allocation3 + $0x78] sm:$0xff] %v714
        %v731 = vsel %vm699, %v698, %v674
        %v732 = vsel %vm699, %v701, %v676
        %v733 = vsel %vm699, %v703, %v678
        %v734 = vsel %vm699, %v705, %v680
        %v735 = vsel %vm699, %v707, %v682
        %v736 = vsel %vm699, %v709, %v684
        %v737 = vsel %vm699, %v711, %v686
        %v738 = vsel %vm699, %v713, %v688
        %747 = vst [vmem:[#allocation3 + $0x200] sm:$0xff] %v731
        %748 = vst [vmem:[#allocation3 + $0x208] sm:$0xff] %v732
        %749 = vst [vmem:[#allocation3 + $0x210] sm:$0xff] %v733
        %750 = vst [vmem:[#allocation3 + $0x218] sm:$0xff] %v734
        %751 = vst [vmem:[#allocation3 + $0x220] sm:$0xff] %v735
        %752 = vst [vmem:[#allocation3 + $0x228] sm:$0xff] %v736
        %753 = vst [vmem:[#allocation3 + $0x230] sm:$0xff] %v737
        %754 = vst [vmem:[#allocation3 + $0x238] sm:$0xff] %v738
        %756 = vrot.lane.b32.xlu0 %v659, 2
        %v757 = vpop.permute.xlu0 %756
        %v758 = vrot.slane %v757, 4
        %v759 = vsel %vm527, %v697, %v758
        %v760 = vsel %vm699, %v688, %v759
        %762 = vst [vmem:[#allocation3 + $0x3c0] sm:$0xff] %v702
        %763 = vst [vmem:[#allocation3 + $0x3c8] sm:$0xff] %v704
        %764 = vst [vmem:[#allocation3 + $0x3d0] sm:$0xff] %v706
        %765 = vst [vmem:[#allocation3 + $0x3d8] sm:$0xff] %v708
        %766 = vst [vmem:[#allocation3 + $0x3e0] sm:$0xff] %v710
        %767 = vst [vmem:[#allocation3 + $0x3e8] sm:$0xff] %v712
        %768 = vst [vmem:[#allocation3 + $0x3f0] sm:$0xff] %v714
        %769 = vst [vmem:[#allocation3 + $0x3f8] sm:$0xff] %v760
        %v770 = vsel %vm699, %v759, %v757
        %772 = vst [vmem:[#allocation3 + $0x580] sm:$0xff] %v732
        %773 = vst [vmem:[#allocation3 + $0x588] sm:$0xff] %v733
        %774 = vst [vmem:[#allocation3 + $0x590] sm:$0xff] %v734
        %775 = vst [vmem:[#allocation3 + $0x598] sm:$0xff] %v735
        %776 = vst [vmem:[#allocation3 + $0x5a0] sm:$0xff] %v736
        %777 = vst [vmem:[#allocation3 + $0x5a8] sm:$0xff] %v737
        %778 = vst [vmem:[#allocation3 + $0x5b0] sm:$0xff] %v738
        %779 = vst [vmem:[#allocation3 + $0x5b8] sm:$0xff] %v770
        %781 = vrot.lane.b32.xlu0 %v660, 2
        %v782 = vpop.permute.xlu0 %781
        %v783 = vrot.slane %v782, 4
        %v784 = vsel %vm527, %v758, %v783
        %v785 = vsel %vm699, %v757, %v784
        %787 = vst [vmem:[#allocation3 + $0x740] sm:$0xff] %v704
        %788 = vst [vmem:[#allocation3 + $0x748] sm:$0xff] %v706
        %789 = vst [vmem:[#allocation3 + $0x750] sm:$0xff] %v708
        %790 = vst [vmem:[#allocation3 + $0x758] sm:$0xff] %v710
        %791 = vst [vmem:[#allocation3 + $0x760] sm:$0xff] %v712
        %792 = vst [vmem:[#allocation3 + $0x768] sm:$0xff] %v714
        %793 = vst [vmem:[#allocation3 + $0x770] sm:$0xff] %v760
        %794 = vst [vmem:[#allocation3 + $0x778] sm:$0xff] %v785
        %v795 = vsel %vm699, %v784, %v782
        %797 = vst [vmem:[#allocation3 + $0x900] sm:$0xff] %v733
        %798 = vst [vmem:[#allocation3 + $0x908] sm:$0xff] %v734
        %799 = vst [vmem:[#allocation3 + $0x910] sm:$0xff] %v735
        %800 = vst [vmem:[#allocation3 + $0x918] sm:$0xff] %v736
        %801 = vst [vmem:[#allocation3 + $0x920] sm:$0xff] %v737
        %802 = vst [vmem:[#allocation3 + $0x928] sm:$0xff] %v738
        %803 = vst [vmem:[#allocation3 + $0x930] sm:$0xff] %v770
        %804 = vst [vmem:[#allocation3 + $0x938] sm:$0xff] %v795
        %806 = vrot.lane.b32.xlu0 %v661, 2
        %v807 = vpop.permute.xlu0 %806
        %v808 = vrot.slane %v807, 4
        %v809 = vsel %vm527, %v783, %v808
        %v810 = vsel %vm699, %v782, %v809
        %812 = vst [vmem:[#allocation3 + $0xac0] sm:$0xff] %v706
        %813 = vst [vmem:[#allocation3 + $0xac8] sm:$0xff] %v708
        %814 = vst [vmem:[#allocation3 + $0xad0] sm:$0xff] %v710
        %815 = vst [vmem:[#allocation3 + $0xad8] sm:$0xff] %v712
        %816 = vst [vmem:[#allocation3 + $0xae0] sm:$0xff] %v714
        %817 = vst [vmem:[#allocation3 + $0xae8] sm:$0xff] %v760
        %818 = vst [vmem:[#allocation3 + $0xaf0] sm:$0xff] %v785
        %819 = vst [vmem:[#allocation3 + $0xaf8] sm:$0xff] %v810
        %v820 = vld [vmem:[#allocation2] sm:$0xff]
        %v821 = vld [vmem:[#allocation2 + $0x8] sm:$0xff]
        %v822 = vld [vmem:[#allocation2 + $0x10] sm:$0xff]
        %v823 = vld [vmem:[#allocation2 + $0x18] sm:$0xff]
        %v824 = vld [vmem:[#allocation2 + $0x20] sm:$0xff]
        %v825 = vld [vmem:[#allocation2 + $0x28] sm:$0xff]
        %v826 = vld [vmem:[#allocation2 + $0x30] sm:$0xff]
        %v827 = vld [vmem:[#allocation2 + $0x38] sm:$0xff]
        %v828 = vld [vmem:[#allocation2 + $0x40] sm:$0xff]
        %v829 = vld [vmem:[#allocation2 + $0x48] sm:$0xff]
        %v830 = vld [vmem:[#allocation2 + $0x50] sm:$0xff]
        %v831 = vld [vmem:[#allocation2 + $0x58] sm:$0xf]
        %841 = vrot.lane.b32.xlu0 %v820, 1
        %v842 = vpop.permute.xlu0 %841
        %843 = vrot.lane.b32.xlu0 %v821, 1
        %v844 = vpop.permute.xlu0 %843
        %845 = vrot.lane.b32.xlu0 %v822, 1
        %v846 = vpop.permute.xlu0 %845
        %847 = vrot.lane.b32.xlu0 %v823, 1
        %v848 = vpop.permute.xlu0 %847
        %849 = vrot.lane.b32.xlu0 %v824, 1
        %v850 = vpop.permute.xlu0 %849
        %851 = vrot.lane.b32.xlu0 %v825, 1
        %v852 = vpop.permute.xlu0 %851
        %853 = vrot.lane.b32.xlu0 %v826, 1
        %v854 = vpop.permute.xlu0 %853
        %855 = vrot.lane.b32.xlu0 %v827, 1
        %v856 = vpop.permute.xlu0 %855
        %857 = vrot.lane.b32.xlu0 %v828, 1
        %v858 = vpop.permute.xlu0 %857
        %v859 = vrot.slane %v842, 4
        %v860 = vrot.slane %v844, 4
        %v861 = vrot.slane %v846, 4
        %v862 = vrot.slane %v848, 4
        %v863 = vrot.slane %v850, 4
        %v864 = vrot.slane %v852, 4
        %v865 = vrot.slane %v854, 4
        %v866 = vrot.slane %v856, 4
        %v867 = vrot.slane %v858, 4
        %v868 = vsel %vm527, %v859, %v860
        %vm869 = vcmask 7168
        %v870 = vsel %vm869, %v842, %v868
        %v871 = vsel %vm527, %v860, %v861
        %v872 = vsel %vm869, %v844, %v871
        %v873 = vsel %vm527, %v861, %v862
        %v874 = vsel %vm869, %v846, %v873
        %v875 = vsel %vm527, %v862, %v863
        %v876 = vsel %vm869, %v848, %v875
        %v877 = vsel %vm527, %v863, %v864
        %v878 = vsel %vm869, %v850, %v877
        %v879 = vsel %vm527, %v864, %v865
        %v880 = vsel %vm869, %v852, %v879
        %v881 = vsel %vm527, %v865, %v866
        %v882 = vsel %vm869, %v854, %v881
        %v883 = vsel %vm527, %v866, %v867
        %v884 = vsel %vm869, %v856, %v883
        %893 = vst [vmem:[#allocation3 + $0x80] sm:$0xff] %v870
        %894 = vst [vmem:[#allocation3 + $0x88] sm:$0xff] %v872
        %895 = vst [vmem:[#allocation3 + $0x90] sm:$0xff] %v874
        %896 = vst [vmem:[#allocation3 + $0x98] sm:$0xff] %v876
        %897 = vst [vmem:[#allocation3 + $0xa0] sm:$0xff] %v878
        %898 = vst [vmem:[#allocation3 + $0xa8] sm:$0xff] %v880
        %899 = vst [vmem:[#allocation3 + $0xb0] sm:$0xff] %v882
        %900 = vst [vmem:[#allocation3 + $0xb8] sm:$0xff] %v884
        %v901 = vsel %vm869, %v868, %v844
        %v902 = vsel %vm869, %v871, %v846
        %v903 = vsel %vm869, %v873, %v848
        %v904 = vsel %vm869, %v875, %v850
        %v905 = vsel %vm869, %v877, %v852
        %v906 = vsel %vm869, %v879, %v854
        %v907 = vsel %vm869, %v881, %v856
        %v908 = vsel %vm869, %v883, %v858
        %917 = vst [vmem:[#allocation3 + $0x240] sm:$0xff] %v901
        %918 = vst [vmem:[#allocation3 + $0x248] sm:$0xff] %v902
        %919 = vst [vmem:[#allocation3 + $0x250] sm:$0xff] %v903
        %920 = vst [vmem:[#allocation3 + $0x258] sm:$0xff] %v904
        %921 = vst [vmem:[#allocation3 + $0x260] sm:$0xff] %v905
        %922 = vst [vmem:[#allocation3 + $0x268] sm:$0xff] %v906
        %923 = vst [vmem:[#allocation3 + $0x270] sm:$0xff] %v907
        %924 = vst [vmem:[#allocation3 + $0x278] sm:$0xff] %v908
        %926 = vrot.lane.b32.xlu0 %v829, 1
        %v927 = vpop.permute.xlu0 %926
        %v928 = vrot.slane %v927, 4
        %v929 = vsel %vm527, %v867, %v928
        %v930 = vsel %vm869, %v858, %v929
        %932 = vst [vmem:[#allocation3 + $0x400] sm:$0xff] %v872
        %933 = vst [vmem:[#allocation3 + $0x408] sm:$0xff] %v874
        %934 = vst [vmem:[#allocation3 + $0x410] sm:$0xff] %v876
        %935 = vst [vmem:[#allocation3 + $0x418] sm:$0xff] %v878
        %936 = vst [vmem:[#allocation3 + $0x420] sm:$0xff] %v880
        %937 = vst [vmem:[#allocation3 + $0x428] sm:$0xff] %v882
        %938 = vst [vmem:[#allocation3 + $0x430] sm:$0xff] %v884
        %939 = vst [vmem:[#allocation3 + $0x438] sm:$0xff] %v930
        %v940 = vsel %vm869, %v929, %v927
        %942 = vst [vmem:[#allocation3 + $0x5c0] sm:$0xff] %v902
        %943 = vst [vmem:[#allocation3 + $0x5c8] sm:$0xff] %v903
        %944 = vst [vmem:[#allocation3 + $0x5d0] sm:$0xff] %v904
        %945 = vst [vmem:[#allocation3 + $0x5d8] sm:$0xff] %v905
        %946 = vst [vmem:[#allocation3 + $0x5e0] sm:$0xff] %v906
        %947 = vst [vmem:[#allocation3 + $0x5e8] sm:$0xff] %v907
        %948 = vst [vmem:[#allocation3 + $0x5f0] sm:$0xff] %v908
        %949 = vst [vmem:[#allocation3 + $0x5f8] sm:$0xff] %v940
        %951 = vrot.lane.b32.xlu0 %v830, 1
        %v952 = vpop.permute.xlu0 %951
        %v953 = vrot.slane %v952, 4
        %v954 = vsel %vm527, %v928, %v953
        %v955 = vsel %vm869, %v927, %v954
        %957 = vst [vmem:[#allocation3 + $0x780] sm:$0xff] %v874
        %958 = vst [vmem:[#allocation3 + $0x788] sm:$0xff] %v876
        %959 = vst [vmem:[#allocation3 + $0x790] sm:$0xff] %v878
        %960 = vst [vmem:[#allocation3 + $0x798] sm:$0xff] %v880
        %961 = vst [vmem:[#allocation3 + $0x7a0] sm:$0xff] %v882
        %962 = vst [vmem:[#allocation3 + $0x7a8] sm:$0xff] %v884
        %963 = vst [vmem:[#allocation3 + $0x7b0] sm:$0xff] %v930
        %964 = vst [vmem:[#allocation3 + $0x7b8] sm:$0xff] %v955
        %v965 = vsel %vm869, %v954, %v952
        %967 = vst [vmem:[#allocation3 + $0x940] sm:$0xff] %v903
        %968 = vst [vmem:[#allocation3 + $0x948] sm:$0xff] %v904
        %969 = vst [vmem:[#allocation3 + $0x950] sm:$0xff] %v905
        %970 = vst [vmem:[#allocation3 + $0x958] sm:$0xff] %v906
        %971 = vst [vmem:[#allocation3 + $0x960] sm:$0xff] %v907
        %972 = vst [vmem:[#allocation3 + $0x968] sm:$0xff] %v908
        %973 = vst [vmem:[#allocation3 + $0x970] sm:$0xff] %v940
        %974 = vst [vmem:[#allocation3 + $0x978] sm:$0xff] %v965
        %976 = vrot.lane.b32.xlu0 %v831, 1
        %v977 = vpop.permute.xlu0 %976
        %v978 = vrot.slane %v977, 4
        %v979 = vsel %vm527, %v953, %v978
        %v980 = vsel %vm869, %v952, %v979
        %982 = vst [vmem:[#allocation3 + $0xb00] sm:$0xff] %v876
        %983 = vst [vmem:[#allocation3 + $0xb08] sm:$0xff] %v878
        %984 = vst [vmem:[#allocation3 + $0xb10] sm:$0xff] %v880
        %985 = vst [vmem:[#allocation3 + $0xb18] sm:$0xff] %v882
        %986 = vst [vmem:[#allocation3 + $0xb20] sm:$0xff] %v884
        %987 = vst [vmem:[#allocation3 + $0xb28] sm:$0xff] %v930
        %988 = vst [vmem:[#allocation3 + $0xb30] sm:$0xff] %v955
        %989 = vst [vmem:[#allocation3 + $0xb38] sm:$0xff] %v980
        %v990 = vld [vmem:[#allocation2 + $0x4] sm:$0xff]
        %v991 = vld [vmem:[#allocation2 + $0xc] sm:$0xff]
        %v992 = vld [vmem:[#allocation2 + $0x14] sm:$0xff]
        %v993 = vld [vmem:[#allocation2 + $0x1c] sm:$0xff]
        %v994 = vld [vmem:[#allocation2 + $0x24] sm:$0xff]
        %v995 = vld [vmem:[#allocation2 + $0x2c] sm:$0xff]
        %v996 = vld [vmem:[#allocation2 + $0x34] sm:$0xff]
        %v997 = vld [vmem:[#allocation2 + $0x3c] sm:$0xff]
        %v998 = vld [vmem:[#allocation2 + $0x44] sm:$0xff]
        %v999 = vld [vmem:[#allocation2 + $0x4c] sm:$0xff]
        %v1000 = vld [vmem:[#allocation2 + $0x54] sm:$0xff]
        %1001 = vst [vmem:[#allocation3 + $0xc0] sm:$0xff] %v990
        %1002 = vst [vmem:[#allocation3 + $0xc8] sm:$0xff] %v991
        %1003 = vst [vmem:[#allocation3 + $0xd0] sm:$0xff] %v992
        %1004 = vst [vmem:[#allocation3 + $0xd8] sm:$0xff] %v993
        %1005 = vst [vmem:[#allocation3 + $0xe0] sm:$0xff] %v994
        %1006 = vst [vmem:[#allocation3 + $0xe8] sm:$0xff] %v995
        %1007 = vst [vmem:[#allocation3 + $0xf0] sm:$0xff] %v996
        %1008 = vst [vmem:[#allocation3 + $0xf8] sm:$0xff] %v997
        %v1018 = vrot.slane %v990, 4
        %v1019 = vrot.slane %v991, 4
        %v1020 = vrot.slane %v992, 4
        %v1021 = vrot.slane %v993, 4
        %v1022 = vrot.slane %v994, 4
        %v1023 = vrot.slane %v995, 4
        %v1024 = vrot.slane %v996, 4
        %v1025 = vrot.slane %v997, 4
        %v1026 = vrot.slane %v998, 4
        %v1027 = vsel %vm527, %v1018, %v1019
        %v1028 = vsel %vm527, %v1019, %v1020
        %v1029 = vsel %vm527, %v1020, %v1021
        %v1030 = vsel %vm527, %v1021, %v1022
        %v1031 = vsel %vm527, %v1022, %v1023
        %v1032 = vsel %vm527, %v1023, %v1024
        %v1033 = vsel %vm527, %v1024, %v1025
        %v1034 = vsel %vm527, %v1025, %v1026
        %1043 = vst [vmem:[#allocation3 + $0x280] sm:$0xff] %v1027
        %1044 = vst [vmem:[#allocation3 + $0x288] sm:$0xff] %v1028
        %1045 = vst [vmem:[#allocation3 + $0x290] sm:$0xff] %v1029
        %1046 = vst [vmem:[#allocation3 + $0x298] sm:$0xff] %v1030
        %1047 = vst [vmem:[#allocation3 + $0x2a0] sm:$0xff] %v1031
        %1048 = vst [vmem:[#allocation3 + $0x2a8] sm:$0xff] %v1032
        %1049 = vst [vmem:[#allocation3 + $0x2b0] sm:$0xff] %v1033
        %1050 = vst [vmem:[#allocation3 + $0x2b8] sm:$0xff] %v1034
        %1051 = vst [vmem:[#allocation3 + $0x440] sm:$0xff] %v991
        %1052 = vst [vmem:[#allocation3 + $0x448] sm:$0xff] %v992
        %1053 = vst [vmem:[#allocation3 + $0x450] sm:$0xff] %v993
        %1054 = vst [vmem:[#allocation3 + $0x458] sm:$0xff] %v994
        %1055 = vst [vmem:[#allocation3 + $0x460] sm:$0xff] %v995
        %1056 = vst [vmem:[#allocation3 + $0x468] sm:$0xff] %v996
        %1057 = vst [vmem:[#allocation3 + $0x470] sm:$0xff] %v997
        %1058 = vst [vmem:[#allocation3 + $0x478] sm:$0xff] %v998
        %v1060 = vrot.slane %v999, 4
        %v1061 = vsel %vm527, %v1026, %v1060
        %1063 = vst [vmem:[#allocation3 + $0x600] sm:$0xff] %v1028
        %1064 = vst [vmem:[#allocation3 + $0x608] sm:$0xff] %v1029
        %1065 = vst [vmem:[#allocation3 + $0x610] sm:$0xff] %v1030
        %1066 = vst [vmem:[#allocation3 + $0x618] sm:$0xff] %v1031
        %1067 = vst [vmem:[#allocation3 + $0x620] sm:$0xff] %v1032
        %1068 = vst [vmem:[#allocation3 + $0x628] sm:$0xff] %v1033
        %1069 = vst [vmem:[#allocation3 + $0x630] sm:$0xff] %v1034
        %1070 = vst [vmem:[#allocation3 + $0x638] sm:$0xff] %v1061
        %1071 = vst [vmem:[#allocation3 + $0x7c0] sm:$0xff] %v992
        %1072 = vst [vmem:[#allocation3 + $0x7c8] sm:$0xff] %v993
        %1073 = vst [vmem:[#allocation3 + $0x7d0] sm:$0xff] %v994
        %1074 = vst [vmem:[#allocation3 + $0x7d8] sm:$0xff] %v995
        %1075 = vst [vmem:[#allocation3 + $0x7e0] sm:$0xff] %v996
        %1076 = vst [vmem:[#allocation3 + $0x7e8] sm:$0xff] %v997
        %1077 = vst [vmem:[#allocation3 + $0x7f0] sm:$0xff] %v998
        %1078 = vst [vmem:[#allocation3 + $0x7f8] sm:$0xff] %v999
        %v1080 = vrot.slane %v1000, 4
        %v1081 = vsel %vm527, %v1060, %v1080
        %1083 = vst [vmem:[#allocation3 + $0x980] sm:$0xff] %v1029
        %1084 = vst [vmem:[#allocation3 + $0x988] sm:$0xff] %v1030
        %1085 = vst [vmem:[#allocation3 + $0x990] sm:$0xff] %v1031
        %1086 = vst [vmem:[#allocation3 + $0x998] sm:$0xff] %v1032
        %1087 = vst [vmem:[#allocation3 + $0x9a0] sm:$0xff] %v1033
        %1088 = vst [vmem:[#allocation3 + $0x9a8] sm:$0xff] %v1034
        %1089 = vst [vmem:[#allocation3 + $0x9b0] sm:$0xff] %v1061
        %1090 = vst [vmem:[#allocation3 + $0x9b8] sm:$0xff] %v1081
        %1091 = vst [vmem:[#allocation3 + $0xb40] sm:$0xff] %v993
        %1092 = vst [vmem:[#allocation3 + $0xb48] sm:$0xff] %v994
        %1093 = vst [vmem:[#allocation3 + $0xb50] sm:$0xff] %v995
        %1094 = vst [vmem:[#allocation3 + $0xb58] sm:$0xff] %v996
        %1095 = vst [vmem:[#allocation3 + $0xb60] sm:$0xff] %v997
        %1096 = vst [vmem:[#allocation3 + $0xb68] sm:$0xff] %v998
        %1097 = vst [vmem:[#allocation3 + $0xb70] sm:$0xff] %v999
        %1098 = vst [vmem:[#allocation3 + $0xb78] sm:$0xff] %v1000
        %v1099 = vld [vmem:[#allocation2 + $0x4] sm:$0xff]
        %v1100 = vld [vmem:[#allocation2 + $0xc] sm:$0xff]
        %v1101 = vld [vmem:[#allocation2 + $0x14] sm:$0xff]
        %v1102 = vld [vmem:[#allocation2 + $0x1c] sm:$0xff]
        %v1103 = vld [vmem:[#allocation2 + $0x24] sm:$0xff]
        %v1104 = vld [vmem:[#allocation2 + $0x2c] sm:$0xff]
        %v1105 = vld [vmem:[#allocation2 + $0x34] sm:$0xff]
        %v1106 = vld [vmem:[#allocation2 + $0x3c] sm:$0xff]
        %v1107 = vld [vmem:[#allocation2 + $0x44] sm:$0xff]
        %v1108 = vld [vmem:[#allocation2 + $0x4c] sm:$0xff]
        %v1109 = vld [vmem:[#allocation2 + $0x54] sm:$0xff]
        %v1110 = vld [vmem:[#allocation2 + $0x5c] sm:$0xf]
        %1120 = vrot.lane.b32.xlu0 %v1099, 127
        %v1121 = vpop.permute.xlu0 %1120
        %1122 = vrot.lane.b32.xlu0 %v1100, 127
        %v1123 = vpop.permute.xlu0 %1122
        %1124 = vrot.lane.b32.xlu0 %v1101, 127
        %v1125 = vpop.permute.xlu0 %1124
        %1126 = vrot.lane.b32.xlu0 %v1102, 127
        %v1127 = vpop.permute.xlu0 %1126
        %1128 = vrot.lane.b32.xlu0 %v1103, 127
        %v1129 = vpop.permute.xlu0 %1128
        %1130 = vrot.lane.b32.xlu0 %v1104, 127
        %v1131 = vpop.permute.xlu0 %1130
        %1132 = vrot.lane.b32.xlu0 %v1105, 127
        %v1133 = vpop.permute.xlu0 %1132
        %1134 = vrot.lane.b32.xlu0 %v1106, 127
        %v1135 = vpop.permute.xlu0 %1134
        %1136 = vrot.lane.b32.xlu0 %v1107, 127
        %v1137 = vpop.permute.xlu0 %1136
        %v1138 = vrot.slane %v1121, 4
        %v1139 = vrot.slane %v1123, 4
        %v1140 = vrot.slane %v1125, 4
        %v1141 = vrot.slane %v1127, 4
        %v1142 = vrot.slane %v1129, 4
        %v1143 = vrot.slane %v1131, 4
        %v1144 = vrot.slane %v1133, 4
        %v1145 = vrot.slane %v1135, 4
        %v1146 = vrot.slane %v1137, 4
        %v1147 = vsel %vm527, %v1138, %v1139
        %vm1148 = vcmask 1039360
        %v1149 = vsel %vm1148, %v1121, %v1147
        %v1150 = vsel %vm527, %v1139, %v1140
        %v1151 = vsel %vm1148, %v1123, %v1150
        %v1152 = vsel %vm527, %v1140, %v1141
        %v1153 = vsel %vm1148, %v1125, %v1152
        %v1154 = vsel %vm527, %v1141, %v1142
        %v1155 = vsel %vm1148, %v1127, %v1154
        %v1156 = vsel %vm527, %v1142, %v1143
        %v1157 = vsel %vm1148, %v1129, %v1156
        %v1158 = vsel %vm527, %v1143, %v1144
        %v1159 = vsel %vm1148, %v1131, %v1158
        %v1160 = vsel %vm527, %v1144, %v1145
        %v1161 = vsel %vm1148, %v1133, %v1160
        %v1162 = vsel %vm527, %v1145, %v1146
        %v1163 = vsel %vm1148, %v1135, %v1162
        %1172 = vst [vmem:[#allocation3 + $0x100] sm:$0xff] %v1149
        %1173 = vst [vmem:[#allocation3 + $0x108] sm:$0xff] %v1151
        %1174 = vst [vmem:[#allocation3 + $0x110] sm:$0xff] %v1153
        %1175 = vst [vmem:[#allocation3 + $0x118] sm:$0xff] %v1155
        %1176 = vst [vmem:[#allocation3 + $0x120] sm:$0xff] %v1157
        %1177 = vst [vmem:[#allocation3 + $0x128] sm:$0xff] %v1159
        %1178 = vst [vmem:[#allocation3 + $0x130] sm:$0xff] %v1161
        %1179 = vst [vmem:[#allocation3 + $0x138] sm:$0xff] %v1163
        %v1180 = vsel %vm1148, %v1147, %v1123
        %v1181 = vsel %vm1148, %v1150, %v1125
        %v1182 = vsel %vm1148, %v1152, %v1127
        %v1183 = vsel %vm1148, %v1154, %v1129
        %v1184 = vsel %vm1148, %v1156, %v1131
        %v1185 = vsel %vm1148, %v1158, %v1133
        %v1186 = vsel %vm1148, %v1160, %v1135
        %v1187 = vsel %vm1148, %v1162, %v1137
        %1196 = vst [vmem:[#allocation3 + $0x2c0] sm:$0xff] %v1180
        %1197 = vst [vmem:[#allocation3 + $0x2c8] sm:$0xff] %v1181
        %1198 = vst [vmem:[#allocation3 + $0x2d0] sm:$0xff] %v1182
        %1199 = vst [vmem:[#allocation3 + $0x2d8] sm:$0xff] %v1183
        %1200 = vst [vmem:[#allocation3 + $0x2e0] sm:$0xff] %v1184
        %1201 = vst [vmem:[#allocation3 + $0x2e8] sm:$0xff] %v1185
        %1202 = vst [vmem:[#allocation3 + $0x2f0] sm:$0xff] %v1186
        %1203 = vst [vmem:[#allocation3 + $0x2f8] sm:$0xff] %v1187
        %1205 = vrot.lane.b32.xlu0 %v1108, 127
        %v1206 = vpop.permute.xlu0 %1205
        %v1207 = vrot.slane %v1206, 4
        %v1208 = vsel %vm527, %v1146, %v1207
        %v1209 = vsel %vm1148, %v1137, %v1208
        %1211 = vst [vmem:[#allocation3 + $0x480] sm:$0xff] %v1151
        %1212 = vst [vmem:[#allocation3 + $0x488] sm:$0xff] %v1153
        %1213 = vst [vmem:[#allocation3 + $0x490] sm:$0xff] %v1155
        %1214 = vst [vmem:[#allocation3 + $0x498] sm:$0xff] %v1157
        %1215 = vst [vmem:[#allocation3 + $0x4a0] sm:$0xff] %v1159
        %1216 = vst [vmem:[#allocation3 + $0x4a8] sm:$0xff] %v1161
        %1217 = vst [vmem:[#allocation3 + $0x4b0] sm:$0xff] %v1163
        %1218 = vst [vmem:[#allocation3 + $0x4b8] sm:$0xff] %v1209
        %v1219 = vsel %vm1148, %v1208, %v1206
        %1221 = vst [vmem:[#allocation3 + $0x640] sm:$0xff] %v1181
        %1222 = vst [vmem:[#allocation3 + $0x648] sm:$0xff] %v1182
        %1223 = vst [vmem:[#allocation3 + $0x650] sm:$0xff] %v1183
        %1224 = vst [vmem:[#allocation3 + $0x658] sm:$0xff] %v1184
        %1225 = vst [vmem:[#allocation3 + $0x660] sm:$0xff] %v1185
        %1226 = vst [vmem:[#allocation3 + $0x668] sm:$0xff] %v1186
        %1227 = vst [vmem:[#allocation3 + $0x670] sm:$0xff] %v1187
        %1228 = vst [vmem:[#allocation3 + $0x678] sm:$0xff] %v1219
        %1230 = vrot.lane.b32.xlu0 %v1109, 127
        %v1231 = vpop.permute.xlu0 %1230
        %v1232 = vrot.slane %v1231, 4
        %v1233 = vsel %vm527, %v1207, %v1232
        %v1234 = vsel %vm1148, %v1206, %v1233
        %1236 = vst [vmem:[#allocation3 + $0x800] sm:$0xff] %v1153
        %1237 = vst [vmem:[#allocation3 + $0x808] sm:$0xff] %v1155
        %1238 = vst [vmem:[#allocation3 + $0x810] sm:$0xff] %v1157
        %1239 = vst [vmem:[#allocation3 + $0x818] sm:$0xff] %v1159
        %1240 = vst [vmem:[#allocation3 + $0x820] sm:$0xff] %v1161
        %1241 = vst [vmem:[#allocation3 + $0x828] sm:$0xff] %v1163
        %1242 = vst [vmem:[#allocation3 + $0x830] sm:$0xff] %v1209
        %1243 = vst [vmem:[#allocation3 + $0x838] sm:$0xff] %v1234
        %v1244 = vsel %vm1148, %v1233, %v1231
        %1246 = vst [vmem:[#allocation3 + $0x9c0] sm:$0xff] %v1182
        %1247 = vst [vmem:[#allocation3 + $0x9c8] sm:$0xff] %v1183
        %1248 = vst [vmem:[#allocation3 + $0x9d0] sm:$0xff] %v1184
        %1249 = vst [vmem:[#allocation3 + $0x9d8] sm:$0xff] %v1185
        %1250 = vst [vmem:[#allocation3 + $0x9e0] sm:$0xff] %v1186
        %1251 = vst [vmem:[#allocation3 + $0x9e8] sm:$0xff] %v1187
        %1252 = vst [vmem:[#allocation3 + $0x9f0] sm:$0xff] %v1219
        %1253 = vst [vmem:[#allocation3 + $0x9f8] sm:$0xff] %v1244
        %1255 = vrot.lane.b32.xlu0 %v1110, 127
        %v1256 = vpop.permute.xlu0 %1255
        %v1257 = vrot.slane %v1256, 4
        %v1258 = vsel %vm527, %v1232, %v1257
        %v1259 = vsel %vm1148, %v1231, %v1258
        %1261 = vst [vmem:[#allocation3 + $0xb80] sm:$0xff] %v1155
        %1262 = vst [vmem:[#allocation3 + $0xb88] sm:$0xff] %v1157
        %1263 = vst [vmem:[#allocation3 + $0xb90] sm:$0xff] %v1159
        %1264 = vst [vmem:[#allocation3 + $0xb98] sm:$0xff] %v1161
        %1265 = vst [vmem:[#allocation3 + $0xba0] sm:$0xff] %v1163
        %1266 = vst [vmem:[#allocation3 + $0xba8] sm:$0xff] %v1209
        %1267 = vst [vmem:[#allocation3 + $0xbb0] sm:$0xff] %v1234
        %1268 = vst [vmem:[#allocation3 + $0xbb8] sm:$0xff] %v1259
        %v1269 = vld [vmem:[#allocation2 + $0x4] sm:$0xff]
        %v1270 = vld [vmem:[#allocation2 + $0xc] sm:$0xff]
        %v1271 = vld [vmem:[#allocation2 + $0x14] sm:$0xff]
        %v1272 = vld [vmem:[#allocation2 + $0x1c] sm:$0xff]
        %v1273 = vld [vmem:[#allocation2 + $0x24] sm:$0xff]
        %v1274 = vld [vmem:[#allocation2 + $0x2c] sm:$0xff]
        %v1275 = vld [vmem:[#allocation2 + $0x34] sm:$0xff]
        %v1276 = vld [vmem:[#allocation2 + $0x3c] sm:$0xff]
        %v1277 = vld [vmem:[#allocation2 + $0x44] sm:$0xff]
        %v1278 = vld [vmem:[#allocation2 + $0x4c] sm:$0xff]
        %v1279 = vld [vmem:[#allocation2 + $0x54] sm:$0xff]
        %v1280 = vld [vmem:[#allocation2 + $0x5c] sm:$0xf]
        %1290 = vrot.lane.b32.xlu0 %v1269, 126
        %v1291 = vpop.permute.xlu0 %1290
        %1292 = vrot.lane.b32.xlu0 %v1270, 126
        %v1293 = vpop.permute.xlu0 %1292
        %1294 = vrot.lane.b32.xlu0 %v1271, 126
        %v1295 = vpop.permute.xlu0 %1294
        %1296 = vrot.lane.b32.xlu0 %v1272, 126
        %v1297 = vpop.permute.xlu0 %1296
        %1298 = vrot.lane.b32.xlu0 %v1273, 126
        %v1299 = vpop.permute.xlu0 %1298
        %1300 = vrot.lane.b32.xlu0 %v1274, 126
        %v1301 = vpop.permute.xlu0 %1300
        %1302 = vrot.lane.b32.xlu0 %v1275, 126
        %v1303 = vpop.permute.xlu0 %1302
        %1304 = vrot.lane.b32.xlu0 %v1276, 126
        %v1305 = vpop.permute.xlu0 %1304
        %1306 = vrot.lane.b32.xlu0 %v1277, 126
        %v1307 = vpop.permute.xlu0 %1306
        %v1308 = vrot.slane %v1291, 4
        %v1309 = vrot.slane %v1293, 4
        %v1310 = vrot.slane %v1295, 4
        %v1311 = vrot.slane %v1297, 4
        %v1312 = vrot.slane %v1299, 4
        %v1313 = vrot.slane %v1301, 4
        %v1314 = vrot.slane %v1303, 4
        %v1315 = vrot.slane %v1305, 4
        %v1316 = vrot.slane %v1307, 4
        %v1317 = vsel %vm527, %v1308, %v1309
        %vm1318 = vcmask 1031168
        %v1319 = vsel %vm1318, %v1291, %v1317
        %v1320 = vsel %vm527, %v1309, %v1310
        %v1321 = vsel %vm1318, %v1293, %v1320
        %v1322 = vsel %vm527, %v1310, %v1311
        %v1323 = vsel %vm1318, %v1295, %v1322
        %v1324 = vsel %vm527, %v1311, %v1312
        %v1325 = vsel %vm1318, %v1297, %v1324
        %v1326 = vsel %vm527, %v1312, %v1313
        %v1327 = vsel %vm1318, %v1299, %v1326
        %v1328 = vsel %vm527, %v1313, %v1314
        %v1329 = vsel %vm1318, %v1301, %v1328
        %v1330 = vsel %vm527, %v1314, %v1315
        %v1331 = vsel %vm1318, %v1303, %v1330
        %v1332 = vsel %vm527, %v1315, %v1316
        %v1333 = vsel %vm1318, %v1305, %v1332
        %1342 = vst [vmem:[#allocation3 + $0x140] sm:$0xff] %v1319
        %1343 = vst [vmem:[#allocation3 + $0x148] sm:$0xff] %v1321
        %1344 = vst [vmem:[#allocation3 + $0x150] sm:$0xff] %v1323
        %1345 = vst [vmem:[#allocation3 + $0x158] sm:$0xff] %v1325
        %1346 = vst [vmem:[#allocation3 + $0x160] sm:$0xff] %v1327
        %1347 = vst [vmem:[#allocation3 + $0x168] sm:$0xff] %v1329
        %1348 = vst [vmem:[#allocation3 + $0x170] sm:$0xff] %v1331
        %1349 = vst [vmem:[#allocation3 + $0x178] sm:$0xff] %v1333
        %v1350 = vsel %vm1318, %v1317, %v1293
        %v1351 = vsel %vm1318, %v1320, %v1295
        %v1352 = vsel %vm1318, %v1322, %v1297
        %v1353 = vsel %vm1318, %v1324, %v1299
        %v1354 = vsel %vm1318, %v1326, %v1301
        %v1355 = vsel %vm1318, %v1328, %v1303
        %v1356 = vsel %vm1318, %v1330, %v1305
        %v1357 = vsel %vm1318, %v1332, %v1307
        %1366 = vst [vmem:[#allocation3 + $0x300] sm:$0xff] %v1350
        %1367 = vst [vmem:[#allocation3 + $0x308] sm:$0xff] %v1351
        %1368 = vst [vmem:[#allocation3 + $0x310] sm:$0xff] %v1352
        %1369 = vst [vmem:[#allocation3 + $0x318] sm:$0xff] %v1353
        %1370 = vst [vmem:[#allocation3 + $0x320] sm:$0xff] %v1354
        %1371 = vst [vmem:[#allocation3 + $0x328] sm:$0xff] %v1355
        %1372 = vst [vmem:[#allocation3 + $0x330] sm:$0xff] %v1356
        %1373 = vst [vmem:[#allocation3 + $0x338] sm:$0xff] %v1357
        %1375 = vrot.lane.b32.xlu0 %v1278, 126
        %v1376 = vpop.permute.xlu0 %1375
        %v1377 = vrot.slane %v1376, 4
        %v1378 = vsel %vm527, %v1316, %v1377
        %v1379 = vsel %vm1318, %v1307, %v1378
        %1381 = vst [vmem:[#allocation3 + $0x4c0] sm:$0xff] %v1321
        %1382 = vst [vmem:[#allocation3 + $0x4c8] sm:$0xff] %v1323
        %1383 = vst [vmem:[#allocation3 + $0x4d0] sm:$0xff] %v1325
        %1384 = vst [vmem:[#allocation3 + $0x4d8] sm:$0xff] %v1327
        %1385 = vst [vmem:[#allocation3 + $0x4e0] sm:$0xff] %v1329
        %1386 = vst [vmem:[#allocation3 + $0x4e8] sm:$0xff] %v1331
        %1387 = vst [vmem:[#allocation3 + $0x4f0] sm:$0xff] %v1333
        %1388 = vst [vmem:[#allocation3 + $0x4f8] sm:$0xff] %v1379
        %v1389 = vsel %vm1318, %v1378, %v1376
        %1391 = vst [vmem:[#allocation3 + $0x680] sm:$0xff] %v1351
        %1392 = vst [vmem:[#allocation3 + $0x688] sm:$0xff] %v1352
        %1393 = vst [vmem:[#allocation3 + $0x690] sm:$0xff] %v1353
        %1394 = vst [vmem:[#allocation3 + $0x698] sm:$0xff] %v1354
        %1395 = vst [vmem:[#allocation3 + $0x6a0] sm:$0xff] %v1355
        %1396 = vst [vmem:[#allocation3 + $0x6a8] sm:$0xff] %v1356
        %1397 = vst [vmem:[#allocation3 + $0x6b0] sm:$0xff] %v1357
        %1398 = vst [vmem:[#allocation3 + $0x6b8] sm:$0xff] %v1389
        %1400 = vrot.lane.b32.xlu0 %v1279, 126
        %v1401 = vpop.permute.xlu0 %1400
        %v1402 = vrot.slane %v1401, 4
        %v1403 = vsel %vm527, %v1377, %v1402
        %v1404 = vsel %vm1318, %v1376, %v1403
        %1406 = vst [vmem:[#allocation3 + $0x840] sm:$0xff] %v1323
        %1407 = vst [vmem:[#allocation3 + $0x848] sm:$0xff] %v1325
        %1408 = vst [vmem:[#allocation3 + $0x850] sm:$0xff] %v1327
        %1409 = vst [vmem:[#allocation3 + $0x858] sm:$0xff] %v1329
        %1410 = vst [vmem:[#allocation3 + $0x860] sm:$0xff] %v1331
        %1411 = vst [vmem:[#allocation3 + $0x868] sm:$0xff] %v1333
        %1412 = vst [vmem:[#allocation3 + $0x870] sm:$0xff] %v1379
        %1413 = vst [vmem:[#allocation3 + $0x878] sm:$0xff] %v1404
        %v1414 = vsel %vm1318, %v1403, %v1401
        %1416 = vst [vmem:[#allocation3 + $0xa00] sm:$0xff] %v1352
        %1417 = vst [vmem:[#allocation3 + $0xa08] sm:$0xff] %v1353
        %1418 = vst [vmem:[#allocation3 + $0xa10] sm:$0xff] %v1354
        %1419 = vst [vmem:[#allocation3 + $0xa18] sm:$0xff] %v1355
        %1420 = vst [vmem:[#allocation3 + $0xa20] sm:$0xff] %v1356
        %1421 = vst [vmem:[#allocation3 + $0xa28] sm:$0xff] %v1357
        %1422 = vst [vmem:[#allocation3 + $0xa30] sm:$0xff] %v1389
        %1423 = vst [vmem:[#allocation3 + $0xa38] sm:$0xff] %v1414
        %1425 = vrot.lane.b32.xlu0 %v1280, 126
        %v1426 = vpop.permute.xlu0 %1425
        %v1427 = vrot.slane %v1426, 4
        %v1428 = vsel %vm527, %v1402, %v1427
        %v1429 = vsel %vm1318, %v1401, %v1428
        %1431 = vst [vmem:[#allocation3 + $0xbc0] sm:$0xff] %v1325
        %1432 = vst [vmem:[#allocation3 + $0xbc8] sm:$0xff] %v1327
        %1433 = vst [vmem:[#allocation3 + $0xbd0] sm:$0xff] %v1329
        %1434 = vst [vmem:[#allocation3 + $0xbd8] sm:$0xff] %v1331
        %1435 = vst [vmem:[#allocation3 + $0xbe0] sm:$0xff] %v1333
        %1436 = vst [vmem:[#allocation3 + $0xbe8] sm:$0xff] %v1379
        %1437 = vst [vmem:[#allocation3 + $0xbf0] sm:$0xff] %v1404
        %1438 = vst [vmem:[#allocation3 + $0xbf8] sm:$0xff] %v1429
        %v1439 = vld [vmem:[#allocation2 + $0x4] sm:$0xff]
        %v1440 = vld [vmem:[#allocation2 + $0xc] sm:$0xff]
        %v1441 = vld [vmem:[#allocation2 + $0x14] sm:$0xff]
        %v1442 = vld [vmem:[#allocation2 + $0x1c] sm:$0xff]
        %v1443 = vld [vmem:[#allocation2 + $0x24] sm:$0xff]
        %v1444 = vld [vmem:[#allocation2 + $0x2c] sm:$0xff]
        %v1445 = vld [vmem:[#allocation2 + $0x34] sm:$0xff]
        %v1446 = vld [vmem:[#allocation2 + $0x3c] sm:$0xff]
        %v1447 = vld [vmem:[#allocation2 + $0x44] sm:$0xff]
        %v1448 = vld [vmem:[#allocation2 + $0x4c] sm:$0xff]
        %v1449 = vld [vmem:[#allocation2 + $0x54] sm:$0xff]
        %v1450 = vld [vmem:[#allocation2 + $0x5c] sm:$0xf]
        %1460 = vrot.lane.b32.xlu0 %v1439, 125
        %v1461 = vpop.permute.xlu0 %1460
        %1462 = vrot.lane.b32.xlu0 %v1440, 125
        %v1463 = vpop.permute.xlu0 %1462
        %1464 = vrot.lane.b32.xlu0 %v1441, 125
        %v1465 = vpop.permute.xlu0 %1464
        %1466 = vrot.lane.b32.xlu0 %v1442, 125
        %v1467 = vpop.permute.xlu0 %1466
        %1468 = vrot.lane.b32.xlu0 %v1443, 125
        %v1469 = vpop.permute.xlu0 %1468
        %1470 = vrot.lane.b32.xlu0 %v1444, 125
        %v1471 = vpop.permute.xlu0 %1470
        %1472 = vrot.lane.b32.xlu0 %v1445, 125
        %v1473 = vpop.permute.xlu0 %1472
        %1474 = vrot.lane.b32.xlu0 %v1446, 125
        %v1475 = vpop.permute.xlu0 %1474
        %1476 = vrot.lane.b32.xlu0 %v1447, 125
        %v1477 = vpop.permute.xlu0 %1476
        %v1478 = vrot.slane %v1461, 4
        %v1479 = vrot.slane %v1463, 4
        %v1480 = vrot.slane %v1465, 4
        %v1481 = vrot.slane %v1467, 4
        %v1482 = vrot.slane %v1469, 4
        %v1483 = vrot.slane %v1471, 4
        %v1484 = vrot.slane %v1473, 4
        %v1485 = vrot.slane %v1475, 4
        %v1486 = vrot.slane %v1477, 4
        %v1487 = vsel %vm527, %v1478, %v1479
        %vm1488 = vcmask 1022976
        %v1489 = vsel %vm1488, %v1461, %v1487
        %v1490 = vsel %vm527, %v1479, %v1480
        %v1491 = vsel %vm1488, %v1463, %v1490
        %v1492 = vsel %vm527, %v1480, %v1481
        %v1493 = vsel %vm1488, %v1465, %v1492
        %v1494 = vsel %vm527, %v1481, %v1482
        %v1495 = vsel %vm1488, %v1467, %v1494
        %v1496 = vsel %vm527, %v1482, %v1483
        %v1497 = vsel %vm1488, %v1469, %v1496
        %v1498 = vsel %vm527, %v1483, %v1484
        %v1499 = vsel %vm1488, %v1471, %v1498
        %v1500 = vsel %vm527, %v1484, %v1485
        %v1501 = vsel %vm1488, %v1473, %v1500
        %v1502 = vsel %vm527, %v1485, %v1486
        %v1503 = vsel %vm1488, %v1475, %v1502
        %1512 = vst [vmem:[#allocation3 + $0x180] sm:$0xff] %v1489
        %1513 = vst [vmem:[#allocation3 + $0x188] sm:$0xff] %v1491
        %1514 = vst [vmem:[#allocation3 + $0x190] sm:$0xff] %v1493
        %1515 = vst [vmem:[#allocation3 + $0x198] sm:$0xff] %v1495
        %1516 = vst [vmem:[#allocation3 + $0x1a0] sm:$0xff] %v1497
        %1517 = vst [vmem:[#allocation3 + $0x1a8] sm:$0xff] %v1499
        %1518 = vst [vmem:[#allocation3 + $0x1b0] sm:$0xff] %v1501
        %1519 = vst [vmem:[#allocation3 + $0x1b8] sm:$0xff] %v1503
        %v1520 = vsel %vm1488, %v1487, %v1463
        %v1521 = vsel %vm1488, %v1490, %v1465
        %v1522 = vsel %vm1488, %v1492, %v1467
        %v1523 = vsel %vm1488, %v1494, %v1469
        %v1524 = vsel %vm1488, %v1496, %v1471
        %v1525 = vsel %vm1488, %v1498, %v1473
        %v1526 = vsel %vm1488, %v1500, %v1475
        %v1527 = vsel %vm1488, %v1502, %v1477
        %1536 = vst [vmem:[#allocation3 + $0x340] sm:$0xff] %v1520
        %1537 = vst [vmem:[#allocation3 + $0x348] sm:$0xff] %v1521
        %1538 = vst [vmem:[#allocation3 + $0x350] sm:$0xff] %v1522
        %1539 = vst [vmem:[#allocation3 + $0x358] sm:$0xff] %v1523
        %1540 = vst [vmem:[#allocation3 + $0x360] sm:$0xff] %v1524
        %1541 = vst [vmem:[#allocation3 + $0x368] sm:$0xff] %v1525
        %1542 = vst [vmem:[#allocation3 + $0x370] sm:$0xff] %v1526
        %1543 = vst [vmem:[#allocation3 + $0x378] sm:$0xff] %v1527
        %1545 = vrot.lane.b32.xlu0 %v1448, 125
        %v1546 = vpop.permute.xlu0 %1545
        %v1547 = vrot.slane %v1546, 4
        %v1548 = vsel %vm527, %v1486, %v1547
        %v1549 = vsel %vm1488, %v1477, %v1548
        %1551 = vst [vmem:[#allocation3 + $0x500] sm:$0xff] %v1491
        %1552 = vst [vmem:[#allocation3 + $0x508] sm:$0xff] %v1493
        %1553 = vst [vmem:[#allocation3 + $0x510] sm:$0xff] %v1495
        %1554 = vst [vmem:[#allocation3 + $0x518] sm:$0xff] %v1497
        %1555 = vst [vmem:[#allocation3 + $0x520] sm:$0xff] %v1499
        %1556 = vst [vmem:[#allocation3 + $0x528] sm:$0xff] %v1501
        %1557 = vst [vmem:[#allocation3 + $0x530] sm:$0xff] %v1503
        %1558 = vst [vmem:[#allocation3 + $0x538] sm:$0xff] %v1549
        %v1559 = vsel %vm1488, %v1548, %v1546
        %1561 = vst [vmem:[#allocation3 + $0x6c0] sm:$0xff] %v1521
        %1562 = vst [vmem:[#allocation3 + $0x6c8] sm:$0xff] %v1522
        %1563 = vst [vmem:[#allocation3 + $0x6d0] sm:$0xff] %v1523
        %1564 = vst [vmem:[#allocation3 + $0x6d8] sm:$0xff] %v1524
        %1565 = vst [vmem:[#allocation3 + $0x6e0] sm:$0xff] %v1525
        %1566 = vst [vmem:[#allocation3 + $0x6e8] sm:$0xff] %v1526
        %1567 = vst [vmem:[#allocation3 + $0x6f0] sm:$0xff] %v1527
        %1568 = vst [vmem:[#allocation3 + $0x6f8] sm:$0xff] %v1559
        %1570 = vrot.lane.b32.xlu0 %v1449, 125
        %v1571 = vpop.permute.xlu0 %1570
        %v1572 = vrot.slane %v1571, 4
        %v1573 = vsel %vm527, %v1547, %v1572
        %v1574 = vsel %vm1488, %v1546, %v1573
        %1576 = vst [vmem:[#allocation3 + $0x880] sm:$0xff] %v1493
        %1577 = vst [vmem:[#allocation3 + $0x888] sm:$0xff] %v1495
        %1578 = vst [vmem:[#allocation3 + $0x890] sm:$0xff] %v1497
        %1579 = vst [vmem:[#allocation3 + $0x898] sm:$0xff] %v1499
        %1580 = vst [vmem:[#allocation3 + $0x8a0] sm:$0xff] %v1501
        %1581 = vst [vmem:[#allocation3 + $0x8a8] sm:$0xff] %v1503
        %1582 = vst [vmem:[#allocation3 + $0x8b0] sm:$0xff] %v1549
        %1583 = vst [vmem:[#allocation3 + $0x8b8] sm:$0xff] %v1574
        %v1584 = vsel %vm1488, %v1573, %v1571
        %1586 = vst [vmem:[#allocation3 + $0xa40] sm:$0xff] %v1522
        %1587 = vst [vmem:[#allocation3 + $0xa48] sm:$0xff] %v1523
        %1588 = vst [vmem:[#allocation3 + $0xa50] sm:$0xff] %v1524
        %1589 = vst [vmem:[#allocation3 + $0xa58] sm:$0xff] %v1525
        %1590 = vst [vmem:[#allocation3 + $0xa60] sm:$0xff] %v1526
        %1591 = vst [vmem:[#allocation3 + $0xa68] sm:$0xff] %v1527
        %1592 = vst [vmem:[#allocation3 + $0xa70] sm:$0xff] %v1559
        %1593 = vst [vmem:[#allocation3 + $0xa78] sm:$0xff] %v1584
        %1595 = vrot.lane.b32.xlu0 %v1450, 125
        %v1596 = vpop.permute.xlu0 %1595
        %v1597 = vrot.slane %v1596, 4
        %v1598 = vsel %vm527, %v1572, %v1597
        %v1599 = vsel %vm1488, %v1571, %v1598
        %1601 = vst [vmem:[#allocation3 + $0xc00] sm:$0xff] %v1495
        %1602 = vst [vmem:[#allocation3 + $0xc08] sm:$0xff] %v1497
        %1603 = vst [vmem:[#allocation3 + $0xc10] sm:$0xff] %v1499
        %1604 = vst [vmem:[#allocation3 + $0xc18] sm:$0xff] %v1501
        %1605 = vst [vmem:[#allocation3 + $0xc20] sm:$0xff] %v1503
        %1606 = vst [vmem:[#allocation3 + $0xc28] sm:$0xff] %v1549
        %1607 = vst [vmem:[#allocation3 + $0xc30] sm:$0xff] %v1574
        %1608 = vst [vmem:[#allocation3 + $0xc38] sm:$0xff] %v1599
        %v1609 = vld [vmem:[%s2] sm:$0xff]
        %v1610 = vld [vmem:[%s2 + $0x8] sm:$0xff]
        %v1611 = vld [vmem:[#allocation3] sm:$0xff]
        %v1612 = vld [vmem:[#allocation3 + $0x8] sm:$0xff]
        %v1613 = vld [vmem:[#allocation3 + $0x10] sm:$0xff]
        %v1614 = vld [vmem:[#allocation3 + $0x18] sm:$0xff]
        %v1615 = vld [vmem:[#allocation3 + $0x20] sm:$0xff]
        %v1616 = vld [vmem:[#allocation3 + $0x28] sm:$0xff]
        %v1617 = vld [vmem:[#allocation3 + $0x30] sm:$0xff]
        %v1618 = vld [vmem:[#allocation3 + $0x38] sm:$0xff]
        %v1619 = vld [vmem:[#allocation3 + $0x40] sm:$0xff]
        %v1620 = vld [vmem:[#allocation3 + $0x48] sm:$0xff]
        %v1621 = vld [vmem:[#allocation3 + $0x50] sm:$0xff]
        %v1622 = vld [vmem:[#allocation3 + $0x58] sm:$0xff]
        %v1623 = vld [vmem:[#allocation3 + $0x60] sm:$0xff]
        %v1624 = vld [vmem:[#allocation3 + $0x68] sm:$0xff]
        %v1625 = vld [vmem:[#allocation3 + $0x70] sm:$0xff]
        %v1626 = vld [vmem:[#allocation3 + $0x78] sm:$0xff]
        %v1627 = vld [vmem:[#allocation3 + $0x80] sm:$0xff]
        %v1628 = vld [vmem:[#allocation3 + $0x88] sm:$0xff]
        %v1629 = vld [vmem:[#allocation3 + $0x90] sm:$0xff]
        %v1630 = vld [vmem:[#allocation3 + $0x98] sm:$0xff]
        %v1631 = vld [vmem:[#allocation3 + $0xa0] sm:$0xff]
        %v1632 = vld [vmem:[#allocation3 + $0xa8] sm:$0xff]
        %v1633 = vld [vmem:[#allocation3 + $0xb0] sm:$0xff]
        %v1634 = vld [vmem:[#allocation3 + $0xb8] sm:$0xff]
        %v1635 = vld [vmem:[#allocation3 + $0xc0] sm:$0xff]
        %v1636 = vld [vmem:[#allocation3 + $0xc8] sm:$0xff]
        %v1637 = vld [vmem:[#allocation3 + $0xd0] sm:$0xff]
        %v1638 = vld [vmem:[#allocation3 + $0xd8] sm:$0xff]
        %v1639 = vld [vmem:[#allocation3 + $0xe0] sm:$0xff]
        %v1640 = vld [vmem:[#allocation3 + $0xe8] sm:$0xff]
        %v1641 = vld [vmem:[#allocation3 + $0xf0] sm:$0xff]
        %v1642 = vld [vmem:[#allocation3 + $0xf8] sm:$0xff]
        %v1643 = vld [vmem:[#allocation3 + $0x100] sm:$0xff]
        %v1644 = vld [vmem:[#allocation3 + $0x108] sm:$0xff]
        %v1645 = vld [vmem:[#allocation3 + $0x110] sm:$0xff]
        %v1646 = vld [vmem:[#allocation3 + $0x118] sm:$0xff]
        %v1647 = vld [vmem:[#allocation3 + $0x120] sm:$0xff]
        %v1648 = vld [vmem:[#allocation3 + $0x128] sm:$0xff]
        %v1649 = vld [vmem:[#allocation3 + $0x130] sm:$0xff]
        %v1650 = vld [vmem:[#allocation3 + $0x138] sm:$0xff]
        %v1651 = vld [vmem:[#allocation3 + $0x140] sm:$0xff]
        %v1652 = vld [vmem:[#allocation3 + $0x148] sm:$0xff]
        %v1653 = vld [vmem:[#allocation3 + $0x150] sm:$0xff]
        %v1654 = vld [vmem:[#allocation3 + $0x158] sm:$0xff]
        %v1655 = vld [vmem:[#allocation3 + $0x160] sm:$0xff]
        %v1656 = vld [vmem:[#allocation3 + $0x168] sm:$0xff]
        %v1657 = vld [vmem:[#allocation3 + $0x170] sm:$0xff]
        %v1658 = vld [vmem:[#allocation3 + $0x178] sm:$0xff]
        %v1659 = vld [vmem:[#allocation3 + $0x180] sm:$0xff]
        %v1660 = vld [vmem:[#allocation3 + $0x188] sm:$0xff]
        %v1661 = vld [vmem:[#allocation3 + $0x190] sm:$0xff]
        %v1662 = vld [vmem:[#allocation3 + $0x198] sm:$0xff]
        %v1663 = vld [vmem:[#allocation3 + $0x1a0] sm:$0xff]
        %v1664 = vld [vmem:[#allocation3 + $0x1a8] sm:$0xff]
        %v1665 = vld [vmem:[#allocation3 + $0x1b0] sm:$0xff]
        %v1666 = vld [vmem:[#allocation3 + $0x1b8] sm:$0xff]
        %v1667 = vld [vmem:[#allocation3 + $0x1c0] sm:$0xff]
        %v1668 = vld [vmem:[#allocation3 + $0x1c8] sm:$0xff]
        %v1669 = vld [vmem:[#allocation3 + $0x1d0] sm:$0xff]
        %v1670 = vld [vmem:[#allocation3 + $0x1d8] sm:$0xff]
        %v1671 = vld [vmem:[#allocation3 + $0x1e0] sm:$0xff]
        %v1672 = vld [vmem:[#allocation3 + $0x1e8] sm:$0xff]
        %v1673 = vld [vmem:[#allocation3 + $0x1f0] sm:$0xff]
        %v1674 = vld [vmem:[#allocation3 + $0x1f8] sm:$0xff]
        %v1675 = vld [vmem:[#allocation3 + $0x200] sm:$0xff]
        %v1676 = vld [vmem:[#allocation3 + $0x208] sm:$0xff]
        %v1677 = vld [vmem:[#allocation3 + $0x210] sm:$0xff]
        %v1678 = vld [vmem:[#allocation3 + $0x218] sm:$0xff]
        %v1679 = vld [vmem:[#allocation3 + $0x220] sm:$0xff]
        %v1680 = vld [vmem:[#allocation3 + $0x228] sm:$0xff]
        %v1681 = vld [vmem:[#allocation3 + $0x230] sm:$0xff]
        %v1682 = vld [vmem:[#allocation3 + $0x238] sm:$0xff]
        %v1683 = vld [vmem:[#allocation3 + $0x240] sm:$0xff]
        %v1684 = vld [vmem:[#allocation3 + $0x248] sm:$0xff]
        %v1685 = vld [vmem:[#allocation3 + $0x250] sm:$0xff]
        %v1686 = vld [vmem:[#allocation3 + $0x258] sm:$0xff]
        %v1687 = vld [vmem:[#allocation3 + $0x260] sm:$0xff]
        %v1688 = vld [vmem:[#allocation3 + $0x268] sm:$0xff]
        %v1689 = vld [vmem:[#allocation3 + $0x270] sm:$0xff]
        %v1690 = vld [vmem:[#allocation3 + $0x278] sm:$0xff]
        %v1691 = vld [vmem:[#allocation3 + $0x280] sm:$0xff]
        %v1692 = vld [vmem:[#allocation3 + $0x288] sm:$0xff]
        %v1693 = vld [vmem:[#allocation3 + $0x290] sm:$0xff]
        %v1694 = vld [vmem:[#allocation3 + $0x298] sm:$0xff]
        %v1695 = vld [vmem:[#allocation3 + $0x2a0] sm:$0xff]
        %v1696 = vld [vmem:[#allocation3 + $0x2a8] sm:$0xff]
        %v1697 = vld [vmem:[#allocation3 + $0x2b0] sm:$0xff]
        %v1698 = vld [vmem:[#allocation3 + $0x2b8] sm:$0xff]
        %v1699 = vld [vmem:[#allocation3 + $0x2c0] sm:$0xff]
        %v1700 = vld [vmem:[#allocation3 + $0x2c8] sm:$0xff]
        %v1701 = vld [vmem:[#allocation3 + $0x2d0] sm:$0xff]
        %v1702 = vld [vmem:[#allocation3 + $0x2d8] sm:$0xff]
        %v1703 = vld [vmem:[#allocation3 + $0x2e0] sm:$0xff]
        %v1704 = vld [vmem:[#allocation3 + $0x2e8] sm:$0xff]
        %v1705 = vld [vmem:[#allocation3 + $0x2f0] sm:$0xff]
        %v1706 = vld [vmem:[#allocation3 + $0x2f8] sm:$0xff]
        %v1707 = vld [vmem:[#allocation3 + $0x300] sm:$0xff]
        %v1708 = vld [vmem:[#allocation3 + $0x308] sm:$0xff]
        %v1709 = vld [vmem:[#allocation3 + $0x310] sm:$0xff]
        %v1710 = vld [vmem:[#allocation3 + $0x318] sm:$0xff]
        %v1711 = vld [vmem:[#allocation3 + $0x320] sm:$0xff]
        %v1712 = vld [vmem:[#allocation3 + $0x328] sm:$0xff]
        %v1713 = vld [vmem:[#allocation3 + $0x330] sm:$0xff]
        %v1714 = vld [vmem:[#allocation3 + $0x338] sm:$0xff]
        %v1715 = vld [vmem:[#allocation3 + $0x340] sm:$0xff]
        %v1716 = vld [vmem:[#allocation3 + $0x348] sm:$0xff]
        %v1717 = vld [vmem:[#allocation3 + $0x350] sm:$0xff]
        %v1718 = vld [vmem:[#allocation3 + $0x358] sm:$0xff]
        %v1719 = vld [vmem:[#allocation3 + $0x360] sm:$0xff]
        %v1720 = vld [vmem:[#allocation3 + $0x368] sm:$0xff]
        %v1721 = vld [vmem:[#allocation3 + $0x370] sm:$0xff]
        %v1722 = vld [vmem:[#allocation3 + $0x378] sm:$0xff]
        %v1723 = vld [vmem:[#allocation3 + $0x380] sm:$0xff]
        %v1724 = vld [vmem:[#allocation3 + $0x388] sm:$0xff]
        %v1725 = vld [vmem:[#allocation3 + $0x390] sm:$0xff]
        %v1726 = vld [vmem:[#allocation3 + $0x398] sm:$0xff]
        %v1727 = vld [vmem:[#allocation3 + $0x3a0] sm:$0xff]
        %v1728 = vld [vmem:[#allocation3 + $0x3a8] sm:$0xff]
        %v1729 = vld [vmem:[#allocation3 + $0x3b0] sm:$0xff]
        %v1730 = vld [vmem:[#allocation3 + $0x3b8] sm:$0xff]
        %v1731 = vld [vmem:[#allocation3 + $0x3c0] sm:$0xff]
        %v1732 = vld [vmem:[#allocation3 + $0x3c8] sm:$0xff]
        %v1733 = vld [vmem:[#allocation3 + $0x3d0] sm:$0xff]
        %v1734 = vld [vmem:[#allocation3 + $0x3d8] sm:$0xff]
        %v1735 = vld [vmem:[#allocation3 + $0x3e0] sm:$0xff]
        %v1736 = vld [vmem:[#allocation3 + $0x3e8] sm:$0xff]
        %v1737 = vld [vmem:[#allocation3 + $0x3f0] sm:$0xff]
        %v1738 = vld [vmem:[#allocation3 + $0x3f8] sm:$0xff]
        %v1739 = vld [vmem:[#allocation3 + $0x400] sm:$0xff]
        %v1740 = vld [vmem:[#allocation3 + $0x408] sm:$0xff]
        %v1741 = vld [vmem:[#allocation3 + $0x410] sm:$0xff]
        %v1742 = vld [vmem:[#allocation3 + $0x418] sm:$0xff]
        %v1743 = vld [vmem:[#allocation3 + $0x420] sm:$0xff]
        %v1744 = vld [vmem:[#allocation3 + $0x428] sm:$0xff]
        %v1745 = vld [vmem:[#allocation3 + $0x430] sm:$0xff]
        %v1746 = vld [vmem:[#allocation3 + $0x438] sm:$0xff]
        %v1747 = vld [vmem:[#allocation3 + $0x440] sm:$0xff]
        %v1748 = vld [vmem:[#allocation3 + $0x448] sm:$0xff]
        %v1749 = vld [vmem:[#allocation3 + $0x450] sm:$0xff]
        %v1750 = vld [vmem:[#allocation3 + $0x458] sm:$0xff]
        %v1751 = vld [vmem:[#allocation3 + $0x460] sm:$0xff]
        %v1752 = vld [vmem:[#allocation3 + $0x468] sm:$0xff]
        %v1753 = vld [vmem:[#allocation3 + $0x470] sm:$0xff]
        %v1754 = vld [vmem:[#allocation3 + $0x478] sm:$0xff]
        %v1755 = vld [vmem:[#allocation3 + $0x480] sm:$0xff]
        %v1756 = vld [vmem:[#allocation3 + $0x488] sm:$0xff]
        %v1757 = vld [vmem:[#allocation3 + $0x490] sm:$0xff]
        %v1758 = vld [vmem:[#allocation3 + $0x498] sm:$0xff]
        %v1759 = vld [vmem:[#allocation3 + $0x4a0] sm:$0xff]
        %v1760 = vld [vmem:[#allocation3 + $0x4a8] sm:$0xff]
        %v1761 = vld [vmem:[#allocation3 + $0x4b0] sm:$0xff]
        %v1762 = vld [vmem:[#allocation3 + $0x4b8] sm:$0xff]
        %v1763 = vld [vmem:[#allocation3 + $0x4c0] sm:$0xff]
        %v1764 = vld [vmem:[#allocation3 + $0x4c8] sm:$0xff]
        %v1765 = vld [vmem:[#allocation3 + $0x4d0] sm:$0xff]
        %v1766 = vld [vmem:[#allocation3 + $0x4d8] sm:$0xff]
        %v1767 = vld [vmem:[#allocation3 + $0x4e0] sm:$0xff]
        %v1768 = vld [vmem:[#allocation3 + $0x4e8] sm:$0xff]
        %v1769 = vld [vmem:[#allocation3 + $0x4f0] sm:$0xff]
        %v1770 = vld [vmem:[#allocation3 + $0x4f8] sm:$0xff]
        %v1771 = vld [vmem:[#allocation3 + $0x500] sm:$0xff]
        %v1772 = vld [vmem:[#allocation3 + $0x508] sm:$0xff]
        %v1773 = vld [vmem:[#allocation3 + $0x510] sm:$0xff]
        %v1774 = vld [vmem:[#allocation3 + $0x518] sm:$0xff]
        %v1775 = vld [vmem:[#allocation3 + $0x520] sm:$0xff]
        %v1776 = vld [vmem:[#allocation3 + $0x528] sm:$0xff]
        %v1777 = vld [vmem:[#allocation3 + $0x530] sm:$0xff]
        %v1778 = vld [vmem:[#allocation3 + $0x538] sm:$0xff]
        %v1779 = vld [vmem:[#allocation3 + $0x540] sm:$0xff]
        %v1780 = vld [vmem:[#allocation3 + $0x548] sm:$0xff]
        %v1781 = vld [vmem:[#allocation3 + $0x550] sm:$0xff]
        %v1782 = vld [vmem:[#allocation3 + $0x558] sm:$0xff]
        %v1783 = vld [vmem:[#allocation3 + $0x560] sm:$0xff]
        %v1784 = vld [vmem:[#allocation3 + $0x568] sm:$0xff]
        %v1785 = vld [vmem:[#allocation3 + $0x570] sm:$0xff]
        %v1786 = vld [vmem:[#allocation3 + $0x578] sm:$0xff]
        %v1787 = vld [vmem:[#allocation3 + $0x580] sm:$0xff]
        %v1788 = vld [vmem:[#allocation3 + $0x588] sm:$0xff]
        %v1789 = vld [vmem:[#allocation3 + $0x590] sm:$0xff]
        %v1790 = vld [vmem:[#allocation3 + $0x598] sm:$0xff]
        %v1791 = vld [vmem:[#allocation3 + $0x5a0] sm:$0xff]
        %v1792 = vld [vmem:[#allocation3 + $0x5a8] sm:$0xff]
        %v1793 = vld [vmem:[#allocation3 + $0x5b0] sm:$0xff]
        %v1794 = vld [vmem:[#allocation3 + $0x5b8] sm:$0xff]
        %v1795 = vld [vmem:[#allocation3 + $0x5c0] sm:$0xff]
        %v1796 = vld [vmem:[#allocation3 + $0x5c8] sm:$0xff]
        %v1797 = vld [vmem:[#allocation3 + $0x5d0] sm:$0xff]
        %v1798 = vld [vmem:[#allocation3 + $0x5d8] sm:$0xff]
        %v1799 = vld [vmem:[#allocation3 + $0x5e0] sm:$0xff]
        %v1800 = vld [vmem:[#allocation3 + $0x5e8] sm:$0xff]
        %v1801 = vld [vmem:[#allocation3 + $0x5f0] sm:$0xff]
        %v1802 = vld [vmem:[#allocation3 + $0x5f8] sm:$0xff]
        %v1803 = vld [vmem:[#allocation3 + $0x600] sm:$0xff]
        %v1804 = vld [vmem:[#allocation3 + $0x608] sm:$0xff]
        %v1805 = vld [vmem:[#allocation3 + $0x610] sm:$0xff]
        %v1806 = vld [vmem:[#allocation3 + $0x618] sm:$0xff]
        %v1807 = vld [vmem:[#allocation3 + $0x620] sm:$0xff]
        %v1808 = vld [vmem:[#allocation3 + $0x628] sm:$0xff]
        %v1809 = vld [vmem:[#allocation3 + $0x630] sm:$0xff]
        %v1810 = vld [vmem:[#allocation3 + $0x638] sm:$0xff]
        %v1811 = vld [vmem:[#allocation3 + $0x640] sm:$0xff]
        %v1812 = vld [vmem:[#allocation3 + $0x648] sm:$0xff]
        %v1813 = vld [vmem:[#allocation3 + $0x650] sm:$0xff]
        %v1814 = vld [vmem:[#allocation3 + $0x658] sm:$0xff]
        %v1815 = vld [vmem:[#allocation3 + $0x660] sm:$0xff]
        %v1816 = vld [vmem:[#allocation3 + $0x668] sm:$0xff]
        %v1817 = vld [vmem:[#allocation3 + $0x670] sm:$0xff]
        %v1818 = vld [vmem:[#allocation3 + $0x678] sm:$0xff]
        %v1819 = vld [vmem:[#allocation3 + $0x680] sm:$0xff]
        %v1820 = vld [vmem:[#allocation3 + $0x688] sm:$0xff]
        %v1821 = vld [vmem:[#allocation3 + $0x690] sm:$0xff]
        %v1822 = vld [vmem:[#allocation3 + $0x698] sm:$0xff]
        %v1823 = vld [vmem:[#allocation3 + $0x6a0] sm:$0xff]
        %v1824 = vld [vmem:[#allocation3 + $0x6a8] sm:$0xff]
        %v1825 = vld [vmem:[#allocation3 + $0x6b0] sm:$0xff]
        %v1826 = vld [vmem:[#allocation3 + $0x6b8] sm:$0xff]
        %v1827 = vld [vmem:[#allocation3 + $0x6c0] sm:$0xff]
        %v1828 = vld [vmem:[#allocation3 + $0x6c8] sm:$0xff]
        %v1829 = vld [vmem:[#allocation3 + $0x6d0] sm:$0xff]
        %v1830 = vld [vmem:[#allocation3 + $0x6d8] sm:$0xff]
        %v1831 = vld [vmem:[#allocation3 + $0x6e0] sm:$0xff]
        %v1832 = vld [vmem:[#allocation3 + $0x6e8] sm:$0xff]
        %v1833 = vld [vmem:[#allocation3 + $0x6f0] sm:$0xff]
        %v1834 = vld [vmem:[#allocation3 + $0x6f8] sm:$0xff]
        %v1835 = vld [vmem:[#allocation3 + $0x700] sm:$0xff]
        %v1836 = vld [vmem:[#allocation3 + $0x708] sm:$0xff]
        %v1837 = vld [vmem:[#allocation3 + $0x710] sm:$0xff]
        %v1838 = vld [vmem:[#allocation3 + $0x718] sm:$0xff]
        %v1839 = vld [vmem:[#allocation3 + $0x720] sm:$0xff]
        %v1840 = vld [vmem:[#allocation3 + $0x728] sm:$0xff]
        %v1841 = vld [vmem:[#allocation3 + $0x730] sm:$0xff]
        %v1842 = vld [vmem:[#allocation3 + $0x738] sm:$0xff]
        %v1843 = vld [vmem:[#allocation3 + $0x740] sm:$0xff]
        %v1844 = vld [vmem:[#allocation3 + $0x748] sm:$0xff]
        %v1845 = vld [vmem:[#allocation3 + $0x750] sm:$0xff]
        %v1846 = vld [vmem:[#allocation3 + $0x758] sm:$0xff]
        %v1847 = vld [vmem:[#allocation3 + $0x760] sm:$0xff]
        %v1848 = vld [vmem:[#allocation3 + $0x768] sm:$0xff]
        %v1849 = vld [vmem:[#allocation3 + $0x770] sm:$0xff]
        %v1850 = vld [vmem:[#allocation3 + $0x778] sm:$0xff]
        %v1851 = vld [vmem:[#allocation3 + $0x780] sm:$0xff]
        %v1852 = vld [vmem:[#allocation3 + $0x788] sm:$0xff]
        %v1853 = vld [vmem:[#allocation3 + $0x790] sm:$0xff]
        %v1854 = vld [vmem:[#allocation3 + $0x798] sm:$0xff]
        %v1855 = vld [vmem:[#allocation3 + $0x7a0] sm:$0xff]
        %v1856 = vld [vmem:[#allocation3 + $0x7a8] sm:$0xff]
        %v1857 = vld [vmem:[#allocation3 + $0x7b0] sm:$0xff]
        %v1858 = vld [vmem:[#allocation3 + $0x7b8] sm:$0xff]
        %v1859 = vld [vmem:[#allocation3 + $0x7c0] sm:$0xff]
        %v1860 = vld [vmem:[#allocation3 + $0x7c8] sm:$0xff]
        %v1861 = vld [vmem:[#allocation3 + $0x7d0] sm:$0xff]
        %v1862 = vld [vmem:[#allocation3 + $0x7d8] sm:$0xff]
        %v1863 = vld [vmem:[#allocation3 + $0x7e0] sm:$0xff]
        %v1864 = vld [vmem:[#allocation3 + $0x7e8] sm:$0xff]
        %v1865 = vld [vmem:[#allocation3 + $0x7f0] sm:$0xff]
        %v1866 = vld [vmem:[#allocation3 + $0x7f8] sm:$0xff]
        %v1867 = vld [vmem:[#allocation3 + $0x800] sm:$0xff]
        %v1868 = vld [vmem:[#allocation3 + $0x808] sm:$0xff]
        %v1869 = vld [vmem:[#allocation3 + $0x810] sm:$0xff]
        %v1870 = vld [vmem:[#allocation3 + $0x818] sm:$0xff]
        %v1871 = vld [vmem:[#allocation3 + $0x820] sm:$0xff]
        %v1872 = vld [vmem:[#allocation3 + $0x828] sm:$0xff]
        %v1873 = vld [vmem:[#allocation3 + $0x830] sm:$0xff]
        %v1874 = vld [vmem:[#allocation3 + $0x838] sm:$0xff]
        %v1875 = vld [vmem:[#allocation3 + $0x840] sm:$0xff]
        %v1876 = vld [vmem:[#allocation3 + $0x848] sm:$0xff]
        %v1877 = vld [vmem:[#allocation3 + $0x850] sm:$0xff]
        %v1878 = vld [vmem:[#allocation3 + $0x858] sm:$0xff]
        %v1879 = vld [vmem:[#allocation3 + $0x860] sm:$0xff]
        %v1880 = vld [vmem:[#allocation3 + $0x868] sm:$0xff]
        %v1881 = vld [vmem:[#allocation3 + $0x870] sm:$0xff]
        %v1882 = vld [vmem:[#allocation3 + $0x878] sm:$0xff]
        %v1883 = vld [vmem:[#allocation3 + $0x880] sm:$0xff]
        %v1884 = vld [vmem:[#allocation3 + $0x888] sm:$0xff]
        %v1885 = vld [vmem:[#allocation3 + $0x890] sm:$0xff]
        %v1886 = vld [vmem:[#allocation3 + $0x898] sm:$0xff]
        %v1887 = vld [vmem:[#allocation3 + $0x8a0] sm:$0xff]
        %v1888 = vld [vmem:[#allocation3 + $0x8a8] sm:$0xff]
        %v1889 = vld [vmem:[#allocation3 + $0x8b0] sm:$0xff]
        %v1890 = vld [vmem:[#allocation3 + $0x8b8] sm:$0xff]
        %v1891 = vld [vmem:[#allocation3 + $0x8c0] sm:$0xff]
        %v1892 = vld [vmem:[#allocation3 + $0x8c8] sm:$0xff]
        %v1893 = vld [vmem:[#allocation3 + $0x8d0] sm:$0xff]
        %v1894 = vld [vmem:[#allocation3 + $0x8d8] sm:$0xff]
        %v1895 = vld [vmem:[#allocation3 + $0x8e0] sm:$0xff]
        %v1896 = vld [vmem:[#allocation3 + $0x8e8] sm:$0xff]
        %v1897 = vld [vmem:[#allocation3 + $0x8f0] sm:$0xff]
        %v1898 = vld [vmem:[#allocation3 + $0x8f8] sm:$0xff]
        %v1899 = vld [vmem:[#allocation3 + $0x900] sm:$0xff]
        %v1900 = vld [vmem:[#allocation3 + $0x908] sm:$0xff]
        %v1901 = vld [vmem:[#allocation3 + $0x910] sm:$0xff]
        %v1902 = vld [vmem:[#allocation3 + $0x918] sm:$0xff]
        %v1903 = vld [vmem:[#allocation3 + $0x920] sm:$0xff]
        %v1904 = vld [vmem:[#allocation3 + $0x928] sm:$0xff]
        %v1905 = vld [vmem:[#allocation3 + $0x930] sm:$0xff]
        %v1906 = vld [vmem:[#allocation3 + $0x938] sm:$0xff]
        %v1907 = vld [vmem:[#allocation3 + $0x940] sm:$0xff]
        %v1908 = vld [vmem:[#allocation3 + $0x948] sm:$0xff]
        %v1909 = vld [vmem:[#allocation3 + $0x950] sm:$0xff]
        %v1910 = vld [vmem:[#allocation3 + $0x958] sm:$0xff]
        %v1911 = vld [vmem:[#allocation3 + $0x960] sm:$0xff]
        %v1912 = vld [vmem:[#allocation3 + $0x968] sm:$0xff]
        %v1913 = vld [vmem:[#allocation3 + $0x970] sm:$0xff]
        %v1914 = vld [vmem:[#allocation3 + $0x978] sm:$0xff]
        %v1915 = vld [vmem:[#allocation3 + $0x980] sm:$0xff]
        %v1916 = vld [vmem:[#allocation3 + $0x988] sm:$0xff]
        %v1917 = vld [vmem:[#allocation3 + $0x990] sm:$0xff]
        %v1918 = vld [vmem:[#allocation3 + $0x998] sm:$0xff]
        %v1919 = vld [vmem:[#allocation3 + $0x9a0] sm:$0xff]
        %v1920 = vld [vmem:[#allocation3 + $0x9a8] sm:$0xff]
        %v1921 = vld [vmem:[#allocation3 + $0x9b0] sm:$0xff]
        %v1922 = vld [vmem:[#allocation3 + $0x9b8] sm:$0xff]
        %v1923 = vld [vmem:[#allocation3 + $0x9c0] sm:$0xff]
        %v1924 = vld [vmem:[#allocation3 + $0x9c8] sm:$0xff]
        %v1925 = vld [vmem:[#allocation3 + $0x9d0] sm:$0xff]
        %v1926 = vld [vmem:[#allocation3 + $0x9d8] sm:$0xff]
        %v1927 = vld [vmem:[#allocation3 + $0x9e0] sm:$0xff]
        %v1928 = vld [vmem:[#allocation3 + $0x9e8] sm:$0xff]
        %v1929 = vld [vmem:[#allocation3 + $0x9f0] sm:$0xff]
        %v1930 = vld [vmem:[#allocation3 + $0x9f8] sm:$0xff]
        %v1931 = vld [vmem:[#allocation3 + $0xa00] sm:$0xff]
        %v1932 = vld [vmem:[#allocation3 + $0xa08] sm:$0xff]
        %v1933 = vld [vmem:[#allocation3 + $0xa10] sm:$0xff]
        %v1934 = vld [vmem:[#allocation3 + $0xa18] sm:$0xff]
        %v1935 = vld [vmem:[#allocation3 + $0xa20] sm:$0xff]
        %v1936 = vld [vmem:[#allocation3 + $0xa28] sm:$0xff]
        %v1937 = vld [vmem:[#allocation3 + $0xa30] sm:$0xff]
        %v1938 = vld [vmem:[#allocation3 + $0xa38] sm:$0xff]
        %v1939 = vld [vmem:[#allocation3 + $0xa40] sm:$0xff]
        %v1940 = vld [vmem:[#allocation3 + $0xa48] sm:$0xff]
        %v1941 = vld [vmem:[#allocation3 + $0xa50] sm:$0xff]
        %v1942 = vld [vmem:[#allocation3 + $0xa58] sm:$0xff]
        %v1943 = vld [vmem:[#allocation3 + $0xa60] sm:$0xff]
        %v1944 = vld [vmem:[#allocation3 + $0xa68] sm:$0xff]
        %v1945 = vld [vmem:[#allocation3 + $0xa70] sm:$0xff]
        %v1946 = vld [vmem:[#allocation3 + $0xa78] sm:$0xff]
        %v1947 = vld [vmem:[#allocation3 + $0xa80] sm:$0xff]
        %v1948 = vld [vmem:[#allocation3 + $0xa88] sm:$0xff]
        %v1949 = vld [vmem:[#allocation3 + $0xa90] sm:$0xff]
        %v1950 = vld [vmem:[#allocation3 + $0xa98] sm:$0xff]
        %v1951 = vld [vmem:[#allocation3 + $0xaa0] sm:$0xff]
        %v1952 = vld [vmem:[#allocation3 + $0xaa8] sm:$0xff]
        %v1953 = vld [vmem:[#allocation3 + $0xab0] sm:$0xff]
        %v1954 = vld [vmem:[#allocation3 + $0xab8] sm:$0xff]
        %v1955 = vld [vmem:[#allocation3 + $0xac0] sm:$0xff]
        %v1956 = vld [vmem:[#allocation3 + $0xac8] sm:$0xff]
        %v1957 = vld [vmem:[#allocation3 + $0xad0] sm:$0xff]
        %v1958 = vld [vmem:[#allocation3 + $0xad8] sm:$0xff]
        %v1959 = vld [vmem:[#allocation3 + $0xae0] sm:$0xff]
        %v1960 = vld [vmem:[#allocation3 + $0xae8] sm:$0xff]
        %v1961 = vld [vmem:[#allocation3 + $0xaf0] sm:$0xff]
        %v1962 = vld [vmem:[#allocation3 + $0xaf8] sm:$0xff]
        %v1963 = vld [vmem:[#allocation3 + $0xb00] sm:$0xff]
        %v1964 = vld [vmem:[#allocation3 + $0xb08] sm:$0xff]
        %v1965 = vld [vmem:[#allocation3 + $0xb10] sm:$0xff]
        %v1966 = vld [vmem:[#allocation3 + $0xb18] sm:$0xff]
        %v1967 = vld [vmem:[#allocation3 + $0xb20] sm:$0xff]
        %v1968 = vld [vmem:[#allocation3 + $0xb28] sm:$0xff]
        %v1969 = vld [vmem:[#allocation3 + $0xb30] sm:$0xff]
        %v1970 = vld [vmem:[#allocation3 + $0xb38] sm:$0xff]
        %v1971 = vld [vmem:[#allocation3 + $0xb40] sm:$0xff]
        %v1972 = vld [vmem:[#allocation3 + $0xb48] sm:$0xff]
        %v1973 = vld [vmem:[#allocation3 + $0xb50] sm:$0xff]
        %v1974 = vld [vmem:[#allocation3 + $0xb58] sm:$0xff]
        %v1975 = vld [vmem:[#allocation3 + $0xb60] sm:$0xff]
        %v1976 = vld [vmem:[#allocation3 + $0xb68] sm:$0xff]
        %v1977 = vld [vmem:[#allocation3 + $0xb70] sm:$0xff]
        %v1978 = vld [vmem:[#allocation3 + $0xb78] sm:$0xff]
        %v1979 = vld [vmem:[#allocation3 + $0xb80] sm:$0xff]
        %v1980 = vld [vmem:[#allocation3 + $0xb88] sm:$0xff]
        %v1981 = vld [vmem:[#allocation3 + $0xb90] sm:$0xff]
        %v1982 = vld [vmem:[#allocation3 + $0xb98] sm:$0xff]
        %v1983 = vld [vmem:[#allocation3 + $0xba0] sm:$0xff]
        %v1984 = vld [vmem:[#allocation3 + $0xba8] sm:$0xff]
        %v1985 = vld [vmem:[#allocation3 + $0xbb0] sm:$0xff]
        %v1986 = vld [vmem:[#allocation3 + $0xbb8] sm:$0xff]
        %v1987 = vld [vmem:[#allocation3 + $0xbc0] sm:$0xff]
        %v1988 = vld [vmem:[#allocation3 + $0xbc8] sm:$0xff]
        %v1989 = vld [vmem:[#allocation3 + $0xbd0] sm:$0xff]
        %v1990 = vld [vmem:[#allocation3 + $0xbd8] sm:$0xff]
        %v1991 = vld [vmem:[#allocation3 + $0xbe0] sm:$0xff]
        %v1992 = vld [vmem:[#allocation3 + $0xbe8] sm:$0xff]
        %v1993 = vld [vmem:[#allocation3 + $0xbf0] sm:$0xff]
        %v1994 = vld [vmem:[#allocation3 + $0xbf8] sm:$0xff]
        %v1995 = vld [vmem:[#allocation3 + $0xc00] sm:$0xff]
        %v1996 = vld [vmem:[#allocation3 + $0xc08] sm:$0xff]
        %v1997 = vld [vmem:[#allocation3 + $0xc10] sm:$0xff]
        %v1998 = vld [vmem:[#allocation3 + $0xc18] sm:$0xff]
        %v1999 = vld [vmem:[#allocation3 + $0xc20] sm:$0xff]
        %v2000 = vld [vmem:[#allocation3 + $0xc28] sm:$0xff]
        %v2001 = vld [vmem:[#allocation3 + $0xc30] sm:$0xff]
        %v2002 = vld [vmem:[#allocation3 + $0xc38] sm:$0xff]
        %v2003 = vld [vmem:[%s3] sm:$0xff]
        %2005 = vset.pattern.permute.xlu0 0
        %2006 = vperm.xlu0 %2005, %v2003
        %v2007 = vpop.permute.xlu0 %2006
        %v2011 = vunpack.c.l.b16 %v1609
        %v2012 = vunpack.c.h.b16 %v1609
        %v2013 = vunpack.c.l.b16 %v1610
        %v2014 = vunpack.c.h.b16 %v1610
        %v2015 = vpack.c.b16 %v2011, %v2011
        %v2016 = vpack.c.b16 %v2012, %v2012
        %v2017 = vpack.c.b16 %v2013, %v2013
        %v2018 = vpack.c.b16 %v2014, %v2014
        %v2414 = vunpack.c.l.b16 %v1611
        %v2415 = vunpack.c.h.b16 %v1611
        %v2416 = vunpack.c.l.b16 %v1612
        %v2417 = vunpack.c.h.b16 %v1612
        %v2418 = vunpack.c.l.b16 %v1613
        %v2419 = vunpack.c.h.b16 %v1613
        %v2420 = vunpack.c.l.b16 %v1614
        %v2421 = vunpack.c.h.b16 %v1614
        %v2422 = vunpack.c.l.b16 %v1615
        %v2423 = vunpack.c.h.b16 %v1615
        %v2424 = vunpack.c.l.b16 %v1616
        %v2425 = vunpack.c.h.b16 %v1616
        %v2426 = vunpack.c.l.b16 %v1617
        %v2427 = vunpack.c.h.b16 %v1617
        %v2428 = vunpack.c.l.b16 %v1618
        %v2429 = vunpack.c.h.b16 %v1618
        %v2430 = vunpack.c.l.b16 %v1619
        %v2431 = vunpack.c.h.b16 %v1619
        %v2432 = vunpack.c.l.b16 %v1620
        %v2433 = vunpack.c.h.b16 %v1620
        %v2434 = vunpack.c.l.b16 %v1621
        %v2435 = vunpack.c.h.b16 %v1621
        %v2436 = vunpack.c.l.b16 %v1622
        %v2437 = vunpack.c.h.b16 %v1622
        %v2438 = vunpack.c.l.b16 %v1623
        %v2439 = vunpack.c.h.b16 %v1623
        %v2440 = vunpack.c.l.b16 %v1624
        %v2441 = vunpack.c.h.b16 %v1624
        %v2442 = vunpack.c.l.b16 %v1625
        %v2443 = vunpack.c.h.b16 %v1625
        %v2444 = vunpack.c.l.b16 %v1626
        %v2445 = vunpack.c.h.b16 %v1626
        %v2446 = vunpack.c.l.b16 %v1627
        %v2447 = vunpack.c.h.b16 %v1627
        %v2448 = vunpack.c.l.b16 %v1628
        %v2449 = vunpack.c.h.b16 %v1628
        %v2450 = vunpack.c.l.b16 %v1629
        %v2451 = vunpack.c.h.b16 %v1629
        %v2452 = vunpack.c.l.b16 %v1630
        %v2453 = vunpack.c.h.b16 %v1630
        %v2454 = vunpack.c.l.b16 %v1631
        %v2455 = vunpack.c.h.b16 %v1631
        %v2456 = vunpack.c.l.b16 %v1632
        %v2457 = vunpack.c.h.b16 %v1632
        %v2458 = vunpack.c.l.b16 %v1633
        %v2459 = vunpack.c.h.b16 %v1633
        %v2460 = vunpack.c.l.b16 %v1634
        %v2461 = vunpack.c.h.b16 %v1634
        %v2462 = vunpack.c.l.b16 %v1635
        %v2463 = vunpack.c.h.b16 %v1635
        %v2464 = vunpack.c.l.b16 %v1636
        %v2465 = vunpack.c.h.b16 %v1636
        %v2466 = vunpack.c.l.b16 %v1637
        %v2467 = vunpack.c.h.b16 %v1637
        %v2468 = vunpack.c.l.b16 %v1638
        %v2469 = vunpack.c.h.b16 %v1638
        %v2470 = vunpack.c.l.b16 %v1639
        %v2471 = vunpack.c.h.b16 %v1639
        %v2472 = vunpack.c.l.b16 %v1640
        %v2473 = vunpack.c.h.b16 %v1640
        %v2474 = vunpack.c.l.b16 %v1641
        %v2475 = vunpack.c.h.b16 %v1641
        %v2476 = vunpack.c.l.b16 %v1642
        %v2477 = vunpack.c.h.b16 %v1642
        %v2478 = vunpack.c.l.b16 %v1643
        %v2479 = vunpack.c.h.b16 %v1643
        %v2480 = vunpack.c.l.b16 %v1644
        %v2481 = vunpack.c.h.b16 %v1644
        %v2482 = vunpack.c.l.b16 %v1645
        %v2483 = vunpack.c.h.b16 %v1645
        %v2484 = vunpack.c.l.b16 %v1646
        %v2485 = vunpack.c.h.b16 %v1646
        %v2486 = vunpack.c.l.b16 %v1647
        %v2487 = vunpack.c.h.b16 %v1647
        %v2488 = vunpack.c.l.b16 %v1648
        %v2489 = vunpack.c.h.b16 %v1648
        %v2490 = vunpack.c.l.b16 %v1649
        %v2491 = vunpack.c.h.b16 %v1649
        %v2492 = vunpack.c.l.b16 %v1650
        %v2493 = vunpack.c.h.b16 %v1650
        %v2494 = vunpack.c.l.b16 %v1651
        %v2495 = vunpack.c.h.b16 %v1651
        %v2496 = vunpack.c.l.b16 %v1652
        %v2497 = vunpack.c.h.b16 %v1652
        %v2498 = vunpack.c.l.b16 %v1653
        %v2499 = vunpack.c.h.b16 %v1653
        %v2500 = vunpack.c.l.b16 %v1654
        %v2501 = vunpack.c.h.b16 %v1654
        %v2502 = vunpack.c.l.b16 %v1655
        %v2503 = vunpack.c.h.b16 %v1655
        %v2504 = vunpack.c.l.b16 %v1656
        %v2505 = vunpack.c.h.b16 %v1656
        %v2506 = vunpack.c.l.b16 %v1657
        %v2507 = vunpack.c.h.b16 %v1657
        %v2508 = vunpack.c.l.b16 %v1658
        %v2509 = vunpack.c.h.b16 %v1658
        %v2510 = vunpack.c.l.b16 %v1659
        %v2511 = vunpack.c.h.b16 %v1659
        %v2512 = vunpack.c.l.b16 %v1660
        %v2513 = vunpack.c.h.b16 %v1660
        %v2514 = vunpack.c.l.b16 %v1661
        %v2515 = vunpack.c.h.b16 %v1661
        %v2516 = vunpack.c.l.b16 %v1662
        %v2517 = vunpack.c.h.b16 %v1662
        %v2518 = vunpack.c.l.b16 %v1663
        %v2519 = vunpack.c.h.b16 %v1663
        %v2520 = vunpack.c.l.b16 %v1664
        %v2521 = vunpack.c.h.b16 %v1664
        %v2522 = vunpack.c.l.b16 %v1665
        %v2523 = vunpack.c.h.b16 %v1665
        %v2524 = vunpack.c.l.b16 %v1666
        %v2525 = vunpack.c.h.b16 %v1666
        %v2526 = vunpack.c.l.b16 %v1667
        %v2527 = vunpack.c.h.b16 %v1667
        %v2528 = vunpack.c.l.b16 %v1668
        %v2529 = vunpack.c.h.b16 %v1668
        %v2530 = vunpack.c.l.b16 %v1669
        %v2531 = vunpack.c.h.b16 %v1669
        %v2532 = vunpack.c.l.b16 %v1670
        %v2533 = vunpack.c.h.b16 %v1670
        %v2534 = vunpack.c.l.b16 %v1671
        %v2535 = vunpack.c.h.b16 %v1671
        %v2536 = vunpack.c.l.b16 %v1672
        %v2537 = vunpack.c.h.b16 %v1672
        %v2538 = vunpack.c.l.b16 %v1673
        %v2539 = vunpack.c.h.b16 %v1673
        %v2540 = vunpack.c.l.b16 %v1674
        %v2541 = vunpack.c.h.b16 %v1674
        %v2542 = vunpack.c.l.b16 %v1675
        %v2543 = vunpack.c.h.b16 %v1675
        %v2544 = vunpack.c.l.b16 %v1676
        %v2545 = vunpack.c.h.b16 %v1676
        %v2546 = vunpack.c.l.b16 %v1677
        %v2547 = vunpack.c.h.b16 %v1677
        %v2548 = vunpack.c.l.b16 %v1678
        %v2549 = vunpack.c.h.b16 %v1678
        %v2550 = vunpack.c.l.b16 %v1679
        %v2551 = vunpack.c.h.b16 %v1679
        %v2552 = vunpack.c.l.b16 %v1680
        %v2553 = vunpack.c.h.b16 %v1680
        %v2554 = vunpack.c.l.b16 %v1681
        %v2555 = vunpack.c.h.b16 %v1681
        %v2556 = vunpack.c.l.b16 %v1682
        %v2557 = vunpack.c.h.b16 %v1682
        %v2558 = vunpack.c.l.b16 %v1683
        %v2559 = vunpack.c.h.b16 %v1683
        %v2560 = vunpack.c.l.b16 %v1684
        %v2561 = vunpack.c.h.b16 %v1684
        %v2562 = vunpack.c.l.b16 %v1685
        %v2563 = vunpack.c.h.b16 %v1685
        %v2564 = vunpack.c.l.b16 %v1686
        %v2565 = vunpack.c.h.b16 %v1686
        %v2566 = vunpack.c.l.b16 %v1687
        %v2567 = vunpack.c.h.b16 %v1687
        %v2568 = vunpack.c.l.b16 %v1688
        %v2569 = vunpack.c.h.b16 %v1688
        %v2570 = vunpack.c.l.b16 %v1689
        %v2571 = vunpack.c.h.b16 %v1689
        %v2572 = vunpack.c.l.b16 %v1690
        %v2573 = vunpack.c.h.b16 %v1690
        %v2574 = vunpack.c.l.b16 %v1691
        %v2575 = vunpack.c.h.b16 %v1691
        %v2576 = vunpack.c.l.b16 %v1692
        %v2577 = vunpack.c.h.b16 %v1692
        %v2578 = vunpack.c.l.b16 %v1693
        %v2579 = vunpack.c.h.b16 %v1693
        %v2580 = vunpack.c.l.b16 %v1694
        %v2581 = vunpack.c.h.b16 %v1694
        %v2582 = vunpack.c.l.b16 %v1695
        %v2583 = vunpack.c.h.b16 %v1695
        %v2584 = vunpack.c.l.b16 %v1696
        %v2585 = vunpack.c.h.b16 %v1696
        %v2586 = vunpack.c.l.b16 %v1697
        %v2587 = vunpack.c.h.b16 %v1697
        %v2588 = vunpack.c.l.b16 %v1698
        %v2589 = vunpack.c.h.b16 %v1698
        %v2590 = vunpack.c.l.b16 %v1699
        %v2591 = vunpack.c.h.b16 %v1699
        %v2592 = vunpack.c.l.b16 %v1700
        %v2593 = vunpack.c.h.b16 %v1700
        %v2594 = vunpack.c.l.b16 %v1701
        %v2595 = vunpack.c.h.b16 %v1701
        %v2596 = vunpack.c.l.b16 %v1702
        %v2597 = vunpack.c.h.b16 %v1702
        %v2598 = vunpack.c.l.b16 %v1703
        %v2599 = vunpack.c.h.b16 %v1703
        %v2600 = vunpack.c.l.b16 %v1704
        %v2601 = vunpack.c.h.b16 %v1704
        %v2602 = vunpack.c.l.b16 %v1705
        %v2603 = vunpack.c.h.b16 %v1705
        %v2604 = vunpack.c.l.b16 %v1706
        %v2605 = vunpack.c.h.b16 %v1706
        %v2606 = vunpack.c.l.b16 %v1707
        %v2607 = vunpack.c.h.b16 %v1707
        %v2608 = vunpack.c.l.b16 %v1708
        %v2609 = vunpack.c.h.b16 %v1708
        %v2610 = vunpack.c.l.b16 %v1709
        %v2611 = vunpack.c.h.b16 %v1709
        %v2612 = vunpack.c.l.b16 %v1710
        %v2613 = vunpack.c.h.b16 %v1710
        %v2614 = vunpack.c.l.b16 %v1711
        %v2615 = vunpack.c.h.b16 %v1711
        %v2616 = vunpack.c.l.b16 %v1712
        %v2617 = vunpack.c.h.b16 %v1712
        %v2618 = vunpack.c.l.b16 %v1713
        %v2619 = vunpack.c.h.b16 %v1713
        %v2620 = vunpack.c.l.b16 %v1714
        %v2621 = vunpack.c.h.b16 %v1714
        %v2622 = vunpack.c.l.b16 %v1715
        %v2623 = vunpack.c.h.b16 %v1715
        %v2624 = vunpack.c.l.b16 %v1716
        %v2625 = vunpack.c.h.b16 %v1716
        %v2626 = vunpack.c.l.b16 %v1717
        %v2627 = vunpack.c.h.b16 %v1717
        %v2628 = vunpack.c.l.b16 %v1718
        %v2629 = vunpack.c.h.b16 %v1718
        %v2630 = vunpack.c.l.b16 %v1719
        %v2631 = vunpack.c.h.b16 %v1719
        %v2632 = vunpack.c.l.b16 %v1720
        %v2633 = vunpack.c.h.b16 %v1720
        %v2634 = vunpack.c.l.b16 %v1721
        %v2635 = vunpack.c.h.b16 %v1721
        %v2636 = vunpack.c.l.b16 %v1722
        %v2637 = vunpack.c.h.b16 %v1722
        %v2638 = vunpack.c.l.b16 %v1723
        %v2639 = vunpack.c.h.b16 %v1723
        %v2640 = vunpack.c.l.b16 %v1724
        %v2641 = vunpack.c.h.b16 %v1724
        %v2642 = vunpack.c.l.b16 %v1725
        %v2643 = vunpack.c.h.b16 %v1725
        %v2644 = vunpack.c.l.b16 %v1726
        %v2645 = vunpack.c.h.b16 %v1726
        %v2646 = vunpack.c.l.b16 %v1727
        %v2647 = vunpack.c.h.b16 %v1727
        %v2648 = vunpack.c.l.b16 %v1728
        %v2649 = vunpack.c.h.b16 %v1728
        %v2650 = vunpack.c.l.b16 %v1729
        %v2651 = vunpack.c.h.b16 %v1729
        %v2652 = vunpack.c.l.b16 %v1730
        %v2653 = vunpack.c.h.b16 %v1730
        %v2654 = vunpack.c.l.b16 %v1731
        %v2655 = vunpack.c.h.b16 %v1731
        %v2656 = vunpack.c.l.b16 %v1732
        %v2657 = vunpack.c.h.b16 %v1732
        %v2658 = vunpack.c.l.b16 %v1733
        %v2659 = vunpack.c.h.b16 %v1733
        %v2660 = vunpack.c.l.b16 %v1734
        %v2661 = vunpack.c.h.b16 %v1734
        %v2662 = vunpack.c.l.b16 %v1735
        %v2663 = vunpack.c.h.b16 %v1735
        %v2664 = vunpack.c.l.b16 %v1736
        %v2665 = vunpack.c.h.b16 %v1736
        %v2666 = vunpack.c.l.b16 %v1737
        %v2667 = vunpack.c.h.b16 %v1737
        %v2668 = vunpack.c.l.b16 %v1738
        %v2669 = vunpack.c.h.b16 %v1738
        %v2670 = vunpack.c.l.b16 %v1739
        %v2671 = vunpack.c.h.b16 %v1739
        %v2672 = vunpack.c.l.b16 %v1740
        %v2673 = vunpack.c.h.b16 %v1740
        %v2674 = vunpack.c.l.b16 %v1741
        %v2675 = vunpack.c.h.b16 %v1741
        %v2676 = vunpack.c.l.b16 %v1742
        %v2677 = vunpack.c.h.b16 %v1742
        %v2678 = vunpack.c.l.b16 %v1743
        %v2679 = vunpack.c.h.b16 %v1743
        %v2680 = vunpack.c.l.b16 %v1744
        %v2681 = vunpack.c.h.b16 %v1744
        %v2682 = vunpack.c.l.b16 %v1745
        %v2683 = vunpack.c.h.b16 %v1745
        %v2684 = vunpack.c.l.b16 %v1746
        %v2685 = vunpack.c.h.b16 %v1746
        %v2686 = vunpack.c.l.b16 %v1747
        %v2687 = vunpack.c.h.b16 %v1747
        %v2688 = vunpack.c.l.b16 %v1748
        %v2689 = vunpack.c.h.b16 %v1748
        %v2690 = vunpack.c.l.b16 %v1749
        %v2691 = vunpack.c.h.b16 %v1749
        %v2692 = vunpack.c.l.b16 %v1750
        %v2693 = vunpack.c.h.b16 %v1750
        %v2694 = vunpack.c.l.b16 %v1751
        %v2695 = vunpack.c.h.b16 %v1751
        %v2696 = vunpack.c.l.b16 %v1752
        %v2697 = vunpack.c.h.b16 %v1752
        %v2698 = vunpack.c.l.b16 %v1753
        %v2699 = vunpack.c.h.b16 %v1753
        %v2700 = vunpack.c.l.b16 %v1754
        %v2701 = vunpack.c.h.b16 %v1754
        %v2702 = vunpack.c.l.b16 %v1755
        %v2703 = vunpack.c.h.b16 %v1755
        %v2704 = vunpack.c.l.b16 %v1756
        %v2705 = vunpack.c.h.b16 %v1756
        %v2706 = vunpack.c.l.b16 %v1757
        %v2707 = vunpack.c.h.b16 %v1757
        %v2708 = vunpack.c.l.b16 %v1758
        %v2709 = vunpack.c.h.b16 %v1758
        %v2710 = vunpack.c.l.b16 %v1759
        %v2711 = vunpack.c.h.b16 %v1759
        %v2712 = vunpack.c.l.b16 %v1760
        %v2713 = vunpack.c.h.b16 %v1760
        %v2714 = vunpack.c.l.b16 %v1761
        %v2715 = vunpack.c.h.b16 %v1761
        %v2716 = vunpack.c.l.b16 %v1762
        %v2717 = vunpack.c.h.b16 %v1762
        %v2718 = vunpack.c.l.b16 %v1763
        %v2719 = vunpack.c.h.b16 %v1763
        %v2720 = vunpack.c.l.b16 %v1764
        %v2721 = vunpack.c.h.b16 %v1764
        %v2722 = vunpack.c.l.b16 %v1765
        %v2723 = vunpack.c.h.b16 %v1765
        %v2724 = vunpack.c.l.b16 %v1766
        %v2725 = vunpack.c.h.b16 %v1766
        %v2726 = vunpack.c.l.b16 %v1767
        %v2727 = vunpack.c.h.b16 %v1767
        %v2728 = vunpack.c.l.b16 %v1768
        %v2729 = vunpack.c.h.b16 %v1768
        %v2730 = vunpack.c.l.b16 %v1769
        %v2731 = vunpack.c.h.b16 %v1769
        %v2732 = vunpack.c.l.b16 %v1770
        %v2733 = vunpack.c.h.b16 %v1770
        %v2734 = vunpack.c.l.b16 %v1771
        %v2735 = vunpack.c.h.b16 %v1771
        %v2736 = vunpack.c.l.b16 %v1772
        %v2737 = vunpack.c.h.b16 %v1772
        %v2738 = vunpack.c.l.b16 %v1773
        %v2739 = vunpack.c.h.b16 %v1773
        %v2740 = vunpack.c.l.b16 %v1774
        %v2741 = vunpack.c.h.b16 %v1774
        %v2742 = vunpack.c.l.b16 %v1775
        %v2743 = vunpack.c.h.b16 %v1775
        %v2744 = vunpack.c.l.b16 %v1776
        %v2745 = vunpack.c.h.b16 %v1776
        %v2746 = vunpack.c.l.b16 %v1777
        %v2747 = vunpack.c.h.b16 %v1777
        %v2748 = vunpack.c.l.b16 %v1778
        %v2749 = vunpack.c.h.b16 %v1778
        %v2750 = vunpack.c.l.b16 %v1779
        %v2751 = vunpack.c.h.b16 %v1779
        %v2752 = vunpack.c.l.b16 %v1780
        %v2753 = vunpack.c.h.b16 %v1780
        %v2754 = vunpack.c.l.b16 %v1781
        %v2755 = vunpack.c.h.b16 %v1781
        %v2756 = vunpack.c.l.b16 %v1782
        %v2757 = vunpack.c.h.b16 %v1782
        %v2758 = vunpack.c.l.b16 %v1783
        %v2759 = vunpack.c.h.b16 %v1783
        %v2760 = vunpack.c.l.b16 %v1784
        %v2761 = vunpack.c.h.b16 %v1784
        %v2762 = vunpack.c.l.b16 %v1785
        %v2763 = vunpack.c.h.b16 %v1785
        %v2764 = vunpack.c.l.b16 %v1786
        %v2765 = vunpack.c.h.b16 %v1786
        %v2766 = vunpack.c.l.b16 %v1787
        %v2767 = vunpack.c.h.b16 %v1787
        %v2768 = vunpack.c.l.b16 %v1788
        %v2769 = vunpack.c.h.b16 %v1788
        %v2770 = vunpack.c.l.b16 %v1789
        %v2771 = vunpack.c.h.b16 %v1789
        %v2772 = vunpack.c.l.b16 %v1790
        %v2773 = vunpack.c.h.b16 %v1790
        %v2774 = vunpack.c.l.b16 %v1791
        %v2775 = vunpack.c.h.b16 %v1791
        %v2776 = vunpack.c.l.b16 %v1792
        %v2777 = vunpack.c.h.b16 %v1792
        %v2778 = vunpack.c.l.b16 %v1793
        %v2779 = vunpack.c.h.b16 %v1793
        %v2780 = vunpack.c.l.b16 %v1794
        %v2781 = vunpack.c.h.b16 %v1794
        %v2782 = vunpack.c.l.b16 %v1795
        %v2783 = vunpack.c.h.b16 %v1795
        %v2784 = vunpack.c.l.b16 %v1796
        %v2785 = vunpack.c.h.b16 %v1796
        %v2786 = vunpack.c.l.b16 %v1797
        %v2787 = vunpack.c.h.b16 %v1797
        %v2788 = vunpack.c.l.b16 %v1798
        %v2789 = vunpack.c.h.b16 %v1798
        %v2790 = vunpack.c.l.b16 %v1799
        %v2791 = vunpack.c.h.b16 %v1799
        %v2792 = vunpack.c.l.b16 %v1800
        %v2793 = vunpack.c.h.b16 %v1800
        %v2794 = vunpack.c.l.b16 %v1801
        %v2795 = vunpack.c.h.b16 %v1801
        %v2796 = vunpack.c.l.b16 %v1802
        %v2797 = vunpack.c.h.b16 %v1802
        %v2798 = vunpack.c.l.b16 %v1803
        %v2799 = vunpack.c.h.b16 %v1803
        %v2800 = vunpack.c.l.b16 %v1804
        %v2801 = vunpack.c.h.b16 %v1804
        %v2802 = vunpack.c.l.b16 %v1805
        %v2803 = vunpack.c.h.b16 %v1805
        %v2804 = vunpack.c.l.b16 %v1806
        %v2805 = vunpack.c.h.b16 %v1806
        %v2806 = vunpack.c.l.b16 %v1807
        %v2807 = vunpack.c.h.b16 %v1807
        %v2808 = vunpack.c.l.b16 %v1808
        %v2809 = vunpack.c.h.b16 %v1808
        %v2810 = vunpack.c.l.b16 %v1809
        %v2811 = vunpack.c.h.b16 %v1809
        %v2812 = vunpack.c.l.b16 %v1810
        %v2813 = vunpack.c.h.b16 %v1810
        %v2814 = vunpack.c.l.b16 %v1811
        %v2815 = vunpack.c.h.b16 %v1811
        %v2816 = vunpack.c.l.b16 %v1812
        %v2817 = vunpack.c.h.b16 %v1812
        %v2818 = vunpack.c.l.b16 %v1813
        %v2819 = vunpack.c.h.b16 %v1813
        %v2820 = vunpack.c.l.b16 %v1814
        %v2821 = vunpack.c.h.b16 %v1814
        %v2822 = vunpack.c.l.b16 %v1815
        %v2823 = vunpack.c.h.b16 %v1815
        %v2824 = vunpack.c.l.b16 %v1816
        %v2825 = vunpack.c.h.b16 %v1816
        %v2826 = vunpack.c.l.b16 %v1817
        %v2827 = vunpack.c.h.b16 %v1817
        %v2828 = vunpack.c.l.b16 %v1818
        %v2829 = vunpack.c.h.b16 %v1818
        %v2830 = vunpack.c.l.b16 %v1819
        %v2831 = vunpack.c.h.b16 %v1819
        %v2832 = vunpack.c.l.b16 %v1820
        %v2833 = vunpack.c.h.b16 %v1820
        %v2834 = vunpack.c.l.b16 %v1821
        %v2835 = vunpack.c.h.b16 %v1821
        %v2836 = vunpack.c.l.b16 %v1822
        %v2837 = vunpack.c.h.b16 %v1822
        %v2838 = vunpack.c.l.b16 %v1823
        %v2839 = vunpack.c.h.b16 %v1823
        %v2840 = vunpack.c.l.b16 %v1824
        %v2841 = vunpack.c.h.b16 %v1824
        %v2842 = vunpack.c.l.b16 %v1825
        %v2843 = vunpack.c.h.b16 %v1825
        %v2844 = vunpack.c.l.b16 %v1826
        %v2845 = vunpack.c.h.b16 %v1826
        %v2846 = vunpack.c.l.b16 %v1827
        %v2847 = vunpack.c.h.b16 %v1827
        %v2848 = vunpack.c.l.b16 %v1828
        %v2849 = vunpack.c.h.b16 %v1828
        %v2850 = vunpack.c.l.b16 %v1829
        %v2851 = vunpack.c.h.b16 %v1829
        %v2852 = vunpack.c.l.b16 %v1830
        %v2853 = vunpack.c.h.b16 %v1830
        %v2854 = vunpack.c.l.b16 %v1831
        %v2855 = vunpack.c.h.b16 %v1831
        %v2856 = vunpack.c.l.b16 %v1832
        %v2857 = vunpack.c.h.b16 %v1832
        %v2858 = vunpack.c.l.b16 %v1833
        %v2859 = vunpack.c.h.b16 %v1833
        %v2860 = vunpack.c.l.b16 %v1834
        %v2861 = vunpack.c.h.b16 %v1834
        %v2862 = vunpack.c.l.b16 %v1835
        %v2863 = vunpack.c.h.b16 %v1835
        %v2864 = vunpack.c.l.b16 %v1836
        %v2865 = vunpack.c.h.b16 %v1836
        %v2866 = vunpack.c.l.b16 %v1837
        %v2867 = vunpack.c.h.b16 %v1837
        %v2868 = vunpack.c.l.b16 %v1838
        %v2869 = vunpack.c.h.b16 %v1838
        %v2870 = vunpack.c.l.b16 %v1839
        %v2871 = vunpack.c.h.b16 %v1839
        %v2872 = vunpack.c.l.b16 %v1840
        %v2873 = vunpack.c.h.b16 %v1840
        %v2874 = vunpack.c.l.b16 %v1841
        %v2875 = vunpack.c.h.b16 %v1841
        %v2876 = vunpack.c.l.b16 %v1842
        %v2877 = vunpack.c.h.b16 %v1842
        %v2878 = vunpack.c.l.b16 %v1843
        %v2879 = vunpack.c.h.b16 %v1843
        %v2880 = vunpack.c.l.b16 %v1844
        %v2881 = vunpack.c.h.b16 %v1844
        %v2882 = vunpack.c.l.b16 %v1845
        %v2883 = vunpack.c.h.b16 %v1845
        %v2884 = vunpack.c.l.b16 %v1846
        %v2885 = vunpack.c.h.b16 %v1846
        %v2886 = vunpack.c.l.b16 %v1847
        %v2887 = vunpack.c.h.b16 %v1847
        %v2888 = vunpack.c.l.b16 %v1848
        %v2889 = vunpack.c.h.b16 %v1848
        %v2890 = vunpack.c.l.b16 %v1849
        %v2891 = vunpack.c.h.b16 %v1849
        %v2892 = vunpack.c.l.b16 %v1850
        %v2893 = vunpack.c.h.b16 %v1850
        %v2894 = vunpack.c.l.b16 %v1851
        %v2895 = vunpack.c.h.b16 %v1851
        %v2896 = vunpack.c.l.b16 %v1852
        %v2897 = vunpack.c.h.b16 %v1852
        %v2898 = vunpack.c.l.b16 %v1853
        %v2899 = vunpack.c.h.b16 %v1853
        %v2900 = vunpack.c.l.b16 %v1854
        %v2901 = vunpack.c.h.b16 %v1854
        %v2902 = vunpack.c.l.b16 %v1855
        %v2903 = vunpack.c.h.b16 %v1855
        %v2904 = vunpack.c.l.b16 %v1856
        %v2905 = vunpack.c.h.b16 %v1856
        %v2906 = vunpack.c.l.b16 %v1857
        %v2907 = vunpack.c.h.b16 %v1857
        %v2908 = vunpack.c.l.b16 %v1858
        %v2909 = vunpack.c.h.b16 %v1858
        %v2910 = vunpack.c.l.b16 %v1859
        %v2911 = vunpack.c.h.b16 %v1859
        %v2912 = vunpack.c.l.b16 %v1860
        %v2913 = vunpack.c.h.b16 %v1860
        %v2914 = vunpack.c.l.b16 %v1861
        %v2915 = vunpack.c.h.b16 %v1861
        %v2916 = vunpack.c.l.b16 %v1862
        %v2917 = vunpack.c.h.b16 %v1862
        %v2918 = vunpack.c.l.b16 %v1863
        %v2919 = vunpack.c.h.b16 %v1863
        %v2920 = vunpack.c.l.b16 %v1864
        %v2921 = vunpack.c.h.b16 %v1864
        %v2922 = vunpack.c.l.b16 %v1865
        %v2923 = vunpack.c.h.b16 %v1865
        %v2924 = vunpack.c.l.b16 %v1866
        %v2925 = vunpack.c.h.b16 %v1866
        %v2926 = vunpack.c.l.b16 %v1867
        %v2927 = vunpack.c.h.b16 %v1867
        %v2928 = vunpack.c.l.b16 %v1868
        %v2929 = vunpack.c.h.b16 %v1868
        %v2930 = vunpack.c.l.b16 %v1869
        %v2931 = vunpack.c.h.b16 %v1869
        %v2932 = vunpack.c.l.b16 %v1870
        %v2933 = vunpack.c.h.b16 %v1870
        %v2934 = vunpack.c.l.b16 %v1871
        %v2935 = vunpack.c.h.b16 %v1871
        %v2936 = vunpack.c.l.b16 %v1872
        %v2937 = vunpack.c.h.b16 %v1872
        %v2938 = vunpack.c.l.b16 %v1873
        %v2939 = vunpack.c.h.b16 %v1873
        %v2940 = vunpack.c.l.b16 %v1874
        %v2941 = vunpack.c.h.b16 %v1874
        %v2942 = vunpack.c.l.b16 %v1875
        %v2943 = vunpack.c.h.b16 %v1875
        %v2944 = vunpack.c.l.b16 %v1876
        %v2945 = vunpack.c.h.b16 %v1876
        %v2946 = vunpack.c.l.b16 %v1877
        %v2947 = vunpack.c.h.b16 %v1877
        %v2948 = vunpack.c.l.b16 %v1878
        %v2949 = vunpack.c.h.b16 %v1878
        %v2950 = vunpack.c.l.b16 %v1879
        %v2951 = vunpack.c.h.b16 %v1879
        %v2952 = vunpack.c.l.b16 %v1880
        %v2953 = vunpack.c.h.b16 %v1880
        %v2954 = vunpack.c.l.b16 %v1881
        %v2955 = vunpack.c.h.b16 %v1881
        %v2956 = vunpack.c.l.b16 %v1882
        %v2957 = vunpack.c.h.b16 %v1882
        %v2958 = vunpack.c.l.b16 %v1883
        %v2959 = vunpack.c.h.b16 %v1883
        %v2960 = vunpack.c.l.b16 %v1884
        %v2961 = vunpack.c.h.b16 %v1884
        %v2962 = vunpack.c.l.b16 %v1885
        %v2963 = vunpack.c.h.b16 %v1885
        %v2964 = vunpack.c.l.b16 %v1886
        %v2965 = vunpack.c.h.b16 %v1886
        %v2966 = vunpack.c.l.b16 %v1887
        %v2967 = vunpack.c.h.b16 %v1887
        %v2968 = vunpack.c.l.b16 %v1888
        %v2969 = vunpack.c.h.b16 %v1888
        %v2970 = vunpack.c.l.b16 %v1889
        %v2971 = vunpack.c.h.b16 %v1889
        %v2972 = vunpack.c.l.b16 %v1890
        %v2973 = vunpack.c.h.b16 %v1890
        %v2974 = vunpack.c.l.b16 %v1891
        %v2975 = vunpack.c.h.b16 %v1891
        %v2976 = vunpack.c.l.b16 %v1892
        %v2977 = vunpack.c.h.b16 %v1892
        %v2978 = vunpack.c.l.b16 %v1893
        %v2979 = vunpack.c.h.b16 %v1893
        %v2980 = vunpack.c.l.b16 %v1894
        %v2981 = vunpack.c.h.b16 %v1894
        %v2982 = vunpack.c.l.b16 %v1895
        %v2983 = vunpack.c.h.b16 %v1895
        %v2984 = vunpack.c.l.b16 %v1896
        %v2985 = vunpack.c.h.b16 %v1896
        %v2986 = vunpack.c.l.b16 %v1897
        %v2987 = vunpack.c.h.b16 %v1897
        %v2988 = vunpack.c.l.b16 %v1898
        %v2989 = vunpack.c.h.b16 %v1898
        %v2990 = vunpack.c.l.b16 %v1899
        %v2991 = vunpack.c.h.b16 %v1899
        %v2992 = vunpack.c.l.b16 %v1900
        %v2993 = vunpack.c.h.b16 %v1900
        %v2994 = vunpack.c.l.b16 %v1901
        %v2995 = vunpack.c.h.b16 %v1901
        %v2996 = vunpack.c.l.b16 %v1902
        %v2997 = vunpack.c.h.b16 %v1902
        %v2998 = vunpack.c.l.b16 %v1903
        %v2999 = vunpack.c.h.b16 %v1903
        %v3000 = vunpack.c.l.b16 %v1904
        %v3001 = vunpack.c.h.b16 %v1904
        %v3002 = vunpack.c.l.b16 %v1905
        %v3003 = vunpack.c.h.b16 %v1905
        %v3004 = vunpack.c.l.b16 %v1906
        %v3005 = vunpack.c.h.b16 %v1906
        %v3006 = vunpack.c.l.b16 %v1907
        %v3007 = vunpack.c.h.b16 %v1907
        %v3008 = vunpack.c.l.b16 %v1908
        %v3009 = vunpack.c.h.b16 %v1908
        %v3010 = vunpack.c.l.b16 %v1909
        %v3011 = vunpack.c.h.b16 %v1909
        %v3012 = vunpack.c.l.b16 %v1910
        %v3013 = vunpack.c.h.b16 %v1910
        %v3014 = vunpack.c.l.b16 %v1911
        %v3015 = vunpack.c.h.b16 %v1911
        %v3016 = vunpack.c.l.b16 %v1912
        %v3017 = vunpack.c.h.b16 %v1912
        %v3018 = vunpack.c.l.b16 %v1913
        %v3019 = vunpack.c.h.b16 %v1913
        %v3020 = vunpack.c.l.b16 %v1914
        %v3021 = vunpack.c.h.b16 %v1914
        %v3022 = vunpack.c.l.b16 %v1915
        %v3023 = vunpack.c.h.b16 %v1915
        %v3024 = vunpack.c.l.b16 %v1916
        %v3025 = vunpack.c.h.b16 %v1916
        %v3026 = vunpack.c.l.b16 %v1917
        %v3027 = vunpack.c.h.b16 %v1917
        %v3028 = vunpack.c.l.b16 %v1918
        %v3029 = vunpack.c.h.b16 %v1918
        %v3030 = vunpack.c.l.b16 %v1919
        %v3031 = vunpack.c.h.b16 %v1919
        %v3032 = vunpack.c.l.b16 %v1920
        %v3033 = vunpack.c.h.b16 %v1920
        %v3034 = vunpack.c.l.b16 %v1921
        %v3035 = vunpack.c.h.b16 %v1921
        %v3036 = vunpack.c.l.b16 %v1922
        %v3037 = vunpack.c.h.b16 %v1922
        %v3038 = vunpack.c.l.b16 %v1923
        %v3039 = vunpack.c.h.b16 %v1923
        %v3040 = vunpack.c.l.b16 %v1924
        %v3041 = vunpack.c.h.b16 %v1924
        %v3042 = vunpack.c.l.b16 %v1925
        %v3043 = vunpack.c.h.b16 %v1925
        %v3044 = vunpack.c.l.b16 %v1926
        %v3045 = vunpack.c.h.b16 %v1926
        %v3046 = vunpack.c.l.b16 %v1927
        %v3047 = vunpack.c.h.b16 %v1927
        %v3048 = vunpack.c.l.b16 %v1928
        %v3049 = vunpack.c.h.b16 %v1928
        %v3050 = vunpack.c.l.b16 %v1929
        %v3051 = vunpack.c.h.b16 %v1929
        %v3052 = vunpack.c.l.b16 %v1930
        %v3053 = vunpack.c.h.b16 %v1930
        %v3054 = vunpack.c.l.b16 %v1931
        %v3055 = vunpack.c.h.b16 %v1931
        %v3056 = vunpack.c.l.b16 %v1932
        %v3057 = vunpack.c.h.b16 %v1932
        %v3058 = vunpack.c.l.b16 %v1933
        %v3059 = vunpack.c.h.b16 %v1933
        %v3060 = vunpack.c.l.b16 %v1934
        %v3061 = vunpack.c.h.b16 %v1934
        %v3062 = vunpack.c.l.b16 %v1935
        %v3063 = vunpack.c.h.b16 %v1935
        %v3064 = vunpack.c.l.b16 %v1936
        %v3065 = vunpack.c.h.b16 %v1936
        %v3066 = vunpack.c.l.b16 %v1937
        %v3067 = vunpack.c.h.b16 %v1937
        %v3068 = vunpack.c.l.b16 %v1938
        %v3069 = vunpack.c.h.b16 %v1938
        %v3070 = vunpack.c.l.b16 %v1939
        %v3071 = vunpack.c.h.b16 %v1939
        %v3072 = vunpack.c.l.b16 %v1940
        %v3073 = vunpack.c.h.b16 %v1940
        %v3074 = vunpack.c.l.b16 %v1941
        %v3075 = vunpack.c.h.b16 %v1941
        %v3076 = vunpack.c.l.b16 %v1942
        %v3077 = vunpack.c.h.b16 %v1942
        %v3078 = vunpack.c.l.b16 %v1943
        %v3079 = vunpack.c.h.b16 %v1943
        %v3080 = vunpack.c.l.b16 %v1944
        %v3081 = vunpack.c.h.b16 %v1944
        %v3082 = vunpack.c.l.b16 %v1945
        %v3083 = vunpack.c.h.b16 %v1945
        %v3084 = vunpack.c.l.b16 %v1946
        %v3085 = vunpack.c.h.b16 %v1946
        %v3086 = vunpack.c.l.b16 %v1947
        %v3087 = vunpack.c.h.b16 %v1947
        %v3088 = vunpack.c.l.b16 %v1948
        %v3089 = vunpack.c.h.b16 %v1948
        %v3090 = vunpack.c.l.b16 %v1949
        %v3091 = vunpack.c.h.b16 %v1949
        %v3092 = vunpack.c.l.b16 %v1950
        %v3093 = vunpack.c.h.b16 %v1950
        %v3094 = vunpack.c.l.b16 %v1951
        %v3095 = vunpack.c.h.b16 %v1951
        %v3096 = vunpack.c.l.b16 %v1952
        %v3097 = vunpack.c.h.b16 %v1952
        %v3098 = vunpack.c.l.b16 %v1953
        %v3099 = vunpack.c.h.b16 %v1953
        %v3100 = vunpack.c.l.b16 %v1954
        %v3101 = vunpack.c.h.b16 %v1954
        %v3102 = vunpack.c.l.b16 %v1955
        %v3103 = vunpack.c.h.b16 %v1955
        %v3104 = vunpack.c.l.b16 %v1956
        %v3105 = vunpack.c.h.b16 %v1956
        %v3106 = vunpack.c.l.b16 %v1957
        %v3107 = vunpack.c.h.b16 %v1957
        %v3108 = vunpack.c.l.b16 %v1958
        %v3109 = vunpack.c.h.b16 %v1958
        %v3110 = vunpack.c.l.b16 %v1959
        %v3111 = vunpack.c.h.b16 %v1959
        %v3112 = vunpack.c.l.b16 %v1960
        %v3113 = vunpack.c.h.b16 %v1960
        %v3114 = vunpack.c.l.b16 %v1961
        %v3115 = vunpack.c.h.b16 %v1961
        %v3116 = vunpack.c.l.b16 %v1962
        %v3117 = vunpack.c.h.b16 %v1962
        %v3118 = vunpack.c.l.b16 %v1963
        %v3119 = vunpack.c.h.b16 %v1963
        %v3120 = vunpack.c.l.b16 %v1964
        %v3121 = vunpack.c.h.b16 %v1964
        %v3122 = vunpack.c.l.b16 %v1965
        %v3123 = vunpack.c.h.b16 %v1965
        %v3124 = vunpack.c.l.b16 %v1966
        %v3125 = vunpack.c.h.b16 %v1966
        %v3126 = vunpack.c.l.b16 %v1967
        %v3127 = vunpack.c.h.b16 %v1967
        %v3128 = vunpack.c.l.b16 %v1968
        %v3129 = vunpack.c.h.b16 %v1968
        %v3130 = vunpack.c.l.b16 %v1969
        %v3131 = vunpack.c.h.b16 %v1969
        %v3132 = vunpack.c.l.b16 %v1970
        %v3133 = vunpack.c.h.b16 %v1970
        %v3134 = vunpack.c.l.b16 %v1971
        %v3135 = vunpack.c.h.b16 %v1971
        %v3136 = vunpack.c.l.b16 %v1972
        %v3137 = vunpack.c.h.b16 %v1972
        %v3138 = vunpack.c.l.b16 %v1973
        %v3139 = vunpack.c.h.b16 %v1973
        %v3140 = vunpack.c.l.b16 %v1974
        %v3141 = vunpack.c.h.b16 %v1974
        %v3142 = vunpack.c.l.b16 %v1975
        %v3143 = vunpack.c.h.b16 %v1975
        %v3144 = vunpack.c.l.b16 %v1976
        %v3145 = vunpack.c.h.b16 %v1976
        %v3146 = vunpack.c.l.b16 %v1977
        %v3147 = vunpack.c.h.b16 %v1977
        %v3148 = vunpack.c.l.b16 %v1978
        %v3149 = vunpack.c.h.b16 %v1978
        %v3150 = vunpack.c.l.b16 %v1979
        %v3151 = vunpack.c.h.b16 %v1979
        %v3152 = vunpack.c.l.b16 %v1980
        %v3153 = vunpack.c.h.b16 %v1980
        %v3154 = vunpack.c.l.b16 %v1981
        %v3155 = vunpack.c.h.b16 %v1981
        %v3156 = vunpack.c.l.b16 %v1982
        %v3157 = vunpack.c.h.b16 %v1982
        %v3158 = vunpack.c.l.b16 %v1983
        %v3159 = vunpack.c.h.b16 %v1983
        %v3160 = vunpack.c.l.b16 %v1984
        %v3161 = vunpack.c.h.b16 %v1984
        %v3162 = vunpack.c.l.b16 %v1985
        %v3163 = vunpack.c.h.b16 %v1985
        %v3164 = vunpack.c.l.b16 %v1986
        %v3165 = vunpack.c.h.b16 %v1986
        %v3166 = vunpack.c.l.b16 %v1987
        %v3167 = vunpack.c.h.b16 %v1987
        %v3168 = vunpack.c.l.b16 %v1988
        %v3169 = vunpack.c.h.b16 %v1988
        %v3170 = vunpack.c.l.b16 %v1989
        %v3171 = vunpack.c.h.b16 %v1989
        %v3172 = vunpack.c.l.b16 %v1990
        %v3173 = vunpack.c.h.b16 %v1990
        %v3174 = vunpack.c.l.b16 %v1991
        %v3175 = vunpack.c.h.b16 %v1991
        %v3176 = vunpack.c.l.b16 %v1992
        %v3177 = vunpack.c.h.b16 %v1992
        %v3178 = vunpack.c.l.b16 %v1993
        %v3179 = vunpack.c.h.b16 %v1993
        %v3180 = vunpack.c.l.b16 %v1994
        %v3181 = vunpack.c.h.b16 %v1994
        %v3182 = vunpack.c.l.b16 %v1995
        %v3183 = vunpack.c.h.b16 %v1995
        %v3184 = vunpack.c.l.b16 %v1996
        %v3185 = vunpack.c.h.b16 %v1996
        %v3186 = vunpack.c.l.b16 %v1997
        %v3187 = vunpack.c.h.b16 %v1997
        %v3188 = vunpack.c.l.b16 %v1998
        %v3189 = vunpack.c.h.b16 %v1998
        %v3190 = vunpack.c.l.b16 %v1999
        %v3191 = vunpack.c.h.b16 %v1999
        %v3192 = vunpack.c.l.b16 %v2000
        %v3193 = vunpack.c.h.b16 %v2000
        %v3194 = vunpack.c.l.b16 %v2001
        %v3195 = vunpack.c.h.b16 %v2001
        %v3196 = vunpack.c.l.b16 %v2002
        %v3197 = vunpack.c.h.b16 %v2002
        %v3198 = vpack.c.b16 %v2430, %v2414
        %v3199 = vpack.c.b16 %v2431, %v2415
        %v3200 = vpack.c.b16 %v2432, %v2416
        %v3201 = vpack.c.b16 %v2433, %v2417
        %v3202 = vpack.c.b16 %v2434, %v2418
        %v3203 = vpack.c.b16 %v2435, %v2419
        %v3204 = vpack.c.b16 %v2436, %v2420
        %v3205 = vpack.c.b16 %v2437, %v2421
        %v3206 = vpack.c.b16 %v2438, %v2422
        %v3207 = vpack.c.b16 %v2439, %v2423
        %v3208 = vpack.c.b16 %v2440, %v2424
        %v3209 = vpack.c.b16 %v2441, %v2425
        %v3210 = vpack.c.b16 %v2442, %v2426
        %v3211 = vpack.c.b16 %v2443, %v2427
        %v3212 = vpack.c.b16 %v2444, %v2428
        %v3213 = vpack.c.b16 %v2445, %v2429
        %v3214 = vpack.c.b16 %v2462, %v2446
        %v3215 = vpack.c.b16 %v2463, %v2447
        %v3216 = vpack.c.b16 %v2464, %v2448
        %v3217 = vpack.c.b16 %v2465, %v2449
        %v3218 = vpack.c.b16 %v2466, %v2450
        %v3219 = vpack.c.b16 %v2467, %v2451
        %v3220 = vpack.c.b16 %v2468, %v2452
        %v3221 = vpack.c.b16 %v2469, %v2453
        %v3222 = vpack.c.b16 %v2470, %v2454
        %v3223 = vpack.c.b16 %v2471, %v2455
        %v3224 = vpack.c.b16 %v2472, %v2456
        %v3225 = vpack.c.b16 %v2473, %v2457
        %v3226 = vpack.c.b16 %v2474, %v2458
        %v3227 = vpack.c.b16 %v2475, %v2459
        %v3228 = vpack.c.b16 %v2476, %v2460
        %v3229 = vpack.c.b16 %v2477, %v2461
        %v3230 = vpack.c.b16 %v2494, %v2478
        %v3231 = vpack.c.b16 %v2495, %v2479
        %v3232 = vpack.c.b16 %v2496, %v2480
        %v3233 = vpack.c.b16 %v2497, %v2481
        %v3234 = vpack.c.b16 %v2498, %v2482
        %v3235 = vpack.c.b16 %v2499, %v2483
        %v3236 = vpack.c.b16 %v2500, %v2484
        %v3237 = vpack.c.b16 %v2501, %v2485
        %v3238 = vpack.c.b16 %v2502, %v2486
        %v3239 = vpack.c.b16 %v2503, %v2487
        %v3240 = vpack.c.b16 %v2504, %v2488
        %v3241 = vpack.c.b16 %v2505, %v2489
        %v3242 = vpack.c.b16 %v2506, %v2490
        %v3243 = vpack.c.b16 %v2507, %v2491
        %v3244 = vpack.c.b16 %v2508, %v2492
        %v3245 = vpack.c.b16 %v2509, %v2493
        %v3246 = vpack.c.b16 %v2526, %v2510
        %v3247 = vpack.c.b16 %v2527, %v2511
        %v3248 = vpack.c.b16 %v2528, %v2512
        %v3249 = vpack.c.b16 %v2529, %v2513
        %v3250 = vpack.c.b16 %v2530, %v2514
        %v3251 = vpack.c.b16 %v2531, %v2515
        %v3252 = vpack.c.b16 %v2532, %v2516
        %v3253 = vpack.c.b16 %v2533, %v2517
        %v3254 = vpack.c.b16 %v2534, %v2518
        %v3255 = vpack.c.b16 %v2535, %v2519
        %v3256 = vpack.c.b16 %v2536, %v2520
        %v3257 = vpack.c.b16 %v2537, %v2521
        %v3258 = vpack.c.b16 %v2538, %v2522
        %v3259 = vpack.c.b16 %v2539, %v2523
        %v3260 = vpack.c.b16 %v2540, %v2524
        %v3261 = vpack.c.b16 %v2541, %v2525
        %v3262 = vpack.c.b16 %v2558, %v2542
        %v3263 = vpack.c.b16 %v2559, %v2543
        %v3264 = vpack.c.b16 %v2560, %v2544
        %v3265 = vpack.c.b16 %v2561, %v2545
        %v3266 = vpack.c.b16 %v2562, %v2546
        %v3267 = vpack.c.b16 %v2563, %v2547
        %v3268 = vpack.c.b16 %v2564, %v2548
        %v3269 = vpack.c.b16 %v2565, %v2549
        %v3270 = vpack.c.b16 %v2566, %v2550
        %v3271 = vpack.c.b16 %v2567, %v2551
        %v3272 = vpack.c.b16 %v2568, %v2552
        %v3273 = vpack.c.b16 %v2569, %v2553
        %v3274 = vpack.c.b16 %v2570, %v2554
        %v3275 = vpack.c.b16 %v2571, %v2555
        %v3276 = vpack.c.b16 %v2572, %v2556
        %v3277 = vpack.c.b16 %v2573, %v2557
        %v3278 = vpack.c.b16 %v2590, %v2574
        %v3279 = vpack.c.b16 %v2591, %v2575
        %v3280 = vpack.c.b16 %v2592, %v2576
        %v3281 = vpack.c.b16 %v2593, %v2577
        %v3282 = vpack.c.b16 %v2594, %v2578
        %v3283 = vpack.c.b16 %v2595, %v2579
        %v3284 = vpack.c.b16 %v2596, %v2580
        %v3285 = vpack.c.b16 %v2597, %v2581
        %v3286 = vpack.c.b16 %v2598, %v2582
        %v3287 = vpack.c.b16 %v2599, %v2583
        %v3288 = vpack.c.b16 %v2600, %v2584
        %v3289 = vpack.c.b16 %v2601, %v2585
        %v3290 = vpack.c.b16 %v2602, %v2586
        %v3291 = vpack.c.b16 %v2603, %v2587
        %v3292 = vpack.c.b16 %v2604, %v2588
        %v3293 = vpack.c.b16 %v2605, %v2589
        %v3294 = vpack.c.b16 %v2622, %v2606
        %v3295 = vpack.c.b16 %v2623, %v2607
        %v3296 = vpack.c.b16 %v2624, %v2608
        %v3297 = vpack.c.b16 %v2625, %v2609
        %v3298 = vpack.c.b16 %v2626, %v2610
        %v3299 = vpack.c.b16 %v2627, %v2611
        %v3300 = vpack.c.b16 %v2628, %v2612
        %v3301 = vpack.c.b16 %v2629, %v2613
        %v3302 = vpack.c.b16 %v2630, %v2614
        %v3303 = vpack.c.b16 %v2631, %v2615
        %v3304 = vpack.c.b16 %v2632, %v2616
        %v3305 = vpack.c.b16 %v2633, %v2617
        %v3306 = vpack.c.b16 %v2634, %v2618
        %v3307 = vpack.c.b16 %v2635, %v2619
        %v3308 = vpack.c.b16 %v2636, %v2620
        %v3309 = vpack.c.b16 %v2637, %v2621
        %v3310 = vpack.c.b16 %v2654, %v2638
        %v3311 = vpack.c.b16 %v2655, %v2639
        %v3312 = vpack.c.b16 %v2656, %v2640
        %v3313 = vpack.c.b16 %v2657, %v2641
        %v3314 = vpack.c.b16 %v2658, %v2642
        %v3315 = vpack.c.b16 %v2659, %v2643
        %v3316 = vpack.c.b16 %v2660, %v2644
        %v3317 = vpack.c.b16 %v2661, %v2645
        %v3318 = vpack.c.b16 %v2662, %v2646
        %v3319 = vpack.c.b16 %v2663, %v2647
        %v3320 = vpack.c.b16 %v2664, %v2648
        %v3321 = vpack.c.b16 %v2665, %v2649
        %v3322 = vpack.c.b16 %v2666, %v2650
        %v3323 = vpack.c.b16 %v2667, %v2651
        %v3324 = vpack.c.b16 %v2668, %v2652
        %v3325 = vpack.c.b16 %v2669, %v2653
        %v3326 = vpack.c.b16 %v2686, %v2670
        %v3327 = vpack.c.b16 %v2687, %v2671
        %v3328 = vpack.c.b16 %v2688, %v2672
        %v3329 = vpack.c.b16 %v2689, %v2673
        %v3330 = vpack.c.b16 %v2690, %v2674
        %v3331 = vpack.c.b16 %v2691, %v2675
        %v3332 = vpack.c.b16 %v2692, %v2676
        %v3333 = vpack.c.b16 %v2693, %v2677
        %v3334 = vpack.c.b16 %v2694, %v2678
        %v3335 = vpack.c.b16 %v2695, %v2679
        %v3336 = vpack.c.b16 %v2696, %v2680
        %v3337 = vpack.c.b16 %v2697, %v2681
        %v3338 = vpack.c.b16 %v2698, %v2682
        %v3339 = vpack.c.b16 %v2699, %v2683
        %v3340 = vpack.c.b16 %v2700, %v2684
        %v3341 = vpack.c.b16 %v2701, %v2685
        %v3342 = vpack.c.b16 %v2718, %v2702
        %v3343 = vpack.c.b16 %v2719, %v2703
        %v3344 = vpack.c.b16 %v2720, %v2704
        %v3345 = vpack.c.b16 %v2721, %v2705
        %v3346 = vpack.c.b16 %v2722, %v2706
        %v3347 = vpack.c.b16 %v2723, %v2707
        %v3348 = vpack.c.b16 %v2724, %v2708
        %v3349 = vpack.c.b16 %v2725, %v2709
        %v3350 = vpack.c.b16 %v2726, %v2710
        %v3351 = vpack.c.b16 %v2727, %v2711
        %v3352 = vpack.c.b16 %v2728, %v2712
        %v3353 = vpack.c.b16 %v2729, %v2713
        %v3354 = vpack.c.b16 %v2730, %v2714
        %v3355 = vpack.c.b16 %v2731, %v2715
        %v3356 = vpack.c.b16 %v2732, %v2716
        %v3357 = vpack.c.b16 %v2733, %v2717
        %v3358 = vpack.c.b16 %v2750, %v2734
        %v3359 = vpack.c.b16 %v2751, %v2735
        %v3360 = vpack.c.b16 %v2752, %v2736
        %v3361 = vpack.c.b16 %v2753, %v2737
        %v3362 = vpack.c.b16 %v2754, %v2738
        %v3363 = vpack.c.b16 %v2755, %v2739
        %v3364 = vpack.c.b16 %v2756, %v2740
        %v3365 = vpack.c.b16 %v2757, %v2741
        %v3366 = vpack.c.b16 %v2758, %v2742
        %v3367 = vpack.c.b16 %v2759, %v2743
        %v3368 = vpack.c.b16 %v2760, %v2744
        %v3369 = vpack.c.b16 %v2761, %v2745
        %v3370 = vpack.c.b16 %v2762, %v2746
        %v3371 = vpack.c.b16 %v2763, %v2747
        %v3372 = vpack.c.b16 %v2764, %v2748
        %v3373 = vpack.c.b16 %v2765, %v2749
        %v3374 = vpack.c.b16 %v2782, %v2766
        %v3375 = vpack.c.b16 %v2783, %v2767
        %v3376 = vpack.c.b16 %v2784, %v2768
        %v3377 = vpack.c.b16 %v2785, %v2769
        %v3378 = vpack.c.b16 %v2786, %v2770
        %v3379 = vpack.c.b16 %v2787, %v2771
        %v3380 = vpack.c.b16 %v2788, %v2772
        %v3381 = vpack.c.b16 %v2789, %v2773
        %v3382 = vpack.c.b16 %v2790, %v2774
        %v3383 = vpack.c.b16 %v2791, %v2775
        %v3384 = vpack.c.b16 %v2792, %v2776
        %v3385 = vpack.c.b16 %v2793, %v2777
        %v3386 = vpack.c.b16 %v2794, %v2778
        %v3387 = vpack.c.b16 %v2795, %v2779
        %v3388 = vpack.c.b16 %v2796, %v2780
        %v3389 = vpack.c.b16 %v2797, %v2781
        %v3390 = vpack.c.b16 %v2814, %v2798
        %v3391 = vpack.c.b16 %v2815, %v2799
        %v3392 = vpack.c.b16 %v2816, %v2800
        %v3393 = vpack.c.b16 %v2817, %v2801
        %v3394 = vpack.c.b16 %v2818, %v2802
        %v3395 = vpack.c.b16 %v2819, %v2803
        %v3396 = vpack.c.b16 %v2820, %v2804
        %v3397 = vpack.c.b16 %v2821, %v2805
        %v3398 = vpack.c.b16 %v2822, %v2806
        %v3399 = vpack.c.b16 %v2823, %v2807
        %v3400 = vpack.c.b16 %v2824, %v2808
        %v3401 = vpack.c.b16 %v2825, %v2809
        %v3402 = vpack.c.b16 %v2826, %v2810
        %v3403 = vpack.c.b16 %v2827, %v2811
        %v3404 = vpack.c.b16 %v2828, %v2812
        %v3405 = vpack.c.b16 %v2829, %v2813
        %v3406 = vpack.c.b16 %v2846, %v2830
        %v3407 = vpack.c.b16 %v2847, %v2831
        %v3408 = vpack.c.b16 %v2848, %v2832
        %v3409 = vpack.c.b16 %v2849, %v2833
        %v3410 = vpack.c.b16 %v2850, %v2834
        %v3411 = vpack.c.b16 %v2851, %v2835
        %v3412 = vpack.c.b16 %v2852, %v2836
        %v3413 = vpack.c.b16 %v2853, %v2837
        %v3414 = vpack.c.b16 %v2854, %v2838
        %v3415 = vpack.c.b16 %v2855, %v2839
        %v3416 = vpack.c.b16 %v2856, %v2840
        %v3417 = vpack.c.b16 %v2857, %v2841
        %v3418 = vpack.c.b16 %v2858, %v2842
        %v3419 = vpack.c.b16 %v2859, %v2843
        %v3420 = vpack.c.b16 %v2860, %v2844
        %v3421 = vpack.c.b16 %v2861, %v2845
        %v3422 = vpack.c.b16 %v2878, %v2862
        %v3423 = vpack.c.b16 %v2879, %v2863
        %v3424 = vpack.c.b16 %v2880, %v2864
        %v3425 = vpack.c.b16 %v2881, %v2865
        %v3426 = vpack.c.b16 %v2882, %v2866
        %v3427 = vpack.c.b16 %v2883, %v2867
        %v3428 = vpack.c.b16 %v2884, %v2868
        %v3429 = vpack.c.b16 %v2885, %v2869
        %v3430 = vpack.c.b16 %v2886, %v2870
        %v3431 = vpack.c.b16 %v2887, %v2871
        %v3432 = vpack.c.b16 %v2888, %v2872
        %v3433 = vpack.c.b16 %v2889, %v2873
        %v3434 = vpack.c.b16 %v2890, %v2874
        %v3435 = vpack.c.b16 %v2891, %v2875
        %v3436 = vpack.c.b16 %v2892, %v2876
        %v3437 = vpack.c.b16 %v2893, %v2877
        %v3438 = vpack.c.b16 %v2910, %v2894
        %v3439 = vpack.c.b16 %v2911, %v2895
        %v3440 = vpack.c.b16 %v2912, %v2896
        %v3441 = vpack.c.b16 %v2913, %v2897
        %v3442 = vpack.c.b16 %v2914, %v2898
        %v3443 = vpack.c.b16 %v2915, %v2899
        %v3444 = vpack.c.b16 %v2916, %v2900
        %v3445 = vpack.c.b16 %v2917, %v2901
        %v3446 = vpack.c.b16 %v2918, %v2902
        %v3447 = vpack.c.b16 %v2919, %v2903
        %v3448 = vpack.c.b16 %v2920, %v2904
        %v3449 = vpack.c.b16 %v2921, %v2905
        %v3450 = vpack.c.b16 %v2922, %v2906
        %v3451 = vpack.c.b16 %v2923, %v2907
        %v3452 = vpack.c.b16 %v2924, %v2908
        %v3453 = vpack.c.b16 %v2925, %v2909
        %v3454 = vpack.c.b16 %v2942, %v2926
        %v3455 = vpack.c.b16 %v2943, %v2927
        %v3456 = vpack.c.b16 %v2944, %v2928
        %v3457 = vpack.c.b16 %v2945, %v2929
        %v3458 = vpack.c.b16 %v2946, %v2930
        %v3459 = vpack.c.b16 %v2947, %v2931
        %v3460 = vpack.c.b16 %v2948, %v2932
        %v3461 = vpack.c.b16 %v2949, %v2933
        %v3462 = vpack.c.b16 %v2950, %v2934
        %v3463 = vpack.c.b16 %v2951, %v2935
        %v3464 = vpack.c.b16 %v2952, %v2936
        %v3465 = vpack.c.b16 %v2953, %v2937
        %v3466 = vpack.c.b16 %v2954, %v2938
        %v3467 = vpack.c.b16 %v2955, %v2939
        %v3468 = vpack.c.b16 %v2956, %v2940
        %v3469 = vpack.c.b16 %v2957, %v2941
        %v3470 = vpack.c.b16 %v2974, %v2958
        %v3471 = vpack.c.b16 %v2975, %v2959
        %v3472 = vpack.c.b16 %v2976, %v2960
        %v3473 = vpack.c.b16 %v2977, %v2961
        %v3474 = vpack.c.b16 %v2978, %v2962
        %v3475 = vpack.c.b16 %v2979, %v2963
        %v3476 = vpack.c.b16 %v2980, %v2964
        %v3477 = vpack.c.b16 %v2981, %v2965
        %v3478 = vpack.c.b16 %v2982, %v2966
        %v3479 = vpack.c.b16 %v2983, %v2967
        %v3480 = vpack.c.b16 %v2984, %v2968
        %v3481 = vpack.c.b16 %v2985, %v2969
        %v3482 = vpack.c.b16 %v2986, %v2970
        %v3483 = vpack.c.b16 %v2987, %v2971
        %v3484 = vpack.c.b16 %v2988, %v2972
        %v3485 = vpack.c.b16 %v2989, %v2973
        %v3486 = vpack.c.b16 %v3006, %v2990
        %v3487 = vpack.c.b16 %v3007, %v2991
        %v3488 = vpack.c.b16 %v3008, %v2992
        %v3489 = vpack.c.b16 %v3009, %v2993
        %v3490 = vpack.c.b16 %v3010, %v2994
        %v3491 = vpack.c.b16 %v3011, %v2995
        %v3492 = vpack.c.b16 %v3012, %v2996
        %v3493 = vpack.c.b16 %v3013, %v2997
        %v3494 = vpack.c.b16 %v3014, %v2998
        %v3495 = vpack.c.b16 %v3015, %v2999
        %v3496 = vpack.c.b16 %v3016, %v3000
        %v3497 = vpack.c.b16 %v3017, %v3001
        %v3498 = vpack.c.b16 %v3018, %v3002
        %v3499 = vpack.c.b16 %v3019, %v3003
        %v3500 = vpack.c.b16 %v3020, %v3004
        %v3501 = vpack.c.b16 %v3021, %v3005
        %v3502 = vpack.c.b16 %v3038, %v3022
        %v3503 = vpack.c.b16 %v3039, %v3023
        %v3504 = vpack.c.b16 %v3040, %v3024
        %v3505 = vpack.c.b16 %v3041, %v3025
        %v3506 = vpack.c.b16 %v3042, %v3026
        %v3507 = vpack.c.b16 %v3043, %v3027
        %v3508 = vpack.c.b16 %v3044, %v3028
        %v3509 = vpack.c.b16 %v3045, %v3029
        %v3510 = vpack.c.b16 %v3046, %v3030
        %v3511 = vpack.c.b16 %v3047, %v3031
        %v3512 = vpack.c.b16 %v3048, %v3032
        %v3513 = vpack.c.b16 %v3049, %v3033
        %v3514 = vpack.c.b16 %v3050, %v3034
        %v3515 = vpack.c.b16 %v3051, %v3035
        %v3516 = vpack.c.b16 %v3052, %v3036
        %v3517 = vpack.c.b16 %v3053, %v3037
        %v3518 = vpack.c.b16 %v3070, %v3054
        %v3519 = vpack.c.b16 %v3071, %v3055
        %v3520 = vpack.c.b16 %v3072, %v3056
        %v3521 = vpack.c.b16 %v3073, %v3057
        %v3522 = vpack.c.b16 %v3074, %v3058
        %v3523 = vpack.c.b16 %v3075, %v3059
        %v3524 = vpack.c.b16 %v3076, %v3060
        %v3525 = vpack.c.b16 %v3077, %v3061
        %v3526 = vpack.c.b16 %v3078, %v3062
        %v3527 = vpack.c.b16 %v3079, %v3063
        %v3528 = vpack.c.b16 %v3080, %v3064
        %v3529 = vpack.c.b16 %v3081, %v3065
        %v3530 = vpack.c.b16 %v3082, %v3066
        %v3531 = vpack.c.b16 %v3083, %v3067
        %v3532 = vpack.c.b16 %v3084, %v3068
        %v3533 = vpack.c.b16 %v3085, %v3069
        %v3534 = vpack.c.b16 %v3102, %v3086
        %v3535 = vpack.c.b16 %v3103, %v3087
        %v3536 = vpack.c.b16 %v3104, %v3088
        %v3537 = vpack.c.b16 %v3105, %v3089
        %v3538 = vpack.c.b16 %v3106, %v3090
        %v3539 = vpack.c.b16 %v3107, %v3091
        %v3540 = vpack.c.b16 %v3108, %v3092
        %v3541 = vpack.c.b16 %v3109, %v3093
        %v3542 = vpack.c.b16 %v3110, %v3094
        %v3543 = vpack.c.b16 %v3111, %v3095
        %v3544 = vpack.c.b16 %v3112, %v3096
        %v3545 = vpack.c.b16 %v3113, %v3097
        %v3546 = vpack.c.b16 %v3114, %v3098
        %v3547 = vpack.c.b16 %v3115, %v3099
        %v3548 = vpack.c.b16 %v3116, %v3100
        %v3549 = vpack.c.b16 %v3117, %v3101
        %v3550 = vpack.c.b16 %v3134, %v3118
        %v3551 = vpack.c.b16 %v3135, %v3119
        %v3552 = vpack.c.b16 %v3136, %v3120
        %v3553 = vpack.c.b16 %v3137, %v3121
        %v3554 = vpack.c.b16 %v3138, %v3122
        %v3555 = vpack.c.b16 %v3139, %v3123
        %v3556 = vpack.c.b16 %v3140, %v3124
        %v3557 = vpack.c.b16 %v3141, %v3125
        %v3558 = vpack.c.b16 %v3142, %v3126
        %v3559 = vpack.c.b16 %v3143, %v3127
        %v3560 = vpack.c.b16 %v3144, %v3128
        %v3561 = vpack.c.b16 %v3145, %v3129
        %v3562 = vpack.c.b16 %v3146, %v3130
        %v3563 = vpack.c.b16 %v3147, %v3131
        %v3564 = vpack.c.b16 %v3148, %v3132
        %v3565 = vpack.c.b16 %v3149, %v3133
        %v3566 = vpack.c.b16 %v3166, %v3150
        %v3567 = vpack.c.b16 %v3167, %v3151
        %v3568 = vpack.c.b16 %v3168, %v3152
        %v3569 = vpack.c.b16 %v3169, %v3153
        %v3570 = vpack.c.b16 %v3170, %v3154
        %v3571 = vpack.c.b16 %v3171, %v3155
        %v3572 = vpack.c.b16 %v3172, %v3156
        %v3573 = vpack.c.b16 %v3173, %v3157
        %v3574 = vpack.c.b16 %v3174, %v3158
        %v3575 = vpack.c.b16 %v3175, %v3159
        %v3576 = vpack.c.b16 %v3176, %v3160
        %v3577 = vpack.c.b16 %v3177, %v3161
        %v3578 = vpack.c.b16 %v3178, %v3162
        %v3579 = vpack.c.b16 %v3179, %v3163
        %v3580 = vpack.c.b16 %v3180, %v3164
        %v3581 = vpack.c.b16 %v3181, %v3165
        %v3582 = vpack.c.b16 %v3182, %v3182
        %v3583 = vpack.c.b16 %v3183, %v3183
        %v3584 = vpack.c.b16 %v3184, %v3184
        %v3585 = vpack.c.b16 %v3185, %v3185
        %v3586 = vpack.c.b16 %v3186, %v3186
        %v3587 = vpack.c.b16 %v3187, %v3187
        %v3588 = vpack.c.b16 %v3188, %v3188
        %v3589 = vpack.c.b16 %v3189, %v3189
        %v3590 = vpack.c.b16 %v3190, %v3190
        %v3591 = vpack.c.b16 %v3191, %v3191
        %v3592 = vpack.c.b16 %v3192, %v3192
        %v3593 = vpack.c.b16 %v3193, %v3193
        %v3594 = vpack.c.b16 %v3194, %v3194
        %v3595 = vpack.c.b16 %v3195, %v3195
        %v3596 = vpack.c.b16 %v3196, %v3196
        %v3597 = vpack.c.b16 %v3197, %v3197
        %vm3982 = vcmask 64512
        %v3984 = vsel %vm3982, %v2018, 0
        %vm3986 = vcmask 1043456
        %v3988 = vsel %vm3986, %v3582, 0
        %v3991 = vsel %vm3986, %v3583, 0
        %v3994 = vsel %vm3986, %v3584, 0
        %v3997 = vsel %vm3986, %v3585, 0
        %v4000 = vsel %vm3986, %v3586, 0
        %v4003 = vsel %vm3986, %v3587, 0
        %v4006 = vsel %vm3986, %v3588, 0
        %v4009 = vsel %vm3986, %v3589, 0
        %v4012 = vsel %vm3986, %v3590, 0
        %v4015 = vsel %vm3986, %v3591, 0
        %v4018 = vsel %vm3986, %v3592, 0
        %v4021 = vsel %vm3986, %v3593, 0
        %v4024 = vsel %vm3986, %v3594, 0
        %v4027 = vsel %vm3986, %v3595, 0
        %v4030 = vsel %vm3986, %v3596, 0
        %v4033 = vsel %vm3986, %v3597, 0
        %4035 = vmatprep.subr.bf16.mxu0 %v3199
        %4036 = vmatpush1.bf16.msra.mxu0 %v3198
        %4037 = vmatprep.subr.bf16.mxu0 %v3215
        %4038 = vmatpush1.bf16.msra.mxu0 %v3214
        %4039 = vmatprep.subr.bf16.mxu0 %v3231
        %4040 = vmatpush1.bf16.msra.mxu0 %v3230
        %4041 = vmatprep.subr.bf16.mxu0 %v3247
        %4042 = vmatpush1.bf16.msra.mxu0 %v3246
        %4043 = vmatprep.subr.bf16.mxu0 %v3263
        %4044 = vmatpush1.bf16.msra.mxu0 %v3262
        %4045 = vmatprep.subr.bf16.mxu0 %v3279
        %4046 = vmatpush1.bf16.msra.mxu0 %v3278
        %4047 = vmatprep.subr.bf16.mxu0 %v3295
        %4048 = vmatpush1.bf16.msra.mxu0 %v3294
        %4049 = vmatprep.subr.bf16.mxu0 %v3311
        %4050 = vmatpush1.bf16.msra.mxu0 %v3310
        %4051 = vmatprep.subr.bf16.mxu0 %v3327
        %4052 = vmatpush1.bf16.msra.mxu0 %v3326
        %4053 = vmatprep.subr.bf16.mxu0 %v3343
        %4054 = vmatpush1.bf16.msra.mxu0 %v3342
        %4055 = vmatprep.subr.bf16.mxu0 %v3359
        %4056 = vmatpush1.bf16.msra.mxu0 %v3358
        %4057 = vmatprep.subr.bf16.mxu0 %v3375
        %4058 = vmatpush1.bf16.msra.mxu0 %v3374
        %4059 = vmatprep.subr.bf16.mxu0 %v3391
        %4060 = vmatpush1.bf16.msra.mxu0 %v3390
        %4061 = vmatprep.subr.bf16.mxu0 %v3407
        %4062 = vmatpush1.bf16.msra.mxu0 %v3406
        %4063 = vmatprep.subr.bf16.mxu0 %v3423
        %4064 = vmatpush1.bf16.msra.mxu0 %v3422
        %4065 = vmatprep.subr.bf16.mxu0 %v3439
        %4066 = vmatpush1.bf16.msra.mxu0 %v3438
        %4067 = vmatprep.mubr.bf16.mxu0 %v2016
        %4068 = vmatmul.mubr.bf16.gmra.mrb[0].mxu0 %v2015
        %v4069 = vpop.f32.mrb[0].mxu0
        %v4070 = vadd.f32 %v2007, %v4069
        %v4071 = vpop.f32.mrb[0].mxu0
        %v4072 = vadd.f32 %v2007, %v4071
        %v4073 = vpop.f32.mrb[0].mxu0
        %v4074 = vpop.f32.mrb[0].mxu0
        %4075 = vdwg.mxu0
        %4076 = vmatprep.subr.bf16.mxu0 %v3455
        %4077 = vmatpush1.bf16.msra.mxu0 %v3454
        %4078 = vmatprep.subr.bf16.mxu0 %v3471
        %4079 = vmatpush1.bf16.msra.mxu0 %v3470
        %4080 = vmatprep.subr.bf16.mxu0 %v3487
        %4081 = vmatpush1.bf16.msra.mxu0 %v3486
        %4082 = vmatprep.subr.bf16.mxu0 %v3503
        %4083 = vmatpush1.bf16.msra.mxu0 %v3502
        %4084 = vmatprep.subr.bf16.mxu0 %v3519
        %4085 = vmatpush1.bf16.msra.mxu0 %v3518
        %4086 = vmatprep.subr.bf16.mxu0 %v3535
        %4087 = vmatpush1.bf16.msra.mxu0 %v3534
        %4088 = vmatprep.subr.bf16.mxu0 %v3551
        %4089 = vmatpush1.bf16.msra.mxu0 %v3550
        %4090 = vmatprep.subr.bf16.mxu0 %v3567
        %4091 = vmatpush1.bf16.msra.mxu0 %v3566
        %4092 = vmatprep.subr.bf16.mxu0 %v3991
        %4093 = vmatpush1.bf16.msra.mxu0 %v3988
        %4094 = vmatprep.subr.bf16.mxu0 0
        %4095 = vmatpush1.bf16.msra.mxu0 0
        %4096 = vmatprep.subr.bf16.mxu0 0
        %4097 = vmatpush1.bf16.msra.mxu0 0
        %4098 = vmatprep.subr.bf16.mxu0 0
        %4099 = vmatpush1.bf16.msra.mxu0 0
        %4100 = vmatprep.subr.bf16.mxu0 0
        %4101 = vmatpush1.bf16.msra.mxu0 0
        %4102 = vmatprep.subr.bf16.mxu0 0
        %4103 = vmatpush1.bf16.msra.mxu0 0
        %4104 = vmatprep.subr.bf16.mxu0 0
        %4105 = vmatpush1.bf16.msra.mxu0 0
        %4106 = vmatprep.subr.bf16.mxu0 0
        %4107 = vmatpush1.bf16.msra.mxu0 0
        %4108 = vmatprep.mubr.bf16.mxu0 %v3984
        %4109 = vmatmul.mubr.bf16.gmra.mrb[0].mxu0 %v2017
        %v4110 = vpop.f32.mrb[0].mxu0
        %v4111 = vadd.f32 %v4070, %v4110
        %v4112 = vpop.f32.mrb[0].mxu0
        %v4113 = vadd.f32 %v4072, %v4112
        %v4114 = vpop.f32.mrb[0].mxu0
        %v4115 = vpop.f32.mrb[0].mxu0
        %4116 = vdwg.mxu0
        %4117 = vmatprep.subr.bf16.mxu0 %v3201
        %4118 = vmatpush1.bf16.msra.mxu0 %v3200
        %4119 = vmatprep.subr.bf16.mxu0 %v3217
        %4120 = vmatpush1.bf16.msra.mxu0 %v3216
        %4121 = vmatprep.subr.bf16.mxu0 %v3233
        %4122 = vmatpush1.bf16.msra.mxu0 %v3232
        %4123 = vmatprep.subr.bf16.mxu0 %v3249
        %4124 = vmatpush1.bf16.msra.mxu0 %v3248
        %4125 = vmatprep.subr.bf16.mxu0 %v3265
        %4126 = vmatpush1.bf16.msra.mxu0 %v3264
        %4127 = vmatprep.subr.bf16.mxu0 %v3281
        %4128 = vmatpush1.bf16.msra.mxu0 %v3280
        %4129 = vmatprep.subr.bf16.mxu0 %v3297
        %4130 = vmatpush1.bf16.msra.mxu0 %v3296
        %4131 = vmatprep.subr.bf16.mxu0 %v3313
        %4132 = vmatpush1.bf16.msra.mxu0 %v3312
        %4133 = vmatprep.subr.bf16.mxu0 %v3329
        %4134 = vmatpush1.bf16.msra.mxu0 %v3328
        %4135 = vmatprep.subr.bf16.mxu0 %v3345
        %4136 = vmatpush1.bf16.msra.mxu0 %v3344
        %4137 = vmatprep.subr.bf16.mxu0 %v3361
        %4138 = vmatpush1.bf16.msra.mxu0 %v3360
        %4139 = vmatprep.subr.bf16.mxu0 %v3377
        %4140 = vmatpush1.bf16.msra.mxu0 %v3376
        %4141 = vmatprep.subr.bf16.mxu0 %v3393
        %4142 = vmatpush1.bf16.msra.mxu0 %v3392
        %4143 = vmatprep.subr.bf16.mxu0 %v3409
        %4144 = vmatpush1.bf16.msra.mxu0 %v3408
        %4145 = vmatprep.subr.bf16.mxu0 %v3425
        %4146 = vmatpush1.bf16.msra.mxu0 %v3424
        %4147 = vmatprep.subr.bf16.mxu0 %v3441
        %4148 = vmatpush1.bf16.msra.mxu0 %v3440
        %4149 = vmatprep.mubr.bf16.mxu0 %v2016
        %4150 = vmatmul.mubr.bf16.gmra.mrb[0].mxu0 %v2015
        %v4151 = vpop.f32.mrb[0].mxu0
        %v4152 = vadd.f32 %v2007, %v4151
        %v4153 = vpop.f32.mrb[0].mxu0
        %v4154 = vadd.f32 %v2007, %v4153
        %v4155 = vpop.f32.mrb[0].mxu0
        %v4156 = vpop.f32.mrb[0].mxu0
        %4157 = vdwg.mxu0
        %4158 = vmatprep.subr.bf16.mxu0 %v3457
        %4159 = vmatpush1.bf16.msra.mxu0 %v3456
        %4160 = vmatprep.subr.bf16.mxu0 %v3473
        %4161 = vmatpush1.bf16.msra.mxu0 %v3472
        %4162 = vmatprep.subr.bf16.mxu0 %v3489
        %4163 = vmatpush1.bf16.msra.mxu0 %v3488
        %4164 = vmatprep.subr.bf16.mxu0 %v3505
        %4165 = vmatpush1.bf16.msra.mxu0 %v3504
        %4166 = vmatprep.subr.bf16.mxu0 %v3521
        %4167 = vmatpush1.bf16.msra.mxu0 %v3520
        %4168 = vmatprep.subr.bf16.mxu0 %v3537
        %4169 = vmatpush1.bf16.msra.mxu0 %v3536
        %4170 = vmatprep.subr.bf16.mxu0 %v3553
        %4171 = vmatpush1.bf16.msra.mxu0 %v3552
        %4172 = vmatprep.subr.bf16.mxu0 %v3569
        %4173 = vmatpush1.bf16.msra.mxu0 %v3568
        %4174 = vmatprep.subr.bf16.mxu0 %v3997
        %4175 = vmatpush1.bf16.msra.mxu0 %v3994
        %4176 = vmatprep.subr.bf16.mxu0 0
        %4177 = vmatpush1.bf16.msra.mxu0 0
        %4178 = vmatprep.subr.bf16.mxu0 0
        %4179 = vmatpush1.bf16.msra.mxu0 0
        %4180 = vmatprep.subr.bf16.mxu0 0
        %4181 = vmatpush1.bf16.msra.mxu0 0
        %4182 = vmatprep.subr.bf16.mxu0 0
        %4183 = vmatpush1.bf16.msra.mxu0 0
        %4184 = vmatprep.subr.bf16.mxu0 0
        %4185 = vmatpush1.bf16.msra.mxu0 0
        %4186 = vmatprep.subr.bf16.mxu0 0
        %4187 = vmatpush1.bf16.msra.mxu0 0
        %4188 = vmatprep.subr.bf16.mxu0 0
        %4189 = vmatpush1.bf16.msra.mxu0 0
        %4190 = vmatprep.mubr.bf16.mxu0 %v3984
        %4191 = vmatmul.mubr.bf16.gmra.mrb[0].mxu0 %v2017
        %v4192 = vpop.f32.mrb[0].mxu0
        %v4193 = vadd.f32 %v4152, %v4192
        %v4194 = vpop.f32.mrb[0].mxu0
        %v4195 = vadd.f32 %v4154, %v4194
        %v4196 = vpop.f32.mrb[0].mxu0
        %v4197 = vpop.f32.mrb[0].mxu0
        %4198 = vdwg.mxu0
        %4199 = vmatprep.subr.bf16.mxu0 %v3203
        %4200 = vmatpush1.bf16.msra.mxu0 %v3202
        %4201 = vmatprep.subr.bf16.mxu0 %v3219
        %4202 = vmatpush1.bf16.msra.mxu0 %v3218
        %4203 = vmatprep.subr.bf16.mxu0 %v3235
        %4204 = vmatpush1.bf16.msra.mxu0 %v3234
        %4205 = vmatprep.subr.bf16.mxu0 %v3251
        %4206 = vmatpush1.bf16.msra.mxu0 %v3250
        %4207 = vmatprep.subr.bf16.mxu0 %v3267
        %4208 = vmatpush1.bf16.msra.mxu0 %v3266
        %4209 = vmatprep.subr.bf16.mxu0 %v3283
        %4210 = vmatpush1.bf16.msra.mxu0 %v3282
        %4211 = vmatprep.subr.bf16.mxu0 %v3299
        %4212 = vmatpush1.bf16.msra.mxu0 %v3298
        %4213 = vmatprep.subr.bf16.mxu0 %v3315
        %4214 = vmatpush1.bf16.msra.mxu0 %v3314
        %4215 = vmatprep.subr.bf16.mxu0 %v3331
        %4216 = vmatpush1.bf16.msra.mxu0 %v3330
        %4217 = vmatprep.subr.bf16.mxu0 %v3347
        %4218 = vmatpush1.bf16.msra.mxu0 %v3346
        %4219 = vmatprep.subr.bf16.mxu0 %v3363
        %4220 = vmatpush1.bf16.msra.mxu0 %v3362
        %4221 = vmatprep.subr.bf16.mxu0 %v3379
        %4222 = vmatpush1.bf16.msra.mxu0 %v3378
        %4223 = vmatprep.subr.bf16.mxu0 %v3395
        %4224 = vmatpush1.bf16.msra.mxu0 %v3394
        %4225 = vmatprep.subr.bf16.mxu0 %v3411
        %4226 = vmatpush1.bf16.msra.mxu0 %v3410
        %4227 = vmatprep.subr.bf16.mxu0 %v3427
        %4228 = vmatpush1.bf16.msra.mxu0 %v3426
        %4229 = vmatprep.subr.bf16.mxu0 %v3443
        %4230 = vmatpush1.bf16.msra.mxu0 %v3442
        %4231 = vmatprep.mubr.bf16.mxu0 %v2016
        %4232 = vmatmul.mubr.bf16.gmra.mrb[0].mxu0 %v2015
        %v4233 = vpop.f32.mrb[0].mxu0
        %v4234 = vadd.f32 %v2007, %v4233
        %v4235 = vpop.f32.mrb[0].mxu0
        %v4236 = vadd.f32 %v2007, %v4235
        %v4237 = vpop.f32.mrb[0].mxu0
        %v4238 = vpop.f32.mrb[0].mxu0
        %4239 = vdwg.mxu0
        %4240 = vmatprep.subr.bf16.mxu0 %v3459
        %4241 = vmatpush1.bf16.msra.mxu0 %v3458
        %4242 = vmatprep.subr.bf16.mxu0 %v3475
        %4243 = vmatpush1.bf16.msra.mxu0 %v3474
        %4244 = vmatprep.subr.bf16.mxu0 %v3491
        %4245 = vmatpush1.bf16.msra.mxu0 %v3490
        %4246 = vmatprep.subr.bf16.mxu0 %v3507
        %4247 = vmatpush1.bf16.msra.mxu0 %v3506
        %4248 = vmatprep.subr.bf16.mxu0 %v3523
        %4249 = vmatpush1.bf16.msra.mxu0 %v3522
        %4250 = vmatprep.subr.bf16.mxu0 %v3539
        %4251 = vmatpush1.bf16.msra.mxu0 %v3538
        %4252 = vmatprep.subr.bf16.mxu0 %v3555
        %4253 = vmatpush1.bf16.msra.mxu0 %v3554
        %4254 = vmatprep.subr.bf16.mxu0 %v3571
        %4255 = vmatpush1.bf16.msra.mxu0 %v3570
        %4256 = vmatprep.subr.bf16.mxu0 %v4003
        %4257 = vmatpush1.bf16.msra.mxu0 %v4000
        %4258 = vmatprep.subr.bf16.mxu0 0
        %4259 = vmatpush1.bf16.msra.mxu0 0
        %4260 = vmatprep.subr.bf16.mxu0 0
        %4261 = vmatpush1.bf16.msra.mxu0 0
        %4262 = vmatprep.subr.bf16.mxu0 0
        %4263 = vmatpush1.bf16.msra.mxu0 0
        %4264 = vmatprep.subr.bf16.mxu0 0
        %4265 = vmatpush1.bf16.msra.mxu0 0
        %4266 = vmatprep.subr.bf16.mxu0 0
        %4267 = vmatpush1.bf16.msra.mxu0 0
        %4268 = vmatprep.subr.bf16.mxu0 0
        %4269 = vmatpush1.bf16.msra.mxu0 0
        %4270 = vmatprep.subr.bf16.mxu0 0
        %4271 = vmatpush1.bf16.msra.mxu0 0
        %4272 = vmatprep.mubr.bf16.mxu0 %v3984
        %4273 = vmatmul.mubr.bf16.gmra.mrb[0].mxu0 %v2017
        %v4274 = vpop.f32.mrb[0].mxu0
        %v4275 = vadd.f32 %v4234, %v4274
        %v4276 = vpop.f32.mrb[0].mxu0
        %v4277 = vadd.f32 %v4236, %v4276
        %v4278 = vpop.f32.mrb[0].mxu0
        %v4279 = vpop.f32.mrb[0].mxu0
        %4280 = vdwg.mxu0
        %4281 = vmatprep.subr.bf16.mxu0 %v3205
        %4282 = vmatpush1.bf16.msra.mxu0 %v3204
        %4283 = vmatprep.subr.bf16.mxu0 %v3221
        %4284 = vmatpush1.bf16.msra.mxu0 %v3220
        %4285 = vmatprep.subr.bf16.mxu0 %v3237
        %4286 = vmatpush1.bf16.msra.mxu0 %v3236
        %4287 = vmatprep.subr.bf16.mxu0 %v3253
        %4288 = vmatpush1.bf16.msra.mxu0 %v3252
        %4289 = vmatprep.subr.bf16.mxu0 %v3269
        %4290 = vmatpush1.bf16.msra.mxu0 %v3268
        %4291 = vmatprep.subr.bf16.mxu0 %v3285
        %4292 = vmatpush1.bf16.msra.mxu0 %v3284
        %4293 = vmatprep.subr.bf16.mxu0 %v3301
        %4294 = vmatpush1.bf16.msra.mxu0 %v3300
        %4295 = vmatprep.subr.bf16.mxu0 %v3317
        %4296 = vmatpush1.bf16.msra.mxu0 %v3316
        %4297 = vmatprep.subr.bf16.mxu0 %v3333
        %4298 = vmatpush1.bf16.msra.mxu0 %v3332
        %4299 = vmatprep.subr.bf16.mxu0 %v3349
        %4300 = vmatpush1.bf16.msra.mxu0 %v3348
        %4301 = vmatprep.subr.bf16.mxu0 %v3365
        %4302 = vmatpush1.bf16.msra.mxu0 %v3364
        %4303 = vmatprep.subr.bf16.mxu0 %v3381
        %4304 = vmatpush1.bf16.msra.mxu0 %v3380
        %4305 = vmatprep.subr.bf16.mxu0 %v3397
        %4306 = vmatpush1.bf16.msra.mxu0 %v3396
        %4307 = vmatprep.subr.bf16.mxu0 %v3413
        %4308 = vmatpush1.bf16.msra.mxu0 %v3412
        %4309 = vmatprep.subr.bf16.mxu0 %v3429
        %4310 = vmatpush1.bf16.msra.mxu0 %v3428
        %4311 = vmatprep.subr.bf16.mxu0 %v3445
        %4312 = vmatpush1.bf16.msra.mxu0 %v3444
        %4313 = vmatprep.mubr.bf16.mxu0 %v2016
        %4314 = vmatmul.mubr.bf16.gmra.mrb[0].mxu0 %v2015
        %v4315 = vpop.f32.mrb[0].mxu0
        %v4316 = vadd.f32 %v2007, %v4315
        %v4317 = vpop.f32.mrb[0].mxu0
        %v4318 = vadd.f32 %v2007, %v4317
        %v4319 = vpop.f32.mrb[0].mxu0
        %v4320 = vpop.f32.mrb[0].mxu0
        %4321 = vdwg.mxu0
        %4322 = vmatprep.subr.bf16.mxu0 %v3461
        %4323 = vmatpush1.bf16.msra.mxu0 %v3460
        %4324 = vmatprep.subr.bf16.mxu0 %v3477
        %4325 = vmatpush1.bf16.msra.mxu0 %v3476
        %4326 = vmatprep.subr.bf16.mxu0 %v3493
        %4327 = vmatpush1.bf16.msra.mxu0 %v3492
        %4328 = vmatprep.subr.bf16.mxu0 %v3509
        %4329 = vmatpush1.bf16.msra.mxu0 %v3508
        %4330 = vmatprep.subr.bf16.mxu0 %v3525
        %4331 = vmatpush1.bf16.msra.mxu0 %v3524
        %4332 = vmatprep.subr.bf16.mxu0 %v3541
        %4333 = vmatpush1.bf16.msra.mxu0 %v3540
        %4334 = vmatprep.subr.bf16.mxu0 %v3557
        %4335 = vmatpush1.bf16.msra.mxu0 %v3556
        %4336 = vmatprep.subr.bf16.mxu0 %v3573
        %4337 = vmatpush1.bf16.msra.mxu0 %v3572
        %4338 = vmatprep.subr.bf16.mxu0 %v4009
        %4339 = vmatpush1.bf16.msra.mxu0 %v4006
        %4340 = vmatprep.subr.bf16.mxu0 0
        %4341 = vmatpush1.bf16.msra.mxu0 0
        %4342 = vmatprep.subr.bf16.mxu0 0
        %4343 = vmatpush1.bf16.msra.mxu0 0
        %4344 = vmatprep.subr.bf16.mxu0 0
        %4345 = vmatpush1.bf16.msra.mxu0 0
        %4346 = vmatprep.subr.bf16.mxu0 0
        %4347 = vmatpush1.bf16.msra.mxu0 0
        %4348 = vmatprep.subr.bf16.mxu0 0
        %4349 = vmatpush1.bf16.msra.mxu0 0
        %4350 = vmatprep.subr.bf16.mxu0 0
        %4351 = vmatpush1.bf16.msra.mxu0 0
        %4352 = vmatprep.subr.bf16.mxu0 0
        %4353 = vmatpush1.bf16.msra.mxu0 0
        %4354 = vmatprep.mubr.bf16.mxu0 %v3984
        %4355 = vmatmul.mubr.bf16.gmra.mrb[0].mxu0 %v2017
        %v4356 = vpop.f32.mrb[0].mxu0
        %v4357 = vadd.f32 %v4316, %v4356
        %v4358 = vpop.f32.mrb[0].mxu0
        %v4359 = vadd.f32 %v4318, %v4358
        %v4360 = vpop.f32.mrb[0].mxu0
        %v4361 = vpop.f32.mrb[0].mxu0
        %4362 = vdwg.mxu0
        %4363 = vmatprep.subr.bf16.mxu0 %v3207
        %4364 = vmatpush1.bf16.msra.mxu0 %v3206
        %4365 = vmatprep.subr.bf16.mxu0 %v3223
        %4366 = vmatpush1.bf16.msra.mxu0 %v3222
        %4367 = vmatprep.subr.bf16.mxu0 %v3239
        %4368 = vmatpush1.bf16.msra.mxu0 %v3238
        %4369 = vmatprep.subr.bf16.mxu0 %v3255
        %4370 = vmatpush1.bf16.msra.mxu0 %v3254
        %4371 = vmatprep.subr.bf16.mxu0 %v3271
        %4372 = vmatpush1.bf16.msra.mxu0 %v3270
        %4373 = vmatprep.subr.bf16.mxu0 %v3287
        %4374 = vmatpush1.bf16.msra.mxu0 %v3286
        %4375 = vmatprep.subr.bf16.mxu0 %v3303
        %4376 = vmatpush1.bf16.msra.mxu0 %v3302
        %4377 = vmatprep.subr.bf16.mxu0 %v3319
        %4378 = vmatpush1.bf16.msra.mxu0 %v3318
        %4379 = vmatprep.subr.bf16.mxu0 %v3335
        %4380 = vmatpush1.bf16.msra.mxu0 %v3334
        %4381 = vmatprep.subr.bf16.mxu0 %v3351
        %4382 = vmatpush1.bf16.msra.mxu0 %v3350
        %4383 = vmatprep.subr.bf16.mxu0 %v3367
        %4384 = vmatpush1.bf16.msra.mxu0 %v3366
        %4385 = vmatprep.subr.bf16.mxu0 %v3383
        %4386 = vmatpush1.bf16.msra.mxu0 %v3382
        %4387 = vmatprep.subr.bf16.mxu0 %v3399
        %4388 = vmatpush1.bf16.msra.mxu0 %v3398
        %4389 = vmatprep.subr.bf16.mxu0 %v3415
        %4390 = vmatpush1.bf16.msra.mxu0 %v3414
        %4391 = vmatprep.subr.bf16.mxu0 %v3431
        %4392 = vmatpush1.bf16.msra.mxu0 %v3430
        %4393 = vmatprep.subr.bf16.mxu0 %v3447
        %4394 = vmatpush1.bf16.msra.mxu0 %v3446
        %4395 = vmatprep.mubr.bf16.mxu0 %v2016
        %4396 = vmatmul.mubr.bf16.gmra.mrb[0].mxu0 %v2015
        %v4397 = vpop.f32.mrb[0].mxu0
        %v4398 = vadd.f32 %v2007, %v4397
        %v4399 = vpop.f32.mrb[0].mxu0
        %v4400 = vadd.f32 %v2007, %v4399
        %v4401 = vpop.f32.mrb[0].mxu0
        %v4402 = vpop.f32.mrb[0].mxu0
        %4403 = vdwg.mxu0
        %4404 = vmatprep.subr.bf16.mxu0 %v3463
        %4405 = vmatpush1.bf16.msra.mxu0 %v3462
        %4406 = vmatprep.subr.bf16.mxu0 %v3479
        %4407 = vmatpush1.bf16.msra.mxu0 %v3478
        %4408 = vmatprep.subr.bf16.mxu0 %v3495
        %4409 = vmatpush1.bf16.msra.mxu0 %v3494
        %4410 = vmatprep.subr.bf16.mxu0 %v3511
        %4411 = vmatpush1.bf16.msra.mxu0 %v3510
        %4412 = vmatprep.subr.bf16.mxu0 %v3527
        %4413 = vmatpush1.bf16.msra.mxu0 %v3526
        %4414 = vmatprep.subr.bf16.mxu0 %v3543
        %4415 = vmatpush1.bf16.msra.mxu0 %v3542
        %4416 = vmatprep.subr.bf16.mxu0 %v3559
        %4417 = vmatpush1.bf16.msra.mxu0 %v3558
        %4418 = vmatprep.subr.bf16.mxu0 %v3575
        %4419 = vmatpush1.bf16.msra.mxu0 %v3574
        %4420 = vmatprep.subr.bf16.mxu0 %v4015
        %4421 = vmatpush1.bf16.msra.mxu0 %v4012
        %4422 = vmatprep.subr.bf16.mxu0 0
        %4423 = vmatpush1.bf16.msra.mxu0 0
        %4424 = vmatprep.subr.bf16.mxu0 0
        %4425 = vmatpush1.bf16.msra.mxu0 0
        %4426 = vmatprep.subr.bf16.mxu0 0
        %4427 = vmatpush1.bf16.msra.mxu0 0
        %4428 = vmatprep.subr.bf16.mxu0 0
        %4429 = vmatpush1.bf16.msra.mxu0 0
        %4430 = vmatprep.subr.bf16.mxu0 0
        %4431 = vmatpush1.bf16.msra.mxu0 0
        %4432 = vmatprep.subr.bf16.mxu0 0
        %4433 = vmatpush1.bf16.msra.mxu0 0
        %4434 = vmatprep.subr.bf16.mxu0 0
        %4435 = vmatpush1.bf16.msra.mxu0 0
        %4436 = vmatprep.mubr.bf16.mxu0 %v3984
        %4437 = vmatmul.mubr.bf16.gmra.mrb[0].mxu0 %v2017
        %v4438 = vpop.f32.mrb[0].mxu0
        %v4439 = vadd.f32 %v4398, %v4438
        %v4440 = vpop.f32.mrb[0].mxu0
        %v4441 = vadd.f32 %v4400, %v4440
        %v4442 = vpop.f32.mrb[0].mxu0
        %v4443 = vpop.f32.mrb[0].mxu0
        %4444 = vdwg.mxu0
        %4445 = vmatprep.subr.bf16.mxu0 %v3209
        %4446 = vmatpush1.bf16.msra.mxu0 %v3208
        %4447 = vmatprep.subr.bf16.mxu0 %v3225
        %4448 = vmatpush1.bf16.msra.mxu0 %v3224
        %4449 = vmatprep.subr.bf16.mxu0 %v3241
        %4450 = vmatpush1.bf16.msra.mxu0 %v3240
        %4451 = vmatprep.subr.bf16.mxu0 %v3257
        %4452 = vmatpush1.bf16.msra.mxu0 %v3256
        %4453 = vmatprep.subr.bf16.mxu0 %v3273
        %4454 = vmatpush1.bf16.msra.mxu0 %v3272
        %4455 = vmatprep.subr.bf16.mxu0 %v3289
        %4456 = vmatpush1.bf16.msra.mxu0 %v3288
        %4457 = vmatprep.subr.bf16.mxu0 %v3305
        %4458 = vmatpush1.bf16.msra.mxu0 %v3304
        %4459 = vmatprep.subr.bf16.mxu0 %v3321
        %4460 = vmatpush1.bf16.msra.mxu0 %v3320
        %4461 = vmatprep.subr.bf16.mxu0 %v3337
        %4462 = vmatpush1.bf16.msra.mxu0 %v3336
        %4463 = vmatprep.subr.bf16.mxu0 %v3353
        %4464 = vmatpush1.bf16.msra.mxu0 %v3352
        %4465 = vmatprep.subr.bf16.mxu0 %v3369
        %4466 = vmatpush1.bf16.msra.mxu0 %v3368
        %4467 = vmatprep.subr.bf16.mxu0 %v3385
        %4468 = vmatpush1.bf16.msra.mxu0 %v3384
        %4469 = vmatprep.subr.bf16.mxu0 %v3401
        %4470 = vmatpush1.bf16.msra.mxu0 %v3400
        %4471 = vmatprep.subr.bf16.mxu0 %v3417
        %4472 = vmatpush1.bf16.msra.mxu0 %v3416
        %4473 = vmatprep.subr.bf16.mxu0 %v3433
        %4474 = vmatpush1.bf16.msra.mxu0 %v3432
        %4475 = vmatprep.subr.bf16.mxu0 %v3449
        %4476 = vmatpush1.bf16.msra.mxu0 %v3448
        %4477 = vmatprep.mubr.bf16.mxu0 %v2016
        %4478 = vmatmul.mubr.bf16.gmra.mrb[0].mxu0 %v2015
        %v4479 = vpop.f32.mrb[0].mxu0
        %v4480 = vadd.f32 %v2007, %v4479
        %v4481 = vpop.f32.mrb[0].mxu0
        %v4482 = vadd.f32 %v2007, %v4481
        %v4483 = vpop.f32.mrb[0].mxu0
        %v4484 = vpop.f32.mrb[0].mxu0
        %4485 = vdwg.mxu0
        %4486 = vmatprep.subr.bf16.mxu0 %v3465
        %4487 = vmatpush1.bf16.msra.mxu0 %v3464
        %4488 = vmatprep.subr.bf16.mxu0 %v3481
        %4489 = vmatpush1.bf16.msra.mxu0 %v3480
        %4490 = vmatprep.subr.bf16.mxu0 %v3497
        %4491 = vmatpush1.bf16.msra.mxu0 %v3496
        %4492 = vmatprep.subr.bf16.mxu0 %v3513
        %4493 = vmatpush1.bf16.msra.mxu0 %v3512
        %4494 = vmatprep.subr.bf16.mxu0 %v3529
        %4495 = vmatpush1.bf16.msra.mxu0 %v3528
        %4496 = vmatprep.subr.bf16.mxu0 %v3545
        %4497 = vmatpush1.bf16.msra.mxu0 %v3544
        %4498 = vmatprep.subr.bf16.mxu0 %v3561
        %4499 = vmatpush1.bf16.msra.mxu0 %v3560
        %4500 = vmatprep.subr.bf16.mxu0 %v3577
        %4501 = vmatpush1.bf16.msra.mxu0 %v3576
        %4502 = vmatprep.subr.bf16.mxu0 %v4021
        %4503 = vmatpush1.bf16.msra.mxu0 %v4018
        %4504 = vmatprep.subr.bf16.mxu0 0
        %4505 = vmatpush1.bf16.msra.mxu0 0
        %4506 = vmatprep.subr.bf16.mxu0 0
        %4507 = vmatpush1.bf16.msra.mxu0 0
        %4508 = vmatprep.subr.bf16.mxu0 0
        %4509 = vmatpush1.bf16.msra.mxu0 0
        %4510 = vmatprep.subr.bf16.mxu0 0
        %4511 = vmatpush1.bf16.msra.mxu0 0
        %4512 = vmatprep.subr.bf16.mxu0 0
        %4513 = vmatpush1.bf16.msra.mxu0 0
        %4514 = vmatprep.subr.bf16.mxu0 0
        %4515 = vmatpush1.bf16.msra.mxu0 0
        %4516 = vmatprep.subr.bf16.mxu0 0
        %4517 = vmatpush1.bf16.msra.mxu0 0
        %4518 = vmatprep.mubr.bf16.mxu0 %v3984
        %4519 = vmatmul.mubr.bf16.gmra.mrb[0].mxu0 %v2017
        %v4520 = vpop.f32.mrb[0].mxu0
        %v4521 = vadd.f32 %v4480, %v4520
        %v4522 = vpop.f32.mrb[0].mxu0
        %v4523 = vadd.f32 %v4482, %v4522
        %v4524 = vpop.f32.mrb[0].mxu0
        %v4525 = vpop.f32.mrb[0].mxu0
        %4526 = vdwg.mxu0
        %4527 = vmatprep.subr.bf16.mxu0 %v3211
        %4528 = vmatpush1.bf16.msra.mxu0 %v3210
        %4529 = vmatprep.subr.bf16.mxu0 %v3227
        %4530 = vmatpush1.bf16.msra.mxu0 %v3226
        %4531 = vmatprep.subr.bf16.mxu0 %v3243
        %4532 = vmatpush1.bf16.msra.mxu0 %v3242
        %4533 = vmatprep.subr.bf16.mxu0 %v3259
        %4534 = vmatpush1.bf16.msra.mxu0 %v3258
        %4535 = vmatprep.subr.bf16.mxu0 %v3275
        %4536 = vmatpush1.bf16.msra.mxu0 %v3274
        %4537 = vmatprep.subr.bf16.mxu0 %v3291
        %4538 = vmatpush1.bf16.msra.mxu0 %v3290
        %4539 = vmatprep.subr.bf16.mxu0 %v3307
        %4540 = vmatpush1.bf16.msra.mxu0 %v3306
        %4541 = vmatprep.subr.bf16.mxu0 %v3323
        %4542 = vmatpush1.bf16.msra.mxu0 %v3322
        %4543 = vmatprep.subr.bf16.mxu0 %v3339
        %4544 = vmatpush1.bf16.msra.mxu0 %v3338
        %4545 = vmatprep.subr.bf16.mxu0 %v3355
        %4546 = vmatpush1.bf16.msra.mxu0 %v3354
        %4547 = vmatprep.subr.bf16.mxu0 %v3371
        %4548 = vmatpush1.bf16.msra.mxu0 %v3370
        %4549 = vmatprep.subr.bf16.mxu0 %v3387
        %4550 = vmatpush1.bf16.msra.mxu0 %v3386
        %4551 = vmatprep.subr.bf16.mxu0 %v3403
        %4552 = vmatpush1.bf16.msra.mxu0 %v3402
        %4553 = vmatprep.subr.bf16.mxu0 %v3419
        %4554 = vmatpush1.bf16.msra.mxu0 %v3418
        %4555 = vmatprep.subr.bf16.mxu0 %v3435
        %4556 = vmatpush1.bf16.msra.mxu0 %v3434
        %4557 = vmatprep.subr.bf16.mxu0 %v3451
        %4558 = vmatpush1.bf16.msra.mxu0 %v3450
        %4559 = vmatprep.mubr.bf16.mxu0 %v2016
        %4560 = vmatmul.mubr.bf16.gmra.mrb[0].mxu0 %v2015
        %v4561 = vpop.f32.mrb[0].mxu0
        %v4562 = vadd.f32 %v2007, %v4561
        %v4563 = vpop.f32.mrb[0].mxu0
        %v4564 = vadd.f32 %v2007, %v4563
        %v4565 = vpop.f32.mrb[0].mxu0
        %v4566 = vpop.f32.mrb[0].mxu0
        %4567 = vdwg.mxu0
        %4568 = vmatprep.subr.bf16.mxu0 %v3467
        %4569 = vmatpush1.bf16.msra.mxu0 %v3466
        %4570 = vmatprep.subr.bf16.mxu0 %v3483
        %4571 = vmatpush1.bf16.msra.mxu0 %v3482
        %4572 = vmatprep.subr.bf16.mxu0 %v3499
        %4573 = vmatpush1.bf16.msra.mxu0 %v3498
        %4574 = vmatprep.subr.bf16.mxu0 %v3515
        %4575 = vmatpush1.bf16.msra.mxu0 %v3514
        %4576 = vmatprep.subr.bf16.mxu0 %v3531
        %4577 = vmatpush1.bf16.msra.mxu0 %v3530
        %4578 = vmatprep.subr.bf16.mxu0 %v3547
        %4579 = vmatpush1.bf16.msra.mxu0 %v3546
        %4580 = vmatprep.subr.bf16.mxu0 %v3563
        %4581 = vmatpush1.bf16.msra.mxu0 %v3562
        %4582 = vmatprep.subr.bf16.mxu0 %v3579
        %4583 = vmatpush1.bf16.msra.mxu0 %v3578
        %4584 = vmatprep.subr.bf16.mxu0 %v4027
        %4585 = vmatpush1.bf16.msra.mxu0 %v4024
        %4586 = vmatprep.subr.bf16.mxu0 0
        %4587 = vmatpush1.bf16.msra.mxu0 0
        %4588 = vmatprep.subr.bf16.mxu0 0
        %4589 = vmatpush1.bf16.msra.mxu0 0
        %4590 = vmatprep.subr.bf16.mxu0 0
        %4591 = vmatpush1.bf16.msra.mxu0 0
        %4592 = vmatprep.subr.bf16.mxu0 0
        %4593 = vmatpush1.bf16.msra.mxu0 0
        %4594 = vmatprep.subr.bf16.mxu0 0
        %4595 = vmatpush1.bf16.msra.mxu0 0
        %4596 = vmatprep.subr.bf16.mxu0 0
        %4597 = vmatpush1.bf16.msra.mxu0 0
        %4598 = vmatprep.subr.bf16.mxu0 0
        %4599 = vmatpush1.bf16.msra.mxu0 0
        %4600 = vmatprep.mubr.bf16.mxu0 %v3984
        %4601 = vmatmul.mubr.bf16.gmra.mrb[0].mxu0 %v2017
        %v4602 = vpop.f32.mrb[0].mxu0
        %v4603 = vadd.f32 %v4562, %v4602
        %v4604 = vpop.f32.mrb[0].mxu0
        %v4605 = vadd.f32 %v4564, %v4604
        %v4606 = vpop.f32.mrb[0].mxu0
        %v4607 = vpop.f32.mrb[0].mxu0
        %4608 = vdwg.mxu0
        %4609 = vmatprep.subr.bf16.mxu0 %v3213
        %4610 = vmatpush1.bf16.msra.mxu0 %v3212
        %4611 = vmatprep.subr.bf16.mxu0 %v3229
        %4612 = vmatpush1.bf16.msra.mxu0 %v3228
        %4613 = vmatprep.subr.bf16.mxu0 %v3245
        %4614 = vmatpush1.bf16.msra.mxu0 %v3244
        %4615 = vmatprep.subr.bf16.mxu0 %v3261
        %4616 = vmatpush1.bf16.msra.mxu0 %v3260
        %4617 = vmatprep.subr.bf16.mxu0 %v3277
        %4618 = vmatpush1.bf16.msra.mxu0 %v3276
        %4619 = vmatprep.subr.bf16.mxu0 %v3293
        %4620 = vmatpush1.bf16.msra.mxu0 %v3292
        %4621 = vmatprep.subr.bf16.mxu0 %v3309
        %4622 = vmatpush1.bf16.msra.mxu0 %v3308
        %4623 = vmatprep.subr.bf16.mxu0 %v3325
        %4624 = vmatpush1.bf16.msra.mxu0 %v3324
        %4625 = vmatprep.subr.bf16.mxu0 %v3341
        %4626 = vmatpush1.bf16.msra.mxu0 %v3340
        %4627 = vmatprep.subr.bf16.mxu0 %v3357
        %4628 = vmatpush1.bf16.msra.mxu0 %v3356
        %4629 = vmatprep.subr.bf16.mxu0 %v3373
        %4630 = vmatpush1.bf16.msra.mxu0 %v3372
        %4631 = vmatprep.subr.bf16.mxu0 %v3389
        %4632 = vmatpush1.bf16.msra.mxu0 %v3388
        %4633 = vmatprep.subr.bf16.mxu0 %v3405
        %4634 = vmatpush1.bf16.msra.mxu0 %v3404
        %4635 = vmatprep.subr.bf16.mxu0 %v3421
        %4636 = vmatpush1.bf16.msra.mxu0 %v3420
        %4637 = vmatprep.subr.bf16.mxu0 %v3437
        %4638 = vmatpush1.bf16.msra.mxu0 %v3436
        %4639 = vmatprep.subr.bf16.mxu0 %v3453
        %4640 = vmatpush1.bf16.msra.mxu0 %v3452
        %4641 = vmatprep.mubr.bf16.mxu0 %v2016
        %4642 = vmatmul.mubr.bf16.gmra.mrb[0].mxu0 %v2015
        %v4643 = vpop.f32.mrb[0].mxu0
        %v4644 = vadd.f32 %v2007, %v4643
        %v4645 = vpop.f32.mrb[0].mxu0
        %v4646 = vadd.f32 %v2007, %v4645
        %v4647 = vpop.f32.mrb[0].mxu0
        %v4648 = vpop.f32.mrb[0].mxu0
        %4649 = vdwg.mxu0
        %4650 = vmatprep.subr.bf16.mxu0 %v3469
        %4651 = vmatpush1.bf16.msra.mxu0 %v3468
        %4652 = vmatprep.subr.bf16.mxu0 %v3485
        %4653 = vmatpush1.bf16.msra.mxu0 %v3484
        %4654 = vmatprep.subr.bf16.mxu0 %v3501
        %4655 = vmatpush1.bf16.msra.mxu0 %v3500
        %4656 = vmatprep.subr.bf16.mxu0 %v3517
        %4657 = vmatpush1.bf16.msra.mxu0 %v3516
        %4658 = vmatprep.subr.bf16.mxu0 %v3533
        %4659 = vmatpush1.bf16.msra.mxu0 %v3532
        %4660 = vmatprep.subr.bf16.mxu0 %v3549
        %4661 = vmatpush1.bf16.msra.mxu0 %v3548
        %4662 = vmatprep.subr.bf16.mxu0 %v3565
        %4663 = vmatpush1.bf16.msra.mxu0 %v3564
        %4664 = vmatprep.subr.bf16.mxu0 %v3581
        %4665 = vmatpush1.bf16.msra.mxu0 %v3580
        %4666 = vmatprep.subr.bf16.mxu0 %v4033
        %4667 = vmatpush1.bf16.msra.mxu0 %v4030
        %4668 = vmatprep.subr.bf16.mxu0 0
        %4669 = vmatpush1.bf16.msra.mxu0 0
        %4670 = vmatprep.subr.bf16.mxu0 0
        %4671 = vmatpush1.bf16.msra.mxu0 0
        %4672 = vmatprep.subr.bf16.mxu0 0
        %4673 = vmatpush1.bf16.msra.mxu0 0
        %4674 = vmatprep.subr.bf16.mxu0 0
        %4675 = vmatpush1.bf16.msra.mxu0 0
        %4676 = vmatprep.subr.bf16.mxu0 0
        %4677 = vmatpush1.bf16.msra.mxu0 0
        %4678 = vmatprep.subr.bf16.mxu0 0
        %4679 = vmatpush1.bf16.msra.mxu0 0
        %4680 = vmatprep.subr.bf16.mxu0 0
        %4681 = vmatpush1.bf16.msra.mxu0 0
        %4682 = vmatprep.mubr.bf16.mxu0 %v3984
        %4683 = vmatmul.mubr.bf16.gmra.mrb[0].mxu0 %v2017
        %v4684 = vpop.f32.mrb[0].mxu0
        %v4685 = vadd.f32 %v4644, %v4684
        %v4686 = vpop.f32.mrb[0].mxu0
        %v4687 = vadd.f32 %v4646, %v4686
        %v4688 = vpop.f32.mrb[0].mxu0
        %v4689 = vpop.f32.mrb[0].mxu0
        %4690 = vdwg.mxu0
        %vm4691 = vcmp.gt.f32.partialorder %v4111, 0.0
        %vm4692 = vcmp.gt.f32.partialorder %v4113, 0.0
        %vm4693 = vcmp.gt.f32.partialorder %v4193, 0.0
        %vm4694 = vcmp.gt.f32.partialorder %v4195, 0.0
        %vm4695 = vcmp.gt.f32.partialorder %v4275, 0.0
        %vm4696 = vcmp.gt.f32.partialorder %v4277, 0.0
        %vm4697 = vcmp.gt.f32.partialorder %v4357, 0.0
        %vm4698 = vcmp.gt.f32.partialorder %v4359, 0.0
        %vm4699 = vcmp.gt.f32.partialorder %v4439, 0.0
        %vm4700 = vcmp.gt.f32.partialorder %v4441, 0.0
        %vm4701 = vcmp.gt.f32.partialorder %v4521, 0.0
        %vm4702 = vcmp.gt.f32.partialorder %v4523, 0.0
        %vm4703 = vcmp.gt.f32.partialorder %v4603, 0.0
        %vm4704 = vcmp.gt.f32.partialorder %v4605, 0.0
        %vm4705 = vcmp.gt.f32.partialorder %v4685, 0.0
        %vm4706 = vcmp.gt.f32.partialorder %v4687, 0.0
        %v4707 = vmin.f32 %v4111, 0.0
        %v4708 = vmin.f32 %v4113, 0.0
        %v4709 = vmin.f32 %v4193, 0.0
        %v4710 = vmin.f32 %v4195, 0.0
        %v4711 = vmin.f32 %v4275, 0.0
        %v4712 = vmin.f32 %v4277, 0.0
        %v4713 = vmin.f32 %v4357, 0.0
        %v4714 = vmin.f32 %v4359, 0.0
        %v4715 = vmin.f32 %v4439, 0.0
        %v4716 = vmin.f32 %v4441, 0.0
        %v4717 = vmin.f32 %v4521, 0.0
        %v4718 = vmin.f32 %v4523, 0.0
        %v4719 = vmin.f32 %v4603, 0.0
        %v4720 = vmin.f32 %v4605, 0.0
        %v4721 = vmin.f32 %v4685, 0.0
        %v4722 = vmin.f32 %v4687, 0.0
        %v4723 = vmul.f32 %v4707, 1.442695
        %v4724 = vpow.pop %v4723
        %v4725 = vmul.f32 %v4708, 1.442695
        %v4726 = vpow.pop %v4725
        %v4727 = vmul.f32 %v4709, 1.442695
        %v4728 = vpow.pop %v4727
        %v4729 = vmul.f32 %v4710, 1.442695
        %v4730 = vpow.pop %v4729
        %v4731 = vmul.f32 %v4711, 1.442695
        %v4732 = vpow.pop %v4731
        %v4733 = vmul.f32 %v4712, 1.442695
        %v4734 = vpow.pop %v4733
        %v4735 = vmul.f32 %v4713, 1.442695
        %v4736 = vpow.pop %v4735
        %v4737 = vmul.f32 %v4714, 1.442695
        %v4738 = vpow.pop %v4737
        %v4739 = vmul.f32 %v4715, 1.442695
        %v4740 = vpow.pop %v4739
        %v4741 = vmul.f32 %v4716, 1.442695
        %v4742 = vpow.pop %v4741
        %v4743 = vmul.f32 %v4717, 1.442695
        %v4744 = vpow.pop %v4743
        %v4745 = vmul.f32 %v4718, 1.442695
        %v4746 = vpow.pop %v4745
        %v4747 = vmul.f32 %v4719, 1.442695
        %v4748 = vpow.pop %v4747
        %v4749 = vmul.f32 %v4720, 1.442695
        %v4750 = vpow.pop %v4749
        %v4751 = vmul.f32 %v4721, 1.442695
        %v4752 = vpow.pop %v4751
        %v4753 = vmul.f32 %v4722, 1.442695
        %v4754 = vpow.pop %v4753
        %v4755 = vsub.f32 %v4724, 1.0
        %v4756 = vsub.f32 %v4726, 1.0
        %v4757 = vsub.f32 %v4728, 1.0
        %v4758 = vsub.f32 %v4730, 1.0
        %v4759 = vsub.f32 %v4732, 1.0
        %v4760 = vsub.f32 %v4734, 1.0
        %v4761 = vsub.f32 %v4736, 1.0
        %v4762 = vsub.f32 %v4738, 1.0
        %v4763 = vsub.f32 %v4740, 1.0
        %v4764 = vsub.f32 %v4742, 1.0
        %v4765 = vsub.f32 %v4744, 1.0
        %v4766 = vsub.f32 %v4746, 1.0
        %v4767 = vsub.f32 %v4748, 1.0
        %v4768 = vsub.f32 %v4750, 1.0
        %v4769 = vsub.f32 %v4752, 1.0
        %v4770 = vsub.f32 %v4754, 1.0
        %v4771 = vsel %vm4691, %v4111, %v4755
        %v4772 = vsel %vm4692, %v4113, %v4756
        %v4773 = vsel %vm4693, %v4193, %v4757
        %v4774 = vsel %vm4694, %v4195, %v4758
        %v4775 = vsel %vm4695, %v4275, %v4759
        %v4776 = vsel %vm4696, %v4277, %v4760
        %v4777 = vsel %vm4697, %v4357, %v4761
        %v4778 = vsel %vm4698, %v4359, %v4762
        %v4779 = vsel %vm4699, %v4439, %v4763
        %v4780 = vsel %vm4700, %v4441, %v4764
        %v4781 = vsel %vm4701, %v4521, %v4765
        %v4782 = vsel %vm4702, %v4523, %v4766
        %v4783 = vsel %vm4703, %v4603, %v4767
        %v4784 = vsel %vm4704, %v4605, %v4768
        %v4785 = vsel %vm4705, %v4685, %v4769
        %v4786 = vsel %vm4706, %v4687, %v4770
        %v4789 = vlaneseq
        %v4790 = vshrl.u32 %v4789, 7
        %v4791 = vsub.s32 0, %v4790
        %v4792 = vrot.slane %v477, %v4791
        %v4793 = vlaneseq
        %v4794 = vshrl.u32 %v4793, 7
        %v4795 = vsub.s32 1, %v4794
        %v4796 = vrot.slane %v477, %v4795
        %v4797 = vlaneseq
        %v4798 = vshrl.u32 %v4797, 7
        %v4799 = vsub.s32 2, %v4798
        %v4800 = vrot.slane %v477, %v4799
        %v4801 = vlaneseq
        %v4802 = vshrl.u32 %v4801, 7
        %v4803 = vsub.s32 3, %v4802
        %v4804 = vrot.slane %v477, %v4803
        %v4805 = vlaneseq
        %v4806 = vshrl.u32 %v4805, 7
        %v4807 = vsub.s32 4, %v4806
        %v4808 = vrot.slane %v477, %v4807
        %v4809 = vlaneseq
        %v4810 = vshrl.u32 %v4809, 7
        %v4811 = vsub.s32 5, %v4810
        %v4812 = vrot.slane %v477, %v4811
        %v4813 = vlaneseq
        %v4814 = vshrl.u32 %v4813, 7
        %v4815 = vsub.s32 6, %v4814
        %v4816 = vrot.slane %v477, %v4815
        %v4817 = vlaneseq
        %v4818 = vshrl.u32 %v4817, 7
        %v4819 = vsub.s32 7, %v4818
        %v4820 = vrot.slane %v477, %v4819
        %v4821 = vlaneseq
        %v4822 = vshrl.u32 %v4821, 7
        %v4823 = vsub.s32 0, %v4822
        %v4824 = vrot.slane %v478, %v4823
        %v4825 = vlaneseq
        %v4826 = vshrl.u32 %v4825, 7
        %v4827 = vsub.s32 1, %v4826
        %v4828 = vrot.slane %v478, %v4827
        %v4829 = vlaneseq
        %v4830 = vshrl.u32 %v4829, 7
        %v4831 = vsub.s32 2, %v4830
        %v4832 = vrot.slane %v478, %v4831
        %v4833 = vlaneseq
        %v4834 = vshrl.u32 %v4833, 7
        %v4835 = vsub.s32 3, %v4834
        %v4836 = vrot.slane %v478, %v4835
        %v4837 = vlaneseq
        %v4838 = vshrl.u32 %v4837, 7
        %v4839 = vsub.s32 4, %v4838
        %v4840 = vrot.slane %v478, %v4839
        %v4841 = vlaneseq
        %v4842 = vshrl.u32 %v4841, 7
        %v4843 = vsub.s32 5, %v4842
        %v4844 = vrot.slane %v478, %v4843
        %v4845 = vlaneseq
        %v4846 = vshrl.u32 %v4845, 7
        %v4847 = vsub.s32 6, %v4846
        %v4848 = vrot.slane %v478, %v4847
        %v4849 = vlaneseq
        %v4850 = vshrl.u32 %v4849, 7
        %v4851 = vsub.s32 7, %v4850
        %v4852 = vrot.slane %v478, %v4851
        %v4869 = vmul.f32 %v4771, %v4792
        %v4870 = vmul.f32 %v4772, %v4796
        %v4871 = vmul.f32 %v4773, %v4800
        %v4872 = vmul.f32 %v4774, %v4804
        %v4873 = vmul.f32 %v4775, %v4808
        %v4874 = vmul.f32 %v4776, %v4812
        %v4875 = vmul.f32 %v4777, %v4816
        %v4876 = vmul.f32 %v4778, %v4820
        %v4877 = vmul.f32 %v4779, %v4824
        %v4878 = vmul.f32 %v4780, %v4828
        %v4879 = vmul.f32 %v4781, %v4832
        %v4880 = vmul.f32 %v4782, %v4836
        %v4881 = vmul.f32 %v4783, %v4840
        %v4882 = vmul.f32 %v4784, %v4844
        %v4883 = vmul.f32 %v4785, %v4848
        %v4884 = vmul.f32 %v4786, %v4852
        %v4885 = vpack.c.bf16 %v4869, %v4869
        %v4886 = vpack.c.bf16 %v4870, %v4870
        %v4887 = vpack.c.bf16 %v4871, %v4871
        %v4888 = vpack.c.bf16 %v4872, %v4872
        %v4889 = vpack.c.bf16 %v4873, %v4873
        %v4890 = vpack.c.bf16 %v4874, %v4874
        %v4891 = vpack.c.bf16 %v4875, %v4875
        %v4892 = vpack.c.bf16 %v4876, %v4876
        %v4893 = vpack.c.bf16 %v4877, %v4877
        %v4894 = vpack.c.bf16 %v4878, %v4878
        %v4895 = vpack.c.bf16 %v4879, %v4879
        %v4896 = vpack.c.bf16 %v4880, %v4880
        %v4897 = vpack.c.bf16 %v4881, %v4881
        %v4898 = vpack.c.bf16 %v4882, %v4882
        %v4899 = vpack.c.bf16 %v4883, %v4883
        %v4900 = vpack.c.bf16 %v4884, %v4884
        %v4917 = vunpack.c.l.b16 %v4885
        %v4918 = vunpack.c.l.b16 %v4886
        %v4919 = vunpack.c.l.b16 %v4887
        %v4920 = vunpack.c.l.b16 %v4888
        %v4921 = vunpack.c.l.b16 %v4889
        %v4922 = vunpack.c.l.b16 %v4890
        %v4923 = vunpack.c.l.b16 %v4891
        %v4924 = vunpack.c.l.b16 %v4892
        %v4925 = vunpack.c.l.b16 %v4893
        %v4926 = vunpack.c.l.b16 %v4894
        %v4927 = vunpack.c.l.b16 %v4895
        %v4928 = vunpack.c.l.b16 %v4896
        %v4929 = vunpack.c.l.b16 %v4897
        %v4930 = vunpack.c.l.b16 %v4898
        %v4931 = vunpack.c.l.b16 %v4899
        %v4932 = vunpack.c.l.b16 %v4900
        %v4933 = vpack.c.b16 %v4918, %v4917
        %v4934 = vpack.c.b16 %v4920, %v4919
        %v4935 = vpack.c.b16 %v4922, %v4921
        %v4936 = vpack.c.b16 %v4924, %v4923
        %v4937 = vpack.c.b16 %v4926, %v4925
        %v4938 = vpack.c.b16 %v4928, %v4927
        %v4939 = vpack.c.b16 %v4930, %v4929
        %v4940 = vpack.c.b16 %v4932, %v4931
        %4949 = vst [vmem:[#allocation2 + $0x10] sm:$0xff] %v4933
        %4950 = vst [vmem:[#allocation2 + $0x18] sm:$0xff] %v4934
        %4951 = vst [vmem:[#allocation2 + $0x20] sm:$0xff] %v4935
        %4952 = vst [vmem:[#allocation2 + $0x28] sm:$0xff] %v4936
        %4953 = vst [vmem:[#allocation2 + $0x30] sm:$0xff] %v4937
        %4954 = vst [vmem:[#allocation2 + $0x38] sm:$0xff] %v4938
        %4955 = vst [vmem:[#allocation2 + $0x40] sm:$0xff] %v4939
        %4956 = vst [vmem:[#allocation2 + $0x48] sm:$0xff] %v4940
        %v4957 = vld [vmem:[#allocation2 + $0x4] sm:$0xff]
        %v4958 = vld [vmem:[#allocation2 + $0xc] sm:$0xff]
        %v4959 = vld [vmem:[#allocation2 + $0x14] sm:$0xff]
        %v4960 = vld [vmem:[#allocation2 + $0x1c] sm:$0xff]
        %v4961 = vld [vmem:[#allocation2 + $0x24] sm:$0xff]
        %v4962 = vld [vmem:[#allocation2 + $0x2c] sm:$0xff]
        %v4963 = vld [vmem:[#allocation2 + $0x34] sm:$0xff]
        %v4964 = vld [vmem:[#allocation2 + $0x3c] sm:$0xff]
        %v4965 = vld [vmem:[#allocation2 + $0x44] sm:$0xff]
        %v4966 = vld [vmem:[#allocation2 + $0x4c] sm:$0xff]
        %v4967 = vld [vmem:[#allocation2 + $0x54] sm:$0xf]
        %4977 = vrot.lane.b32.xlu0 %v4957, 2
        %v4978 = vpop.permute.xlu0 %4977
        %4979 = vrot.lane.b32.xlu0 %v4958, 2
        %v4980 = vpop.permute.xlu0 %4979
        %4981 = vrot.lane.b32.xlu0 %v4959, 2
        %v4982 = vpop.permute.xlu0 %4981
        %4983 = vrot.lane.b32.xlu0 %v4960, 2
        %v4984 = vpop.permute.xlu0 %4983
        %4985 = vrot.lane.b32.xlu0 %v4961, 2
        %v4986 = vpop.permute.xlu0 %4985
        %4987 = vrot.lane.b32.xlu0 %v4962, 2
        %v4988 = vpop.permute.xlu0 %4987
        %4989 = vrot.lane.b32.xlu0 %v4963, 2
        %v4990 = vpop.permute.xlu0 %4989
        %4991 = vrot.lane.b32.xlu0 %v4964, 2
        %v4992 = vpop.permute.xlu0 %4991
        %4993 = vrot.lane.b32.xlu0 %v4965, 2
        %v4994 = vpop.permute.xlu0 %4993
        %v4995 = vrot.slane %v4978, 4
        %v4996 = vrot.slane %v4980, 4
        %v4997 = vrot.slane %v4982, 4
        %v4998 = vrot.slane %v4984, 4
        %v4999 = vrot.slane %v4986, 4
        %v5000 = vrot.slane %v4988, 4
        %v5001 = vrot.slane %v4990, 4
        %v5002 = vrot.slane %v4992, 4
        %v5003 = vrot.slane %v4994, 4
        %v5004 = vsel %vm527, %v4995, %v4996
        %v5005 = vsel %vm699, %v4978, %v5004
        %v5006 = vsel %vm527, %v4996, %v4997
        %v5007 = vsel %vm699, %v4980, %v5006
        %v5008 = vsel %vm527, %v4997, %v4998
        %v5009 = vsel %vm699, %v4982, %v5008
        %v5010 = vsel %vm527, %v4998, %v4999
        %v5011 = vsel %vm699, %v4984, %v5010
        %v5012 = vsel %vm527, %v4999, %v5000
        %v5013 = vsel %vm699, %v4986, %v5012
        %v5014 = vsel %vm527, %v5000, %v5001
        %v5015 = vsel %vm699, %v4988, %v5014
        %v5016 = vsel %vm527, %v5001, %v5002
        %v5017 = vsel %vm699, %v4990, %v5016
        %v5018 = vsel %vm527, %v5002, %v5003
        %v5019 = vsel %vm699, %v4992, %v5018
        %5028 = vst [vmem:[#allocation3] sm:$0xff] %v5005
        %5029 = vst [vmem:[#allocation3 + $0x8] sm:$0xff] %v5007
        %5030 = vst [vmem:[#allocation3 + $0x10] sm:$0xff] %v5009
        %5031 = vst [vmem:[#allocation3 + $0x18] sm:$0xff] %v5011
        %5032 = vst [vmem:[#allocation3 + $0x20] sm:$0xff] %v5013
        %5033 = vst [vmem:[#allocation3 + $0x28] sm:$0xff] %v5015
        %5034 = vst [vmem:[#allocation3 + $0x30] sm:$0xff] %v5017
        %5035 = vst [vmem:[#allocation3 + $0x38] sm:$0xff] %v5019
        %v5036 = vsel %vm699, %v5004, %v4980
        %v5037 = vsel %vm699, %v5006, %v4982
        %v5038 = vsel %vm699, %v5008, %v4984
        %v5039 = vsel %vm699, %v5010, %v4986
        %v5040 = vsel %vm699, %v5012, %v4988
        %v5041 = vsel %vm699, %v5014, %v4990
        %v5042 = vsel %vm699, %v5016, %v4992
        %v5043 = vsel %vm699, %v5018, %v4994
        %5052 = vst [vmem:[#allocation3 + $0x140] sm:$0xff] %v5036
        %5053 = vst [vmem:[#allocation3 + $0x148] sm:$0xff] %v5037
        %5054 = vst [vmem:[#allocation3 + $0x150] sm:$0xff] %v5038
        %5055 = vst [vmem:[#allocation3 + $0x158] sm:$0xff] %v5039
        %5056 = vst [vmem:[#allocation3 + $0x160] sm:$0xff] %v5040
        %5057 = vst [vmem:[#allocation3 + $0x168] sm:$0xff] %v5041
        %5058 = vst [vmem:[#allocation3 + $0x170] sm:$0xff] %v5042
        %5059 = vst [vmem:[#allocation3 + $0x178] sm:$0xff] %v5043
        %5061 = vrot.lane.b32.xlu0 %v4966, 2
        %v5062 = vpop.permute.xlu0 %5061
        %v5063 = vrot.slane %v5062, 4
        %v5064 = vsel %vm527, %v5003, %v5063
        %v5065 = vsel %vm699, %v4994, %v5064
        %5067 = vst [vmem:[#allocation3 + $0x280] sm:$0xff] %v5007
        %5068 = vst [vmem:[#allocation3 + $0x288] sm:$0xff] %v5009
        %5069 = vst [vmem:[#allocation3 + $0x290] sm:$0xff] %v5011
        %5070 = vst [vmem:[#allocation3 + $0x298] sm:$0xff] %v5013
        %5071 = vst [vmem:[#allocation3 + $0x2a0] sm:$0xff] %v5015
        %5072 = vst [vmem:[#allocation3 + $0x2a8] sm:$0xff] %v5017
        %5073 = vst [vmem:[#allocation3 + $0x2b0] sm:$0xff] %v5019
        %5074 = vst [vmem:[#allocation3 + $0x2b8] sm:$0xff] %v5065
        %v5075 = vsel %vm699, %v5064, %v5062
        %5077 = vst [vmem:[#allocation3 + $0x3c0] sm:$0xff] %v5037
        %5078 = vst [vmem:[#allocation3 + $0x3c8] sm:$0xff] %v5038
        %5079 = vst [vmem:[#allocation3 + $0x3d0] sm:$0xff] %v5039
        %5080 = vst [vmem:[#allocation3 + $0x3d8] sm:$0xff] %v5040
        %5081 = vst [vmem:[#allocation3 + $0x3e0] sm:$0xff] %v5041
        %5082 = vst [vmem:[#allocation3 + $0x3e8] sm:$0xff] %v5042
        %5083 = vst [vmem:[#allocation3 + $0x3f0] sm:$0xff] %v5043
        %5084 = vst [vmem:[#allocation3 + $0x3f8] sm:$0xff] %v5075
        %5086 = vrot.lane.b32.xlu0 %v4967, 2
        %v5087 = vpop.permute.xlu0 %5086
        %v5088 = vrot.slane %v5087, 4
        %v5089 = vsel %vm527, %v5063, %v5088
        %v5090 = vsel %vm699, %v5062, %v5089
        %5092 = vst [vmem:[#allocation3 + $0x500] sm:$0xff] %v5009
        %5093 = vst [vmem:[#allocation3 + $0x508] sm:$0xff] %v5011
        %5094 = vst [vmem:[#allocation3 + $0x510] sm:$0xff] %v5013
        %5095 = vst [vmem:[#allocation3 + $0x518] sm:$0xff] %v5015
        %5096 = vst [vmem:[#allocation3 + $0x520] sm:$0xff] %v5017
        %5097 = vst [vmem:[#allocation3 + $0x528] sm:$0xff] %v5019
        %5098 = vst [vmem:[#allocation3 + $0x530] sm:$0xff] %v5065
        %5099 = vst [vmem:[#allocation3 + $0x538] sm:$0xff] %v5090
        %v5100 = vld [vmem:[#allocation2 + $0x4] sm:$0xff]
        %v5101 = vld [vmem:[#allocation2 + $0xc] sm:$0xff]
        %v5102 = vld [vmem:[#allocation2 + $0x14] sm:$0xff]
        %v5103 = vld [vmem:[#allocation2 + $0x1c] sm:$0xff]
        %v5104 = vld [vmem:[#allocation2 + $0x24] sm:$0xff]
        %v5105 = vld [vmem:[#allocation2 + $0x2c] sm:$0xff]
        %v5106 = vld [vmem:[#allocation2 + $0x34] sm:$0xff]
        %v5107 = vld [vmem:[#allocation2 + $0x3c] sm:$0xff]
        %v5108 = vld [vmem:[#allocation2 + $0x44] sm:$0xff]
        %v5109 = vld [vmem:[#allocation2 + $0x4c] sm:$0xff]
        %v5110 = vld [vmem:[#allocation2 + $0x54] sm:$0xf]
        %5120 = vrot.lane.b32.xlu0 %v5100, 1
        %v5121 = vpop.permute.xlu0 %5120
        %5122 = vrot.lane.b32.xlu0 %v5101, 1
        %v5123 = vpop.permute.xlu0 %5122
        %5124 = vrot.lane.b32.xlu0 %v5102, 1
        %v5125 = vpop.permute.xlu0 %5124
        %5126 = vrot.lane.b32.xlu0 %v5103, 1
        %v5127 = vpop.permute.xlu0 %5126
        %5128 = vrot.lane.b32.xlu0 %v5104, 1
        %v5129 = vpop.permute.xlu0 %5128
        %5130 = vrot.lane.b32.xlu0 %v5105, 1
        %v5131 = vpop.permute.xlu0 %5130
        %5132 = vrot.lane.b32.xlu0 %v5106, 1
        %v5133 = vpop.permute.xlu0 %5132
        %5134 = vrot.lane.b32.xlu0 %v5107, 1
        %v5135 = vpop.permute.xlu0 %5134
        %5136 = vrot.lane.b32.xlu0 %v5108, 1
        %v5137 = vpop.permute.xlu0 %5136
        %v5138 = vrot.slane %v5121, 4
        %v5139 = vrot.slane %v5123, 4
        %v5140 = vrot.slane %v5125, 4
        %v5141 = vrot.slane %v5127, 4
        %v5142 = vrot.slane %v5129, 4
        %v5143 = vrot.slane %v5131, 4
        %v5144 = vrot.slane %v5133, 4
        %v5145 = vrot.slane %v5135, 4
        %v5146 = vrot.slane %v5137, 4
        %v5147 = vsel %vm527, %v5138, %v5139
        %v5148 = vsel %vm869, %v5121, %v5147
        %v5149 = vsel %vm527, %v5139, %v5140
        %v5150 = vsel %vm869, %v5123, %v5149
        %v5151 = vsel %vm527, %v5140, %v5141
        %v5152 = vsel %vm869, %v5125, %v5151
        %v5153 = vsel %vm527, %v5141, %v5142
        %v5154 = vsel %vm869, %v5127, %v5153
        %v5155 = vsel %vm527, %v5142, %v5143
        %v5156 = vsel %vm869, %v5129, %v5155
        %v5157 = vsel %vm527, %v5143, %v5144
        %v5158 = vsel %vm869, %v5131, %v5157
        %v5159 = vsel %vm527, %v5144, %v5145
        %v5160 = vsel %vm869, %v5133, %v5159
        %v5161 = vsel %vm527, %v5145, %v5146
        %v5162 = vsel %vm869, %v5135, %v5161
        %5171 = vst [vmem:[#allocation3 + $0x40] sm:$0xff] %v5148
        %5172 = vst [vmem:[#allocation3 + $0x48] sm:$0xff] %v5150
        %5173 = vst [vmem:[#allocation3 + $0x50] sm:$0xff] %v5152
        %5174 = vst [vmem:[#allocation3 + $0x58] sm:$0xff] %v5154
        %5175 = vst [vmem:[#allocation3 + $0x60] sm:$0xff] %v5156
        %5176 = vst [vmem:[#allocation3 + $0x68] sm:$0xff] %v5158
        %5177 = vst [vmem:[#allocation3 + $0x70] sm:$0xff] %v5160
        %5178 = vst [vmem:[#allocation3 + $0x78] sm:$0xff] %v5162
        %v5179 = vsel %vm869, %v5147, %v5123
        %v5180 = vsel %vm869, %v5149, %v5125
        %v5181 = vsel %vm869, %v5151, %v5127
        %v5182 = vsel %vm869, %v5153, %v5129
        %v5183 = vsel %vm869, %v5155, %v5131
        %v5184 = vsel %vm869, %v5157, %v5133
        %v5185 = vsel %vm869, %v5159, %v5135
        %v5186 = vsel %vm869, %v5161, %v5137
        %5195 = vst [vmem:[#allocation3 + $0x180] sm:$0xff] %v5179
        %5196 = vst [vmem:[#allocation3 + $0x188] sm:$0xff] %v5180
        %5197 = vst [vmem:[#allocation3 + $0x190] sm:$0xff] %v5181
        %5198 = vst [vmem:[#allocation3 + $0x198] sm:$0xff] %v5182
        %5199 = vst [vmem:[#allocation3 + $0x1a0] sm:$0xff] %v5183
        %5200 = vst [vmem:[#allocation3 + $0x1a8] sm:$0xff] %v5184
        %5201 = vst [vmem:[#allocation3 + $0x1b0] sm:$0xff] %v5185
        %5202 = vst [vmem:[#allocation3 + $0x1b8] sm:$0xff] %v5186
        %5204 = vrot.lane.b32.xlu0 %v5109, 1
        %v5205 = vpop.permute.xlu0 %5204
        %v5206 = vrot.slane %v5205, 4
        %v5207 = vsel %vm527, %v5146, %v5206
        %v5208 = vsel %vm869, %v5137, %v5207
        %5210 = vst [vmem:[#allocation3 + $0x2c0] sm:$0xff] %v5150
        %5211 = vst [vmem:[#allocation3 + $0x2c8] sm:$0xff] %v5152
        %5212 = vst [vmem:[#allocation3 + $0x2d0] sm:$0xff] %v5154
        %5213 = vst [vmem:[#allocation3 + $0x2d8] sm:$0xff] %v5156
        %5214 = vst [vmem:[#allocation3 + $0x2e0] sm:$0xff] %v5158
        %5215 = vst [vmem:[#allocation3 + $0x2e8] sm:$0xff] %v5160
        %5216 = vst [vmem:[#allocation3 + $0x2f0] sm:$0xff] %v5162
        %5217 = vst [vmem:[#allocation3 + $0x2f8] sm:$0xff] %v5208
        %v5218 = vsel %vm869, %v5207, %v5205
        %5220 = vst [vmem:[#allocation3 + $0x400] sm:$0xff] %v5180
        %5221 = vst [vmem:[#allocation3 + $0x408] sm:$0xff] %v5181
        %5222 = vst [vmem:[#allocation3 + $0x410] sm:$0xff] %v5182
        %5223 = vst [vmem:[#allocation3 + $0x418] sm:$0xff] %v5183
        %5224 = vst [vmem:[#allocation3 + $0x420] sm:$0xff] %v5184
        %5225 = vst [vmem:[#allocation3 + $0x428] sm:$0xff] %v5185
        %5226 = vst [vmem:[#allocation3 + $0x430] sm:$0xff] %v5186
        %5227 = vst [vmem:[#allocation3 + $0x438] sm:$0xff] %v5218
        %5229 = vrot.lane.b32.xlu0 %v5110, 1
        %v5230 = vpop.permute.xlu0 %5229
        %v5231 = vrot.slane %v5230, 4
        %v5232 = vsel %vm527, %v5206, %v5231
        %v5233 = vsel %vm869, %v5205, %v5232
        %5235 = vst [vmem:[#allocation3 + $0x540] sm:$0xff] %v5152
        %5236 = vst [vmem:[#allocation3 + $0x548] sm:$0xff] %v5154
        %5237 = vst [vmem:[#allocation3 + $0x550] sm:$0xff] %v5156
        %5238 = vst [vmem:[#allocation3 + $0x558] sm:$0xff] %v5158
        %5239 = vst [vmem:[#allocation3 + $0x560] sm:$0xff] %v5160
        %5240 = vst [vmem:[#allocation3 + $0x568] sm:$0xff] %v5162
        %5241 = vst [vmem:[#allocation3 + $0x570] sm:$0xff] %v5208
        %5242 = vst [vmem:[#allocation3 + $0x578] sm:$0xff] %v5233
        %v5243 = vld [vmem:[#allocation2 + $0x8] sm:$0xff]
        %v5244 = vld [vmem:[#allocation2 + $0x10] sm:$0xff]
        %v5245 = vld [vmem:[#allocation2 + $0x18] sm:$0xff]
        %v5246 = vld [vmem:[#allocation2 + $0x20] sm:$0xff]
        %v5247 = vld [vmem:[#allocation2 + $0x28] sm:$0xff]
        %v5248 = vld [vmem:[#allocation2 + $0x30] sm:$0xff]
        %v5249 = vld [vmem:[#allocation2 + $0x38] sm:$0xff]
        %v5250 = vld [vmem:[#allocation2 + $0x40] sm:$0xff]
        %v5251 = vld [vmem:[#allocation2 + $0x48] sm:$0xff]
        %v5252 = vld [vmem:[#allocation2 + $0x50] sm:$0xff]
        %5253 = vst [vmem:[#allocation3 + $0x80] sm:$0xff] %v5243
        %5254 = vst [vmem:[#allocation3 + $0x88] sm:$0xff] %v5244
        %5255 = vst [vmem:[#allocation3 + $0x90] sm:$0xff] %v5245
        %5256 = vst [vmem:[#allocation3 + $0x98] sm:$0xff] %v5246
        %5257 = vst [vmem:[#allocation3 + $0xa0] sm:$0xff] %v5247
        %5258 = vst [vmem:[#allocation3 + $0xa8] sm:$0xff] %v5248
        %5259 = vst [vmem:[#allocation3 + $0xb0] sm:$0xff] %v5249
        %5260 = vst [vmem:[#allocation3 + $0xb8] sm:$0xff] %v5250
        %v5270 = vrot.slane %v5243, 4
        %v5271 = vrot.slane %v5244, 4
        %v5272 = vrot.slane %v5245, 4
        %v5273 = vrot.slane %v5246, 4
        %v5274 = vrot.slane %v5247, 4
        %v5275 = vrot.slane %v5248, 4
        %v5276 = vrot.slane %v5249, 4
        %v5277 = vrot.slane %v5250, 4
        %v5278 = vrot.slane %v5251, 4
        %v5279 = vsel %vm527, %v5270, %v5271
        %v5280 = vsel %vm527, %v5271, %v5272
        %v5281 = vsel %vm527, %v5272, %v5273
        %v5282 = vsel %vm527, %v5273, %v5274
        %v5283 = vsel %vm527, %v5274, %v5275
        %v5284 = vsel %vm527, %v5275, %v5276
        %v5285 = vsel %vm527, %v5276, %v5277
        %v5286 = vsel %vm527, %v5277, %v5278
        %5295 = vst [vmem:[#allocation3 + $0x1c0] sm:$0xff] %v5279
        %5296 = vst [vmem:[#allocation3 + $0x1c8] sm:$0xff] %v5280
        %5297 = vst [vmem:[#allocation3 + $0x1d0] sm:$0xff] %v5281
        %5298 = vst [vmem:[#allocation3 + $0x1d8] sm:$0xff] %v5282
        %5299 = vst [vmem:[#allocation3 + $0x1e0] sm:$0xff] %v5283
        %5300 = vst [vmem:[#allocation3 + $0x1e8] sm:$0xff] %v5284
        %5301 = vst [vmem:[#allocation3 + $0x1f0] sm:$0xff] %v5285
        %5302 = vst [vmem:[#allocation3 + $0x1f8] sm:$0xff] %v5286
        %5303 = vst [vmem:[#allocation3 + $0x300] sm:$0xff] %v5244
        %5304 = vst [vmem:[#allocation3 + $0x308] sm:$0xff] %v5245
        %5305 = vst [vmem:[#allocation3 + $0x310] sm:$0xff] %v5246
        %5306 = vst [vmem:[#allocation3 + $0x318] sm:$0xff] %v5247
        %5307 = vst [vmem:[#allocation3 + $0x320] sm:$0xff] %v5248
        %5308 = vst [vmem:[#allocation3 + $0x328] sm:$0xff] %v5249
        %5309 = vst [vmem:[#allocation3 + $0x330] sm:$0xff] %v5250
        %5310 = vst [vmem:[#allocation3 + $0x338] sm:$0xff] %v5251
        %v5312 = vrot.slane %v5252, 4
        %v5313 = vsel %vm527, %v5278, %v5312
        %5315 = vst [vmem:[#allocation3 + $0x440] sm:$0xff] %v5280
        %5316 = vst [vmem:[#allocation3 + $0x448] sm:$0xff] %v5281
        %5317 = vst [vmem:[#allocation3 + $0x450] sm:$0xff] %v5282
        %5318 = vst [vmem:[#allocation3 + $0x458] sm:$0xff] %v5283
        %5319 = vst [vmem:[#allocation3 + $0x460] sm:$0xff] %v5284
        %5320 = vst [vmem:[#allocation3 + $0x468] sm:$0xff] %v5285
        %5321 = vst [vmem:[#allocation3 + $0x470] sm:$0xff] %v5286
        %5322 = vst [vmem:[#allocation3 + $0x478] sm:$0xff] %v5313
        %5323 = vst [vmem:[#allocation3 + $0x580] sm:$0xff] %v5245
        %5324 = vst [vmem:[#allocation3 + $0x588] sm:$0xff] %v5246
        %5325 = vst [vmem:[#allocation3 + $0x590] sm:$0xff] %v5247
        %5326 = vst [vmem:[#allocation3 + $0x598] sm:$0xff] %v5248
        %5327 = vst [vmem:[#allocation3 + $0x5a0] sm:$0xff] %v5249
        %5328 = vst [vmem:[#allocation3 + $0x5a8] sm:$0xff] %v5250
        %5329 = vst [vmem:[#allocation3 + $0x5b0] sm:$0xff] %v5251
        %5330 = vst [vmem:[#allocation3 + $0x5b8] sm:$0xff] %v5252
        %v5331 = vld [vmem:[#allocation2 + $0x8] sm:$0xff]
        %v5332 = vld [vmem:[#allocation2 + $0x10] sm:$0xff]
        %v5333 = vld [vmem:[#allocation2 + $0x18] sm:$0xff]
        %v5334 = vld [vmem:[#allocation2 + $0x20] sm:$0xff]
        %v5335 = vld [vmem:[#allocation2 + $0x28] sm:$0xff]
        %v5336 = vld [vmem:[#allocation2 + $0x30] sm:$0xff]
        %v5337 = vld [vmem:[#allocation2 + $0x38] sm:$0xff]
        %v5338 = vld [vmem:[#allocation2 + $0x40] sm:$0xff]
        %v5339 = vld [vmem:[#allocation2 + $0x48] sm:$0xff]
        %v5340 = vld [vmem:[#allocation2 + $0x50] sm:$0xff]
        %v5341 = vld [vmem:[#allocation2 + $0x58] sm:$0xf]
        %5351 = vrot.lane.b32.xlu0 %v5331, 127
        %v5352 = vpop.permute.xlu0 %5351
        %5353 = vrot.lane.b32.xlu0 %v5332, 127
        %v5354 = vpop.permute.xlu0 %5353
        %5355 = vrot.lane.b32.xlu0 %v5333, 127
        %v5356 = vpop.permute.xlu0 %5355
        %5357 = vrot.lane.b32.xlu0 %v5334, 127
        %v5358 = vpop.permute.xlu0 %5357
        %5359 = vrot.lane.b32.xlu0 %v5335, 127
        %v5360 = vpop.permute.xlu0 %5359
        %5361 = vrot.lane.b32.xlu0 %v5336, 127
        %v5362 = vpop.permute.xlu0 %5361
        %5363 = vrot.lane.b32.xlu0 %v5337, 127
        %v5364 = vpop.permute.xlu0 %5363
        %5365 = vrot.lane.b32.xlu0 %v5338, 127
        %v5366 = vpop.permute.xlu0 %5365
        %5367 = vrot.lane.b32.xlu0 %v5339, 127
        %v5368 = vpop.permute.xlu0 %5367
        %v5369 = vrot.slane %v5352, 4
        %v5370 = vrot.slane %v5354, 4
        %v5371 = vrot.slane %v5356, 4
        %v5372 = vrot.slane %v5358, 4
        %v5373 = vrot.slane %v5360, 4
        %v5374 = vrot.slane %v5362, 4
        %v5375 = vrot.slane %v5364, 4
        %v5376 = vrot.slane %v5366, 4
        %v5377 = vrot.slane %v5368, 4
        %v5378 = vsel %vm527, %v5369, %v5370
        %v5379 = vsel %vm1148, %v5352, %v5378
        %v5380 = vsel %vm527, %v5370, %v5371
        %v5381 = vsel %vm1148, %v5354, %v5380
        %v5382 = vsel %vm527, %v5371, %v5372
        %v5383 = vsel %vm1148, %v5356, %v5382
        %v5384 = vsel %vm527, %v5372, %v5373
        %v5385 = vsel %vm1148, %v5358, %v5384
        %v5386 = vsel %vm527, %v5373, %v5374
        %v5387 = vsel %vm1148, %v5360, %v5386
        %v5388 = vsel %vm527, %v5374, %v5375
        %v5389 = vsel %vm1148, %v5362, %v5388
        %v5390 = vsel %vm527, %v5375, %v5376
        %v5391 = vsel %vm1148, %v5364, %v5390
        %v5392 = vsel %vm527, %v5376, %v5377
        %v5393 = vsel %vm1148, %v5366, %v5392
        %5402 = vst [vmem:[#allocation3 + $0xc0] sm:$0xff] %v5379
        %5403 = vst [vmem:[#allocation3 + $0xc8] sm:$0xff] %v5381
        %5404 = vst [vmem:[#allocation3 + $0xd0] sm:$0xff] %v5383
        %5405 = vst [vmem:[#allocation3 + $0xd8] sm:$0xff] %v5385
        %5406 = vst [vmem:[#allocation3 + $0xe0] sm:$0xff] %v5387
        %5407 = vst [vmem:[#allocation3 + $0xe8] sm:$0xff] %v5389
        %5408 = vst [vmem:[#allocation3 + $0xf0] sm:$0xff] %v5391
        %5409 = vst [vmem:[#allocation3 + $0xf8] sm:$0xff] %v5393
        %v5410 = vsel %vm1148, %v5378, %v5354
        %v5411 = vsel %vm1148, %v5380, %v5356
        %v5412 = vsel %vm1148, %v5382, %v5358
        %v5413 = vsel %vm1148, %v5384, %v5360
        %v5414 = vsel %vm1148, %v5386, %v5362
        %v5415 = vsel %vm1148, %v5388, %v5364
        %v5416 = vsel %vm1148, %v5390, %v5366
        %v5417 = vsel %vm1148, %v5392, %v5368
        %5426 = vst [vmem:[#allocation3 + $0x200] sm:$0xff] %v5410
        %5427 = vst [vmem:[#allocation3 + $0x208] sm:$0xff] %v5411
        %5428 = vst [vmem:[#allocation3 + $0x210] sm:$0xff] %v5412
        %5429 = vst [vmem:[#allocation3 + $0x218] sm:$0xff] %v5413
        %5430 = vst [vmem:[#allocation3 + $0x220] sm:$0xff] %v5414
        %5431 = vst [vmem:[#allocation3 + $0x228] sm:$0xff] %v5415
        %5432 = vst [vmem:[#allocation3 + $0x230] sm:$0xff] %v5416
        %5433 = vst [vmem:[#allocation3 + $0x238] sm:$0xff] %v5417
        %5435 = vrot.lane.b32.xlu0 %v5340, 127
        %v5436 = vpop.permute.xlu0 %5435
        %v5437 = vrot.slane %v5436, 4
        %v5438 = vsel %vm527, %v5377, %v5437
        %v5439 = vsel %vm1148, %v5368, %v5438
        %5441 = vst [vmem:[#allocation3 + $0x340] sm:$0xff] %v5381
        %5442 = vst [vmem:[#allocation3 + $0x348] sm:$0xff] %v5383
        %5443 = vst [vmem:[#allocation3 + $0x350] sm:$0xff] %v5385
        %5444 = vst [vmem:[#allocation3 + $0x358] sm:$0xff] %v5387
        %5445 = vst [vmem:[#allocation3 + $0x360] sm:$0xff] %v5389
        %5446 = vst [vmem:[#allocation3 + $0x368] sm:$0xff] %v5391
        %5447 = vst [vmem:[#allocation3 + $0x370] sm:$0xff] %v5393
        %5448 = vst [vmem:[#allocation3 + $0x378] sm:$0xff] %v5439
        %v5449 = vsel %vm1148, %v5438, %v5436
        %5451 = vst [vmem:[#allocation3 + $0x480] sm:$0xff] %v5411
        %5452 = vst [vmem:[#allocation3 + $0x488] sm:$0xff] %v5412
        %5453 = vst [vmem:[#allocation3 + $0x490] sm:$0xff] %v5413
        %5454 = vst [vmem:[#allocation3 + $0x498] sm:$0xff] %v5414
        %5455 = vst [vmem:[#allocation3 + $0x4a0] sm:$0xff] %v5415
        %5456 = vst [vmem:[#allocation3 + $0x4a8] sm:$0xff] %v5416
        %5457 = vst [vmem:[#allocation3 + $0x4b0] sm:$0xff] %v5417
        %5458 = vst [vmem:[#allocation3 + $0x4b8] sm:$0xff] %v5449
        %5460 = vrot.lane.b32.xlu0 %v5341, 127
        %v5461 = vpop.permute.xlu0 %5460
        %v5462 = vrot.slane %v5461, 4
        %v5463 = vsel %vm527, %v5437, %v5462
        %v5464 = vsel %vm1148, %v5436, %v5463
        %5466 = vst [vmem:[#allocation3 + $0x5c0] sm:$0xff] %v5383
        %5467 = vst [vmem:[#allocation3 + $0x5c8] sm:$0xff] %v5385
        %5468 = vst [vmem:[#allocation3 + $0x5d0] sm:$0xff] %v5387
        %5469 = vst [vmem:[#allocation3 + $0x5d8] sm:$0xff] %v5389
        %5470 = vst [vmem:[#allocation3 + $0x5e0] sm:$0xff] %v5391
        %5471 = vst [vmem:[#allocation3 + $0x5e8] sm:$0xff] %v5393
        %5472 = vst [vmem:[#allocation3 + $0x5f0] sm:$0xff] %v5439
        %5473 = vst [vmem:[#allocation3 + $0x5f8] sm:$0xff] %v5464
        %v5474 = vld [vmem:[#allocation2 + $0x8] sm:$0xff]
        %v5475 = vld [vmem:[#allocation2 + $0x10] sm:$0xff]
        %v5476 = vld [vmem:[#allocation2 + $0x18] sm:$0xff]
        %v5477 = vld [vmem:[#allocation2 + $0x20] sm:$0xff]
        %v5478 = vld [vmem:[#allocation2 + $0x28] sm:$0xff]
        %v5479 = vld [vmem:[#allocation2 + $0x30] sm:$0xff]
        %v5480 = vld [vmem:[#allocation2 + $0x38] sm:$0xff]
        %v5481 = vld [vmem:[#allocation2 + $0x40] sm:$0xff]
        %v5482 = vld [vmem:[#allocation2 + $0x48] sm:$0xff]
        %v5483 = vld [vmem:[#allocation2 + $0x50] sm:$0xff]
        %v5484 = vld [vmem:[#allocation2 + $0x58] sm:$0xf]
        %5494 = vrot.lane.b32.xlu0 %v5474, 126
        %v5495 = vpop.permute.xlu0 %5494
        %5496 = vrot.lane.b32.xlu0 %v5475, 126
        %v5497 = vpop.permute.xlu0 %5496
        %5498 = vrot.lane.b32.xlu0 %v5476, 126
        %v5499 = vpop.permute.xlu0 %5498
        %5500 = vrot.lane.b32.xlu0 %v5477, 126
        %v5501 = vpop.permute.xlu0 %5500
        %5502 = vrot.lane.b32.xlu0 %v5478, 126
        %v5503 = vpop.permute.xlu0 %5502
        %5504 = vrot.lane.b32.xlu0 %v5479, 126
        %v5505 = vpop.permute.xlu0 %5504
        %5506 = vrot.lane.b32.xlu0 %v5480, 126
        %v5507 = vpop.permute.xlu0 %5506
        %5508 = vrot.lane.b32.xlu0 %v5481, 126
        %v5509 = vpop.permute.xlu0 %5508
        %5510 = vrot.lane.b32.xlu0 %v5482, 126
        %v5511 = vpop.permute.xlu0 %5510
        %v5512 = vrot.slane %v5495, 4
        %v5513 = vrot.slane %v5497, 4
        %v5514 = vrot.slane %v5499, 4
        %v5515 = vrot.slane %v5501, 4
        %v5516 = vrot.slane %v5503, 4
        %v5517 = vrot.slane %v5505, 4
        %v5518 = vrot.slane %v5507, 4
        %v5519 = vrot.slane %v5509, 4
        %v5520 = vrot.slane %v5511, 4
        %v5521 = vsel %vm527, %v5512, %v5513
        %v5522 = vsel %vm1318, %v5495, %v5521
        %v5523 = vsel %vm527, %v5513, %v5514
        %v5524 = vsel %vm1318, %v5497, %v5523
        %v5525 = vsel %vm527, %v5514, %v5515
        %v5526 = vsel %vm1318, %v5499, %v5525
        %v5527 = vsel %vm527, %v5515, %v5516
        %v5528 = vsel %vm1318, %v5501, %v5527
        %v5529 = vsel %vm527, %v5516, %v5517
        %v5530 = vsel %vm1318, %v5503, %v5529
        %v5531 = vsel %vm527, %v5517, %v5518
        %v5532 = vsel %vm1318, %v5505, %v5531
        %v5533 = vsel %vm527, %v5518, %v5519
        %v5534 = vsel %vm1318, %v5507, %v5533
        %v5535 = vsel %vm527, %v5519, %v5520
        %v5536 = vsel %vm1318, %v5509, %v5535
        %5545 = vst [vmem:[#allocation3 + $0x100] sm:$0xff] %v5522
        %5546 = vst [vmem:[#allocation3 + $0x108] sm:$0xff] %v5524
        %5547 = vst [vmem:[#allocation3 + $0x110] sm:$0xff] %v5526
        %5548 = vst [vmem:[#allocation3 + $0x118] sm:$0xff] %v5528
        %5549 = vst [vmem:[#allocation3 + $0x120] sm:$0xff] %v5530
        %5550 = vst [vmem:[#allocation3 + $0x128] sm:$0xff] %v5532
        %5551 = vst [vmem:[#allocation3 + $0x130] sm:$0xff] %v5534
        %5552 = vst [vmem:[#allocation3 + $0x138] sm:$0xff] %v5536
        %v5553 = vsel %vm1318, %v5521, %v5497
        %v5554 = vsel %vm1318, %v5523, %v5499
        %v5555 = vsel %vm1318, %v5525, %v5501
        %v5556 = vsel %vm1318, %v5527, %v5503
        %v5557 = vsel %vm1318, %v5529, %v5505
        %v5558 = vsel %vm1318, %v5531, %v5507
        %v5559 = vsel %vm1318, %v5533, %v5509
        %v5560 = vsel %vm1318, %v5535, %v5511
        %5569 = vst [vmem:[#allocation3 + $0x240] sm:$0xff] %v5553
        %5570 = vst [vmem:[#allocation3 + $0x248] sm:$0xff] %v5554
        %5571 = vst [vmem:[#allocation3 + $0x250] sm:$0xff] %v5555
        %5572 = vst [vmem:[#allocation3 + $0x258] sm:$0xff] %v5556
        %5573 = vst [vmem:[#allocation3 + $0x260] sm:$0xff] %v5557
        %5574 = vst [vmem:[#allocation3 + $0x268] sm:$0xff] %v5558
        %5575 = vst [vmem:[#allocation3 + $0x270] sm:$0xff] %v5559
        %5576 = vst [vmem:[#allocation3 + $0x278] sm:$0xff] %v5560
        %5578 = vrot.lane.b32.xlu0 %v5483, 126
        %v5579 = vpop.permute.xlu0 %5578
        %v5580 = vrot.slane %v5579, 4
        %v5581 = vsel %vm527, %v5520, %v5580
        %v5582 = vsel %vm1318, %v5511, %v5581
        %5584 = vst [vmem:[#allocation3 + $0x380] sm:$0xff] %v5524
        %5585 = vst [vmem:[#allocation3 + $0x388] sm:$0xff] %v5526
        %5586 = vst [vmem:[#allocation3 + $0x390] sm:$0xff] %v5528
        %5587 = vst [vmem:[#allocation3 + $0x398] sm:$0xff] %v5530
        %5588 = vst [vmem:[#allocation3 + $0x3a0] sm:$0xff] %v5532
        %5589 = vst [vmem:[#allocation3 + $0x3a8] sm:$0xff] %v5534
        %5590 = vst [vmem:[#allocation3 + $0x3b0] sm:$0xff] %v5536
        %5591 = vst [vmem:[#allocation3 + $0x3b8] sm:$0xff] %v5582
        %v5592 = vsel %vm1318, %v5581, %v5579
        %5594 = vst [vmem:[#allocation3 + $0x4c0] sm:$0xff] %v5554
        %5595 = vst [vmem:[#allocation3 + $0x4c8] sm:$0xff] %v5555
        %5596 = vst [vmem:[#allocation3 + $0x4d0] sm:$0xff] %v5556
        %5597 = vst [vmem:[#allocation3 + $0x4d8] sm:$0xff] %v5557
        %5598 = vst [vmem:[#allocation3 + $0x4e0] sm:$0xff] %v5558
        %5599 = vst [vmem:[#allocation3 + $0x4e8] sm:$0xff] %v5559
        %5600 = vst [vmem:[#allocation3 + $0x4f0] sm:$0xff] %v5560
        %5601 = vst [vmem:[#allocation3 + $0x4f8] sm:$0xff] %v5592
        %5603 = vrot.lane.b32.xlu0 %v5484, 126
        %v5604 = vpop.permute.xlu0 %5603
        %v5605 = vrot.slane %v5604, 4
        %v5606 = vsel %vm527, %v5580, %v5605
        %v5607 = vsel %vm1318, %v5579, %v5606
        %5609 = vst [vmem:[#allocation3 + $0x600] sm:$0xff] %v5526
        %5610 = vst [vmem:[#allocation3 + $0x608] sm:$0xff] %v5528
        %5611 = vst [vmem:[#allocation3 + $0x610] sm:$0xff] %v5530
        %5612 = vst [vmem:[#allocation3 + $0x618] sm:$0xff] %v5532
        %5613 = vst [vmem:[#allocation3 + $0x620] sm:$0xff] %v5534
        %5614 = vst [vmem:[#allocation3 + $0x628] sm:$0xff] %v5536
        %5615 = vst [vmem:[#allocation3 + $0x630] sm:$0xff] %v5582
        %5616 = vst [vmem:[#allocation3 + $0x638] sm:$0xff] %v5607
        %v5617 = vld [vmem:[%s4] sm:$0xff]
        %v5618 = vld [vmem:[#allocation3] sm:$0xff]
        %v5619 = vld [vmem:[#allocation3 + $0x8] sm:$0xff]
        %v5620 = vld [vmem:[#allocation3 + $0x10] sm:$0xff]
        %v5621 = vld [vmem:[#allocation3 + $0x18] sm:$0xff]
        %v5622 = vld [vmem:[#allocation3 + $0x20] sm:$0xff]
        %v5623 = vld [vmem:[#allocation3 + $0x28] sm:$0xff]
        %v5624 = vld [vmem:[#allocation3 + $0x30] sm:$0xff]
        %v5625 = vld [vmem:[#allocation3 + $0x38] sm:$0xff]
        %v5626 = vld [vmem:[#allocation3 + $0x40] sm:$0xff]
        %v5627 = vld [vmem:[#allocation3 + $0x48] sm:$0xff]
        %v5628 = vld [vmem:[#allocation3 + $0x50] sm:$0xff]
        %v5629 = vld [vmem:[#allocation3 + $0x58] sm:$0xff]
        %v5630 = vld [vmem:[#allocation3 + $0x60] sm:$0xff]
        %v5631 = vld [vmem:[#allocation3 + $0x68] sm:$0xff]
        %v5632 = vld [vmem:[#allocation3 + $0x70] sm:$0xff]
        %v5633 = vld [vmem:[#allocation3 + $0x78] sm:$0xff]
        %v5634 = vld [vmem:[#allocation3 + $0x80] sm:$0xff]
        %v5635 = vld [vmem:[#allocation3 + $0x88] sm:$0xff]
        %v5636 = vld [vmem:[#allocation3 + $0x90] sm:$0xff]
        %v5637 = vld [vmem:[#allocation3 + $0x98] sm:$0xff]
        %v5638 = vld [vmem:[#allocation3 + $0xa0] sm:$0xff]
        %v5639 = vld [vmem:[#allocation3 + $0xa8] sm:$0xff]
        %v5640 = vld [vmem:[#allocation3 + $0xb0] sm:$0xff]
        %v5641 = vld [vmem:[#allocation3 + $0xb8] sm:$0xff]
        %v5642 = vld [vmem:[#allocation3 + $0xc0] sm:$0xff]
        %v5643 = vld [vmem:[#allocation3 + $0xc8] sm:$0xff]
        %v5644 = vld [vmem:[#allocation3 + $0xd0] sm:$0xff]
        %v5645 = vld [vmem:[#allocation3 + $0xd8] sm:$0xff]
        %v5646 = vld [vmem:[#allocation3 + $0xe0] sm:$0xff]
        %v5647 = vld [vmem:[#allocation3 + $0xe8] sm:$0xff]
        %v5648 = vld [vmem:[#allocation3 + $0xf0] sm:$0xff]
        %v5649 = vld [vmem:[#allocation3 + $0xf8] sm:$0xff]
        %v5650 = vld [vmem:[#allocation3 + $0x100] sm:$0xff]
        %v5651 = vld [vmem:[#allocation3 + $0x108] sm:$0xff]
        %v5652 = vld [vmem:[#allocation3 + $0x110] sm:$0xff]
        %v5653 = vld [vmem:[#allocation3 + $0x118] sm:$0xff]
        %v5654 = vld [vmem:[#allocation3 + $0x120] sm:$0xff]
        %v5655 = vld [vmem:[#allocation3 + $0x128] sm:$0xff]
        %v5656 = vld [vmem:[#allocation3 + $0x130] sm:$0xff]
        %v5657 = vld [vmem:[#allocation3 + $0x138] sm:$0xff]
        %v5658 = vld [vmem:[#allocation3 + $0x140] sm:$0xff]
        %v5659 = vld [vmem:[#allocation3 + $0x148] sm:$0xff]
        %v5660 = vld [vmem:[#allocation3 + $0x150] sm:$0xff]
        %v5661 = vld [vmem:[#allocation3 + $0x158] sm:$0xff]
        %v5662 = vld [vmem:[#allocation3 + $0x160] sm:$0xff]
        %v5663 = vld [vmem:[#allocation3 + $0x168] sm:$0xff]
        %v5664 = vld [vmem:[#allocation3 + $0x170] sm:$0xff]
        %v5665 = vld [vmem:[#allocation3 + $0x178] sm:$0xff]
        %v5666 = vld [vmem:[#allocation3 + $0x180] sm:$0xff]
        %v5667 = vld [vmem:[#allocation3 + $0x188] sm:$0xff]
        %v5668 = vld [vmem:[#allocation3 + $0x190] sm:$0xff]
        %v5669 = vld [vmem:[#allocation3 + $0x198] sm:$0xff]
        %v5670 = vld [vmem:[#allocation3 + $0x1a0] sm:$0xff]
        %v5671 = vld [vmem:[#allocation3 + $0x1a8] sm:$0xff]
        %v5672 = vld [vmem:[#allocation3 + $0x1b0] sm:$0xff]
        %v5673 = vld [vmem:[#allocation3 + $0x1b8] sm:$0xff]
        %v5674 = vld [vmem:[#allocation3 + $0x1c0] sm:$0xff]
        %v5675 = vld [vmem:[#allocation3 + $0x1c8] sm:$0xff]
        %v5676 = vld [vmem:[#allocation3 + $0x1d0] sm:$0xff]
        %v5677 = vld [vmem:[#allocation3 + $0x1d8] sm:$0xff]
        %v5678 = vld [vmem:[#allocation3 + $0x1e0] sm:$0xff]
        %v5679 = vld [vmem:[#allocation3 + $0x1e8] sm:$0xff]
        %v5680 = vld [vmem:[#allocation3 + $0x1f0] sm:$0xff]
        %v5681 = vld [vmem:[#allocation3 + $0x1f8] sm:$0xff]
        %v5682 = vld [vmem:[#allocation3 + $0x200] sm:$0xff]
        %v5683 = vld [vmem:[#allocation3 + $0x208] sm:$0xff]
        %v5684 = vld [vmem:[#allocation3 + $0x210] sm:$0xff]
        %v5685 = vld [vmem:[#allocation3 + $0x218] sm:$0xff]
        %v5686 = vld [vmem:[#allocation3 + $0x220] sm:$0xff]
        %v5687 = vld [vmem:[#allocation3 + $0x228] sm:$0xff]
        %v5688 = vld [vmem:[#allocation3 + $0x230] sm:$0xff]
        %v5689 = vld [vmem:[#allocation3 + $0x238] sm:$0xff]
        %v5690 = vld [vmem:[#allocation3 + $0x240] sm:$0xff]
        %v5691 = vld [vmem:[#allocation3 + $0x248] sm:$0xff]
        %v5692 = vld [vmem:[#allocation3 + $0x250] sm:$0xff]
        %v5693 = vld [vmem:[#allocation3 + $0x258] sm:$0xff]
        %v5694 = vld [vmem:[#allocation3 + $0x260] sm:$0xff]
        %v5695 = vld [vmem:[#allocation3 + $0x268] sm:$0xff]
        %v5696 = vld [vmem:[#allocation3 + $0x270] sm:$0xff]
        %v5697 = vld [vmem:[#allocation3 + $0x278] sm:$0xff]
        %v5698 = vld [vmem:[#allocation3 + $0x280] sm:$0xff]
        %v5699 = vld [vmem:[#allocation3 + $0x288] sm:$0xff]
        %v5700 = vld [vmem:[#allocation3 + $0x290] sm:$0xff]
        %v5701 = vld [vmem:[#allocation3 + $0x298] sm:$0xff]
        %v5702 = vld [vmem:[#allocation3 + $0x2a0] sm:$0xff]
        %v5703 = vld [vmem:[#allocation3 + $0x2a8] sm:$0xff]
        %v5704 = vld [vmem:[#allocation3 + $0x2b0] sm:$0xff]
        %v5705 = vld [vmem:[#allocation3 + $0x2b8] sm:$0xff]
        %v5706 = vld [vmem:[#allocation3 + $0x2c0] sm:$0xff]
        %v5707 = vld [vmem:[#allocation3 + $0x2c8] sm:$0xff]
        %v5708 = vld [vmem:[#allocation3 + $0x2d0] sm:$0xff]
        %v5709 = vld [vmem:[#allocation3 + $0x2d8] sm:$0xff]
        %v5710 = vld [vmem:[#allocation3 + $0x2e0] sm:$0xff]
        %v5711 = vld [vmem:[#allocation3 + $0x2e8] sm:$0xff]
        %v5712 = vld [vmem:[#allocation3 + $0x2f0] sm:$0xff]
        %v5713 = vld [vmem:[#allocation3 + $0x2f8] sm:$0xff]
        %v5714 = vld [vmem:[#allocation3 + $0x300] sm:$0xff]
        %v5715 = vld [vmem:[#allocation3 + $0x308] sm:$0xff]
        %v5716 = vld [vmem:[#allocation3 + $0x310] sm:$0xff]
        %v5717 = vld [vmem:[#allocation3 + $0x318] sm:$0xff]
        %v5718 = vld [vmem:[#allocation3 + $0x320] sm:$0xff]
        %v5719 = vld [vmem:[#allocation3 + $0x328] sm:$0xff]
        %v5720 = vld [vmem:[#allocation3 + $0x330] sm:$0xff]
        %v5721 = vld [vmem:[#allocation3 + $0x338] sm:$0xff]
        %v5722 = vld [vmem:[#allocation3 + $0x340] sm:$0xff]
        %v5723 = vld [vmem:[#allocation3 + $0x348] sm:$0xff]
        %v5724 = vld [vmem:[#allocation3 + $0x350] sm:$0xff]
        %v5725 = vld [vmem:[#allocation3 + $0x358] sm:$0xff]
        %v5726 = vld [vmem:[#allocation3 + $0x360] sm:$0xff]
        %v5727 = vld [vmem:[#allocation3 + $0x368] sm:$0xff]
        %v5728 = vld [vmem:[#allocation3 + $0x370] sm:$0xff]
        %v5729 = vld [vmem:[#allocation3 + $0x378] sm:$0xff]
        %v5730 = vld [vmem:[#allocation3 + $0x380] sm:$0xff]
        %v5731 = vld [vmem:[#allocation3 + $0x388] sm:$0xff]
        %v5732 = vld [vmem:[#allocation3 + $0x390] sm:$0xff]
        %v5733 = vld [vmem:[#allocation3 + $0x398] sm:$0xff]
        %v5734 = vld [vmem:[#allocation3 + $0x3a0] sm:$0xff]
        %v5735 = vld [vmem:[#allocation3 + $0x3a8] sm:$0xff]
        %v5736 = vld [vmem:[#allocation3 + $0x3b0] sm:$0xff]
        %v5737 = vld [vmem:[#allocation3 + $0x3b8] sm:$0xff]
        %v5738 = vld [vmem:[#allocation3 + $0x3c0] sm:$0xff]
        %v5739 = vld [vmem:[#allocation3 + $0x3c8] sm:$0xff]
        %v5740 = vld [vmem:[#allocation3 + $0x3d0] sm:$0xff]
        %v5741 = vld [vmem:[#allocation3 + $0x3d8] sm:$0xff]
        %v5742 = vld [vmem:[#allocation3 + $0x3e0] sm:$0xff]
        %v5743 = vld [vmem:[#allocation3 + $0x3e8] sm:$0xff]
        %v5744 = vld [vmem:[#allocation3 + $0x3f0] sm:$0xff]
        %v5745 = vld [vmem:[#allocation3 + $0x3f8] sm:$0xff]
        %v5746 = vld [vmem:[#allocation3 + $0x400] sm:$0xff]
        %v5747 = vld [vmem:[#allocation3 + $0x408] sm:$0xff]
        %v5748 = vld [vmem:[#allocation3 + $0x410] sm:$0xff]
        %v5749 = vld [vmem:[#allocation3 + $0x418] sm:$0xff]
        %v5750 = vld [vmem:[#allocation3 + $0x420] sm:$0xff]
        %v5751 = vld [vmem:[#allocation3 + $0x428] sm:$0xff]
        %v5752 = vld [vmem:[#allocation3 + $0x430] sm:$0xff]
        %v5753 = vld [vmem:[#allocation3 + $0x438] sm:$0xff]
        %v5754 = vld [vmem:[#allocation3 + $0x440] sm:$0xff]
        %v5755 = vld [vmem:[#allocation3 + $0x448] sm:$0xff]
        %v5756 = vld [vmem:[#allocation3 + $0x450] sm:$0xff]
        %v5757 = vld [vmem:[#allocation3 + $0x458] sm:$0xff]
        %v5758 = vld [vmem:[#allocation3 + $0x460] sm:$0xff]
        %v5759 = vld [vmem:[#allocation3 + $0x468] sm:$0xff]
        %v5760 = vld [vmem:[#allocation3 + $0x470] sm:$0xff]
        %v5761 = vld [vmem:[#allocation3 + $0x478] sm:$0xff]
        %v5762 = vld [vmem:[#allocation3 + $0x480] sm:$0xff]
        %v5763 = vld [vmem:[#allocation3 + $0x488] sm:$0xff]
        %v5764 = vld [vmem:[#allocation3 + $0x490] sm:$0xff]
        %v5765 = vld [vmem:[#allocation3 + $0x498] sm:$0xff]
        %v5766 = vld [vmem:[#allocation3 + $0x4a0] sm:$0xff]
        %v5767 = vld [vmem:[#allocation3 + $0x4a8] sm:$0xff]
        %v5768 = vld [vmem:[#allocation3 + $0x4b0] sm:$0xff]
        %v5769 = vld [vmem:[#allocation3 + $0x4b8] sm:$0xff]
        %v5770 = vld [vmem:[#allocation3 + $0x4c0] sm:$0xff]
        %v5771 = vld [vmem:[#allocation3 + $0x4c8] sm:$0xff]
        %v5772 = vld [vmem:[#allocation3 + $0x4d0] sm:$0xff]
        %v5773 = vld [vmem:[#allocation3 + $0x4d8] sm:$0xff]
        %v5774 = vld [vmem:[#allocation3 + $0x4e0] sm:$0xff]
        %v5775 = vld [vmem:[#allocation3 + $0x4e8] sm:$0xff]
        %v5776 = vld [vmem:[#allocation3 + $0x4f0] sm:$0xff]
        %v5777 = vld [vmem:[#allocation3 + $0x4f8] sm:$0xff]
        %v5778 = vld [vmem:[#allocation3 + $0x500] sm:$0xff]
        %v5779 = vld [vmem:[#allocation3 + $0x508] sm:$0xff]
        %v5780 = vld [vmem:[#allocation3 + $0x510] sm:$0xff]
        %v5781 = vld [vmem:[#allocation3 + $0x518] sm:$0xff]
        %v5782 = vld [vmem:[#allocation3 + $0x520] sm:$0xff]
        %v5783 = vld [vmem:[#allocation3 + $0x528] sm:$0xff]
        %v5784 = vld [vmem:[#allocation3 + $0x530] sm:$0xff]
        %v5785 = vld [vmem:[#allocation3 + $0x538] sm:$0xff]
        %v5786 = vld [vmem:[#allocation3 + $0x540] sm:$0xff]
        %v5787 = vld [vmem:[#allocation3 + $0x548] sm:$0xff]
        %v5788 = vld [vmem:[#allocation3 + $0x550] sm:$0xff]
        %v5789 = vld [vmem:[#allocation3 + $0x558] sm:$0xff]
        %v5790 = vld [vmem:[#allocation3 + $0x560] sm:$0xff]
        %v5791 = vld [vmem:[#allocation3 + $0x568] sm:$0xff]
        %v5792 = vld [vmem:[#allocation3 + $0x570] sm:$0xff]
        %v5793 = vld [vmem:[#allocation3 + $0x578] sm:$0xff]
        %v5794 = vld [vmem:[#allocation3 + $0x580] sm:$0xff]
        %v5795 = vld [vmem:[#allocation3 + $0x588] sm:$0xff]
        %v5796 = vld [vmem:[#allocation3 + $0x590] sm:$0xff]
        %v5797 = vld [vmem:[#allocation3 + $0x598] sm:$0xff]
        %v5798 = vld [vmem:[#allocation3 + $0x5a0] sm:$0xff]
        %v5799 = vld [vmem:[#allocation3 + $0x5a8] sm:$0xff]
        %v5800 = vld [vmem:[#allocation3 + $0x5b0] sm:$0xff]
        %v5801 = vld [vmem:[#allocation3 + $0x5b8] sm:$0xff]
        %v5802 = vld [vmem:[#allocation3 + $0x5c0] sm:$0xff]
        %v5803 = vld [vmem:[#allocation3 + $0x5c8] sm:$0xff]
        %v5804 = vld [vmem:[#allocation3 + $0x5d0] sm:$0xff]
        %v5805 = vld [vmem:[#allocation3 + $0x5d8] sm:$0xff]
        %v5806 = vld [vmem:[#allocation3 + $0x5e0] sm:$0xff]
        %v5807 = vld [vmem:[#allocation3 + $0x5e8] sm:$0xff]
        %v5808 = vld [vmem:[#allocation3 + $0x5f0] sm:$0xff]
        %v5809 = vld [vmem:[#allocation3 + $0x5f8] sm:$0xff]
        %v5810 = vld [vmem:[#allocation3 + $0x600] sm:$0xff]
        %v5811 = vld [vmem:[#allocation3 + $0x608] sm:$0xff]
        %v5812 = vld [vmem:[#allocation3 + $0x610] sm:$0xff]
        %v5813 = vld [vmem:[#allocation3 + $0x618] sm:$0xff]
        %v5814 = vld [vmem:[#allocation3 + $0x620] sm:$0xff]
        %v5815 = vld [vmem:[#allocation3 + $0x628] sm:$0xff]
        %v5816 = vld [vmem:[#allocation3 + $0x630] sm:$0xff]
        %v5817 = vld [vmem:[#allocation3 + $0x638] sm:$0xff]
        %v5818 = vld [vmem:[%s5] sm:$0xff]
        %5820 = vset.pattern.permute.xlu0 0
        %5821 = vperm.xlu0 %5820, %v5818
        %v5822 = vpop.permute.xlu0 %5821
        %v5825 = vunpack.c.l.b16 %v5617
        %v5826 = vunpack.c.h.b16 %v5617
        %v5827 = vpack.c.b16 %v5825, %v5825
        %v5828 = vpack.c.b16 %v5826, %v5826
        %v6030 = vunpack.c.l.b16 %v5618
        %v6031 = vunpack.c.h.b16 %v5618
        %v6032 = vunpack.c.l.b16 %v5619
        %v6033 = vunpack.c.h.b16 %v5619
        %v6034 = vunpack.c.l.b16 %v5620
        %v6035 = vunpack.c.h.b16 %v5620
        %v6036 = vunpack.c.l.b16 %v5621
        %v6037 = vunpack.c.h.b16 %v5621
        %v6038 = vunpack.c.l.b16 %v5622
        %v6039 = vunpack.c.h.b16 %v5622
        %v6040 = vunpack.c.l.b16 %v5623
        %v6041 = vunpack.c.h.b16 %v5623
        %v6042 = vunpack.c.l.b16 %v5624
        %v6043 = vunpack.c.h.b16 %v5624
        %v6044 = vunpack.c.l.b16 %v5625
        %v6045 = vunpack.c.h.b16 %v5625
        %v6046 = vunpack.c.l.b16 %v5626
        %v6047 = vunpack.c.h.b16 %v5626
        %v6048 = vunpack.c.l.b16 %v5627
        %v6049 = vunpack.c.h.b16 %v5627
        %v6050 = vunpack.c.l.b16 %v5628
        %v6051 = vunpack.c.h.b16 %v5628
        %v6052 = vunpack.c.l.b16 %v5629
        %v6053 = vunpack.c.h.b16 %v5629
        %v6054 = vunpack.c.l.b16 %v5630
        %v6055 = vunpack.c.h.b16 %v5630
        %v6056 = vunpack.c.l.b16 %v5631
        %v6057 = vunpack.c.h.b16 %v5631
        %v6058 = vunpack.c.l.b16 %v5632
        %v6059 = vunpack.c.h.b16 %v5632
        %v6060 = vunpack.c.l.b16 %v5633
        %v6061 = vunpack.c.h.b16 %v5633
        %v6062 = vunpack.c.l.b16 %v5634
        %v6063 = vunpack.c.h.b16 %v5634
        %v6064 = vunpack.c.l.b16 %v5635
        %v6065 = vunpack.c.h.b16 %v5635
        %v6066 = vunpack.c.l.b16 %v5636
        %v6067 = vunpack.c.h.b16 %v5636
        %v6068 = vunpack.c.l.b16 %v5637
        %v6069 = vunpack.c.h.b16 %v5637
        %v6070 = vunpack.c.l.b16 %v5638
        %v6071 = vunpack.c.h.b16 %v5638
        %v6072 = vunpack.c.l.b16 %v5639
        %v6073 = vunpack.c.h.b16 %v5639
        %v6074 = vunpack.c.l.b16 %v5640
        %v6075 = vunpack.c.h.b16 %v5640
        %v6076 = vunpack.c.l.b16 %v5641
        %v6077 = vunpack.c.h.b16 %v5641
        %v6078 = vunpack.c.l.b16 %v5642
        %v6079 = vunpack.c.h.b16 %v5642
        %v6080 = vunpack.c.l.b16 %v5643
        %v6081 = vunpack.c.h.b16 %v5643
        %v6082 = vunpack.c.l.b16 %v5644
        %v6083 = vunpack.c.h.b16 %v5644
        %v6084 = vunpack.c.l.b16 %v5645
        %v6085 = vunpack.c.h.b16 %v5645
        %v6086 = vunpack.c.l.b16 %v5646
        %v6087 = vunpack.c.h.b16 %v5646
        %v6088 = vunpack.c.l.b16 %v5647
        %v6089 = vunpack.c.h.b16 %v5647
        %v6090 = vunpack.c.l.b16 %v5648
        %v6091 = vunpack.c.h.b16 %v5648
        %v6092 = vunpack.c.l.b16 %v5649
        %v6093 = vunpack.c.h.b16 %v5649
        %v6094 = vunpack.c.l.b16 %v5650
        %v6095 = vunpack.c.h.b16 %v5650
        %v6096 = vunpack.c.l.b16 %v5651
        %v6097 = vunpack.c.h.b16 %v5651
        %v6098 = vunpack.c.l.b16 %v5652
        %v6099 = vunpack.c.h.b16 %v5652
        %v6100 = vunpack.c.l.b16 %v5653
        %v6101 = vunpack.c.h.b16 %v5653
        %v6102 = vunpack.c.l.b16 %v5654
        %v6103 = vunpack.c.h.b16 %v5654
        %v6104 = vunpack.c.l.b16 %v5655
        %v6105 = vunpack.c.h.b16 %v5655
        %v6106 = vunpack.c.l.b16 %v5656
        %v6107 = vunpack.c.h.b16 %v5656
        %v6108 = vunpack.c.l.b16 %v5657
        %v6109 = vunpack.c.h.b16 %v5657
        %v6110 = vunpack.c.l.b16 %v5658
        %v6111 = vunpack.c.h.b16 %v5658
        %v6112 = vunpack.c.l.b16 %v5659
        %v6113 = vunpack.c.h.b16 %v5659
        %v6114 = vunpack.c.l.b16 %v5660
        %v6115 = vunpack.c.h.b16 %v5660
        %v6116 = vunpack.c.l.b16 %v5661
        %v6117 = vunpack.c.h.b16 %v5661
        %v6118 = vunpack.c.l.b16 %v5662
        %v6119 = vunpack.c.h.b16 %v5662
        %v6120 = vunpack.c.l.b16 %v5663
        %v6121 = vunpack.c.h.b16 %v5663
        %v6122 = vunpack.c.l.b16 %v5664
        %v6123 = vunpack.c.h.b16 %v5664
        %v6124 = vunpack.c.l.b16 %v5665
        %v6125 = vunpack.c.h.b16 %v5665
        %v6126 = vunpack.c.l.b16 %v5666
        %v6127 = vunpack.c.h.b16 %v5666
        %v6128 = vunpack.c.l.b16 %v5667
        %v6129 = vunpack.c.h.b16 %v5667
        %v6130 = vunpack.c.l.b16 %v5668
        %v6131 = vunpack.c.h.b16 %v5668
        %v6132 = vunpack.c.l.b16 %v5669
        %v6133 = vunpack.c.h.b16 %v5669
        %v6134 = vunpack.c.l.b16 %v5670
        %v6135 = vunpack.c.h.b16 %v5670
        %v6136 = vunpack.c.l.b16 %v5671
        %v6137 = vunpack.c.h.b16 %v5671
        %v6138 = vunpack.c.l.b16 %v5672
        %v6139 = vunpack.c.h.b16 %v5672
        %v6140 = vunpack.c.l.b16 %v5673
        %v6141 = vunpack.c.h.b16 %v5673
        %v6142 = vunpack.c.l.b16 %v5674
        %v6143 = vunpack.c.h.b16 %v5674
        %v6144 = vunpack.c.l.b16 %v5675
        %v6145 = vunpack.c.h.b16 %v5675
        %v6146 = vunpack.c.l.b16 %v5676
        %v6147 = vunpack.c.h.b16 %v5676
        %v6148 = vunpack.c.l.b16 %v5677
        %v6149 = vunpack.c.h.b16 %v5677
        %v6150 = vunpack.c.l.b16 %v5678
        %v6151 = vunpack.c.h.b16 %v5678
        %v6152 = vunpack.c.l.b16 %v5679
        %v6153 = vunpack.c.h.b16 %v5679
        %v6154 = vunpack.c.l.b16 %v5680
        %v6155 = vunpack.c.h.b16 %v5680
        %v6156 = vunpack.c.l.b16 %v5681
        %v6157 = vunpack.c.h.b16 %v5681
        %v6158 = vunpack.c.l.b16 %v5682
        %v6159 = vunpack.c.h.b16 %v5682
        %v6160 = vunpack.c.l.b16 %v5683
        %v6161 = vunpack.c.h.b16 %v5683
        %v6162 = vunpack.c.l.b16 %v5684
        %v6163 = vunpack.c.h.b16 %v5684
        %v6164 = vunpack.c.l.b16 %v5685
        %v6165 = vunpack.c.h.b16 %v5685
        %v6166 = vunpack.c.l.b16 %v5686
        %v6167 = vunpack.c.h.b16 %v5686
        %v6168 = vunpack.c.l.b16 %v5687
        %v6169 = vunpack.c.h.b16 %v5687
        %v6170 = vunpack.c.l.b16 %v5688
        %v6171 = vunpack.c.h.b16 %v5688
        %v6172 = vunpack.c.l.b16 %v5689
        %v6173 = vunpack.c.h.b16 %v5689
        %v6174 = vunpack.c.l.b16 %v5690
        %v6175 = vunpack.c.h.b16 %v5690
        %v6176 = vunpack.c.l.b16 %v5691
        %v6177 = vunpack.c.h.b16 %v5691
        %v6178 = vunpack.c.l.b16 %v5692
        %v6179 = vunpack.c.h.b16 %v5692
        %v6180 = vunpack.c.l.b16 %v5693
        %v6181 = vunpack.c.h.b16 %v5693
        %v6182 = vunpack.c.l.b16 %v5694
        %v6183 = vunpack.c.h.b16 %v5694
        %v6184 = vunpack.c.l.b16 %v5695
        %v6185 = vunpack.c.h.b16 %v5695
        %v6186 = vunpack.c.l.b16 %v5696
        %v6187 = vunpack.c.h.b16 %v5696
        %v6188 = vunpack.c.l.b16 %v5697
        %v6189 = vunpack.c.h.b16 %v5697
        %v6190 = vunpack.c.l.b16 %v5698
        %v6191 = vunpack.c.h.b16 %v5698
        %v6192 = vunpack.c.l.b16 %v5699
        %v6193 = vunpack.c.h.b16 %v5699
        %v6194 = vunpack.c.l.b16 %v5700
        %v6195 = vunpack.c.h.b16 %v5700
        %v6196 = vunpack.c.l.b16 %v5701
        %v6197 = vunpack.c.h.b16 %v5701
        %v6198 = vunpack.c.l.b16 %v5702
        %v6199 = vunpack.c.h.b16 %v5702
        %v6200 = vunpack.c.l.b16 %v5703
        %v6201 = vunpack.c.h.b16 %v5703
        %v6202 = vunpack.c.l.b16 %v5704
        %v6203 = vunpack.c.h.b16 %v5704
        %v6204 = vunpack.c.l.b16 %v5705
        %v6205 = vunpack.c.h.b16 %v5705
        %v6206 = vunpack.c.l.b16 %v5706
        %v6207 = vunpack.c.h.b16 %v5706
        %v6208 = vunpack.c.l.b16 %v5707
        %v6209 = vunpack.c.h.b16 %v5707
        %v6210 = vunpack.c.l.b16 %v5708
        %v6211 = vunpack.c.h.b16 %v5708
        %v6212 = vunpack.c.l.b16 %v5709
        %v6213 = vunpack.c.h.b16 %v5709
        %v6214 = vunpack.c.l.b16 %v5710
        %v6215 = vunpack.c.h.b16 %v5710
        %v6216 = vunpack.c.l.b16 %v5711
        %v6217 = vunpack.c.h.b16 %v5711
        %v6218 = vunpack.c.l.b16 %v5712
        %v6219 = vunpack.c.h.b16 %v5712
        %v6220 = vunpack.c.l.b16 %v5713
        %v6221 = vunpack.c.h.b16 %v5713
        %v6222 = vunpack.c.l.b16 %v5714
        %v6223 = vunpack.c.h.b16 %v5714
        %v6224 = vunpack.c.l.b16 %v5715
        %v6225 = vunpack.c.h.b16 %v5715
        %v6226 = vunpack.c.l.b16 %v5716
        %v6227 = vunpack.c.h.b16 %v5716
        %v6228 = vunpack.c.l.b16 %v5717
        %v6229 = vunpack.c.h.b16 %v5717
        %v6230 = vunpack.c.l.b16 %v5718
        %v6231 = vunpack.c.h.b16 %v5718
        %v6232 = vunpack.c.l.b16 %v5719
        %v6233 = vunpack.c.h.b16 %v5719
        %v6234 = vunpack.c.l.b16 %v5720
        %v6235 = vunpack.c.h.b16 %v5720
        %v6236 = vunpack.c.l.b16 %v5721
        %v6237 = vunpack.c.h.b16 %v5721
        %v6238 = vunpack.c.l.b16 %v5722
        %v6239 = vunpack.c.h.b16 %v5722
        %v6240 = vunpack.c.l.b16 %v5723
        %v6241 = vunpack.c.h.b16 %v5723
        %v6242 = vunpack.c.l.b16 %v5724
        %v6243 = vunpack.c.h.b16 %v5724
        %v6244 = vunpack.c.l.b16 %v5725
        %v6245 = vunpack.c.h.b16 %v5725
        %v6246 = vunpack.c.l.b16 %v5726
        %v6247 = vunpack.c.h.b16 %v5726
        %v6248 = vunpack.c.l.b16 %v5727
        %v6249 = vunpack.c.h.b16 %v5727
        %v6250 = vunpack.c.l.b16 %v5728
        %v6251 = vunpack.c.h.b16 %v5728
        %v6252 = vunpack.c.l.b16 %v5729
        %v6253 = vunpack.c.h.b16 %v5729
        %v6254 = vunpack.c.l.b16 %v5730
        %v6255 = vunpack.c.h.b16 %v5730
        %v6256 = vunpack.c.l.b16 %v5731
        %v6257 = vunpack.c.h.b16 %v5731
        %v6258 = vunpack.c.l.b16 %v5732
        %v6259 = vunpack.c.h.b16 %v5732
        %v6260 = vunpack.c.l.b16 %v5733
        %v6261 = vunpack.c.h.b16 %v5733
        %v6262 = vunpack.c.l.b16 %v5734
        %v6263 = vunpack.c.h.b16 %v5734
        %v6264 = vunpack.c.l.b16 %v5735
        %v6265 = vunpack.c.h.b16 %v5735
        %v6266 = vunpack.c.l.b16 %v5736
        %v6267 = vunpack.c.h.b16 %v5736
        %v6268 = vunpack.c.l.b16 %v5737
        %v6269 = vunpack.c.h.b16 %v5737
        %v6270 = vunpack.c.l.b16 %v5738
        %v6271 = vunpack.c.h.b16 %v5738
        %v6272 = vunpack.c.l.b16 %v5739
        %v6273 = vunpack.c.h.b16 %v5739
        %v6274 = vunpack.c.l.b16 %v5740
        %v6275 = vunpack.c.h.b16 %v5740
        %v6276 = vunpack.c.l.b16 %v5741
        %v6277 = vunpack.c.h.b16 %v5741
        %v6278 = vunpack.c.l.b16 %v5742
        %v6279 = vunpack.c.h.b16 %v5742
        %v6280 = vunpack.c.l.b16 %v5743
        %v6281 = vunpack.c.h.b16 %v5743
        %v6282 = vunpack.c.l.b16 %v5744
        %v6283 = vunpack.c.h.b16 %v5744
        %v6284 = vunpack.c.l.b16 %v5745
        %v6285 = vunpack.c.h.b16 %v5745
        %v6286 = vunpack.c.l.b16 %v5746
        %v6287 = vunpack.c.h.b16 %v5746
        %v6288 = vunpack.c.l.b16 %v5747
        %v6289 = vunpack.c.h.b16 %v5747
        %v6290 = vunpack.c.l.b16 %v5748
        %v6291 = vunpack.c.h.b16 %v5748
        %v6292 = vunpack.c.l.b16 %v5749
        %v6293 = vunpack.c.h.b16 %v5749
        %v6294 = vunpack.c.l.b16 %v5750
        %v6295 = vunpack.c.h.b16 %v5750
        %v6296 = vunpack.c.l.b16 %v5751
        %v6297 = vunpack.c.h.b16 %v5751
        %v6298 = vunpack.c.l.b16 %v5752
        %v6299 = vunpack.c.h.b16 %v5752
        %v6300 = vunpack.c.l.b16 %v5753
        %v6301 = vunpack.c.h.b16 %v5753
        %v6302 = vunpack.c.l.b16 %v5754
        %v6303 = vunpack.c.h.b16 %v5754
        %v6304 = vunpack.c.l.b16 %v5755
        %v6305 = vunpack.c.h.b16 %v5755
        %v6306 = vunpack.c.l.b16 %v5756
        %v6307 = vunpack.c.h.b16 %v5756
        %v6308 = vunpack.c.l.b16 %v5757
        %v6309 = vunpack.c.h.b16 %v5757
        %v6310 = vunpack.c.l.b16 %v5758
        %v6311 = vunpack.c.h.b16 %v5758
        %v6312 = vunpack.c.l.b16 %v5759
        %v6313 = vunpack.c.h.b16 %v5759
        %v6314 = vunpack.c.l.b16 %v5760
        %v6315 = vunpack.c.h.b16 %v5760
        %v6316 = vunpack.c.l.b16 %v5761
        %v6317 = vunpack.c.h.b16 %v5761
        %v6318 = vunpack.c.l.b16 %v5762
        %v6319 = vunpack.c.h.b16 %v5762
        %v6320 = vunpack.c.l.b16 %v5763
        %v6321 = vunpack.c.h.b16 %v5763
        %v6322 = vunpack.c.l.b16 %v5764
        %v6323 = vunpack.c.h.b16 %v5764
        %v6324 = vunpack.c.l.b16 %v5765
        %v6325 = vunpack.c.h.b16 %v5765
        %v6326 = vunpack.c.l.b16 %v5766
        %v6327 = vunpack.c.h.b16 %v5766
        %v6328 = vunpack.c.l.b16 %v5767
        %v6329 = vunpack.c.h.b16 %v5767
        %v6330 = vunpack.c.l.b16 %v5768
        %v6331 = vunpack.c.h.b16 %v5768
        %v6332 = vunpack.c.l.b16 %v5769
        %v6333 = vunpack.c.h.b16 %v5769
        %v6334 = vunpack.c.l.b16 %v5770
        %v6335 = vunpack.c.h.b16 %v5770
        %v6336 = vunpack.c.l.b16 %v5771
        %v6337 = vunpack.c.h.b16 %v5771
        %v6338 = vunpack.c.l.b16 %v5772
        %v6339 = vunpack.c.h.b16 %v5772
        %v6340 = vunpack.c.l.b16 %v5773
        %v6341 = vunpack.c.h.b16 %v5773
        %v6342 = vunpack.c.l.b16 %v5774
        %v6343 = vunpack.c.h.b16 %v5774
        %v6344 = vunpack.c.l.b16 %v5775
        %v6345 = vunpack.c.h.b16 %v5775
        %v6346 = vunpack.c.l.b16 %v5776
        %v6347 = vunpack.c.h.b16 %v5776
        %v6348 = vunpack.c.l.b16 %v5777
        %v6349 = vunpack.c.h.b16 %v5777
        %v6350 = vunpack.c.l.b16 %v5778
        %v6351 = vunpack.c.h.b16 %v5778
        %v6352 = vunpack.c.l.b16 %v5779
        %v6353 = vunpack.c.h.b16 %v5779
        %v6354 = vunpack.c.l.b16 %v5780
        %v6355 = vunpack.c.h.b16 %v5780
        %v6356 = vunpack.c.l.b16 %v5781
        %v6357 = vunpack.c.h.b16 %v5781
        %v6358 = vunpack.c.l.b16 %v5782
        %v6359 = vunpack.c.h.b16 %v5782
        %v6360 = vunpack.c.l.b16 %v5783
        %v6361 = vunpack.c.h.b16 %v5783
        %v6362 = vunpack.c.l.b16 %v5784
        %v6363 = vunpack.c.h.b16 %v5784
        %v6364 = vunpack.c.l.b16 %v5785
        %v6365 = vunpack.c.h.b16 %v5785
        %v6366 = vunpack.c.l.b16 %v5786
        %v6367 = vunpack.c.h.b16 %v5786
        %v6368 = vunpack.c.l.b16 %v5787
        %v6369 = vunpack.c.h.b16 %v5787
        %v6370 = vunpack.c.l.b16 %v5788
        %v6371 = vunpack.c.h.b16 %v5788
        %v6372 = vunpack.c.l.b16 %v5789
        %v6373 = vunpack.c.h.b16 %v5789
        %v6374 = vunpack.c.l.b16 %v5790
        %v6375 = vunpack.c.h.b16 %v5790
        %v6376 = vunpack.c.l.b16 %v5791
        %v6377 = vunpack.c.h.b16 %v5791
        %v6378 = vunpack.c.l.b16 %v5792
        %v6379 = vunpack.c.h.b16 %v5792
        %v6380 = vunpack.c.l.b16 %v5793
        %v6381 = vunpack.c.h.b16 %v5793
        %v6382 = vunpack.c.l.b16 %v5794
        %v6383 = vunpack.c.h.b16 %v5794
        %v6384 = vunpack.c.l.b16 %v5795
        %v6385 = vunpack.c.h.b16 %v5795
        %v6386 = vunpack.c.l.b16 %v5796
        %v6387 = vunpack.c.h.b16 %v5796
        %v6388 = vunpack.c.l.b16 %v5797
        %v6389 = vunpack.c.h.b16 %v5797
        %v6390 = vunpack.c.l.b16 %v5798
        %v6391 = vunpack.c.h.b16 %v5798
        %v6392 = vunpack.c.l.b16 %v5799
        %v6393 = vunpack.c.h.b16 %v5799
        %v6394 = vunpack.c.l.b16 %v5800
        %v6395 = vunpack.c.h.b16 %v5800
        %v6396 = vunpack.c.l.b16 %v5801
        %v6397 = vunpack.c.h.b16 %v5801
        %v6398 = vunpack.c.l.b16 %v5802
        %v6399 = vunpack.c.h.b16 %v5802
        %v6400 = vunpack.c.l.b16 %v5803
        %v6401 = vunpack.c.h.b16 %v5803
        %v6402 = vunpack.c.l.b16 %v5804
        %v6403 = vunpack.c.h.b16 %v5804
        %v6404 = vunpack.c.l.b16 %v5805
        %v6405 = vunpack.c.h.b16 %v5805
        %v6406 = vunpack.c.l.b16 %v5806
        %v6407 = vunpack.c.h.b16 %v5806
        %v6408 = vunpack.c.l.b16 %v5807
        %v6409 = vunpack.c.h.b16 %v5807
        %v6410 = vunpack.c.l.b16 %v5808
        %v6411 = vunpack.c.h.b16 %v5808
        %v6412 = vunpack.c.l.b16 %v5809
        %v6413 = vunpack.c.h.b16 %v5809
        %v6414 = vunpack.c.l.b16 %v5810
        %v6415 = vunpack.c.h.b16 %v5810
        %v6416 = vunpack.c.l.b16 %v5811
        %v6417 = vunpack.c.h.b16 %v5811
        %v6418 = vunpack.c.l.b16 %v5812
        %v6419 = vunpack.c.h.b16 %v5812
        %v6420 = vunpack.c.l.b16 %v5813
        %v6421 = vunpack.c.h.b16 %v5813
        %v6422 = vunpack.c.l.b16 %v5814
        %v6423 = vunpack.c.h.b16 %v5814
        %v6424 = vunpack.c.l.b16 %v5815
        %v6425 = vunpack.c.h.b16 %v5815
        %v6426 = vunpack.c.l.b16 %v5816
        %v6427 = vunpack.c.h.b16 %v5816
        %v6428 = vunpack.c.l.b16 %v5817
        %v6429 = vunpack.c.h.b16 %v5817
        %v6430 = vpack.c.b16 %v6046, %v6030
        %v6431 = vpack.c.b16 %v6047, %v6031
        %v6432 = vpack.c.b16 %v6048, %v6032
        %v6433 = vpack.c.b16 %v6049, %v6033
        %v6434 = vpack.c.b16 %v6050, %v6034
        %v6435 = vpack.c.b16 %v6051, %v6035
        %v6436 = vpack.c.b16 %v6052, %v6036
        %v6437 = vpack.c.b16 %v6053, %v6037
        %v6438 = vpack.c.b16 %v6054, %v6038
        %v6439 = vpack.c.b16 %v6055, %v6039
        %v6440 = vpack.c.b16 %v6056, %v6040
        %v6441 = vpack.c.b16 %v6057, %v6041
        %v6442 = vpack.c.b16 %v6058, %v6042
        %v6443 = vpack.c.b16 %v6059, %v6043
        %v6444 = vpack.c.b16 %v6060, %v6044
        %v6445 = vpack.c.b16 %v6061, %v6045
        %v6446 = vpack.c.b16 %v6078, %v6062
        %v6447 = vpack.c.b16 %v6079, %v6063
        %v6448 = vpack.c.b16 %v6080, %v6064
        %v6449 = vpack.c.b16 %v6081, %v6065
        %v6450 = vpack.c.b16 %v6082, %v6066
        %v6451 = vpack.c.b16 %v6083, %v6067
        %v6452 = vpack.c.b16 %v6084, %v6068
        %v6453 = vpack.c.b16 %v6085, %v6069
        %v6454 = vpack.c.b16 %v6086, %v6070
        %v6455 = vpack.c.b16 %v6087, %v6071
        %v6456 = vpack.c.b16 %v6088, %v6072
        %v6457 = vpack.c.b16 %v6089, %v6073
        %v6458 = vpack.c.b16 %v6090, %v6074
        %v6459 = vpack.c.b16 %v6091, %v6075
        %v6460 = vpack.c.b16 %v6092, %v6076
        %v6461 = vpack.c.b16 %v6093, %v6077
        %v6462 = vpack.c.b16 %v6110, %v6094
        %v6463 = vpack.c.b16 %v6111, %v6095
        %v6464 = vpack.c.b16 %v6112, %v6096
        %v6465 = vpack.c.b16 %v6113, %v6097
        %v6466 = vpack.c.b16 %v6114, %v6098
        %v6467 = vpack.c.b16 %v6115, %v6099
        %v6468 = vpack.c.b16 %v6116, %v6100
        %v6469 = vpack.c.b16 %v6117, %v6101
        %v6470 = vpack.c.b16 %v6118, %v6102
        %v6471 = vpack.c.b16 %v6119, %v6103
        %v6472 = vpack.c.b16 %v6120, %v6104
        %v6473 = vpack.c.b16 %v6121, %v6105
        %v6474 = vpack.c.b16 %v6122, %v6106
        %v6475 = vpack.c.b16 %v6123, %v6107
        %v6476 = vpack.c.b16 %v6124, %v6108
        %v6477 = vpack.c.b16 %v6125, %v6109
        %v6478 = vpack.c.b16 %v6142, %v6126
        %v6479 = vpack.c.b16 %v6143, %v6127
        %v6480 = vpack.c.b16 %v6144, %v6128
        %v6481 = vpack.c.b16 %v6145, %v6129
        %v6482 = vpack.c.b16 %v6146, %v6130
        %v6483 = vpack.c.b16 %v6147, %v6131
        %v6484 = vpack.c.b16 %v6148, %v6132
        %v6485 = vpack.c.b16 %v6149, %v6133
        %v6486 = vpack.c.b16 %v6150, %v6134
        %v6487 = vpack.c.b16 %v6151, %v6135
        %v6488 = vpack.c.b16 %v6152, %v6136
        %v6489 = vpack.c.b16 %v6153, %v6137
        %v6490 = vpack.c.b16 %v6154, %v6138
        %v6491 = vpack.c.b16 %v6155, %v6139
        %v6492 = vpack.c.b16 %v6156, %v6140
        %v6493 = vpack.c.b16 %v6157, %v6141
        %v6494 = vpack.c.b16 %v6174, %v6158
        %v6495 = vpack.c.b16 %v6175, %v6159
        %v6496 = vpack.c.b16 %v6176, %v6160
        %v6497 = vpack.c.b16 %v6177, %v6161
        %v6498 = vpack.c.b16 %v6178, %v6162
        %v6499 = vpack.c.b16 %v6179, %v6163
        %v6500 = vpack.c.b16 %v6180, %v6164
        %v6501 = vpack.c.b16 %v6181, %v6165
        %v6502 = vpack.c.b16 %v6182, %v6166
        %v6503 = vpack.c.b16 %v6183, %v6167
        %v6504 = vpack.c.b16 %v6184, %v6168
        %v6505 = vpack.c.b16 %v6185, %v6169
        %v6506 = vpack.c.b16 %v6186, %v6170
        %v6507 = vpack.c.b16 %v6187, %v6171
        %v6508 = vpack.c.b16 %v6188, %v6172
        %v6509 = vpack.c.b16 %v6189, %v6173
        %v6510 = vpack.c.b16 %v6206, %v6190
        %v6511 = vpack.c.b16 %v6207, %v6191
        %v6512 = vpack.c.b16 %v6208, %v6192
        %v6513 = vpack.c.b16 %v6209, %v6193
        %v6514 = vpack.c.b16 %v6210, %v6194
        %v6515 = vpack.c.b16 %v6211, %v6195
        %v6516 = vpack.c.b16 %v6212, %v6196
        %v6517 = vpack.c.b16 %v6213, %v6197
        %v6518 = vpack.c.b16 %v6214, %v6198
        %v6519 = vpack.c.b16 %v6215, %v6199
        %v6520 = vpack.c.b16 %v6216, %v6200
        %v6521 = vpack.c.b16 %v6217, %v6201
        %v6522 = vpack.c.b16 %v6218, %v6202
        %v6523 = vpack.c.b16 %v6219, %v6203
        %v6524 = vpack.c.b16 %v6220, %v6204
        %v6525 = vpack.c.b16 %v6221, %v6205
        %v6526 = vpack.c.b16 %v6238, %v6222
        %v6527 = vpack.c.b16 %v6239, %v6223
        %v6528 = vpack.c.b16 %v6240, %v6224
        %v6529 = vpack.c.b16 %v6241, %v6225
        %v6530 = vpack.c.b16 %v6242, %v6226
        %v6531 = vpack.c.b16 %v6243, %v6227
        %v6532 = vpack.c.b16 %v6244, %v6228
        %v6533 = vpack.c.b16 %v6245, %v6229
        %v6534 = vpack.c.b16 %v6246, %v6230
        %v6535 = vpack.c.b16 %v6247, %v6231
        %v6536 = vpack.c.b16 %v6248, %v6232
        %v6537 = vpack.c.b16 %v6249, %v6233
        %v6538 = vpack.c.b16 %v6250, %v6234
        %v6539 = vpack.c.b16 %v6251, %v6235
        %v6540 = vpack.c.b16 %v6252, %v6236
        %v6541 = vpack.c.b16 %v6253, %v6237
        %v6542 = vpack.c.b16 %v6270, %v6254
        %v6543 = vpack.c.b16 %v6271, %v6255
        %v6544 = vpack.c.b16 %v6272, %v6256
        %v6545 = vpack.c.b16 %v6273, %v6257
        %v6546 = vpack.c.b16 %v6274, %v6258
        %v6547 = vpack.c.b16 %v6275, %v6259
        %v6548 = vpack.c.b16 %v6276, %v6260
        %v6549 = vpack.c.b16 %v6277, %v6261
        %v6550 = vpack.c.b16 %v6278, %v6262
        %v6551 = vpack.c.b16 %v6279, %v6263
        %v6552 = vpack.c.b16 %v6280, %v6264
        %v6553 = vpack.c.b16 %v6281, %v6265
        %v6554 = vpack.c.b16 %v6282, %v6266
        %v6555 = vpack.c.b16 %v6283, %v6267
        %v6556 = vpack.c.b16 %v6284, %v6268
        %v6557 = vpack.c.b16 %v6285, %v6269
        %v6558 = vpack.c.b16 %v6302, %v6286
        %v6559 = vpack.c.b16 %v6303, %v6287
        %v6560 = vpack.c.b16 %v6304, %v6288
        %v6561 = vpack.c.b16 %v6305, %v6289
        %v6562 = vpack.c.b16 %v6306, %v6290
        %v6563 = vpack.c.b16 %v6307, %v6291
        %v6564 = vpack.c.b16 %v6308, %v6292
        %v6565 = vpack.c.b16 %v6309, %v6293
        %v6566 = vpack.c.b16 %v6310, %v6294
        %v6567 = vpack.c.b16 %v6311, %v6295
        %v6568 = vpack.c.b16 %v6312, %v6296
        %v6569 = vpack.c.b16 %v6313, %v6297
        %v6570 = vpack.c.b16 %v6314, %v6298
        %v6571 = vpack.c.b16 %v6315, %v6299
        %v6572 = vpack.c.b16 %v6316, %v6300
        %v6573 = vpack.c.b16 %v6317, %v6301
        %v6574 = vpack.c.b16 %v6334, %v6318
        %v6575 = vpack.c.b16 %v6335, %v6319
        %v6576 = vpack.c.b16 %v6336, %v6320
        %v6577 = vpack.c.b16 %v6337, %v6321
        %v6578 = vpack.c.b16 %v6338, %v6322
        %v6579 = vpack.c.b16 %v6339, %v6323
        %v6580 = vpack.c.b16 %v6340, %v6324
        %v6581 = vpack.c.b16 %v6341, %v6325
        %v6582 = vpack.c.b16 %v6342, %v6326
        %v6583 = vpack.c.b16 %v6343, %v6327
        %v6584 = vpack.c.b16 %v6344, %v6328
        %v6585 = vpack.c.b16 %v6345, %v6329
        %v6586 = vpack.c.b16 %v6346, %v6330
        %v6587 = vpack.c.b16 %v6347, %v6331
        %v6588 = vpack.c.b16 %v6348, %v6332
        %v6589 = vpack.c.b16 %v6349, %v6333
        %v6590 = vpack.c.b16 %v6366, %v6350
        %v6591 = vpack.c.b16 %v6367, %v6351
        %v6592 = vpack.c.b16 %v6368, %v6352
        %v6593 = vpack.c.b16 %v6369, %v6353
        %v6594 = vpack.c.b16 %v6370, %v6354
        %v6595 = vpack.c.b16 %v6371, %v6355
        %v6596 = vpack.c.b16 %v6372, %v6356
        %v6597 = vpack.c.b16 %v6373, %v6357
        %v6598 = vpack.c.b16 %v6374, %v6358
        %v6599 = vpack.c.b16 %v6375, %v6359
        %v6600 = vpack.c.b16 %v6376, %v6360
        %v6601 = vpack.c.b16 %v6377, %v6361
        %v6602 = vpack.c.b16 %v6378, %v6362
        %v6603 = vpack.c.b16 %v6379, %v6363
        %v6604 = vpack.c.b16 %v6380, %v6364
        %v6605 = vpack.c.b16 %v6381, %v6365
        %v6606 = vpack.c.b16 %v6398, %v6382
        %v6607 = vpack.c.b16 %v6399, %v6383
        %v6608 = vpack.c.b16 %v6400, %v6384
        %v6609 = vpack.c.b16 %v6401, %v6385
        %v6610 = vpack.c.b16 %v6402, %v6386
        %v6611 = vpack.c.b16 %v6403, %v6387
        %v6612 = vpack.c.b16 %v6404, %v6388
        %v6613 = vpack.c.b16 %v6405, %v6389
        %v6614 = vpack.c.b16 %v6406, %v6390
        %v6615 = vpack.c.b16 %v6407, %v6391
        %v6616 = vpack.c.b16 %v6408, %v6392
        %v6617 = vpack.c.b16 %v6409, %v6393
        %v6618 = vpack.c.b16 %v6410, %v6394
        %v6619 = vpack.c.b16 %v6411, %v6395
        %v6620 = vpack.c.b16 %v6412, %v6396
        %v6621 = vpack.c.b16 %v6413, %v6397
        %v6622 = vpack.c.b16 %v6414, %v6414
        %v6623 = vpack.c.b16 %v6415, %v6415
        %v6624 = vpack.c.b16 %v6416, %v6416
        %v6625 = vpack.c.b16 %v6417, %v6417
        %v6626 = vpack.c.b16 %v6418, %v6418
        %v6627 = vpack.c.b16 %v6419, %v6419
        %v6628 = vpack.c.b16 %v6420, %v6420
        %v6629 = vpack.c.b16 %v6421, %v6421
        %v6630 = vpack.c.b16 %v6422, %v6422
        %v6631 = vpack.c.b16 %v6423, %v6423
        %v6632 = vpack.c.b16 %v6424, %v6424
        %v6633 = vpack.c.b16 %v6425, %v6425
        %v6634 = vpack.c.b16 %v6426, %v6426
        %v6635 = vpack.c.b16 %v6427, %v6427
        %v6636 = vpack.c.b16 %v6428, %v6428
        %v6637 = vpack.c.b16 %v6429, %v6429
        %vm6830 = vcmask 588800
        %v6832 = vsel %vm6830, %v5828, 0
        %v6835 = vsel %vm3986, %v6622, 0
        %v6838 = vsel %vm3986, %v6623, 0
        %v6841 = vsel %vm3986, %v6624, 0
        %v6844 = vsel %vm3986, %v6625, 0
        %v6847 = vsel %vm3986, %v6626, 0
        %v6850 = vsel %vm3986, %v6627, 0
        %v6853 = vsel %vm3986, %v6628, 0
        %v6856 = vsel %vm3986, %v6629, 0
        %v6859 = vsel %vm3986, %v6630, 0
        %v6862 = vsel %vm3986, %v6631, 0
        %v6865 = vsel %vm3986, %v6632, 0
        %v6868 = vsel %vm3986, %v6633, 0
        %v6871 = vsel %vm3986, %v6634, 0
        %v6874 = vsel %vm3986, %v6635, 0
        %v6877 = vsel %vm3986, %v6636, 0
        %v6880 = vsel %vm3986, %v6637, 0
        %6882 = vmatprep.subr.bf16.mxu0 %v6431
        %6883 = vmatpush1.bf16.msra.mxu0 %v6430
        %6884 = vmatprep.subr.bf16.mxu0 %v6447
        %6885 = vmatpush1.bf16.msra.mxu0 %v6446
        %6886 = vmatprep.subr.bf16.mxu0 %v6463
        %6887 = vmatpush1.bf16.msra.mxu0 %v6462
        %6888 = vmatprep.subr.bf16.mxu0 %v6479
        %6889 = vmatpush1.bf16.msra.mxu0 %v6478
        %6890 = vmatprep.subr.bf16.mxu0 %v6495
        %6891 = vmatpush1.bf16.msra.mxu0 %v6494
        %6892 = vmatprep.subr.bf16.mxu0 %v6511
        %6893 = vmatpush1.bf16.msra.mxu0 %v6510
        %6894 = vmatprep.subr.bf16.mxu0 %v6527
        %6895 = vmatpush1.bf16.msra.mxu0 %v6526
        %6896 = vmatprep.subr.bf16.mxu0 %v6543
        %6897 = vmatpush1.bf16.msra.mxu0 %v6542
        %6898 = vmatprep.subr.bf16.mxu0 %v6559
        %6899 = vmatpush1.bf16.msra.mxu0 %v6558
        %6900 = vmatprep.subr.bf16.mxu0 %v6575
        %6901 = vmatpush1.bf16.msra.mxu0 %v6574
        %6902 = vmatprep.subr.bf16.mxu0 %v6591
        %6903 = vmatpush1.bf16.msra.mxu0 %v6590
        %6904 = vmatprep.subr.bf16.mxu0 %v6607
        %6905 = vmatpush1.bf16.msra.mxu0 %v6606
        %6906 = vmatprep.subr.bf16.mxu0 %v6838
        %6907 = vmatpush1.bf16.msra.mxu0 %v6835
        %6908 = vmatprep.subr.bf16.mxu0 0
        %6909 = vmatpush1.bf16.msra.mxu0 0
        %6910 = vmatprep.subr.bf16.mxu0 0
        %6911 = vmatpush1.bf16.msra.mxu0 0
        %6912 = vmatprep.subr.bf16.mxu0 0
        %6913 = vmatpush1.bf16.msra.mxu0 0
        %6914 = vmatprep.mubr.bf16.mxu0 %v6832
        %6915 = vmatmul.mubr.bf16.gmra.mrb[0].mxu0 %v5827
        %v6916 = vpop.f32.mrb[0].mxu0
        %v6917 = vadd.f32 %v5822, %v6916
        %v6918 = vpop.f32.mrb[0].mxu0
        %v6919 = vadd.f32 %v5822, %v6918
        %v6920 = vpop.f32.mrb[0].mxu0
        %v6921 = vpop.f32.mrb[0].mxu0
        %6922 = vdwg.mxu0
        %6923 = vmatprep.subr.bf16.mxu0 %v6433
        %6924 = vmatpush1.bf16.msra.mxu0 %v6432
        %6925 = vmatprep.subr.bf16.mxu0 %v6449
        %6926 = vmatpush1.bf16.msra.mxu0 %v6448
        %6927 = vmatprep.subr.bf16.mxu0 %v6465
        %6928 = vmatpush1.bf16.msra.mxu0 %v6464
        %6929 = vmatprep.subr.bf16.mxu0 %v6481
        %6930 = vmatpush1.bf16.msra.mxu0 %v6480
        %6931 = vmatprep.subr.bf16.mxu0 %v6497
        %6932 = vmatpush1.bf16.msra.mxu0 %v6496
        %6933 = vmatprep.subr.bf16.mxu0 %v6513
        %6934 = vmatpush1.bf16.msra.mxu0 %v6512
        %6935 = vmatprep.subr.bf16.mxu0 %v6529
        %6936 = vmatpush1.bf16.msra.mxu0 %v6528
        %6937 = vmatprep.subr.bf16.mxu0 %v6545
        %6938 = vmatpush1.bf16.msra.mxu0 %v6544
        %6939 = vmatprep.subr.bf16.mxu0 %v6561
        %6940 = vmatpush1.bf16.msra.mxu0 %v6560
        %6941 = vmatprep.subr.bf16.mxu0 %v6577
        %6942 = vmatpush1.bf16.msra.mxu0 %v6576
        %6943 = vmatprep.subr.bf16.mxu0 %v6593
        %6944 = vmatpush1.bf16.msra.mxu0 %v6592
        %6945 = vmatprep.subr.bf16.mxu0 %v6609
        %6946 = vmatpush1.bf16.msra.mxu0 %v6608
        %6947 = vmatprep.subr.bf16.mxu0 %v6844
        %6948 = vmatpush1.bf16.msra.mxu0 %v6841
        %6949 = vmatprep.subr.bf16.mxu0 0
        %6950 = vmatpush1.bf16.msra.mxu0 0
        %6951 = vmatprep.subr.bf16.mxu0 0
        %6952 = vmatpush1.bf16.msra.mxu0 0
        %6953 = vmatprep.subr.bf16.mxu0 0
        %6954 = vmatpush1.bf16.msra.mxu0 0
        %6955 = vmatprep.mubr.bf16.mxu0 %v6832
        %6956 = vmatmul.mubr.bf16.gmra.mrb[0].mxu0 %v5827
        %v6957 = vpop.f32.mrb[0].mxu0
        %v6958 = vadd.f32 %v5822, %v6957
        %v6959 = vpop.f32.mrb[0].mxu0
        %v6960 = vadd.f32 %v5822, %v6959
        %v6961 = vpop.f32.mrb[0].mxu0
        %v6962 = vpop.f32.mrb[0].mxu0
        %6963 = vdwg.mxu0
        %6964 = vmatprep.subr.bf16.mxu0 %v6435
        %6965 = vmatpush1.bf16.msra.mxu0 %v6434
        %6966 = vmatprep.subr.bf16.mxu0 %v6451
        %6967 = vmatpush1.bf16.msra.mxu0 %v6450
        %6968 = vmatprep.subr.bf16.mxu0 %v6467
        %6969 = vmatpush1.bf16.msra.mxu0 %v6466
        %6970 = vmatprep.subr.bf16.mxu0 %v6483
        %6971 = vmatpush1.bf16.msra.mxu0 %v6482
        %6972 = vmatprep.subr.bf16.mxu0 %v6499
        %6973 = vmatpush1.bf16.msra.mxu0 %v6498
        %6974 = vmatprep.subr.bf16.mxu0 %v6515
        %6975 = vmatpush1.bf16.msra.mxu0 %v6514
        %6976 = vmatprep.subr.bf16.mxu0 %v6531
        %6977 = vmatpush1.bf16.msra.mxu0 %v6530
        %6978 = vmatprep.subr.bf16.mxu0 %v6547
        %6979 = vmatpush1.bf16.msra.mxu0 %v6546
        %6980 = vmatprep.subr.bf16.mxu0 %v6563
        %6981 = vmatpush1.bf16.msra.mxu0 %v6562
        %6982 = vmatprep.subr.bf16.mxu0 %v6579
        %6983 = vmatpush1.bf16.msra.mxu0 %v6578
        %6984 = vmatprep.subr.bf16.mxu0 %v6595
        %6985 = vmatpush1.bf16.msra.mxu0 %v6594
        %6986 = vmatprep.subr.bf16.mxu0 %v6611
        %6987 = vmatpush1.bf16.msra.mxu0 %v6610
        %6988 = vmatprep.subr.bf16.mxu0 %v6850
        %6989 = vmatpush1.bf16.msra.mxu0 %v6847
        %6990 = vmatprep.subr.bf16.mxu0 0
        %6991 = vmatpush1.bf16.msra.mxu0 0
        %6992 = vmatprep.subr.bf16.mxu0 0
        %6993 = vmatpush1.bf16.msra.mxu0 0
        %6994 = vmatprep.subr.bf16.mxu0 0
        %6995 = vmatpush1.bf16.msra.mxu0 0
        %6996 = vmatprep.mubr.bf16.mxu0 %v6832
        %6997 = vmatmul.mubr.bf16.gmra.mrb[0].mxu0 %v5827
        %v6998 = vpop.f32.mrb[0].mxu0
        %v6999 = vadd.f32 %v5822, %v6998
        %v7000 = vpop.f32.mrb[0].mxu0
        %v7001 = vadd.f32 %v5822, %v7000
        %v7002 = vpop.f32.mrb[0].mxu0
        %v7003 = vpop.f32.mrb[0].mxu0
        %7004 = vdwg.mxu0
        %7005 = vmatprep.subr.bf16.mxu0 %v6437
        %7006 = vmatpush1.bf16.msra.mxu0 %v6436
        %7007 = vmatprep.subr.bf16.mxu0 %v6453
        %7008 = vmatpush1.bf16.msra.mxu0 %v6452
        %7009 = vmatprep.subr.bf16.mxu0 %v6469
        %7010 = vmatpush1.bf16.msra.mxu0 %v6468
        %7011 = vmatprep.subr.bf16.mxu0 %v6485
        %7012 = vmatpush1.bf16.msra.mxu0 %v6484
        %7013 = vmatprep.subr.bf16.mxu0 %v6501
        %7014 = vmatpush1.bf16.msra.mxu0 %v6500
        %7015 = vmatprep.subr.bf16.mxu0 %v6517
        %7016 = vmatpush1.bf16.msra.mxu0 %v6516
        %7017 = vmatprep.subr.bf16.mxu0 %v6533
        %7018 = vmatpush1.bf16.msra.mxu0 %v6532
        %7019 = vmatprep.subr.bf16.mxu0 %v6549
        %7020 = vmatpush1.bf16.msra.mxu0 %v6548
        %7021 = vmatprep.subr.bf16.mxu0 %v6565
        %7022 = vmatpush1.bf16.msra.mxu0 %v6564
        %7023 = vmatprep.subr.bf16.mxu0 %v6581
        %7024 = vmatpush1.bf16.msra.mxu0 %v6580
        %7025 = vmatprep.subr.bf16.mxu0 %v6597
        %7026 = vmatpush1.bf16.msra.mxu0 %v6596
        %7027 = vmatprep.subr.bf16.mxu0 %v6613
        %7028 = vmatpush1.bf16.msra.mxu0 %v6612
        %7029 = vmatprep.subr.bf16.mxu0 %v6856
        %7030 = vmatpush1.bf16.msra.mxu0 %v6853
        %7031 = vmatprep.subr.bf16.mxu0 0
        %7032 = vmatpush1.bf16.msra.mxu0 0
        %7033 = vmatprep.subr.bf16.mxu0 0
        %7034 = vmatpush1.bf16.msra.mxu0 0
        %7035 = vmatprep.subr.bf16.mxu0 0
        %7036 = vmatpush1.bf16.msra.mxu0 0
        %7037 = vmatprep.mubr.bf16.mxu0 %v6832
        %7038 = vmatmul.mubr.bf16.gmra.mrb[0].mxu0 %v5827
        %v7039 = vpop.f32.mrb[0].mxu0
        %v7040 = vadd.f32 %v5822, %v7039
        %v7041 = vpop.f32.mrb[0].mxu0
        %v7042 = vadd.f32 %v5822, %v7041
        %v7043 = vpop.f32.mrb[0].mxu0
        %v7044 = vpop.f32.mrb[0].mxu0
        %7045 = vdwg.mxu0
        %7046 = vmatprep.subr.bf16.mxu0 %v6439
        %7047 = vmatpush1.bf16.msra.mxu0 %v6438
        %7048 = vmatprep.subr.bf16.mxu0 %v6455
        %7049 = vmatpush1.bf16.msra.mxu0 %v6454
        %7050 = vmatprep.subr.bf16.mxu0 %v6471
        %7051 = vmatpush1.bf16.msra.mxu0 %v6470
        %7052 = vmatprep.subr.bf16.mxu0 %v6487
        %7053 = vmatpush1.bf16.msra.mxu0 %v6486
        %7054 = vmatprep.subr.bf16.mxu0 %v6503
        %7055 = vmatpush1.bf16.msra.mxu0 %v6502
        %7056 = vmatprep.subr.bf16.mxu0 %v6519
        %7057 = vmatpush1.bf16.msra.mxu0 %v6518
        %7058 = vmatprep.subr.bf16.mxu0 %v6535
        %7059 = vmatpush1.bf16.msra.mxu0 %v6534
        %7060 = vmatprep.subr.bf16.mxu0 %v6551
        %7061 = vmatpush1.bf16.msra.mxu0 %v6550
        %7062 = vmatprep.subr.bf16.mxu0 %v6567
        %7063 = vmatpush1.bf16.msra.mxu0 %v6566
        %7064 = vmatprep.subr.bf16.mxu0 %v6583
        %7065 = vmatpush1.bf16.msra.mxu0 %v6582
        %7066 = vmatprep.subr.bf16.mxu0 %v6599
        %7067 = vmatpush1.bf16.msra.mxu0 %v6598
        %7068 = vmatprep.subr.bf16.mxu0 %v6615
        %7069 = vmatpush1.bf16.msra.mxu0 %v6614
        %7070 = vmatprep.subr.bf16.mxu0 %v6862
        %7071 = vmatpush1.bf16.msra.mxu0 %v6859
        %7072 = vmatprep.subr.bf16.mxu0 0
        %7073 = vmatpush1.bf16.msra.mxu0 0
        %7074 = vmatprep.subr.bf16.mxu0 0
        %7075 = vmatpush1.bf16.msra.mxu0 0
        %7076 = vmatprep.subr.bf16.mxu0 0
        %7077 = vmatpush1.bf16.msra.mxu0 0
        %7078 = vmatprep.mubr.bf16.mxu0 %v6832
        %7079 = vmatmul.mubr.bf16.gmra.mrb[0].mxu0 %v5827
        %v7080 = vpop.f32.mrb[0].mxu0
        %v7081 = vadd.f32 %v5822, %v7080
        %v7082 = vpop.f32.mrb[0].mxu0
        %v7083 = vadd.f32 %v5822, %v7082
        %v7084 = vpop.f32.mrb[0].mxu0
        %v7085 = vpop.f32.mrb[0].mxu0
        %7086 = vdwg.mxu0
        %7087 = vmatprep.subr.bf16.mxu0 %v6441
        %7088 = vmatpush1.bf16.msra.mxu0 %v6440
        %7089 = vmatprep.subr.bf16.mxu0 %v6457
        %7090 = vmatpush1.bf16.msra.mxu0 %v6456
        %7091 = vmatprep.subr.bf16.mxu0 %v6473
        %7092 = vmatpush1.bf16.msra.mxu0 %v6472
        %7093 = vmatprep.subr.bf16.mxu0 %v6489
        %7094 = vmatpush1.bf16.msra.mxu0 %v6488
        %7095 = vmatprep.subr.bf16.mxu0 %v6505
        %7096 = vmatpush1.bf16.msra.mxu0 %v6504
        %7097 = vmatprep.subr.bf16.mxu0 %v6521
        %7098 = vmatpush1.bf16.msra.mxu0 %v6520
        %7099 = vmatprep.subr.bf16.mxu0 %v6537
        %7100 = vmatpush1.bf16.msra.mxu0 %v6536
        %7101 = vmatprep.subr.bf16.mxu0 %v6553
        %7102 = vmatpush1.bf16.msra.mxu0 %v6552
        %7103 = vmatprep.subr.bf16.mxu0 %v6569
        %7104 = vmatpush1.bf16.msra.mxu0 %v6568
        %7105 = vmatprep.subr.bf16.mxu0 %v6585
        %7106 = vmatpush1.bf16.msra.mxu0 %v6584
        %7107 = vmatprep.subr.bf16.mxu0 %v6601
        %7108 = vmatpush1.bf16.msra.mxu0 %v6600
        %7109 = vmatprep.subr.bf16.mxu0 %v6617
        %7110 = vmatpush1.bf16.msra.mxu0 %v6616
        %7111 = vmatprep.subr.bf16.mxu0 %v6868
        %7112 = vmatpush1.bf16.msra.mxu0 %v6865
        %7113 = vmatprep.subr.bf16.mxu0 0
        %7114 = vmatpush1.bf16.msra.mxu0 0
        %7115 = vmatprep.subr.bf16.mxu0 0
        %7116 = vmatpush1.bf16.msra.mxu0 0
        %7117 = vmatprep.subr.bf16.mxu0 0
        %7118 = vmatpush1.bf16.msra.mxu0 0
        %7119 = vmatprep.mubr.bf16.mxu0 %v6832
        %7120 = vmatmul.mubr.bf16.gmra.mrb[0].mxu0 %v5827
        %v7121 = vpop.f32.mrb[0].mxu0
        %v7122 = vadd.f32 %v5822, %v7121
        %v7123 = vpop.f32.mrb[0].mxu0
        %v7124 = vadd.f32 %v5822, %v7123
        %v7125 = vpop.f32.mrb[0].mxu0
        %v7126 = vpop.f32.mrb[0].mxu0
        %7127 = vdwg.mxu0
        %7128 = vmatprep.subr.bf16.mxu0 %v6443
        %7129 = vmatpush1.bf16.msra.mxu0 %v6442
        %7130 = vmatprep.subr.bf16.mxu0 %v6459
        %7131 = vmatpush1.bf16.msra.mxu0 %v6458
        %7132 = vmatprep.subr.bf16.mxu0 %v6475
        %7133 = vmatpush1.bf16.msra.mxu0 %v6474
        %7134 = vmatprep.subr.bf16.mxu0 %v6491
        %7135 = vmatpush1.bf16.msra.mxu0 %v6490
        %7136 = vmatprep.subr.bf16.mxu0 %v6507
        %7137 = vmatpush1.bf16.msra.mxu0 %v6506
        %7138 = vmatprep.subr.bf16.mxu0 %v6523
        %7139 = vmatpush1.bf16.msra.mxu0 %v6522
        %7140 = vmatprep.subr.bf16.mxu0 %v6539
        %7141 = vmatpush1.bf16.msra.mxu0 %v6538
        %7142 = vmatprep.subr.bf16.mxu0 %v6555
        %7143 = vmatpush1.bf16.msra.mxu0 %v6554
        %7144 = vmatprep.subr.bf16.mxu0 %v6571
        %7145 = vmatpush1.bf16.msra.mxu0 %v6570
        %7146 = vmatprep.subr.bf16.mxu0 %v6587
        %7147 = vmatpush1.bf16.msra.mxu0 %v6586
        %7148 = vmatprep.subr.bf16.mxu0 %v6603
        %7149 = vmatpush1.bf16.msra.mxu0 %v6602
        %7150 = vmatprep.subr.bf16.mxu0 %v6619
        %7151 = vmatpush1.bf16.msra.mxu0 %v6618
        %7152 = vmatprep.subr.bf16.mxu0 %v6874
        %7153 = vmatpush1.bf16.msra.mxu0 %v6871
        %7154 = vmatprep.subr.bf16.mxu0 0
        %7155 = vmatpush1.bf16.msra.mxu0 0
        %7156 = vmatprep.subr.bf16.mxu0 0
        %7157 = vmatpush1.bf16.msra.mxu0 0
        %7158 = vmatprep.subr.bf16.mxu0 0
        %7159 = vmatpush1.bf16.msra.mxu0 0
        %7160 = vmatprep.mubr.bf16.mxu0 %v6832
        %7161 = vmatmul.mubr.bf16.gmra.mrb[0].mxu0 %v5827
        %v7162 = vpop.f32.mrb[0].mxu0
        %v7163 = vadd.f32 %v5822, %v7162
        %v7164 = vpop.f32.mrb[0].mxu0
        %v7165 = vadd.f32 %v5822, %v7164
        %v7166 = vpop.f32.mrb[0].mxu0
        %v7167 = vpop.f32.mrb[0].mxu0
        %7168 = vdwg.mxu0
        %7169 = vmatprep.subr.bf16.mxu0 %v6445
        %7170 = vmatpush1.bf16.msra.mxu0 %v6444
        %7171 = vmatprep.subr.bf16.mxu0 %v6461
        %7172 = vmatpush1.bf16.msra.mxu0 %v6460
        %7173 = vmatprep.subr.bf16.mxu0 %v6477
        %7174 = vmatpush1.bf16.msra.mxu0 %v6476
        %7175 = vmatprep.subr.bf16.mxu0 %v6493
        %7176 = vmatpush1.bf16.msra.mxu0 %v6492
        %7177 = vmatprep.subr.bf16.mxu0 %v6509
        %7178 = vmatpush1.bf16.msra.mxu0 %v6508
        %7179 = vmatprep.subr.bf16.mxu0 %v6525
        %7180 = vmatpush1.bf16.msra.mxu0 %v6524
        %7181 = vmatprep.subr.bf16.mxu0 %v6541
        %7182 = vmatpush1.bf16.msra.mxu0 %v6540
        %7183 = vmatprep.subr.bf16.mxu0 %v6557
        %7184 = vmatpush1.bf16.msra.mxu0 %v6556
        %7185 = vmatprep.subr.bf16.mxu0 %v6573
        %7186 = vmatpush1.bf16.msra.mxu0 %v6572
        %7187 = vmatprep.subr.bf16.mxu0 %v6589
        %7188 = vmatpush1.bf16.msra.mxu0 %v6588
        %7189 = vmatprep.subr.bf16.mxu0 %v6605
        %7190 = vmatpush1.bf16.msra.mxu0 %v6604
        %7191 = vmatprep.subr.bf16.mxu0 %v6621
        %7192 = vmatpush1.bf16.msra.mxu0 %v6620
        %7193 = vmatprep.subr.bf16.mxu0 %v6880
        %7194 = vmatpush1.bf16.msra.mxu0 %v6877
        %7195 = vmatprep.subr.bf16.mxu0 0
        %7196 = vmatpush1.bf16.msra.mxu0 0
        %7197 = vmatprep.subr.bf16.mxu0 0
        %7198 = vmatpush1.bf16.msra.mxu0 0
        %7199 = vmatprep.subr.bf16.mxu0 0
        %7200 = vmatpush1.bf16.msra.mxu0 0
        %7201 = vmatprep.mubr.bf16.mxu0 %v6832
        %7202 = vmatmul.mubr.bf16.gmra.mrb[0].mxu0 %v5827
        %v7203 = vpop.f32.mrb[0].mxu0
        %v7204 = vadd.f32 %v5822, %v7203
        %v7205 = vpop.f32.mrb[0].mxu0
        %v7206 = vadd.f32 %v5822, %v7205
        %v7207 = vpop.f32.mrb[0].mxu0
        %v7208 = vpop.f32.mrb[0].mxu0
        %7209 = vdwg.mxu0
        %vm7210 = vcmp.gt.f32.partialorder %v6917, 0.0
        %vm7211 = vcmp.gt.f32.partialorder %v6919, 0.0
        %vm7212 = vcmp.gt.f32.partialorder %v6958, 0.0
        %vm7213 = vcmp.gt.f32.partialorder %v6960, 0.0
        %vm7214 = vcmp.gt.f32.partialorder %v6999, 0.0
        %vm7215 = vcmp.gt.f32.partialorder %v7001, 0.0
        %vm7216 = vcmp.gt.f32.partialorder %v7040, 0.0
        %vm7217 = vcmp.gt.f32.partialorder %v7042, 0.0
        %vm7218 = vcmp.gt.f32.partialorder %v7081, 0.0
        %vm7219 = vcmp.gt.f32.partialorder %v7083, 0.0
        %vm7220 = vcmp.gt.f32.partialorder %v7122, 0.0
        %vm7221 = vcmp.gt.f32.partialorder %v7124, 0.0
        %vm7222 = vcmp.gt.f32.partialorder %v7163, 0.0
        %vm7223 = vcmp.gt.f32.partialorder %v7165, 0.0
        %vm7224 = vcmp.gt.f32.partialorder %v7204, 0.0
        %vm7225 = vcmp.gt.f32.partialorder %v7206, 0.0
        %v7226 = vmin.f32 %v6917, 0.0
        %v7227 = vmin.f32 %v6919, 0.0
        %v7228 = vmin.f32 %v6958, 0.0
        %v7229 = vmin.f32 %v6960, 0.0
        %v7230 = vmin.f32 %v6999, 0.0
        %v7231 = vmin.f32 %v7001, 0.0
        %v7232 = vmin.f32 %v7040, 0.0
        %v7233 = vmin.f32 %v7042, 0.0
        %v7234 = vmin.f32 %v7081, 0.0
        %v7235 = vmin.f32 %v7083, 0.0
        %v7236 = vmin.f32 %v7122, 0.0
        %v7237 = vmin.f32 %v7124, 0.0
        %v7238 = vmin.f32 %v7163, 0.0
        %v7239 = vmin.f32 %v7165, 0.0
        %v7240 = vmin.f32 %v7204, 0.0
        %v7241 = vmin.f32 %v7206, 0.0
        %v7242 = vmul.f32 %v7226, 1.442695
        %v7243 = vpow.pop %v7242
        %v7244 = vmul.f32 %v7227, 1.442695
        %v7245 = vpow.pop %v7244
        %v7246 = vmul.f32 %v7228, 1.442695
        %v7247 = vpow.pop %v7246
        %v7248 = vmul.f32 %v7229, 1.442695
        %v7249 = vpow.pop %v7248
        %v7250 = vmul.f32 %v7230, 1.442695
        %v7251 = vpow.pop %v7250
        %v7252 = vmul.f32 %v7231, 1.442695
        %v7253 = vpow.pop %v7252
        %v7254 = vmul.f32 %v7232, 1.442695
        %v7255 = vpow.pop %v7254
        %v7256 = vmul.f32 %v7233, 1.442695
        %v7257 = vpow.pop %v7256
        %v7258 = vmul.f32 %v7234, 1.442695
        %v7259 = vpow.pop %v7258
        %v7260 = vmul.f32 %v7235, 1.442695
        %v7261 = vpow.pop %v7260
        %v7262 = vmul.f32 %v7236, 1.442695
        %v7263 = vpow.pop %v7262
        %v7264 = vmul.f32 %v7237, 1.442695
        %v7265 = vpow.pop %v7264
        %v7266 = vmul.f32 %v7238, 1.442695
        %v7267 = vpow.pop %v7266
        %v7268 = vmul.f32 %v7239, 1.442695
        %v7269 = vpow.pop %v7268
        %v7270 = vmul.f32 %v7240, 1.442695
        %v7271 = vpow.pop %v7270
        %v7272 = vmul.f32 %v7241, 1.442695
        %v7273 = vpow.pop %v7272
        %v7274 = vsub.f32 %v7243, 1.0
        %v7275 = vsub.f32 %v7245, 1.0
        %v7276 = vsub.f32 %v7247, 1.0
        %v7277 = vsub.f32 %v7249, 1.0
        %v7278 = vsub.f32 %v7251, 1.0
        %v7279 = vsub.f32 %v7253, 1.0
        %v7280 = vsub.f32 %v7255, 1.0
        %v7281 = vsub.f32 %v7257, 1.0
        %v7282 = vsub.f32 %v7259, 1.0
        %v7283 = vsub.f32 %v7261, 1.0
        %v7284 = vsub.f32 %v7263, 1.0
        %v7285 = vsub.f32 %v7265, 1.0
        %v7286 = vsub.f32 %v7267, 1.0
        %v7287 = vsub.f32 %v7269, 1.0
        %v7288 = vsub.f32 %v7271, 1.0
        %v7289 = vsub.f32 %v7273, 1.0
        %v7290 = vsel %vm7210, %v6917, %v7274
        %v7291 = vsel %vm7211, %v6919, %v7275
        %v7292 = vsel %vm7212, %v6958, %v7276
        %v7293 = vsel %vm7213, %v6960, %v7277
        %v7294 = vsel %vm7214, %v6999, %v7278
        %v7295 = vsel %vm7215, %v7001, %v7279
        %v7296 = vsel %vm7216, %v7040, %v7280
        %v7297 = vsel %vm7217, %v7042, %v7281
        %v7298 = vsel %vm7218, %v7081, %v7282
        %v7299 = vsel %vm7219, %v7083, %v7283
        %v7300 = vsel %vm7220, %v7122, %v7284
        %v7301 = vsel %vm7221, %v7124, %v7285
        %v7302 = vsel %vm7222, %v7163, %v7286
        %v7303 = vsel %vm7223, %v7165, %v7287
        %v7304 = vsel %vm7224, %v7204, %v7288
        %v7305 = vsel %vm7225, %v7206, %v7289
        %v7306 = vmul.f32 %v7290, %v4792
        %v7307 = vmul.f32 %v7291, %v4796
        %v7308 = vmul.f32 %v7292, %v4800
        %v7309 = vmul.f32 %v7293, %v4804
        %v7310 = vmul.f32 %v7294, %v4808
        %v7311 = vmul.f32 %v7295, %v4812
        %v7312 = vmul.f32 %v7296, %v4816
        %v7313 = vmul.f32 %v7297, %v4820
        %v7314 = vmul.f32 %v7298, %v4824
        %v7315 = vmul.f32 %v7299, %v4828
        %v7316 = vmul.f32 %v7300, %v4832
        %v7317 = vmul.f32 %v7301, %v4836
        %v7318 = vmul.f32 %v7302, %v4840
        %v7319 = vmul.f32 %v7303, %v4844
        %v7320 = vmul.f32 %v7304, %v4848
        %v7321 = vmul.f32 %v7305, %v4852
        %v7322 = vpack.c.bf16 %v7306, %v7306
        %v7323 = vpack.c.bf16 %v7307, %v7307
        %v7324 = vpack.c.bf16 %v7308, %v7308
        %v7325 = vpack.c.bf16 %v7309, %v7309
        %v7326 = vpack.c.bf16 %v7310, %v7310
        %v7327 = vpack.c.bf16 %v7311, %v7311
        %v7328 = vpack.c.bf16 %v7312, %v7312
        %v7329 = vpack.c.bf16 %v7313, %v7313
        %v7330 = vpack.c.bf16 %v7314, %v7314
        %v7331 = vpack.c.bf16 %v7315, %v7315
        %v7332 = vpack.c.bf16 %v7316, %v7316
        %v7333 = vpack.c.bf16 %v7317, %v7317
        %v7334 = vpack.c.bf16 %v7318, %v7318
        %v7335 = vpack.c.bf16 %v7319, %v7319
        %v7336 = vpack.c.bf16 %v7320, %v7320
        %v7337 = vpack.c.bf16 %v7321, %v7321
        %v7354 = vunpack.c.l.b16 %v7322
        %v7355 = vunpack.c.l.b16 %v7323
        %v7356 = vunpack.c.l.b16 %v7324
        %v7357 = vunpack.c.l.b16 %v7325
        %v7358 = vunpack.c.l.b16 %v7326
        %v7359 = vunpack.c.l.b16 %v7327
        %v7360 = vunpack.c.l.b16 %v7328
        %v7361 = vunpack.c.l.b16 %v7329
        %v7362 = vunpack.c.l.b16 %v7330
        %v7363 = vunpack.c.l.b16 %v7331
        %v7364 = vunpack.c.l.b16 %v7332
        %v7365 = vunpack.c.l.b16 %v7333
        %v7366 = vunpack.c.l.b16 %v7334
        %v7367 = vunpack.c.l.b16 %v7335
        %v7368 = vunpack.c.l.b16 %v7336
        %v7369 = vunpack.c.l.b16 %v7337
        %v7370 = vpack.c.b16 %v7355, %v7354
        %v7371 = vpack.c.b16 %v7357, %v7356
        %v7372 = vpack.c.b16 %v7359, %v7358
        %v7373 = vpack.c.b16 %v7361, %v7360
        %v7374 = vpack.c.b16 %v7363, %v7362
        %v7375 = vpack.c.b16 %v7365, %v7364
        %v7376 = vpack.c.b16 %v7367, %v7366
        %v7377 = vpack.c.b16 %v7369, %v7368
        %7386 = vst [vmem:[#allocation2 + $0x10] sm:$0xff] %v7370
        %7387 = vst [vmem:[#allocation2 + $0x18] sm:$0xff] %v7371
        %7388 = vst [vmem:[#allocation2 + $0x20] sm:$0xff] %v7372
        %7389 = vst [vmem:[#allocation2 + $0x28] sm:$0xff] %v7373
        %7390 = vst [vmem:[#allocation2 + $0x30] sm:$0xff] %v7374
        %7391 = vst [vmem:[#allocation2 + $0x38] sm:$0xff] %v7375
        %7392 = vst [vmem:[#allocation2 + $0x40] sm:$0xff] %v7376
        %7393 = vst [vmem:[#allocation2 + $0x48] sm:$0xff] %v7377
        %v7394 = vld [vmem:[#allocation2 + $0x8] sm:$0xff]
        %v7395 = vld [vmem:[#allocation2 + $0x10] sm:$0xff]
        %v7396 = vld [vmem:[#allocation2 + $0x18] sm:$0xff]
        %v7397 = vld [vmem:[#allocation2 + $0x20] sm:$0xff]
        %v7398 = vld [vmem:[#allocation2 + $0x28] sm:$0xff]
        %v7399 = vld [vmem:[#allocation2 + $0x30] sm:$0xff]
        %v7400 = vld [vmem:[#allocation2 + $0x38] sm:$0xff]
        %v7401 = vld [vmem:[#allocation2 + $0x40] sm:$0xff]
        %v7402 = vld [vmem:[#allocation2 + $0x48] sm:$0xff]
        %v7403 = vld [vmem:[#allocation2 + $0x50] sm:$0xf]
        %7413 = vrot.lane.b32.xlu0 %v7394, 1
        %v7414 = vpop.permute.xlu0 %7413
        %7415 = vrot.lane.b32.xlu0 %v7395, 1
        %v7416 = vpop.permute.xlu0 %7415
        %7417 = vrot.lane.b32.xlu0 %v7396, 1
        %v7418 = vpop.permute.xlu0 %7417
        %7419 = vrot.lane.b32.xlu0 %v7397, 1
        %v7420 = vpop.permute.xlu0 %7419
        %7421 = vrot.lane.b32.xlu0 %v7398, 1
        %v7422 = vpop.permute.xlu0 %7421
        %7423 = vrot.lane.b32.xlu0 %v7399, 1
        %v7424 = vpop.permute.xlu0 %7423
        %7425 = vrot.lane.b32.xlu0 %v7400, 1
        %v7426 = vpop.permute.xlu0 %7425
        %7427 = vrot.lane.b32.xlu0 %v7401, 1
        %v7428 = vpop.permute.xlu0 %7427
        %7429 = vrot.lane.b32.xlu0 %v7402, 1
        %v7430 = vpop.permute.xlu0 %7429
        %v7431 = vrot.slane %v7414, 4
        %v7432 = vrot.slane %v7416, 4
        %v7433 = vrot.slane %v7418, 4
        %v7434 = vrot.slane %v7420, 4
        %v7435 = vrot.slane %v7422, 4
        %v7436 = vrot.slane %v7424, 4
        %v7437 = vrot.slane %v7426, 4
        %v7438 = vrot.slane %v7428, 4
        %v7439 = vrot.slane %v7430, 4
        %v7440 = vsel %vm527, %v7431, %v7432
        %v7441 = vsel %vm869, %v7414, %v7440
        %v7442 = vsel %vm527, %v7432, %v7433
        %v7443 = vsel %vm869, %v7416, %v7442
        %v7444 = vsel %vm527, %v7433, %v7434
        %v7445 = vsel %vm869, %v7418, %v7444
        %v7446 = vsel %vm527, %v7434, %v7435
        %v7447 = vsel %vm869, %v7420, %v7446
        %v7448 = vsel %vm527, %v7435, %v7436
        %v7449 = vsel %vm869, %v7422, %v7448
        %v7450 = vsel %vm527, %v7436, %v7437
        %v7451 = vsel %vm869, %v7424, %v7450
        %v7452 = vsel %vm527, %v7437, %v7438
        %v7453 = vsel %vm869, %v7426, %v7452
        %v7454 = vsel %vm527, %v7438, %v7439
        %v7455 = vsel %vm869, %v7428, %v7454
        %7464 = vst [vmem:[#allocation3] sm:$0xff] %v7441
        %7465 = vst [vmem:[#allocation3 + $0x8] sm:$0xff] %v7443
        %7466 = vst [vmem:[#allocation3 + $0x10] sm:$0xff] %v7445
        %7467 = vst [vmem:[#allocation3 + $0x18] sm:$0xff] %v7447
        %7468 = vst [vmem:[#allocation3 + $0x20] sm:$0xff] %v7449
        %7469 = vst [vmem:[#allocation3 + $0x28] sm:$0xff] %v7451
        %7470 = vst [vmem:[#allocation3 + $0x30] sm:$0xff] %v7453
        %7471 = vst [vmem:[#allocation3 + $0x38] sm:$0xff] %v7455
        %v7472 = vsel %vm869, %v7440, %v7416
        %v7473 = vsel %vm869, %v7442, %v7418
        %v7474 = vsel %vm869, %v7444, %v7420
        %v7475 = vsel %vm869, %v7446, %v7422
        %v7476 = vsel %vm869, %v7448, %v7424
        %v7477 = vsel %vm869, %v7450, %v7426
        %v7478 = vsel %vm869, %v7452, %v7428
        %v7479 = vsel %vm869, %v7454, %v7430
        %7488 = vst [vmem:[#allocation3 + $0xc0] sm:$0xff] %v7472
        %7489 = vst [vmem:[#allocation3 + $0xc8] sm:$0xff] %v7473
        %7490 = vst [vmem:[#allocation3 + $0xd0] sm:$0xff] %v7474
        %7491 = vst [vmem:[#allocation3 + $0xd8] sm:$0xff] %v7475
        %7492 = vst [vmem:[#allocation3 + $0xe0] sm:$0xff] %v7476
        %7493 = vst [vmem:[#allocation3 + $0xe8] sm:$0xff] %v7477
        %7494 = vst [vmem:[#allocation3 + $0xf0] sm:$0xff] %v7478
        %7495 = vst [vmem:[#allocation3 + $0xf8] sm:$0xff] %v7479
        %7497 = vrot.lane.b32.xlu0 %v7403, 1
        %v7498 = vpop.permute.xlu0 %7497
        %v7499 = vrot.slane %v7498, 4
        %v7500 = vsel %vm527, %v7439, %v7499
        %v7501 = vsel %vm869, %v7430, %v7500
        %7503 = vst [vmem:[#allocation3 + $0x180] sm:$0xff] %v7443
        %7504 = vst [vmem:[#allocation3 + $0x188] sm:$0xff] %v7445
        %7505 = vst [vmem:[#allocation3 + $0x190] sm:$0xff] %v7447
        %7506 = vst [vmem:[#allocation3 + $0x198] sm:$0xff] %v7449
        %7507 = vst [vmem:[#allocation3 + $0x1a0] sm:$0xff] %v7451
        %7508 = vst [vmem:[#allocation3 + $0x1a8] sm:$0xff] %v7453
        %7509 = vst [vmem:[#allocation3 + $0x1b0] sm:$0xff] %v7455
        %7510 = vst [vmem:[#allocation3 + $0x1b8] sm:$0xff] %v7501
        %v7511 = vld [vmem:[#allocation2 + $0xc] sm:$0xff]
        %v7512 = vld [vmem:[#allocation2 + $0x14] sm:$0xff]
        %v7513 = vld [vmem:[#allocation2 + $0x1c] sm:$0xff]
        %v7514 = vld [vmem:[#allocation2 + $0x24] sm:$0xff]
        %v7515 = vld [vmem:[#allocation2 + $0x2c] sm:$0xff]
        %v7516 = vld [vmem:[#allocation2 + $0x34] sm:$0xff]
        %v7517 = vld [vmem:[#allocation2 + $0x3c] sm:$0xff]
        %v7518 = vld [vmem:[#allocation2 + $0x44] sm:$0xff]
        %v7519 = vld [vmem:[#allocation2 + $0x4c] sm:$0xff]
        %7520 = vst [vmem:[#allocation3 + $0x40] sm:$0xff] %v7511
        %7521 = vst [vmem:[#allocation3 + $0x48] sm:$0xff] %v7512
        %7522 = vst [vmem:[#allocation3 + $0x50] sm:$0xff] %v7513
        %7523 = vst [vmem:[#allocation3 + $0x58] sm:$0xff] %v7514
        %7524 = vst [vmem:[#allocation3 + $0x60] sm:$0xff] %v7515
        %7525 = vst [vmem:[#allocation3 + $0x68] sm:$0xff] %v7516
        %7526 = vst [vmem:[#allocation3 + $0x70] sm:$0xff] %v7517
        %7527 = vst [vmem:[#allocation3 + $0x78] sm:$0xff] %v7518
        %v7537 = vrot.slane %v7511, 4
        %v7538 = vrot.slane %v7512, 4
        %v7539 = vrot.slane %v7513, 4
        %v7540 = vrot.slane %v7514, 4
        %v7541 = vrot.slane %v7515, 4
        %v7542 = vrot.slane %v7516, 4
        %v7543 = vrot.slane %v7517, 4
        %v7544 = vrot.slane %v7518, 4
        %v7545 = vrot.slane %v7519, 4
        %v7546 = vsel %vm527, %v7537, %v7538
        %v7547 = vsel %vm527, %v7538, %v7539
        %v7548 = vsel %vm527, %v7539, %v7540
        %v7549 = vsel %vm527, %v7540, %v7541
        %v7550 = vsel %vm527, %v7541, %v7542
        %v7551 = vsel %vm527, %v7542, %v7543
        %v7552 = vsel %vm527, %v7543, %v7544
        %v7553 = vsel %vm527, %v7544, %v7545
        %7562 = vst [vmem:[#allocation3 + $0x100] sm:$0xff] %v7546
        %7563 = vst [vmem:[#allocation3 + $0x108] sm:$0xff] %v7547
        %7564 = vst [vmem:[#allocation3 + $0x110] sm:$0xff] %v7548
        %7565 = vst [vmem:[#allocation3 + $0x118] sm:$0xff] %v7549
        %7566 = vst [vmem:[#allocation3 + $0x120] sm:$0xff] %v7550
        %7567 = vst [vmem:[#allocation3 + $0x128] sm:$0xff] %v7551
        %7568 = vst [vmem:[#allocation3 + $0x130] sm:$0xff] %v7552
        %7569 = vst [vmem:[#allocation3 + $0x138] sm:$0xff] %v7553
        %7570 = vst [vmem:[#allocation3 + $0x1c0] sm:$0xff] %v7512
        %7571 = vst [vmem:[#allocation3 + $0x1c8] sm:$0xff] %v7513
        %7572 = vst [vmem:[#allocation3 + $0x1d0] sm:$0xff] %v7514
        %7573 = vst [vmem:[#allocation3 + $0x1d8] sm:$0xff] %v7515
        %7574 = vst [vmem:[#allocation3 + $0x1e0] sm:$0xff] %v7516
        %7575 = vst [vmem:[#allocation3 + $0x1e8] sm:$0xff] %v7517
        %7576 = vst [vmem:[#allocation3 + $0x1f0] sm:$0xff] %v7518
        %7577 = vst [vmem:[#allocation3 + $0x1f8] sm:$0xff] %v7519
        %v7578 = vld [vmem:[#allocation2 + $0xc] sm:$0xff]
        %v7579 = vld [vmem:[#allocation2 + $0x14] sm:$0xff]
        %v7580 = vld [vmem:[#allocation2 + $0x1c] sm:$0xff]
        %v7581 = vld [vmem:[#allocation2 + $0x24] sm:$0xff]
        %v7582 = vld [vmem:[#allocation2 + $0x2c] sm:$0xff]
        %v7583 = vld [vmem:[#allocation2 + $0x34] sm:$0xff]
        %v7584 = vld [vmem:[#allocation2 + $0x3c] sm:$0xff]
        %v7585 = vld [vmem:[#allocation2 + $0x44] sm:$0xff]
        %v7586 = vld [vmem:[#allocation2 + $0x4c] sm:$0xff]
        %v7587 = vld [vmem:[#allocation2 + $0x54] sm:$0xf]
        %7597 = vrot.lane.b32.xlu0 %v7578, 127
        %v7598 = vpop.permute.xlu0 %7597
        %7599 = vrot.lane.b32.xlu0 %v7579, 127
        %v7600 = vpop.permute.xlu0 %7599
        %7601 = vrot.lane.b32.xlu0 %v7580, 127
        %v7602 = vpop.permute.xlu0 %7601
        %7603 = vrot.lane.b32.xlu0 %v7581, 127
        %v7604 = vpop.permute.xlu0 %7603
        %7605 = vrot.lane.b32.xlu0 %v7582, 127
        %v7606 = vpop.permute.xlu0 %7605
        %7607 = vrot.lane.b32.xlu0 %v7583, 127
        %v7608 = vpop.permute.xlu0 %7607
        %7609 = vrot.lane.b32.xlu0 %v7584, 127
        %v7610 = vpop.permute.xlu0 %7609
        %7611 = vrot.lane.b32.xlu0 %v7585, 127
        %v7612 = vpop.permute.xlu0 %7611
        %7613 = vrot.lane.b32.xlu0 %v7586, 127
        %v7614 = vpop.permute.xlu0 %7613
        %v7615 = vrot.slane %v7598, 4
        %v7616 = vrot.slane %v7600, 4
        %v7617 = vrot.slane %v7602, 4
        %v7618 = vrot.slane %v7604, 4
        %v7619 = vrot.slane %v7606, 4
        %v7620 = vrot.slane %v7608, 4
        %v7621 = vrot.slane %v7610, 4
        %v7622 = vrot.slane %v7612, 4
        %v7623 = vrot.slane %v7614, 4
        %v7624 = vsel %vm527, %v7615, %v7616
        %v7625 = vsel %vm1148, %v7598, %v7624
        %v7626 = vsel %vm527, %v7616, %v7617
        %v7627 = vsel %vm1148, %v7600, %v7626
        %v7628 = vsel %vm527, %v7617, %v7618
        %v7629 = vsel %vm1148, %v7602, %v7628
        %v7630 = vsel %vm527, %v7618, %v7619
        %v7631 = vsel %vm1148, %v7604, %v7630
        %v7632 = vsel %vm527, %v7619, %v7620
        %v7633 = vsel %vm1148, %v7606, %v7632
        %v7634 = vsel %vm527, %v7620, %v7621
        %v7635 = vsel %vm1148, %v7608, %v7634
        %v7636 = vsel %vm527, %v7621, %v7622
        %v7637 = vsel %vm1148, %v7610, %v7636
        %v7638 = vsel %vm527, %v7622, %v7623
        %v7639 = vsel %vm1148, %v7612, %v7638
        %7648 = vst [vmem:[#allocation3 + $0x80] sm:$0xff] %v7625
        %7649 = vst [vmem:[#allocation3 + $0x88] sm:$0xff] %v7627
        %7650 = vst [vmem:[#allocation3 + $0x90] sm:$0xff] %v7629
        %7651 = vst [vmem:[#allocation3 + $0x98] sm:$0xff] %v7631
        %7652 = vst [vmem:[#allocation3 + $0xa0] sm:$0xff] %v7633
        %7653 = vst [vmem:[#allocation3 + $0xa8] sm:$0xff] %v7635
        %7654 = vst [vmem:[#allocation3 + $0xb0] sm:$0xff] %v7637
        %7655 = vst [vmem:[#allocation3 + $0xb8] sm:$0xff] %v7639
        %v7656 = vsel %vm1148, %v7624, %v7600
        %v7657 = vsel %vm1148, %v7626, %v7602
        %v7658 = vsel %vm1148, %v7628, %v7604
        %v7659 = vsel %vm1148, %v7630, %v7606
        %v7660 = vsel %vm1148, %v7632, %v7608
        %v7661 = vsel %vm1148, %v7634, %v7610
        %v7662 = vsel %vm1148, %v7636, %v7612
        %v7663 = vsel %vm1148, %v7638, %v7614
        %7672 = vst [vmem:[#allocation3 + $0x140] sm:$0xff] %v7656
        %7673 = vst [vmem:[#allocation3 + $0x148] sm:$0xff] %v7657
        %7674 = vst [vmem:[#allocation3 + $0x150] sm:$0xff] %v7658
        %7675 = vst [vmem:[#allocation3 + $0x158] sm:$0xff] %v7659
        %7676 = vst [vmem:[#allocation3 + $0x160] sm:$0xff] %v7660
        %7677 = vst [vmem:[#allocation3 + $0x168] sm:$0xff] %v7661
        %7678 = vst [vmem:[#allocation3 + $0x170] sm:$0xff] %v7662
        %7679 = vst [vmem:[#allocation3 + $0x178] sm:$0xff] %v7663
        %7681 = vrot.lane.b32.xlu0 %v7587, 127
        %v7682 = vpop.permute.xlu0 %7681
        %v7683 = vrot.slane %v7682, 4
        %v7684 = vsel %vm527, %v7623, %v7683
        %v7685 = vsel %vm1148, %v7614, %v7684
        %7687 = vst [vmem:[#allocation3 + $0x200] sm:$0xff] %v7627
        %7688 = vst [vmem:[#allocation3 + $0x208] sm:$0xff] %v7629
        %7689 = vst [vmem:[#allocation3 + $0x210] sm:$0xff] %v7631
        %7690 = vst [vmem:[#allocation3 + $0x218] sm:$0xff] %v7633
        %7691 = vst [vmem:[#allocation3 + $0x220] sm:$0xff] %v7635
        %7692 = vst [vmem:[#allocation3 + $0x228] sm:$0xff] %v7637
        %7693 = vst [vmem:[#allocation3 + $0x230] sm:$0xff] %v7639
        %7694 = vst [vmem:[#allocation3 + $0x238] sm:$0xff] %v7685
        %v7695 = vld [vmem:[%s6] sm:$0xf]
        %v7696 = vld [vmem:[#allocation3] sm:$0xff]
        %v7697 = vld [vmem:[#allocation3 + $0x8] sm:$0xff]
        %v7698 = vld [vmem:[#allocation3 + $0x10] sm:$0xff]
        %v7699 = vld [vmem:[#allocation3 + $0x18] sm:$0xff]
        %v7700 = vld [vmem:[#allocation3 + $0x20] sm:$0xff]
        %v7701 = vld [vmem:[#allocation3 + $0x28] sm:$0xff]
        %v7702 = vld [vmem:[#allocation3 + $0x30] sm:$0xff]
        %v7703 = vld [vmem:[#allocation3 + $0x38] sm:$0xff]
        %v7704 = vld [vmem:[#allocation3 + $0x40] sm:$0xff]
        %v7705 = vld [vmem:[#allocation3 + $0x48] sm:$0xff]
        %v7706 = vld [vmem:[#allocation3 + $0x50] sm:$0xff]
        %v7707 = vld [vmem:[#allocation3 + $0x58] sm:$0xff]
        %v7708 = vld [vmem:[#allocation3 + $0x60] sm:$0xff]
        %v7709 = vld [vmem:[#allocation3 + $0x68] sm:$0xff]
        %v7710 = vld [vmem:[#allocation3 + $0x70] sm:$0xff]
        %v7711 = vld [vmem:[#allocation3 + $0x78] sm:$0xff]
        %v7712 = vld [vmem:[#allocation3 + $0x80] sm:$0xff]
        %v7713 = vld [vmem:[#allocation3 + $0x88] sm:$0xff]
        %v7714 = vld [vmem:[#allocation3 + $0x90] sm:$0xff]
        %v7715 = vld [vmem:[#allocation3 + $0x98] sm:$0xff]
        %v7716 = vld [vmem:[#allocation3 + $0xa0] sm:$0xff]
        %v7717 = vld [vmem:[#allocation3 + $0xa8] sm:$0xff]
        %v7718 = vld [vmem:[#allocation3 + $0xb0] sm:$0xff]
        %v7719 = vld [vmem:[#allocation3 + $0xb8] sm:$0xff]
        %v7720 = vld [vmem:[#allocation3 + $0xc0] sm:$0xff]
        %v7721 = vld [vmem:[#allocation3 + $0xc8] sm:$0xff]
        %v7722 = vld [vmem:[#allocation3 + $0xd0] sm:$0xff]
        %v7723 = vld [vmem:[#allocation3 + $0xd8] sm:$0xff]
        %v7724 = vld [vmem:[#allocation3 + $0xe0] sm:$0xff]
        %v7725 = vld [vmem:[#allocation3 + $0xe8] sm:$0xff]
        %v7726 = vld [vmem:[#allocation3 + $0xf0] sm:$0xff]
        %v7727 = vld [vmem:[#allocation3 + $0xf8] sm:$0xff]
        %v7728 = vld [vmem:[#allocation3 + $0x100] sm:$0xff]
        %v7729 = vld [vmem:[#allocation3 + $0x108] sm:$0xff]
        %v7730 = vld [vmem:[#allocation3 + $0x110] sm:$0xff]
        %v7731 = vld [vmem:[#allocation3 + $0x118] sm:$0xff]
        %v7732 = vld [vmem:[#allocation3 + $0x120] sm:$0xff]
        %v7733 = vld [vmem:[#allocation3 + $0x128] sm:$0xff]
        %v7734 = vld [vmem:[#allocation3 + $0x130] sm:$0xff]
        %v7735 = vld [vmem:[#allocation3 + $0x138] sm:$0xff]
        %v7736 = vld [vmem:[#allocation3 + $0x140] sm:$0xff]
        %v7737 = vld [vmem:[#allocation3 + $0x148] sm:$0xff]
        %v7738 = vld [vmem:[#allocation3 + $0x150] sm:$0xff]
        %v7739 = vld [vmem:[#allocation3 + $0x158] sm:$0xff]
        %v7740 = vld [vmem:[#allocation3 + $0x160] sm:$0xff]
        %v7741 = vld [vmem:[#allocation3 + $0x168] sm:$0xff]
        %v7742 = vld [vmem:[#allocation3 + $0x170] sm:$0xff]
        %v7743 = vld [vmem:[#allocation3 + $0x178] sm:$0xff]
        %v7744 = vld [vmem:[#allocation3 + $0x180] sm:$0xff]
        %v7745 = vld [vmem:[#allocation3 + $0x188] sm:$0xff]
        %v7746 = vld [vmem:[#allocation3 + $0x190] sm:$0xff]
        %v7747 = vld [vmem:[#allocation3 + $0x198] sm:$0xff]
        %v7748 = vld [vmem:[#allocation3 + $0x1a0] sm:$0xff]
        %v7749 = vld [vmem:[#allocation3 + $0x1a8] sm:$0xff]
        %v7750 = vld [vmem:[#allocation3 + $0x1b0] sm:$0xff]
        %v7751 = vld [vmem:[#allocation3 + $0x1b8] sm:$0xff]
        %v7752 = vld [vmem:[#allocation3 + $0x1c0] sm:$0xff]
        %v7753 = vld [vmem:[#allocation3 + $0x1c8] sm:$0xff]
        %v7754 = vld [vmem:[#allocation3 + $0x1d0] sm:$0xff]
        %v7755 = vld [vmem:[#allocation3 + $0x1d8] sm:$0xff]
        %v7756 = vld [vmem:[#allocation3 + $0x1e0] sm:$0xff]
        %v7757 = vld [vmem:[#allocation3 + $0x1e8] sm:$0xff]
        %v7758 = vld [vmem:[#allocation3 + $0x1f0] sm:$0xff]
        %v7759 = vld [vmem:[#allocation3 + $0x1f8] sm:$0xff]
        %v7760 = vld [vmem:[#allocation3 + $0x200] sm:$0xff]
        %v7761 = vld [vmem:[#allocation3 + $0x208] sm:$0xff]
        %v7762 = vld [vmem:[#allocation3 + $0x210] sm:$0xff]
        %v7763 = vld [vmem:[#allocation3 + $0x218] sm:$0xff]
        %v7764 = vld [vmem:[#allocation3 + $0x220] sm:$0xff]
        %v7765 = vld [vmem:[#allocation3 + $0x228] sm:$0xff]
        %v7766 = vld [vmem:[#allocation3 + $0x230] sm:$0xff]
        %v7767 = vld [vmem:[#allocation3 + $0x238] sm:$0xff]
        %v7768 = vld [vmem:[%s7] sm:$0xff]
        %7770 = vset.pattern.permute.xlu0 0
        %7771 = vperm.xlu0 %7770, %v7768
        %v7772 = vpop.permute.xlu0 %7771
        %v7846 = vunpack.c.l.b16 %v7696
        %v7847 = vunpack.c.h.b16 %v7696
        %v7848 = vunpack.c.l.b16 %v7697
        %v7849 = vunpack.c.h.b16 %v7697
        %v7850 = vunpack.c.l.b16 %v7698
        %v7851 = vunpack.c.h.b16 %v7698
        %v7852 = vunpack.c.l.b16 %v7699
        %v7853 = vunpack.c.h.b16 %v7699
        %v7854 = vunpack.c.l.b16 %v7700
        %v7855 = vunpack.c.h.b16 %v7700
        %v7856 = vunpack.c.l.b16 %v7701
        %v7857 = vunpack.c.h.b16 %v7701
        %v7858 = vunpack.c.l.b16 %v7702
        %v7859 = vunpack.c.h.b16 %v7702
        %v7860 = vunpack.c.l.b16 %v7703
        %v7861 = vunpack.c.h.b16 %v7703
        %v7862 = vunpack.c.l.b16 %v7704
        %v7863 = vunpack.c.h.b16 %v7704
        %v7864 = vunpack.c.l.b16 %v7705
        %v7865 = vunpack.c.h.b16 %v7705
        %v7866 = vunpack.c.l.b16 %v7706
        %v7867 = vunpack.c.h.b16 %v7706
        %v7868 = vunpack.c.l.b16 %v7707
        %v7869 = vunpack.c.h.b16 %v7707
        %v7870 = vunpack.c.l.b16 %v7708
        %v7871 = vunpack.c.h.b16 %v7708
        %v7872 = vunpack.c.l.b16 %v7709
        %v7873 = vunpack.c.h.b16 %v7709
        %v7874 = vunpack.c.l.b16 %v7710
        %v7875 = vunpack.c.h.b16 %v7710
        %v7876 = vunpack.c.l.b16 %v7711
        %v7877 = vunpack.c.h.b16 %v7711
        %v7878 = vunpack.c.l.b16 %v7712
        %v7879 = vunpack.c.h.b16 %v7712
        %v7880 = vunpack.c.l.b16 %v7713
        %v7881 = vunpack.c.h.b16 %v7713
        %v7882 = vunpack.c.l.b16 %v7714
        %v7883 = vunpack.c.h.b16 %v7714
        %v7884 = vunpack.c.l.b16 %v7715
        %v7885 = vunpack.c.h.b16 %v7715
        %v7886 = vunpack.c.l.b16 %v7716
        %v7887 = vunpack.c.h.b16 %v7716
        %v7888 = vunpack.c.l.b16 %v7717
        %v7889 = vunpack.c.h.b16 %v7717
        %v7890 = vunpack.c.l.b16 %v7718
        %v7891 = vunpack.c.h.b16 %v7718
        %v7892 = vunpack.c.l.b16 %v7719
        %v7893 = vunpack.c.h.b16 %v7719
        %v7894 = vunpack.c.l.b16 %v7720
        %v7895 = vunpack.c.h.b16 %v7720
        %v7896 = vunpack.c.l.b16 %v7721
        %v7897 = vunpack.c.h.b16 %v7721
        %v7898 = vunpack.c.l.b16 %v7722
        %v7899 = vunpack.c.h.b16 %v7722
        %v7900 = vunpack.c.l.b16 %v7723
        %v7901 = vunpack.c.h.b16 %v7723
        %v7902 = vunpack.c.l.b16 %v7724
        %v7903 = vunpack.c.h.b16 %v7724
        %v7904 = vunpack.c.l.b16 %v7725
        %v7905 = vunpack.c.h.b16 %v7725
        %v7906 = vunpack.c.l.b16 %v7726
        %v7907 = vunpack.c.h.b16 %v7726
        %v7908 = vunpack.c.l.b16 %v7727
        %v7909 = vunpack.c.h.b16 %v7727
        %v7910 = vunpack.c.l.b16 %v7728
        %v7911 = vunpack.c.h.b16 %v7728
        %v7912 = vunpack.c.l.b16 %v7729
        %v7913 = vunpack.c.h.b16 %v7729
        %v7914 = vunpack.c.l.b16 %v7730
        %v7915 = vunpack.c.h.b16 %v7730
        %v7916 = vunpack.c.l.b16 %v7731
        %v7917 = vunpack.c.h.b16 %v7731
        %v7918 = vunpack.c.l.b16 %v7732
        %v7919 = vunpack.c.h.b16 %v7732
        %v7920 = vunpack.c.l.b16 %v7733
        %v7921 = vunpack.c.h.b16 %v7733
        %v7922 = vunpack.c.l.b16 %v7734
        %v7923 = vunpack.c.h.b16 %v7734
        %v7924 = vunpack.c.l.b16 %v7735
        %v7925 = vunpack.c.h.b16 %v7735
        %v7926 = vunpack.c.l.b16 %v7736
        %v7927 = vunpack.c.h.b16 %v7736
        %v7928 = vunpack.c.l.b16 %v7737
        %v7929 = vunpack.c.h.b16 %v7737
        %v7930 = vunpack.c.l.b16 %v7738
        %v7931 = vunpack.c.h.b16 %v7738
        %v7932 = vunpack.c.l.b16 %v7739
        %v7933 = vunpack.c.h.b16 %v7739
        %v7934 = vunpack.c.l.b16 %v7740
        %v7935 = vunpack.c.h.b16 %v7740
        %v7936 = vunpack.c.l.b16 %v7741
        %v7937 = vunpack.c.h.b16 %v7741
        %v7938 = vunpack.c.l.b16 %v7742
        %v7939 = vunpack.c.h.b16 %v7742
        %v7940 = vunpack.c.l.b16 %v7743
        %v7941 = vunpack.c.h.b16 %v7743
        %v7942 = vunpack.c.l.b16 %v7744
        %v7943 = vunpack.c.h.b16 %v7744
        %v7944 = vunpack.c.l.b16 %v7745
        %v7945 = vunpack.c.h.b16 %v7745
        %v7946 = vunpack.c.l.b16 %v7746
        %v7947 = vunpack.c.h.b16 %v7746
        %v7948 = vunpack.c.l.b16 %v7747
        %v7949 = vunpack.c.h.b16 %v7747
        %v7950 = vunpack.c.l.b16 %v7748
        %v7951 = vunpack.c.h.b16 %v7748
        %v7952 = vunpack.c.l.b16 %v7749
        %v7953 = vunpack.c.h.b16 %v7749
        %v7954 = vunpack.c.l.b16 %v7750
        %v7955 = vunpack.c.h.b16 %v7750
        %v7956 = vunpack.c.l.b16 %v7751
        %v7957 = vunpack.c.h.b16 %v7751
        %v7958 = vunpack.c.l.b16 %v7752
        %v7959 = vunpack.c.h.b16 %v7752
        %v7960 = vunpack.c.l.b16 %v7753
        %v7961 = vunpack.c.h.b16 %v7753
        %v7962 = vunpack.c.l.b16 %v7754
        %v7963 = vunpack.c.h.b16 %v7754
        %v7964 = vunpack.c.l.b16 %v7755
        %v7965 = vunpack.c.h.b16 %v7755
        %v7966 = vunpack.c.l.b16 %v7756
        %v7967 = vunpack.c.h.b16 %v7756
        %v7968 = vunpack.c.l.b16 %v7757
        %v7969 = vunpack.c.h.b16 %v7757
        %v7970 = vunpack.c.l.b16 %v7758
        %v7971 = vunpack.c.h.b16 %v7758
        %v7972 = vunpack.c.l.b16 %v7759
        %v7973 = vunpack.c.h.b16 %v7759
        %v7974 = vunpack.c.l.b16 %v7760
        %v7975 = vunpack.c.h.b16 %v7760
        %v7976 = vunpack.c.l.b16 %v7761
        %v7977 = vunpack.c.h.b16 %v7761
        %v7978 = vunpack.c.l.b16 %v7762
        %v7979 = vunpack.c.h.b16 %v7762
        %v7980 = vunpack.c.l.b16 %v7763
        %v7981 = vunpack.c.h.b16 %v7763
        %v7982 = vunpack.c.l.b16 %v7764
        %v7983 = vunpack.c.h.b16 %v7764
        %v7984 = vunpack.c.l.b16 %v7765
        %v7985 = vunpack.c.h.b16 %v7765
        %v7986 = vunpack.c.l.b16 %v7766
        %v7987 = vunpack.c.h.b16 %v7766
        %v7988 = vunpack.c.l.b16 %v7767
        %v7989 = vunpack.c.h.b16 %v7767
        %v7990 = vpack.c.b16 %v7862, %v7846
        %v7991 = vpack.c.b16 %v7863, %v7847
        %v7992 = vpack.c.b16 %v7864, %v7848
        %v7993 = vpack.c.b16 %v7865, %v7849
        %v7994 = vpack.c.b16 %v7866, %v7850
        %v7995 = vpack.c.b16 %v7867, %v7851
        %v7996 = vpack.c.b16 %v7868, %v7852
        %v7997 = vpack.c.b16 %v7869, %v7853
        %v7998 = vpack.c.b16 %v7870, %v7854
        %v7999 = vpack.c.b16 %v7871, %v7855
        %v8000 = vpack.c.b16 %v7872, %v7856
        %v8001 = vpack.c.b16 %v7873, %v7857
        %v8002 = vpack.c.b16 %v7874, %v7858
        %v8003 = vpack.c.b16 %v7875, %v7859
        %v8004 = vpack.c.b16 %v7876, %v7860
        %v8005 = vpack.c.b16 %v7877, %v7861
        %v8006 = vpack.c.b16 %v7894, %v7878
        %v8007 = vpack.c.b16 %v7895, %v7879
        %v8008 = vpack.c.b16 %v7896, %v7880
        %v8009 = vpack.c.b16 %v7897, %v7881
        %v8010 = vpack.c.b16 %v7898, %v7882
        %v8011 = vpack.c.b16 %v7899, %v7883
        %v8012 = vpack.c.b16 %v7900, %v7884
        %v8013 = vpack.c.b16 %v7901, %v7885
        %v8014 = vpack.c.b16 %v7902, %v7886
        %v8015 = vpack.c.b16 %v7903, %v7887
        %v8016 = vpack.c.b16 %v7904, %v7888
        %v8017 = vpack.c.b16 %v7905, %v7889
        %v8018 = vpack.c.b16 %v7906, %v7890
        %v8019 = vpack.c.b16 %v7907, %v7891
        %v8020 = vpack.c.b16 %v7908, %v7892
        %v8021 = vpack.c.b16 %v7909, %v7893
        %v8022 = vpack.c.b16 %v7926, %v7910
        %v8023 = vpack.c.b16 %v7927, %v7911
        %v8024 = vpack.c.b16 %v7928, %v7912
        %v8025 = vpack.c.b16 %v7929, %v7913
        %v8026 = vpack.c.b16 %v7930, %v7914
        %v8027 = vpack.c.b16 %v7931, %v7915
        %v8028 = vpack.c.b16 %v7932, %v7916
        %v8029 = vpack.c.b16 %v7933, %v7917
        %v8030 = vpack.c.b16 %v7934, %v7918
        %v8031 = vpack.c.b16 %v7935, %v7919
        %v8032 = vpack.c.b16 %v7936, %v7920
        %v8033 = vpack.c.b16 %v7937, %v7921
        %v8034 = vpack.c.b16 %v7938, %v7922
        %v8035 = vpack.c.b16 %v7939, %v7923
        %v8036 = vpack.c.b16 %v7940, %v7924
        %v8037 = vpack.c.b16 %v7941, %v7925
        %v8038 = vpack.c.b16 %v7958, %v7942
        %v8039 = vpack.c.b16 %v7959, %v7943
        %v8040 = vpack.c.b16 %v7960, %v7944
        %v8041 = vpack.c.b16 %v7961, %v7945
        %v8042 = vpack.c.b16 %v7962, %v7946
        %v8043 = vpack.c.b16 %v7963, %v7947
        %v8044 = vpack.c.b16 %v7964, %v7948
        %v8045 = vpack.c.b16 %v7965, %v7949
        %v8046 = vpack.c.b16 %v7966, %v7950
        %v8047 = vpack.c.b16 %v7967, %v7951
        %v8048 = vpack.c.b16 %v7968, %v7952
        %v8049 = vpack.c.b16 %v7969, %v7953
        %v8050 = vpack.c.b16 %v7970, %v7954
        %v8051 = vpack.c.b16 %v7971, %v7955
        %v8052 = vpack.c.b16 %v7972, %v7956
        %v8053 = vpack.c.b16 %v7973, %v7957
        %v8054 = vpack.c.b16 %v7974, %v7974
        %v8055 = vpack.c.b16 %v7975, %v7975
        %v8056 = vpack.c.b16 %v7976, %v7976
        %v8057 = vpack.c.b16 %v7977, %v7977
        %v8058 = vpack.c.b16 %v7978, %v7978
        %v8059 = vpack.c.b16 %v7979, %v7979
        %v8060 = vpack.c.b16 %v7980, %v7980
        %v8061 = vpack.c.b16 %v7981, %v7981
        %v8062 = vpack.c.b16 %v7982, %v7982
        %v8063 = vpack.c.b16 %v7983, %v7983
        %v8064 = vpack.c.b16 %v7984, %v7984
        %v8065 = vpack.c.b16 %v7985, %v7985
        %v8066 = vpack.c.b16 %v7986, %v7986
        %v8067 = vpack.c.b16 %v7987, %v7987
        %v8068 = vpack.c.b16 %v7988, %v7988
        %v8069 = vpack.c.b16 %v7989, %v7989
        %v8135 = vsel %vm6830, %v7695, 0
        %v8138 = vsel %vm3986, %v8054, 0
        %v8141 = vsel %vm3986, %v8055, 0
        %v8144 = vsel %vm3986, %v8056, 0
        %v8147 = vsel %vm3986, %v8057, 0
        %v8150 = vsel %vm3986, %v8058, 0
        %v8153 = vsel %vm3986, %v8059, 0
        %v8156 = vsel %vm3986, %v8060, 0
        %v8159 = vsel %vm3986, %v8061, 0
        %v8162 = vsel %vm3986, %v8062, 0
        %v8165 = vsel %vm3986, %v8063, 0
        %v8168 = vsel %vm3986, %v8064, 0
        %v8171 = vsel %vm3986, %v8065, 0
        %v8174 = vsel %vm3986, %v8066, 0
        %v8177 = vsel %vm3986, %v8067, 0
        %v8180 = vsel %vm3986, %v8068, 0
        %v8183 = vsel %vm3986, %v8069, 0
        %8185 = vmatprep.subr.bf16.mxu0 %v7991
        %8186 = vmatpush1.bf16.msra.mxu0 %v7990
        %8187 = vmatprep.subr.bf16.mxu0 %v8007
        %8188 = vmatpush1.bf16.msra.mxu0 %v8006
        %8189 = vmatprep.subr.bf16.mxu0 %v8023
        %8190 = vmatpush1.bf16.msra.mxu0 %v8022
        %8191 = vmatprep.subr.bf16.mxu0 %v8039
        %8192 = vmatpush1.bf16.msra.mxu0 %v8038
        %8193 = vmatprep.subr.bf16.mxu0 %v8141
        %8194 = vmatpush1.bf16.msra.mxu0 %v8138
        %8195 = vmatprep.subr.bf16.mxu0 0
        %8196 = vmatpush1.bf16.msra.mxu0 0
        %8197 = vmatprep.subr.bf16.mxu0 0
        %8198 = vmatpush1.bf16.msra.mxu0 0
        %8199 = vmatprep.subr.bf16.mxu0 0
        %8200 = vmatpush1.bf16.msra.mxu0 0
        %8201 = vmatprep.subr.bf16.mxu0 0
        %8202 = vmatpush1.bf16.msra.mxu0 0
        %8203 = vmatprep.subr.bf16.mxu0 0
        %8204 = vmatpush1.bf16.msra.mxu0 0
        %8205 = vmatprep.subr.bf16.mxu0 0
        %8206 = vmatpush1.bf16.msra.mxu0 0
        %8207 = vmatprep.subr.bf16.mxu0 0
        %8208 = vmatpush1.bf16.msra.mxu0 0
        %8209 = vmatprep.subr.bf16.mxu0 0
        %8210 = vmatpush1.bf16.msra.mxu0 0
        %8211 = vmatprep.subr.bf16.mxu0 0
        %8212 = vmatpush1.bf16.msra.mxu0 0
        %8213 = vmatprep.subr.bf16.mxu0 0
        %8214 = vmatpush1.bf16.msra.mxu0 0
        %8215 = vmatprep.subr.bf16.mxu0 0
        %8216 = vmatpush1.bf16.msra.mxu0 0
        %8217 = vmatprep.mubr.bf16.mxu0 0
        %8218 = vmatmul.mubr.bf16.gmra.mrb[0].mxu0 %v8135
        %v8219 = vpop.f32.mrb[0].mxu0
        %v8220 = vadd.f32 %v7772, %v8219
        %v8221 = vpop.f32.mrb[0].mxu0
        %v8222 = vadd.f32 %v7772, %v8221
        %v8223 = vpop.f32.mrb[0].mxu0
        %v8224 = vpop.f32.mrb[0].mxu0
        %8225 = vdwg.mxu0
        %8226 = vmatprep.subr.bf16.mxu0 %v7993
        %8227 = vmatpush1.bf16.msra.mxu0 %v7992
        %8228 = vmatprep.subr.bf16.mxu0 %v8009
        %8229 = vmatpush1.bf16.msra.mxu0 %v8008
        %8230 = vmatprep.subr.bf16.mxu0 %v8025
        %8231 = vmatpush1.bf16.msra.mxu0 %v8024
        %8232 = vmatprep.subr.bf16.mxu0 %v8041
        %8233 = vmatpush1.bf16.msra.mxu0 %v8040
        %8234 = vmatprep.subr.bf16.mxu0 %v8147
        %8235 = vmatpush1.bf16.msra.mxu0 %v8144
        %8236 = vmatprep.subr.bf16.mxu0 0
        %8237 = vmatpush1.bf16.msra.mxu0 0
        %8238 = vmatprep.subr.bf16.mxu0 0
        %8239 = vmatpush1.bf16.msra.mxu0 0
        %8240 = vmatprep.subr.bf16.mxu0 0
        %8241 = vmatpush1.bf16.msra.mxu0 0
        %8242 = vmatprep.subr.bf16.mxu0 0
        %8243 = vmatpush1.bf16.msra.mxu0 0
        %8244 = vmatprep.subr.bf16.mxu0 0
        %8245 = vmatpush1.bf16.msra.mxu0 0
        %8246 = vmatprep.subr.bf16.mxu0 0
        %8247 = vmatpush1.bf16.msra.mxu0 0
        %8248 = vmatprep.subr.bf16.mxu0 0
        %8249 = vmatpush1.bf16.msra.mxu0 0
        %8250 = vmatprep.subr.bf16.mxu0 0
        %8251 = vmatpush1.bf16.msra.mxu0 0
        %8252 = vmatprep.subr.bf16.mxu0 0
        %8253 = vmatpush1.bf16.msra.mxu0 0
        %8254 = vmatprep.subr.bf16.mxu0 0
        %8255 = vmatpush1.bf16.msra.mxu0 0
        %8256 = vmatprep.subr.bf16.mxu0 0
        %8257 = vmatpush1.bf16.msra.mxu0 0
        %8258 = vmatprep.mubr.bf16.mxu0 0
        %8259 = vmatmul.mubr.bf16.gmra.mrb[0].mxu0 %v8135
        %v8260 = vpop.f32.mrb[0].mxu0
        %v8261 = vadd.f32 %v7772, %v8260
        %v8262 = vpop.f32.mrb[0].mxu0
        %v8263 = vadd.f32 %v7772, %v8262
        %v8264 = vpop.f32.mrb[0].mxu0
        %v8265 = vpop.f32.mrb[0].mxu0
        %8266 = vdwg.mxu0
        %8267 = vmatprep.subr.bf16.mxu0 %v7995
        %8268 = vmatpush1.bf16.msra.mxu0 %v7994
        %8269 = vmatprep.subr.bf16.mxu0 %v8011
        %8270 = vmatpush1.bf16.msra.mxu0 %v8010
        %8271 = vmatprep.subr.bf16.mxu0 %v8027
        %8272 = vmatpush1.bf16.msra.mxu0 %v8026
        %8273 = vmatprep.subr.bf16.mxu0 %v8043
        %8274 = vmatpush1.bf16.msra.mxu0 %v8042
        %8275 = vmatprep.subr.bf16.mxu0 %v8153
        %8276 = vmatpush1.bf16.msra.mxu0 %v8150
        %8277 = vmatprep.subr.bf16.mxu0 0
        %8278 = vmatpush1.bf16.msra.mxu0 0
        %8279 = vmatprep.subr.bf16.mxu0 0
        %8280 = vmatpush1.bf16.msra.mxu0 0
        %8281 = vmatprep.subr.bf16.mxu0 0
        %8282 = vmatpush1.bf16.msra.mxu0 0
        %8283 = vmatprep.subr.bf16.mxu0 0
        %8284 = vmatpush1.bf16.msra.mxu0 0
        %8285 = vmatprep.subr.bf16.mxu0 0
        %8286 = vmatpush1.bf16.msra.mxu0 0
        %8287 = vmatprep.subr.bf16.mxu0 0
        %8288 = vmatpush1.bf16.msra.mxu0 0
        %8289 = vmatprep.subr.bf16.mxu0 0
        %8290 = vmatpush1.bf16.msra.mxu0 0
        %8291 = vmatprep.subr.bf16.mxu0 0
        %8292 = vmatpush1.bf16.msra.mxu0 0
        %8293 = vmatprep.subr.bf16.mxu0 0
        %8294 = vmatpush1.bf16.msra.mxu0 0
        %8295 = vmatprep.subr.bf16.mxu0 0
        %8296 = vmatpush1.bf16.msra.mxu0 0
        %8297 = vmatprep.subr.bf16.mxu0 0
        %8298 = vmatpush1.bf16.msra.mxu0 0
        %8299 = vmatprep.mubr.bf16.mxu0 0
        %8300 = vmatmul.mubr.bf16.gmra.mrb[0].mxu0 %v8135
        %v8301 = vpop.f32.mrb[0].mxu0
        %v8302 = vadd.f32 %v7772, %v8301
        %v8303 = vpop.f32.mrb[0].mxu0
        %v8304 = vadd.f32 %v7772, %v8303
        %v8305 = vpop.f32.mrb[0].mxu0
        %v8306 = vpop.f32.mrb[0].mxu0
        %8307 = vdwg.mxu0
        %8308 = vmatprep.subr.bf16.mxu0 %v7997
        %8309 = vmatpush1.bf16.msra.mxu0 %v7996
        %8310 = vmatprep.subr.bf16.mxu0 %v8013
        %8311 = vmatpush1.bf16.msra.mxu0 %v8012
        %8312 = vmatprep.subr.bf16.mxu0 %v8029
        %8313 = vmatpush1.bf16.msra.mxu0 %v8028
        %8314 = vmatprep.subr.bf16.mxu0 %v8045
        %8315 = vmatpush1.bf16.msra.mxu0 %v8044
        %8316 = vmatprep.subr.bf16.mxu0 %v8159
        %8317 = vmatpush1.bf16.msra.mxu0 %v8156
        %8318 = vmatprep.subr.bf16.mxu0 0
        %8319 = vmatpush1.bf16.msra.mxu0 0
        %8320 = vmatprep.subr.bf16.mxu0 0
        %8321 = vmatpush1.bf16.msra.mxu0 0
        %8322 = vmatprep.subr.bf16.mxu0 0
        %8323 = vmatpush1.bf16.msra.mxu0 0
        %8324 = vmatprep.subr.bf16.mxu0 0
        %8325 = vmatpush1.bf16.msra.mxu0 0
        %8326 = vmatprep.subr.bf16.mxu0 0
        %8327 = vmatpush1.bf16.msra.mxu0 0
        %8328 = vmatprep.subr.bf16.mxu0 0
        %8329 = vmatpush1.bf16.msra.mxu0 0
        %8330 = vmatprep.subr.bf16.mxu0 0
        %8331 = vmatpush1.bf16.msra.mxu0 0
        %8332 = vmatprep.subr.bf16.mxu0 0
        %8333 = vmatpush1.bf16.msra.mxu0 0
        %8334 = vmatprep.subr.bf16.mxu0 0
        %8335 = vmatpush1.bf16.msra.mxu0 0
        %8336 = vmatprep.subr.bf16.mxu0 0
        %8337 = vmatpush1.bf16.msra.mxu0 0
        %8338 = vmatprep.subr.bf16.mxu0 0
        %8339 = vmatpush1.bf16.msra.mxu0 0
        %8340 = vmatprep.mubr.bf16.mxu0 0
        %8341 = vmatmul.mubr.bf16.gmra.mrb[0].mxu0 %v8135
        %v8342 = vpop.f32.mrb[0].mxu0
        %v8343 = vadd.f32 %v7772, %v8342
        %v8344 = vpop.f32.mrb[0].mxu0
        %v8345 = vadd.f32 %v7772, %v8344
        %v8346 = vpop.f32.mrb[0].mxu0
        %v8347 = vpop.f32.mrb[0].mxu0
        %8348 = vdwg.mxu0
        %8349 = vmatprep.subr.bf16.mxu0 %v7999
        %8350 = vmatpush1.bf16.msra.mxu0 %v7998
        %8351 = vmatprep.subr.bf16.mxu0 %v8015
        %8352 = vmatpush1.bf16.msra.mxu0 %v8014
        %8353 = vmatprep.subr.bf16.mxu0 %v8031
        %8354 = vmatpush1.bf16.msra.mxu0 %v8030
        %8355 = vmatprep.subr.bf16.mxu0 %v8047
        %8356 = vmatpush1.bf16.msra.mxu0 %v8046
        %8357 = vmatprep.subr.bf16.mxu0 %v8165
        %8358 = vmatpush1.bf16.msra.mxu0 %v8162
        %8359 = vmatprep.subr.bf16.mxu0 0
        %8360 = vmatpush1.bf16.msra.mxu0 0
        %8361 = vmatprep.subr.bf16.mxu0 0
        %8362 = vmatpush1.bf16.msra.mxu0 0
        %8363 = vmatprep.subr.bf16.mxu0 0
        %8364 = vmatpush1.bf16.msra.mxu0 0
        %8365 = vmatprep.subr.bf16.mxu0 0
        %8366 = vmatpush1.bf16.msra.mxu0 0
        %8367 = vmatprep.subr.bf16.mxu0 0
        %8368 = vmatpush1.bf16.msra.mxu0 0
        %8369 = vmatprep.subr.bf16.mxu0 0
        %8370 = vmatpush1.bf16.msra.mxu0 0
        %8371 = vmatprep.subr.bf16.mxu0 0
        %8372 = vmatpush1.bf16.msra.mxu0 0
        %8373 = vmatprep.subr.bf16.mxu0 0
        %8374 = vmatpush1.bf16.msra.mxu0 0
        %8375 = vmatprep.subr.bf16.mxu0 0
        %8376 = vmatpush1.bf16.msra.mxu0 0
        %8377 = vmatprep.subr.bf16.mxu0 0
        %8378 = vmatpush1.bf16.msra.mxu0 0
        %8379 = vmatprep.subr.bf16.mxu0 0
        %8380 = vmatpush1.bf16.msra.mxu0 0
        %8381 = vmatprep.mubr.bf16.mxu0 0
        %8382 = vmatmul.mubr.bf16.gmra.mrb[0].mxu0 %v8135
        %v8383 = vpop.f32.mrb[0].mxu0
        %v8384 = vadd.f32 %v7772, %v8383
        %v8385 = vpop.f32.mrb[0].mxu0
        %v8386 = vadd.f32 %v7772, %v8385
        %v8387 = vpop.f32.mrb[0].mxu0
        %v8388 = vpop.f32.mrb[0].mxu0
        %8389 = vdwg.mxu0
        %8390 = vmatprep.subr.bf16.mxu0 %v8001
        %8391 = vmatpush1.bf16.msra.mxu0 %v8000
        %8392 = vmatprep.subr.bf16.mxu0 %v8017
        %8393 = vmatpush1.bf16.msra.mxu0 %v8016
        %8394 = vmatprep.subr.bf16.mxu0 %v8033
        %8395 = vmatpush1.bf16.msra.mxu0 %v8032
        %8396 = vmatprep.subr.bf16.mxu0 %v8049
        %8397 = vmatpush1.bf16.msra.mxu0 %v8048
        %8398 = vmatprep.subr.bf16.mxu0 %v8171
        %8399 = vmatpush1.bf16.msra.mxu0 %v8168
        %8400 = vmatprep.subr.bf16.mxu0 0
        %8401 = vmatpush1.bf16.msra.mxu0 0
        %8402 = vmatprep.subr.bf16.mxu0 0
        %8403 = vmatpush1.bf16.msra.mxu0 0
        %8404 = vmatprep.subr.bf16.mxu0 0
        %8405 = vmatpush1.bf16.msra.mxu0 0
        %8406 = vmatprep.subr.bf16.mxu0 0
        %8407 = vmatpush1.bf16.msra.mxu0 0
        %8408 = vmatprep.subr.bf16.mxu0 0
        %8409 = vmatpush1.bf16.msra.mxu0 0
        %8410 = vmatprep.subr.bf16.mxu0 0
        %8411 = vmatpush1.bf16.msra.mxu0 0
        %8412 = vmatprep.subr.bf16.mxu0 0
        %8413 = vmatpush1.bf16.msra.mxu0 0
        %8414 = vmatprep.subr.bf16.mxu0 0
        %8415 = vmatpush1.bf16.msra.mxu0 0
        %8416 = vmatprep.subr.bf16.mxu0 0
        %8417 = vmatpush1.bf16.msra.mxu0 0
        %8418 = vmatprep.subr.bf16.mxu0 0
        %8419 = vmatpush1.bf16.msra.mxu0 0
        %8420 = vmatprep.subr.bf16.mxu0 0
        %8421 = vmatpush1.bf16.msra.mxu0 0
        %8422 = vmatprep.mubr.bf16.mxu0 0
        %8423 = vmatmul.mubr.bf16.gmra.mrb[0].mxu0 %v8135
        %v8424 = vpop.f32.mrb[0].mxu0
        %v8425 = vadd.f32 %v7772, %v8424
        %v8426 = vpop.f32.mrb[0].mxu0
        %v8427 = vadd.f32 %v7772, %v8426
        %v8428 = vpop.f32.mrb[0].mxu0
        %v8429 = vpop.f32.mrb[0].mxu0
        %8430 = vdwg.mxu0
        %8431 = vmatprep.subr.bf16.mxu0 %v8003
        %8432 = vmatpush1.bf16.msra.mxu0 %v8002
        %8433 = vmatprep.subr.bf16.mxu0 %v8019
        %8434 = vmatpush1.bf16.msra.mxu0 %v8018
        %8435 = vmatprep.subr.bf16.mxu0 %v8035
        %8436 = vmatpush1.bf16.msra.mxu0 %v8034
        %8437 = vmatprep.subr.bf16.mxu0 %v8051
        %8438 = vmatpush1.bf16.msra.mxu0 %v8050
        %8439 = vmatprep.subr.bf16.mxu0 %v8177
        %8440 = vmatpush1.bf16.msra.mxu0 %v8174
        %8441 = vmatprep.subr.bf16.mxu0 0
        %8442 = vmatpush1.bf16.msra.mxu0 0
        %8443 = vmatprep.subr.bf16.mxu0 0
        %8444 = vmatpush1.bf16.msra.mxu0 0
        %8445 = vmatprep.subr.bf16.mxu0 0
        %8446 = vmatpush1.bf16.msra.mxu0 0
        %8447 = vmatprep.subr.bf16.mxu0 0
        %8448 = vmatpush1.bf16.msra.mxu0 0
        %8449 = vmatprep.subr.bf16.mxu0 0
        %8450 = vmatpush1.bf16.msra.mxu0 0
        %8451 = vmatprep.subr.bf16.mxu0 0
        %8452 = vmatpush1.bf16.msra.mxu0 0
        %8453 = vmatprep.subr.bf16.mxu0 0
        %8454 = vmatpush1.bf16.msra.mxu0 0
        %8455 = vmatprep.subr.bf16.mxu0 0
        %8456 = vmatpush1.bf16.msra.mxu0 0
        %8457 = vmatprep.subr.bf16.mxu0 0
        %8458 = vmatpush1.bf16.msra.mxu0 0
        %8459 = vmatprep.subr.bf16.mxu0 0
        %8460 = vmatpush1.bf16.msra.mxu0 0
        %8461 = vmatprep.subr.bf16.mxu0 0
        %8462 = vmatpush1.bf16.msra.mxu0 0
        %8463 = vmatprep.mubr.bf16.mxu0 0
        %8464 = vmatmul.mubr.bf16.gmra.mrb[0].mxu0 %v8135
        %v8465 = vpop.f32.mrb[0].mxu0
        %v8466 = vadd.f32 %v7772, %v8465
        %v8467 = vpop.f32.mrb[0].mxu0
        %v8468 = vadd.f32 %v7772, %v8467
        %v8469 = vpop.f32.mrb[0].mxu0
        %v8470 = vpop.f32.mrb[0].mxu0
        %8471 = vdwg.mxu0
        %8472 = vmatprep.subr.bf16.mxu0 %v8005
        %8473 = vmatpush1.bf16.msra.mxu0 %v8004
        %8474 = vmatprep.subr.bf16.mxu0 %v8021
        %8475 = vmatpush1.bf16.msra.mxu0 %v8020
        %8476 = vmatprep.subr.bf16.mxu0 %v8037
        %8477 = vmatpush1.bf16.msra.mxu0 %v8036
        %8478 = vmatprep.subr.bf16.mxu0 %v8053
        %8479 = vmatpush1.bf16.msra.mxu0 %v8052
        %8480 = vmatprep.subr.bf16.mxu0 %v8183
        %8481 = vmatpush1.bf16.msra.mxu0 %v8180
        %8482 = vmatprep.subr.bf16.mxu0 0
        %8483 = vmatpush1.bf16.msra.mxu0 0
        %8484 = vmatprep.subr.bf16.mxu0 0
        %8485 = vmatpush1.bf16.msra.mxu0 0
        %8486 = vmatprep.subr.bf16.mxu0 0
        %8487 = vmatpush1.bf16.msra.mxu0 0
        %8488 = vmatprep.subr.bf16.mxu0 0
        %8489 = vmatpush1.bf16.msra.mxu0 0
        %8490 = vmatprep.subr.bf16.mxu0 0
        %8491 = vmatpush1.bf16.msra.mxu0 0
        %8492 = vmatprep.subr.bf16.mxu0 0
        %8493 = vmatpush1.bf16.msra.mxu0 0
        %8494 = vmatprep.subr.bf16.mxu0 0
        %8495 = vmatpush1.bf16.msra.mxu0 0
        %8496 = vmatprep.subr.bf16.mxu0 0
        %8497 = vmatpush1.bf16.msra.mxu0 0
        %8498 = vmatprep.subr.bf16.mxu0 0
        %8499 = vmatpush1.bf16.msra.mxu0 0
        %8500 = vmatprep.subr.bf16.mxu0 0
        %8501 = vmatpush1.bf16.msra.mxu0 0
        %8502 = vmatprep.subr.bf16.mxu0 0
        %8503 = vmatpush1.bf16.msra.mxu0 0
        %8504 = vmatprep.mubr.bf16.mxu0 0
        %8505 = vmatmul.mubr.bf16.gmra.mrb[0].mxu0 %v8135
        %v8506 = vpop.f32.mrb[0].mxu0
        %v8507 = vadd.f32 %v7772, %v8506
        %v8508 = vpop.f32.mrb[0].mxu0
        %v8509 = vadd.f32 %v7772, %v8508
        %v8510 = vpop.f32.mrb[0].mxu0
        %v8511 = vpop.f32.mrb[0].mxu0
        %8512 = vdwg.mxu0
        %v8513 = vld [vmem:[%s339] sm:$0xff]
        %v8514 = vld [vmem:[%s339 + $0x8] sm:$0xff]
        %v8515 = vld [vmem:[%s339 + $0x10] sm:$0xff]
        %v8516 = vld [vmem:[%s339 + $0x18] sm:$0xff]
        %v8517 = vld [vmem:[%s339 + $0x20] sm:$0xff]
        %v8518 = vld [vmem:[%s339 + $0x28] sm:$0xff]
        %v8519 = vld [vmem:[%s339 + $0x30] sm:$0xff]
        %v8520 = vld [vmem:[%s339 + $0x38] sm:$0xff]
        %v8521 = vld [vmem:[%s339 + $0x40] sm:$0xff]
        %v8522 = vld [vmem:[%s339 + $0x48] sm:$0xff]
        %v8523 = vld [vmem:[%s339 + $0x50] sm:$0xff]
        %v8524 = vld [vmem:[%s339 + $0x58] sm:$0xff]
        %v8525 = vld [vmem:[%s339 + $0x60] sm:$0xff]
        %v8526 = vld [vmem:[%s339 + $0x68] sm:$0xff]
        %v8527 = vld [vmem:[%s339 + $0x70] sm:$0xff]
        %v8528 = vld [vmem:[%s339 + $0x78] sm:$0xff]
        %v8529 = vld [vmem:[%s8] sm:$0xf]
        %v8530 = vpack.c.bf16 %v8513, %v8513
        %v8531 = vpack.c.bf16 %v8514, %v8514
        %v8532 = vpack.c.bf16 %v8515, %v8515
        %v8533 = vpack.c.bf16 %v8516, %v8516
        %v8534 = vpack.c.bf16 %v8517, %v8517
        %v8535 = vpack.c.bf16 %v8518, %v8518
        %v8536 = vpack.c.bf16 %v8519, %v8519
        %v8537 = vpack.c.bf16 %v8520, %v8520
        %v8538 = vpack.c.bf16 %v8521, %v8521
        %v8539 = vpack.c.bf16 %v8522, %v8522
        %v8540 = vpack.c.bf16 %v8523, %v8523
        %v8541 = vpack.c.bf16 %v8524, %v8524
        %v8542 = vpack.c.bf16 %v8525, %v8525
        %v8543 = vpack.c.bf16 %v8526, %v8526
        %v8544 = vpack.c.bf16 %v8527, %v8527
        %v8545 = vpack.c.bf16 %v8528, %v8528
        %v8546 = vld [vmem:[%s9] sm:$0xff]
        %8548 = vset.pattern.permute.xlu0 0
        %8549 = vperm.xlu0 %8548, %v8546
        %v8550 = vpop.permute.xlu0 %8549
        %v8553 = vsel %vm3982, %v8529, 0
        %v8556 = vsel %vm3986, %v8530, 0
        %v8559 = vsel %vm3986, %v8531, 0
        %v8562 = vsel %vm3986, %v8532, 0
        %v8565 = vsel %vm3986, %v8533, 0
        %v8568 = vsel %vm3986, %v8534, 0
        %v8571 = vsel %vm3986, %v8535, 0
        %v8574 = vsel %vm3986, %v8536, 0
        %v8577 = vsel %vm3986, %v8537, 0
        %v8580 = vsel %vm3986, %v8538, 0
        %v8583 = vsel %vm3986, %v8539, 0
        %v8586 = vsel %vm3986, %v8540, 0
        %v8589 = vsel %vm3986, %v8541, 0
        %v8592 = vsel %vm3986, %v8542, 0
        %v8595 = vsel %vm3986, %v8543, 0
        %v8598 = vsel %vm3986, %v8544, 0
        %v8601 = vsel %vm3986, %v8545, 0
        %8603 = vmatprep.subr.bf16.mxu0 %v8559
        %8604 = vmatpush1.bf16.msra.mxu0 %v8556
        %8605 = vmatprep.subr.bf16.mxu0 0
        %8606 = vmatpush1.bf16.msra.mxu0 0
        %8607 = vmatprep.subr.bf16.mxu0 0
        %8608 = vmatpush1.bf16.msra.mxu0 0
        %8609 = vmatprep.subr.bf16.mxu0 0
        %8610 = vmatpush1.bf16.msra.mxu0 0
        %8611 = vmatprep.subr.bf16.mxu0 0
        %8612 = vmatpush1.bf16.msra.mxu0 0
        %8613 = vmatprep.subr.bf16.mxu0 0
        %8614 = vmatpush1.bf16.msra.mxu0 0
        %8615 = vmatprep.subr.bf16.mxu0 0
        %8616 = vmatpush1.bf16.msra.mxu0 0
        %8617 = vmatprep.subr.bf16.mxu0 0
        %8618 = vmatpush1.bf16.msra.mxu0 0
        %8619 = vmatprep.subr.bf16.mxu0 0
        %8620 = vmatpush1.bf16.msra.mxu0 0
        %8621 = vmatprep.subr.bf16.mxu0 0
        %8622 = vmatpush1.bf16.msra.mxu0 0
        %8623 = vmatprep.subr.bf16.mxu0 0
        %8624 = vmatpush1.bf16.msra.mxu0 0
        %8625 = vmatprep.subr.bf16.mxu0 0
        %8626 = vmatpush1.bf16.msra.mxu0 0
        %8627 = vmatprep.subr.bf16.mxu0 0
        %8628 = vmatpush1.bf16.msra.mxu0 0
        %8629 = vmatprep.subr.bf16.mxu0 0
        %8630 = vmatpush1.bf16.msra.mxu0 0
        %8631 = vmatprep.subr.bf16.mxu0 0
        %8632 = vmatpush1.bf16.msra.mxu0 0
        %8633 = vmatprep.subr.bf16.mxu0 0
        %8634 = vmatpush1.bf16.msra.mxu0 0
        %8635 = vmatprep.mubr.bf16.mxu0 0
        %8636 = vmatmul.mubr.bf16.gmra.mrb[0].mxu0 %v8553
        %v8637 = vpop.f32.mrb[0].mxu0
        %v8638 = vadd.f32 %v8550, %v8637
        %v8639 = vpop.f32.mrb[0].mxu0
        %v8640 = vadd.f32 %v8550, %v8639
        %v8641 = vpop.f32.mrb[0].mxu0
        %v8642 = vpop.f32.mrb[0].mxu0
        %8643 = vdwg.mxu0
        %8644 = vmatprep.subr.bf16.mxu0 %v8565
        %8645 = vmatpush1.bf16.msra.mxu0 %v8562
        %8646 = vmatprep.subr.bf16.mxu0 0
        %8647 = vmatpush1.bf16.msra.mxu0 0
        %8648 = vmatprep.subr.bf16.mxu0 0
        %8649 = vmatpush1.bf16.msra.mxu0 0
        %8650 = vmatprep.subr.bf16.mxu0 0
        %8651 = vmatpush1.bf16.msra.mxu0 0
        %8652 = vmatprep.subr.bf16.mxu0 0
        %8653 = vmatpush1.bf16.msra.mxu0 0
        %8654 = vmatprep.subr.bf16.mxu0 0
        %8655 = vmatpush1.bf16.msra.mxu0 0
        %8656 = vmatprep.subr.bf16.mxu0 0
        %8657 = vmatpush1.bf16.msra.mxu0 0
        %8658 = vmatprep.subr.bf16.mxu0 0
        %8659 = vmatpush1.bf16.msra.mxu0 0
        %8660 = vmatprep.subr.bf16.mxu0 0
        %8661 = vmatpush1.bf16.msra.mxu0 0
        %8662 = vmatprep.subr.bf16.mxu0 0
        %8663 = vmatpush1.bf16.msra.mxu0 0
        %8664 = vmatprep.subr.bf16.mxu0 0
        %8665 = vmatpush1.bf16.msra.mxu0 0
        %8666 = vmatprep.subr.bf16.mxu0 0
        %8667 = vmatpush1.bf16.msra.mxu0 0
        %8668 = vmatprep.subr.bf16.mxu0 0
        %8669 = vmatpush1.bf16.msra.mxu0 0
        %8670 = vmatprep.subr.bf16.mxu0 0
        %8671 = vmatpush1.bf16.msra.mxu0 0
        %8672 = vmatprep.subr.bf16.mxu0 0
        %8673 = vmatpush1.bf16.msra.mxu0 0
        %8674 = vmatprep.subr.bf16.mxu0 0
        %8675 = vmatpush1.bf16.msra.mxu0 0
        %8676 = vmatprep.mubr.bf16.mxu0 0
        %8677 = vmatmul.mubr.bf16.gmra.mrb[0].mxu0 %v8553
        %v8678 = vpop.f32.mrb[0].mxu0
        %v8679 = vadd.f32 %v8550, %v8678
        %v8680 = vpop.f32.mrb[0].mxu0
        %v8681 = vadd.f32 %v8550, %v8680
        %v8682 = vpop.f32.mrb[0].mxu0
        %v8683 = vpop.f32.mrb[0].mxu0
        %8684 = vdwg.mxu0
        %8685 = vmatprep.subr.bf16.mxu0 %v8571
        %8686 = vmatpush1.bf16.msra.mxu0 %v8568
        %8687 = vmatprep.subr.bf16.mxu0 0
        %8688 = vmatpush1.bf16.msra.mxu0 0
        %8689 = vmatprep.subr.bf16.mxu0 0
        %8690 = vmatpush1.bf16.msra.mxu0 0
        %8691 = vmatprep.subr.bf16.mxu0 0
        %8692 = vmatpush1.bf16.msra.mxu0 0
        %8693 = vmatprep.subr.bf16.mxu0 0
        %8694 = vmatpush1.bf16.msra.mxu0 0
        %8695 = vmatprep.subr.bf16.mxu0 0
        %8696 = vmatpush1.bf16.msra.mxu0 0
        %8697 = vmatprep.subr.bf16.mxu0 0
        %8698 = vmatpush1.bf16.msra.mxu0 0
        %8699 = vmatprep.subr.bf16.mxu0 0
        %8700 = vmatpush1.bf16.msra.mxu0 0
        %8701 = vmatprep.subr.bf16.mxu0 0
        %8702 = vmatpush1.bf16.msra.mxu0 0
        %8703 = vmatprep.subr.bf16.mxu0 0
        %8704 = vmatpush1.bf16.msra.mxu0 0
        %8705 = vmatprep.subr.bf16.mxu0 0
        %8706 = vmatpush1.bf16.msra.mxu0 0
        %8707 = vmatprep.subr.bf16.mxu0 0
        %8708 = vmatpush1.bf16.msra.mxu0 0
        %8709 = vmatprep.subr.bf16.mxu0 0
        %8710 = vmatpush1.bf16.msra.mxu0 0
        %8711 = vmatprep.subr.bf16.mxu0 0
        %8712 = vmatpush1.bf16.msra.mxu0 0
        %8713 = vmatprep.subr.bf16.mxu0 0
        %8714 = vmatpush1.bf16.msra.mxu0 0
        %8715 = vmatprep.subr.bf16.mxu0 0
        %8716 = vmatpush1.bf16.msra.mxu0 0
        %8717 = vmatprep.mubr.bf16.mxu0 0
        %8718 = vmatmul.mubr.bf16.gmra.mrb[0].mxu0 %v8553
        %v8719 = vpop.f32.mrb[0].mxu0
        %v8720 = vadd.f32 %v8550, %v8719
        %v8721 = vpop.f32.mrb[0].mxu0
        %v8722 = vadd.f32 %v8550, %v8721
        %v8723 = vpop.f32.mrb[0].mxu0
        %v8724 = vpop.f32.mrb[0].mxu0
        %8725 = vdwg.mxu0
        %8726 = vmatprep.subr.bf16.mxu0 %v8577
        %8727 = vmatpush1.bf16.msra.mxu0 %v8574
        %8728 = vmatprep.subr.bf16.mxu0 0
        %8729 = vmatpush1.bf16.msra.mxu0 0
        %8730 = vmatprep.subr.bf16.mxu0 0
        %8731 = vmatpush1.bf16.msra.mxu0 0
        %8732 = vmatprep.subr.bf16.mxu0 0
        %8733 = vmatpush1.bf16.msra.mxu0 0
        %8734 = vmatprep.subr.bf16.mxu0 0
        %8735 = vmatpush1.bf16.msra.mxu0 0
        %8736 = vmatprep.subr.bf16.mxu0 0
        %8737 = vmatpush1.bf16.msra.mxu0 0
        %8738 = vmatprep.subr.bf16.mxu0 0
        %8739 = vmatpush1.bf16.msra.mxu0 0
        %8740 = vmatprep.subr.bf16.mxu0 0
        %8741 = vmatpush1.bf16.msra.mxu0 0
        %8742 = vmatprep.subr.bf16.mxu0 0
        %8743 = vmatpush1.bf16.msra.mxu0 0
        %8744 = vmatprep.subr.bf16.mxu0 0
        %8745 = vmatpush1.bf16.msra.mxu0 0
        %8746 = vmatprep.subr.bf16.mxu0 0
        %8747 = vmatpush1.bf16.msra.mxu0 0
        %8748 = vmatprep.subr.bf16.mxu0 0
        %8749 = vmatpush1.bf16.msra.mxu0 0
        %8750 = vmatprep.subr.bf16.mxu0 0
        %8751 = vmatpush1.bf16.msra.mxu0 0
        %8752 = vmatprep.subr.bf16.mxu0 0
        %8753 = vmatpush1.bf16.msra.mxu0 0
        %8754 = vmatprep.subr.bf16.mxu0 0
        %8755 = vmatpush1.bf16.msra.mxu0 0
        %8756 = vmatprep.subr.bf16.mxu0 0
        %8757 = vmatpush1.bf16.msra.mxu0 0
        %8758 = vmatprep.mubr.bf16.mxu0 0
        %8759 = vmatmul.mubr.bf16.gmra.mrb[0].mxu0 %v8553
        %v8760 = vpop.f32.mrb[0].mxu0
        %v8761 = vadd.f32 %v8550, %v8760
        %v8762 = vpop.f32.mrb[0].mxu0
        %v8763 = vadd.f32 %v8550, %v8762
        %v8764 = vpop.f32.mrb[0].mxu0
        %v8765 = vpop.f32.mrb[0].mxu0
        %8766 = vdwg.mxu0
        %8767 = vmatprep.subr.bf16.mxu0 %v8583
        %8768 = vmatpush1.bf16.msra.mxu0 %v8580
        %8769 = vmatprep.subr.bf16.mxu0 0
        %8770 = vmatpush1.bf16.msra.mxu0 0
        %8771 = vmatprep.subr.bf16.mxu0 0
        %8772 = vmatpush1.bf16.msra.mxu0 0
        %8773 = vmatprep.subr.bf16.mxu0 0
        %8774 = vmatpush1.bf16.msra.mxu0 0
        %8775 = vmatprep.subr.bf16.mxu0 0
        %8776 = vmatpush1.bf16.msra.mxu0 0
        %8777 = vmatprep.subr.bf16.mxu0 0
        %8778 = vmatpush1.bf16.msra.mxu0 0
        %8779 = vmatprep.subr.bf16.mxu0 0
        %8780 = vmatpush1.bf16.msra.mxu0 0
        %8781 = vmatprep.subr.bf16.mxu0 0
        %8782 = vmatpush1.bf16.msra.mxu0 0
        %8783 = vmatprep.subr.bf16.mxu0 0
        %8784 = vmatpush1.bf16.msra.mxu0 0
        %8785 = vmatprep.subr.bf16.mxu0 0
        %8786 = vmatpush1.bf16.msra.mxu0 0
        %8787 = vmatprep.subr.bf16.mxu0 0
        %8788 = vmatpush1.bf16.msra.mxu0 0
        %8789 = vmatprep.subr.bf16.mxu0 0
        %8790 = vmatpush1.bf16.msra.mxu0 0
        %8791 = vmatprep.subr.bf16.mxu0 0
        %8792 = vmatpush1.bf16.msra.mxu0 0
        %8793 = vmatprep.subr.bf16.mxu0 0
        %8794 = vmatpush1.bf16.msra.mxu0 0
        %8795 = vmatprep.subr.bf16.mxu0 0
        %8796 = vmatpush1.bf16.msra.mxu0 0
        %8797 = vmatprep.subr.bf16.mxu0 0
        %8798 = vmatpush1.bf16.msra.mxu0 0
        %8799 = vmatprep.mubr.bf16.mxu0 0
        %8800 = vmatmul.mubr.bf16.gmra.mrb[0].mxu0 %v8553
        %v8801 = vpop.f32.mrb[0].mxu0
        %v8802 = vadd.f32 %v8550, %v8801
        %v8803 = vpop.f32.mrb[0].mxu0
        %v8804 = vadd.f32 %v8550, %v8803
        %v8805 = vpop.f32.mrb[0].mxu0
        %v8806 = vpop.f32.mrb[0].mxu0
        %8807 = vdwg.mxu0
        %8808 = vmatprep.subr.bf16.mxu0 %v8589
        %8809 = vmatpush1.bf16.msra.mxu0 %v8586
        %8810 = vmatprep.subr.bf16.mxu0 0
        %8811 = vmatpush1.bf16.msra.mxu0 0
        %8812 = vmatprep.subr.bf16.mxu0 0
        %8813 = vmatpush1.bf16.msra.mxu0 0
        %8814 = vmatprep.subr.bf16.mxu0 0
        %8815 = vmatpush1.bf16.msra.mxu0 0
        %8816 = vmatprep.subr.bf16.mxu0 0
        %8817 = vmatpush1.bf16.msra.mxu0 0
        %8818 = vmatprep.subr.bf16.mxu0 0
        %8819 = vmatpush1.bf16.msra.mxu0 0
        %8820 = vmatprep.subr.bf16.mxu0 0
        %8821 = vmatpush1.bf16.msra.mxu0 0
        %8822 = vmatprep.subr.bf16.mxu0 0
        %8823 = vmatpush1.bf16.msra.mxu0 0
        %8824 = vmatprep.subr.bf16.mxu0 0
        %8825 = vmatpush1.bf16.msra.mxu0 0
        %8826 = vmatprep.subr.bf16.mxu0 0
        %8827 = vmatpush1.bf16.msra.mxu0 0
        %8828 = vmatprep.subr.bf16.mxu0 0
        %8829 = vmatpush1.bf16.msra.mxu0 0
        %8830 = vmatprep.subr.bf16.mxu0 0
        %8831 = vmatpush1.bf16.msra.mxu0 0
        %8832 = vmatprep.subr.bf16.mxu0 0
        %8833 = vmatpush1.bf16.msra.mxu0 0
        %8834 = vmatprep.subr.bf16.mxu0 0
        %8835 = vmatpush1.bf16.msra.mxu0 0
        %8836 = vmatprep.subr.bf16.mxu0 0
        %8837 = vmatpush1.bf16.msra.mxu0 0
        %8838 = vmatprep.subr.bf16.mxu0 0
        %8839 = vmatpush1.bf16.msra.mxu0 0
        %8840 = vmatprep.mubr.bf16.mxu0 0
        %8841 = vmatmul.mubr.bf16.gmra.mrb[0].mxu0 %v8553
        %v8842 = vpop.f32.mrb[0].mxu0
        %v8843 = vadd.f32 %v8550, %v8842
        %v8844 = vpop.f32.mrb[0].mxu0
        %v8845 = vadd.f32 %v8550, %v8844
        %v8846 = vpop.f32.mrb[0].mxu0
        %v8847 = vpop.f32.mrb[0].mxu0
        %8848 = vdwg.mxu0
        %8849 = vmatprep.subr.bf16.mxu0 %v8595
        %8850 = vmatpush1.bf16.msra.mxu0 %v8592
        %8851 = vmatprep.subr.bf16.mxu0 0
        %8852 = vmatpush1.bf16.msra.mxu0 0
        %8853 = vmatprep.subr.bf16.mxu0 0
        %8854 = vmatpush1.bf16.msra.mxu0 0
        %8855 = vmatprep.subr.bf16.mxu0 0
        %8856 = vmatpush1.bf16.msra.mxu0 0
        %8857 = vmatprep.subr.bf16.mxu0 0
        %8858 = vmatpush1.bf16.msra.mxu0 0
        %8859 = vmatprep.subr.bf16.mxu0 0
        %8860 = vmatpush1.bf16.msra.mxu0 0
        %8861 = vmatprep.subr.bf16.mxu0 0
        %8862 = vmatpush1.bf16.msra.mxu0 0
        %8863 = vmatprep.subr.bf16.mxu0 0
        %8864 = vmatpush1.bf16.msra.mxu0 0
        %8865 = vmatprep.subr.bf16.mxu0 0
        %8866 = vmatpush1.bf16.msra.mxu0 0
        %8867 = vmatprep.subr.bf16.mxu0 0
        %8868 = vmatpush1.bf16.msra.mxu0 0
        %8869 = vmatprep.subr.bf16.mxu0 0
        %8870 = vmatpush1.bf16.msra.mxu0 0
        %8871 = vmatprep.subr.bf16.mxu0 0
        %8872 = vmatpush1.bf16.msra.mxu0 0
        %8873 = vmatprep.subr.bf16.mxu0 0
        %8874 = vmatpush1.bf16.msra.mxu0 0
        %8875 = vmatprep.subr.bf16.mxu0 0
        %8876 = vmatpush1.bf16.msra.mxu0 0
        %8877 = vmatprep.subr.bf16.mxu0 0
        %8878 = vmatpush1.bf16.msra.mxu0 0
        %8879 = vmatprep.subr.bf16.mxu0 0
        %8880 = vmatpush1.bf16.msra.mxu0 0
        %8881 = vmatprep.mubr.bf16.mxu0 0
        %8882 = vmatmul.mubr.bf16.gmra.mrb[0].mxu0 %v8553
        %v8883 = vpop.f32.mrb[0].mxu0
        %v8884 = vadd.f32 %v8550, %v8883
        %v8885 = vpop.f32.mrb[0].mxu0
        %v8886 = vadd.f32 %v8550, %v8885
        %v8887 = vpop.f32.mrb[0].mxu0
        %v8888 = vpop.f32.mrb[0].mxu0
        %8889 = vdwg.mxu0
        %8890 = vmatprep.subr.bf16.mxu0 %v8601
        %8891 = vmatpush1.bf16.msra.mxu0 %v8598
        %8892 = vmatprep.subr.bf16.mxu0 0
        %8893 = vmatpush1.bf16.msra.mxu0 0
        %8894 = vmatprep.subr.bf16.mxu0 0
        %8895 = vmatpush1.bf16.msra.mxu0 0
        %8896 = vmatprep.subr.bf16.mxu0 0
        %8897 = vmatpush1.bf16.msra.mxu0 0
        %8898 = vmatprep.subr.bf16.mxu0 0
        %8899 = vmatpush1.bf16.msra.mxu0 0
        %8900 = vmatprep.subr.bf16.mxu0 0
        %8901 = vmatpush1.bf16.msra.mxu0 0
        %8902 = vmatprep.subr.bf16.mxu0 0
        %8903 = vmatpush1.bf16.msra.mxu0 0
        %8904 = vmatprep.subr.bf16.mxu0 0
        %8905 = vmatpush1.bf16.msra.mxu0 0
        %8906 = vmatprep.subr.bf16.mxu0 0
        %8907 = vmatpush1.bf16.msra.mxu0 0
        %8908 = vmatprep.subr.bf16.mxu0 0
        %8909 = vmatpush1.bf16.msra.mxu0 0
        %8910 = vmatprep.subr.bf16.mxu0 0
        %8911 = vmatpush1.bf16.msra.mxu0 0
        %8912 = vmatprep.subr.bf16.mxu0 0
        %8913 = vmatpush1.bf16.msra.mxu0 0
        %8914 = vmatprep.subr.bf16.mxu0 0
        %8915 = vmatpush1.bf16.msra.mxu0 0
        %8916 = vmatprep.subr.bf16.mxu0 0
        %8917 = vmatpush1.bf16.msra.mxu0 0
        %8918 = vmatprep.subr.bf16.mxu0 0
        %8919 = vmatpush1.bf16.msra.mxu0 0
        %8920 = vmatprep.subr.bf16.mxu0 0
        %8921 = vmatpush1.bf16.msra.mxu0 0
        %8922 = vmatprep.mubr.bf16.mxu0 0
        %8923 = vmatmul.mubr.bf16.gmra.mrb[0].mxu0 %v8553
        %v8924 = vpop.f32.mrb[0].mxu0
        %v8925 = vadd.f32 %v8550, %v8924
        %v8926 = vpop.f32.mrb[0].mxu0
        %v8927 = vadd.f32 %v8550, %v8926
        %v8928 = vpop.f32.mrb[0].mxu0
        %v8929 = vpop.f32.mrb[0].mxu0
        %8930 = vdwg.mxu0
        %v8931 = vadd.f32 %v8220, %v8638
        %v8932 = vadd.f32 %v8222, %v8640
        %v8933 = vadd.f32 %v8261, %v8679
        %v8934 = vadd.f32 %v8263, %v8681
        %v8935 = vadd.f32 %v8302, %v8720
        %v8936 = vadd.f32 %v8304, %v8722
        %v8937 = vadd.f32 %v8343, %v8761
        %v8938 = vadd.f32 %v8345, %v8763
        %v8939 = vadd.f32 %v8384, %v8802
        %v8940 = vadd.f32 %v8386, %v8804
        %v8941 = vadd.f32 %v8425, %v8843
        %v8942 = vadd.f32 %v8427, %v8845
        %v8943 = vadd.f32 %v8466, %v8884
        %v8944 = vadd.f32 %v8468, %v8886
        %v8945 = vadd.f32 %v8507, %v8925
        %v8946 = vadd.f32 %v8509, %v8927
        %vm8947 = vcmp.gt.f32.partialorder %v8931, 0.0
        %vm8948 = vcmp.gt.f32.partialorder %v8932, 0.0
        %vm8949 = vcmp.gt.f32.partialorder %v8933, 0.0
        %vm8950 = vcmp.gt.f32.partialorder %v8934, 0.0
        %vm8951 = vcmp.gt.f32.partialorder %v8935, 0.0
        %vm8952 = vcmp.gt.f32.partialorder %v8936, 0.0
        %vm8953 = vcmp.gt.f32.partialorder %v8937, 0.0
        %vm8954 = vcmp.gt.f32.partialorder %v8938, 0.0
        %vm8955 = vcmp.gt.f32.partialorder %v8939, 0.0
        %vm8956 = vcmp.gt.f32.partialorder %v8940, 0.0
        %vm8957 = vcmp.gt.f32.partialorder %v8941, 0.0
        %vm8958 = vcmp.gt.f32.partialorder %v8942, 0.0
        %vm8959 = vcmp.gt.f32.partialorder %v8943, 0.0
        %vm8960 = vcmp.gt.f32.partialorder %v8944, 0.0
        %vm8961 = vcmp.gt.f32.partialorder %v8945, 0.0
        %vm8962 = vcmp.gt.f32.partialorder %v8946, 0.0
        %v8963 = vmin.f32 %v8931, 0.0
        %v8964 = vmin.f32 %v8932, 0.0
        %v8965 = vmin.f32 %v8933, 0.0
        %v8966 = vmin.f32 %v8934, 0.0
        %v8967 = vmin.f32 %v8935, 0.0
        %v8968 = vmin.f32 %v8936, 0.0
        %v8969 = vmin.f32 %v8937, 0.0
        %v8970 = vmin.f32 %v8938, 0.0
        %v8971 = vmin.f32 %v8939, 0.0
        %v8972 = vmin.f32 %v8940, 0.0
        %v8973 = vmin.f32 %v8941, 0.0
        %v8974 = vmin.f32 %v8942, 0.0
        %v8975 = vmin.f32 %v8943, 0.0
        %v8976 = vmin.f32 %v8944, 0.0
        %v8977 = vmin.f32 %v8945, 0.0
        %v8978 = vmin.f32 %v8946, 0.0
        %v8979 = vmul.f32 %v8963, 1.442695
        %v8980 = vpow.pop %v8979
        %v8981 = vmul.f32 %v8964, 1.442695
        %v8982 = vpow.pop %v8981
        %v8983 = vmul.f32 %v8965, 1.442695
        %v8984 = vpow.pop %v8983
        %v8985 = vmul.f32 %v8966, 1.442695
        %v8986 = vpow.pop %v8985
        %v8987 = vmul.f32 %v8967, 1.442695
        %v8988 = vpow.pop %v8987
        %v8989 = vmul.f32 %v8968, 1.442695
        %v8990 = vpow.pop %v8989
        %v8991 = vmul.f32 %v8969, 1.442695
        %v8992 = vpow.pop %v8991
        %v8993 = vmul.f32 %v8970, 1.442695
        %v8994 = vpow.pop %v8993
        %v8995 = vmul.f32 %v8971, 1.442695
        %v8996 = vpow.pop %v8995
        %v8997 = vmul.f32 %v8972, 1.442695
        %v8998 = vpow.pop %v8997
        %v8999 = vmul.f32 %v8973, 1.442695
        %v9000 = vpow.pop %v8999
        %v9001 = vmul.f32 %v8974, 1.442695
        %v9002 = vpow.pop %v9001
        %v9003 = vmul.f32 %v8975, 1.442695
        %v9004 = vpow.pop %v9003
        %v9005 = vmul.f32 %v8976, 1.442695
        %v9006 = vpow.pop %v9005
        %v9007 = vmul.f32 %v8977, 1.442695
        %v9008 = vpow.pop %v9007
        %v9009 = vmul.f32 %v8978, 1.442695
        %v9010 = vpow.pop %v9009
        %v9011 = vsub.f32 %v8980, 1.0
        %v9012 = vsub.f32 %v8982, 1.0
        %v9013 = vsub.f32 %v8984, 1.0
        %v9014 = vsub.f32 %v8986, 1.0
        %v9015 = vsub.f32 %v8988, 1.0
        %v9016 = vsub.f32 %v8990, 1.0
        %v9017 = vsub.f32 %v8992, 1.0
        %v9018 = vsub.f32 %v8994, 1.0
        %v9019 = vsub.f32 %v8996, 1.0
        %v9020 = vsub.f32 %v8998, 1.0
        %v9021 = vsub.f32 %v9000, 1.0
        %v9022 = vsub.f32 %v9002, 1.0
        %v9023 = vsub.f32 %v9004, 1.0
        %v9024 = vsub.f32 %v9006, 1.0
        %v9025 = vsub.f32 %v9008, 1.0
        %v9026 = vsub.f32 %v9010, 1.0
        %v9027 = vsel %vm8947, %v8931, %v9011
        %v9028 = vsel %vm8948, %v8932, %v9012
        %v9029 = vsel %vm8949, %v8933, %v9013
        %v9030 = vsel %vm8950, %v8934, %v9014
        %v9031 = vsel %vm8951, %v8935, %v9015
        %v9032 = vsel %vm8952, %v8936, %v9016
        %v9033 = vsel %vm8953, %v8937, %v9017
        %v9034 = vsel %vm8954, %v8938, %v9018
        %v9035 = vsel %vm8955, %v8939, %v9019
        %v9036 = vsel %vm8956, %v8940, %v9020
        %v9037 = vsel %vm8957, %v8941, %v9021
        %v9038 = vsel %vm8958, %v8942, %v9022
        %v9039 = vsel %vm8959, %v8943, %v9023
        %v9040 = vsel %vm8960, %v8944, %v9024
        %v9041 = vsel %vm8961, %v8945, %v9025
        %v9042 = vsel %vm8962, %v8946, %v9026
        %9043 = vst [vmem:[%s375] sm:$0xff] %v9027
        %9044 = vst [vmem:[%s375 + $0x8] sm:$0xff] %v9028
        %9045 = vst [vmem:[%s375 + $0x10] sm:$0xff] %v9029
        %9046 = vst [vmem:[%s375 + $0x18] sm:$0xff] %v9030
        %9047 = vst [vmem:[%s375 + $0x20] sm:$0xff] %v9031
        %9048 = vst [vmem:[%s375 + $0x28] sm:$0xff] %v9032
        %9049 = vst [vmem:[%s375 + $0x30] sm:$0xff] %v9033
        %9050 = vst [vmem:[%s375 + $0x38] sm:$0xff] %v9034
        %9051 = vst [vmem:[%s375 + $0x40] sm:$0xff] %v9035
        %9052 = vst [vmem:[%s375 + $0x48] sm:$0xff] %v9036
        %9053 = vst [vmem:[%s375 + $0x50] sm:$0xff] %v9037
        %9054 = vst [vmem:[%s375 + $0x58] sm:$0xff] %v9038
        %9055 = vst [vmem:[%s375 + $0x60] sm:$0xff] %v9039
        %9056 = vst [vmem:[%s375 + $0x68] sm:$0xff] %v9040
        %9057 = vst [vmem:[%s375 + $0x70] sm:$0xff] %v9041
        %9058 = vst [vmem:[%s375 + $0x78] sm:$0xff] %v9042
        %s9059 = sand.u32 %s250, 1
        %s9060 = scalar_lea.sflag [#allocation6], %s9059
        %s9061 = sand.u32 %s250, 1
        %s9062 = smul.addr %s9061, 128
        %s9063 = scalar_lea.vmem [#allocation7], %s9062
        // Predicated region
        $region65: #{tpu_custom_call.1} parent=59 // pred_check
          %p9064 = pneg %p260
        $region66: #{tpu_custom_call.1} parent=59 // pred_check_branch
          %9066 = sbr.rel (%p9064) target = $region68
        $region67: #{tpu_custom_call.1} parent=59 // pred_region
          %s9068 = ssub.s32 2048, 2048
          %9069 = vsyncadd %s9060, %s9068
          %s9070 = smul.addr %s27, 16
          %s9071 = smul.addr %s9070, 128
          %s9072 = scalar_lea.hbm %s10, %s9071
          %s9074 = sshll.u32 %s9063, 4
          %s9075 = int_to_ptr.vmem [resolvable:$true] %s9074
          %9077 = dma.vmem_to_hbm [thread:$0]  %s9075, 2048, %s9072, %s9060
        $region68: #{tpu_custom_call.1} parent=59 // pred_fallthru
          _
      $region60: #{tpu_custom_call.1} parent=5 // pred_fallthru
        _
      %p9078 = scmp.le.s32.totalorder 2, %s22
      // Predicated region
      $region69: #{tpu_custom_call.1} parent=5 // pred_check
        %p9079 = pneg %p9078
      $region70: #{tpu_custom_call.1} parent=5 // pred_check_branch
        %9081 = sbr.rel (%p9079) target = $region72
      $region71: #{tpu_custom_call.1} parent=5 // pred_region
        %s9082 = ssub.s32 %s22, 2
        // Predicated region
        $region73: #{tpu_custom_call.1} parent=71 // pred_check
          %p9083 = pneg %p266
        $region74: #{tpu_custom_call.1} parent=71 // pred_check_branch
          %9085 = sbr.rel (%p9083) target = $region76
        $region75: #{tpu_custom_call.1} parent=71 // pred_region
          %s9086 = sand.u32 %s251, 1
          %s9087 = scalar_lea.sflag [#allocation6], %s9086
          %s9088 = sand.u32 %s251, 1
          %s9089 = smul.addr %s9088, 128
          %s9090 = scalar_lea.vmem [#allocation7], %s9089
          %9091 = dma.done %s9087, 2048
        $region76: #{tpu_custom_call.1} parent=71 // pred_fallthru
          _
      $region72: #{tpu_custom_call.1} parent=5 // pred_fallthru
        _
    $region6: #{tpu_custom_call.1} parent=1 // loop_footer
      %s26 = sadd.s32 1, %s22
    $region7: #{tpu_custom_call.1} parent=1 // loop_footer_branch
      %21 = sbr.rel target = $region3
    $region8: #{tpu_custom_call.1} parent=1 // loop_exit
      _
    %9092 = vsyncpa [#allocation5], 1
    %s9093 = scalar_lea.sflag [#allocation5], 1
    %9094 = vsyncpa %s9093, 1
    %9095 = vsyncpa [#allocation6], 1
    %s9096 = scalar_lea.sflag [#allocation6], 1
    %9097 = vsyncpa %s9096, 1

</llo_original>
